<compile_context>
chip_gen: v5e
topology: v5e:2x2
jax: 0.10.0
libtpu: 0.0.40
codegen_flags: <defaults>
</compile_context>

<pallas_src>
import jax
import jax.numpy as jnp
from jax.experimental import pallas as pl
from jax.experimental.pallas import tpu as pltpu


def _zero_halo(buf):
    """Zero only the 1-wide spatial border of a (Hp, Wp, C) VMEM scratch."""
    Hp, Wp, C = buf.shape
    zrow = jnp.zeros((1, Wp, C), buf.dtype)
    zcol = jnp.zeros((Hp, 1, C), buf.dtype)
    buf[0:1, :, :] = zrow
    buf[Hp - 1:Hp, :, :] = zrow
    buf[:, 0:1, :] = zcol
    buf[:, Wp - 1:Wp, :] = zcol


def basic_block_kernel(x_ref, w1_ref, w2_ref, b1_ref, b2_ref, out_ref,
                       xpad, midpad, col1, col2):
    """One batch element per grid step.

    x_ref   : (H, W, Cin)      bf16  un-padded NHWC input (batch squeezed)
    w1_ref  : (9*Cin, Cout)    bf16  conv1 weights, BN1-scale folded, tap-major
    w2_ref  : (9*Cout, Cout)   bf16  conv2 weights, BN2-scale folded
    b?_ref  : (1, Cout)        f32   folded BN bias
    out_ref : (H*W, Cout)      f32
    xpad    : VMEM (H+2, W+2, Cin)   bf16 scratch (padded input)
    midpad  : VMEM (H+2, W+2, Cout)  bf16 scratch (padded intermediate)
    col1    : VMEM (H*W, 9*Cin)      bf16 im2col slab for conv1
    col2    : VMEM (H*W, 9*Cout)     bf16 im2col slab for conv2
    """
    Hp, Wp, Cin = xpad.shape
    H, W = Hp - 2, Wp - 2
    Cout = midpad.shape[-1]

    # Zero only the halo border (interiors are fully overwritten below).
    # Done unconditionally each step: negligible cost, and safe when the
    # "parallel" grid axis is sharded across TensorCores.
    _zero_halo(xpad)
    _zero_halo(midpad)

    # Padded copy of the input lives in VMEM (conv1 halo handled here, not via
    # an HBM jnp.pad in the wrapper).
    xpad[1:H + 1, 1:W + 1, :] = x_ref[...]

    # ---- conv1: im2col slab (K = 9*Cin) + a single bf16 MXU matmul ----------
    for kh in range(3):
        for kw in range(3):
            t = kh * 3 + kw
            col1[:, t * Cin:(t + 1) * Cin] = (
                xpad[kh:kh + H, kw:kw + W, :].reshape(H * W, Cin))
    acc1 = jnp.dot(col1[...], w1_ref[...], preferred_element_type=jnp.float32)

    # bn1 (scale already folded into w1) -> bias add + relu
    out1 = jnp.maximum(acc1 + b1_ref[0], 0.0).astype(jnp.bfloat16)

    # Re-pad the intermediate for conv2 (interior only; halo is already zero).
    midpad[1:H + 1, 1:W + 1, :] = out1.reshape(H, W, Cout)

    # ---- conv2: im2col slab (K = 9*Cout) + a single bf16 MXU matmul ---------
    for kh in range(3):
        for kw in range(3):
            t = kh * 3 + kw
            col2[:, t * Cout:(t + 1) * Cout] = (
                midpad[kh:kh + H, kw:kw + W, :].reshape(H * W, Cout))
    acc2 = jnp.dot(col2[...], w2_ref[...], preferred_element_type=jnp.float32)

    # bn2 (scale folded into w2) -> bias add only (no relu before returning).
    out_ref[...] = (acc2 + b2_ref[0]).astype(out_ref.dtype)


@jax.jit
def basic_block_forward(x_nchw, w1_oihw, w2_oihw,
                        g1, beta1, rm1, rv1, g2, beta2, rm2, rv2, eps=1e-5):
    """Forward pass of BasicBlock.  Returns (out, residual), both NCHW."""
    N, Cin, H, W = x_nchw.shape
    Cout = w1_oihw.shape[0]
    Hp, Wp = H + 2, W + 2

    # Fold inference-mode BN into per-channel scale/bias.  The scale goes into
    # the conv weights; only the bias is applied inside the kernel.
    s1 = g1 * jax.lax.rsqrt(rv1 + eps)
    s2 = g2 * jax.lax.rsqrt(rv2 + eps)
    b1 = (beta1 - rm1 * s1).reshape(1, Cout).astype(jnp.float32)
    b2 = (beta2 - rm2 * s2).reshape(1, Cout).astype(jnp.float32)

    # OIHW -> HWIO, fold BN scale on the output channel, flatten to
    # (9*C, Cout) in tap-major / channel-minor order (matches the im2col slab),
    # and keep weights in HBM as bf16.
    w1 = (jnp.transpose(w1_oihw, (2, 3, 1, 0)) * s1).reshape(9 * Cin, Cout)
    w2 = (jnp.transpose(w2_oihw, (2, 3, 1, 0)) * s2).reshape(9 * Cout, Cout)
    w1 = w1.astype(jnp.bfloat16)
    w2 = w2.astype(jnp.bfloat16)

    # NCHW -> NHWC (channels on the lane axis), bf16 activations in HBM.
    x_nhwc = jnp.transpose(x_nchw, (0, 2, 3, 1)).astype(jnp.bfloat16)

    # Explicit VMEM budget (re-derived so it is valid on v7x's 64 MiB VMEM).
    est = (2 * H * W * Cin * 2                 # x block, double-buffered, bf16
           + 2 * H * W * Cout * 4              # out block, double-buffered, f32
           + 2 * (9 * Cin * Cout + 9 * Cout * Cout) * 2   # weights (buffered)
           + Hp * Wp * (Cin + Cout) * 2        # xpad + midpad scratch
           + H * W * 9 * (Cin + Cout) * 2      # im2col scratches
           + 4 * H * W * Cout * 4)             # accumulators / temporaries
    vmem_limit = int(min(32 * 1024 * 1024, max(4 * 1024 * 1024, 4 * est)))

    out_flat = pl.pallas_call(
        basic_block_kernel,
        out_shape=jax.ShapeDtypeStruct((N, H * W, Cout), jnp.float32),
        grid_spec=pltpu.PrefetchScalarGridSpec(
            num_scalar_prefetch=0,
            grid=(N,),
            in_specs=[
                pl.BlockSpec((pl.Squeezed(), H, W, Cin),
                             lambda n: (n, 0, 0, 0)),
                pl.BlockSpec((9 * Cin, Cout), lambda n: (0, 0)),
                pl.BlockSpec((9 * Cout, Cout), lambda n: (0, 0)),
                pl.BlockSpec((1, Cout), lambda n: (0, 0)),
                pl.BlockSpec((1, Cout), lambda n: (0, 0)),
            ],
            out_specs=pl.BlockSpec((pl.Squeezed(), H * W, Cout),
                                   lambda n: (n, 0, 0)),
            scratch_shapes=[
                pltpu.VMEM((Hp, Wp, Cin), jnp.bfloat16),
                pltpu.VMEM((Hp, Wp, Cout), jnp.bfloat16),
                pltpu.VMEM((H * W, 9 * Cin), jnp.bfloat16),
                pltpu.VMEM((H * W, 9 * Cout), jnp.bfloat16),
            ],
        ),
        compiler_params=pltpu.CompilerParams(
            dimension_semantics=("parallel",),
            vmem_limit_bytes=vmem_limit),
    )(x_nhwc, w1, w2, b1, b2)

    out_nchw = jnp.transpose(out_flat.reshape(N, H, W, Cout), (0, 3, 1, 2))
    residual = x_nchw          # downsample is None -> identity residual
    return out_nchw, residual


def _reference(x_nchw, w1_oihw, w2_oihw, g1, beta1, rm1, rv1,
               g2, beta2, rm2, rv2, eps=1e-5):
    """Pure-JAX f32 reference (lax conv) for correctness checking."""
    x = jnp.transpose(x_nchw, (0, 2, 3, 1))
    w1 = jnp.transpose(w1_oihw, (2, 3, 1, 0))
    w2 = jnp.transpose(w2_oihw, (2, 3, 1, 0))
    dn = ("NHWC", "HWIO", "NHWC")
    y = jax.lax.conv_general_dilated(x, w1, (1, 1), "SAME",
                                     dimension_numbers=dn)
    y = g1 * (y - rm1) / jnp.sqrt(rv1 + eps) + beta1
    y = jnp.maximum(y, 0.0)
    y = jax.lax.conv_general_dilated(y, w2, (1, 1), "SAME",
                                     dimension_numbers=dn)
    y = g2 * (y - rm2) / jnp.sqrt(rv2 + eps) + beta2
    return jnp.transpose(y, (0, 3, 1, 2)), x_nchw


if __name__ == "__main__":
    N, Cin, H, W = 2, 4, 16, 16     # inplanes=4
    Cout = 8                        # planes=8

    key = jax.random.PRNGKey(0)
    k = jax.random.split(key, 8)

    x = jax.random.normal(k[0], (N, Cin, H, W), jnp.float32)
    # conv weights (PyTorch OIHW shapes)
    w1 = jax.random.normal(k[1], (Cout, Cin, 3, 3), jnp.float32) * 0.1
    w2 = jax.random.normal(k[2], (Cout, Cout, 3, 3), jnp.float32) * 0.1
    # BatchNorm parameters / running stats (deterministic, non-trivial)
    g1 = 1.0 + 0.1 * jax.random.normal(k[3], (Cout,), jnp.float32)
    beta1 = 0.1 * jax.random.normal(k[4], (Cout,), jnp.float32)
    rm1 = 0.05 * jnp.arange(Cout, dtype=jnp.float32)
    rv1 = 1.0 + 0.01 * jnp.arange(Cout, dtype=jnp.float32)
    g2 = 1.0 + 0.1 * jax.random.normal(k[5], (Cout,), jnp.float32)
    beta2 = 0.1 * jax.random.normal(k[6], (Cout,), jnp.float32)
    rm2 = -0.03 * jnp.arange(Cout, dtype=jnp.float32)
    rv2 = 1.0 + 0.02 * jnp.arange(Cout, dtype=jnp.float32)

    out, residual = basic_block_forward(x, w1, w2, g1, beta1, rm1, rv1,
                                        g2, beta2, rm2, rv2)
    jax.block_until_ready((out, residual))

    ref_out, ref_res = _reference(x, w1, w2, g1, beta1, rm1, rv1,
                                  g2, beta2, rm2, rv2)
    assert out.shape == (N, Cout, H, W)
    assert residual.shape == (N, Cin, H, W)
    # bf16 matmul operands with f32 accumulation -> loosened tolerance.
    assert jnp.allclose(out, ref_out, atol=5e-2, rtol=5e-2)
    assert jnp.allclose(residual, ref_res)

    print("KERNEL_OK")
</pallas_src>

<mosaic_0001>
module attributes {stable_mosaic.version = 11 : i64} {
  func.func @basic_block_kernel(%arg0: i32, %arg1: memref<1x16x16x4xbf16, #tpu.memory_space<vmem>>, %arg2: memref<36x8xbf16, #tpu.memory_space<vmem>>, %arg3: memref<72x8xbf16, #tpu.memory_space<vmem>>, %arg4: memref<1x8xf32, #tpu.memory_space<vmem>>, %arg5: memref<1x8xf32, #tpu.memory_space<vmem>>, %arg6: memref<1x256x8xf32, #tpu.memory_space<vmem>>, %arg7: memref<18x18x4xbf16, #tpu.memory_space<vmem>>, %arg8: memref<18x18x8xbf16, #tpu.memory_space<vmem>>, %arg9: memref<256x36xbf16, #tpu.memory_space<vmem>>, %arg10: memref<256x72xbf16, #tpu.memory_space<vmem>>) attributes {dimension_semantics = [#tpu.dimension_semantics<parallel>], iteration_bounds = array<i64: 2>, scalar_prefetch = 0 : i64, scratch_operands = 4 : i64, tpu.core_type = #tpu.core_type<tc>, window_params = [{transform_indices = @transform_0, window_bounds = array<i64: 1, 16, 16, 4>}, {pipeline_mode = #tpu.pipeline_mode<synchronous>, transform_indices = @transform_1, window_bounds = array<i64: 36, 8>}, {pipeline_mode = #tpu.pipeline_mode<synchronous>, transform_indices = @transform_2, window_bounds = array<i64: 72, 8>}, {pipeline_mode = #tpu.pipeline_mode<synchronous>, transform_indices = @transform_3, window_bounds = array<i64: 1, 8>}, {pipeline_mode = #tpu.pipeline_mode<synchronous>, transform_indices = @transform_4, window_bounds = array<i64: 1, 8>}, {transform_indices = @transform_5, window_bounds = array<i64: 1, 256, 8>}]} {
    %cst = arith.constant 0.000000e+00 : bf16
    %0 = vector.broadcast %cst : bf16 to vector<1x18x4xbf16>
    %cst_0 = arith.constant 0.000000e+00 : bf16
    %1 = vector.broadcast %cst_0 : bf16 to vector<18x1x4xbf16>
    %c0 = arith.constant 0 : index
    %c0_1 = arith.constant 0 : index
    %c0_2 = arith.constant 0 : index
    %2 = vector.load %arg7[%c0, %c0_1, %c0_2] : memref<18x18x4xbf16, #tpu.memory_space<vmem>>, vector<1x18x4xbf16>
    tpu.vector_store %arg7[%c0, %c0_1, %c0_2], %0 {strides = array<i32>} : memref<18x18x4xbf16, #tpu.memory_space<vmem>>, vector<1x18x4xbf16>,
    %c17 = arith.constant 17 : index
    %c0_3 = arith.constant 0 : index
    %c0_4 = arith.constant 0 : index
    %3 = vector.load %arg7[%c17, %c0_3, %c0_4] : memref<18x18x4xbf16, #tpu.memory_space<vmem>>, vector<1x18x4xbf16>
    tpu.vector_store %arg7[%c17, %c0_3, %c0_4], %0 {strides = array<i32>} : memref<18x18x4xbf16, #tpu.memory_space<vmem>>, vector<1x18x4xbf16>,
    %c0_5 = arith.constant 0 : index
    %c0_6 = arith.constant 0 : index
    %c0_7 = arith.constant 0 : index
    %4 = vector.load %arg7[%c0_5, %c0_6, %c0_7] : memref<18x18x4xbf16, #tpu.memory_space<vmem>>, vector<18x1x4xbf16>
    tpu.vector_store %arg7[%c0_5, %c0_6, %c0_7], %1 {strides = array<i32>} : memref<18x18x4xbf16, #tpu.memory_space<vmem>>, vector<18x1x4xbf16>,
    %c0_8 = arith.constant 0 : index
    %c17_9 = arith.constant 17 : index
    %c0_10 = arith.constant 0 : index
    %5 = vector.load %arg7[%c0_8, %c17_9, %c0_10] : memref<18x18x4xbf16, #tpu.memory_space<vmem>>, vector<18x1x4xbf16>
    tpu.vector_store %arg7[%c0_8, %c17_9, %c0_10], %1 {strides = array<i32>} : memref<18x18x4xbf16, #tpu.memory_space<vmem>>, vector<18x1x4xbf16>,
    %cst_11 = arith.constant 0.000000e+00 : bf16
    %6 = vector.broadcast %cst_11 : bf16 to vector<1x18x8xbf16>
    %cst_12 = arith.constant 0.000000e+00 : bf16
    %7 = vector.broadcast %cst_12 : bf16 to vector<18x1x8xbf16>
    %c0_13 = arith.constant 0 : index
    %c0_14 = arith.constant 0 : index
    %c0_15 = arith.constant 0 : index
    %8 = vector.load %arg8[%c0_13, %c0_14, %c0_15] : memref<18x18x8xbf16, #tpu.memory_space<vmem>>, vector<1x18x8xbf16>
    tpu.vector_store %arg8[%c0_13, %c0_14, %c0_15], %6 {strides = array<i32>} : memref<18x18x8xbf16, #tpu.memory_space<vmem>>, vector<1x18x8xbf16>,
    %c17_16 = arith.constant 17 : index
    %c0_17 = arith.constant 0 : index
    %c0_18 = arith.constant 0 : index
    %9 = vector.load %arg8[%c17_16, %c0_17, %c0_18] : memref<18x18x8xbf16, #tpu.memory_space<vmem>>, vector<1x18x8xbf16>
    tpu.vector_store %arg8[%c17_16, %c0_17, %c0_18], %6 {strides = array<i32>} : memref<18x18x8xbf16, #tpu.memory_space<vmem>>, vector<1x18x8xbf16>,
    %c0_19 = arith.constant 0 : index
    %c0_20 = arith.constant 0 : index
    %c0_21 = arith.constant 0 : index
    %10 = vector.load %arg8[%c0_19, %c0_20, %c0_21] : memref<18x18x8xbf16, #tpu.memory_space<vmem>>, vector<18x1x8xbf16>
    tpu.vector_store %arg8[%c0_19, %c0_20, %c0_21], %7 {strides = array<i32>} : memref<18x18x8xbf16, #tpu.memory_space<vmem>>, vector<18x1x8xbf16>,
    %c0_22 = arith.constant 0 : index
    %c17_23 = arith.constant 17 : index
    %c0_24 = arith.constant 0 : index
    %11 = vector.load %arg8[%c0_22, %c17_23, %c0_24] : memref<18x18x8xbf16, #tpu.memory_space<vmem>>, vector<18x1x8xbf16>
    tpu.vector_store %arg8[%c0_22, %c17_23, %c0_24], %7 {strides = array<i32>} : memref<18x18x8xbf16, #tpu.memory_space<vmem>>, vector<18x1x8xbf16>,
    %c0_25 = arith.constant 0 : index
    %c0_26 = arith.constant 0 : index
    %c0_27 = arith.constant 0 : index
    %c0_28 = arith.constant 0 : index
    %12 = vector.load %arg1[%c0_25, %c0_26, %c0_27, %c0_28] : memref<1x16x16x4xbf16, #tpu.memory_space<vmem>>, vector<1x16x16x4xbf16>
    %13 = vector.shape_cast %12 : vector<1x16x16x4xbf16> to vector<16x16x4xbf16>
    %c1 = arith.constant 1 : index
    %c1_29 = arith.constant 1 : index
    %c0_30 = arith.constant 0 : index
    %14 = vector.load %arg7[%c1, %c1_29, %c0_30] : memref<18x18x4xbf16, #tpu.memory_space<vmem>>, vector<16x16x4xbf16>
    tpu.vector_store %arg7[%c1, %c1_29, %c0_30], %13 {strides = array<i32>} : memref<18x18x4xbf16, #tpu.memory_space<vmem>>, vector<16x16x4xbf16>,
    %c0_31 = arith.constant 0 : index
    %c0_32 = arith.constant 0 : index
    %c0_33 = arith.constant 0 : index
    %15 = vector.load %arg7[%c0_31, %c0_32, %c0_33] : memref<18x18x4xbf16, #tpu.memory_space<vmem>>, vector<16x16x4xbf16>
    %16 = vector.shape_cast %15 : vector<16x16x4xbf16> to vector<256x4xbf16>
    %c0_34 = arith.constant 0 : index
    %c0_35 = arith.constant 0 : index
    %17 = vector.load %arg9[%c0_34, %c0_35] : memref<256x36xbf16, #tpu.memory_space<vmem>>, vector<256x4xbf16>
    tpu.vector_store %arg9[%c0_34, %c0_35], %16 {strides = array<i32>} : memref<256x36xbf16, #tpu.memory_space<vmem>>, vector<256x4xbf16>,
    %c0_36 = arith.constant 0 : index
    %c1_37 = arith.constant 1 : index
    %c0_38 = arith.constant 0 : index
    %18 = vector.load %arg7[%c0_36, %c1_37, %c0_38] : memref<18x18x4xbf16, #tpu.memory_space<vmem>>, vector<16x16x4xbf16>
    %19 = vector.shape_cast %18 : vector<16x16x4xbf16> to vector<256x4xbf16>
    %c0_39 = arith.constant 0 : index
    %c4 = arith.constant 4 : index
    %20 = vector.load %arg9[%c0_39, %c4] : memref<256x36xbf16, #tpu.memory_space<vmem>>, vector<256x4xbf16>
    tpu.vector_store %arg9[%c0_39, %c4], %19 {strides = array<i32>} : memref<256x36xbf16, #tpu.memory_space<vmem>>, vector<256x4xbf16>,
    %c0_40 = arith.constant 0 : index
    %c2 = arith.constant 2 : index
    %c0_41 = arith.constant 0 : index
    %21 = vector.load %arg7[%c0_40, %c2, %c0_41] : memref<18x18x4xbf16, #tpu.memory_space<vmem>>, vector<16x16x4xbf16>
    %22 = vector.shape_cast %21 : vector<16x16x4xbf16> to vector<256x4xbf16>
    %c0_42 = arith.constant 0 : index
    %c8 = arith.constant 8 : index
    %23 = vector.load %arg9[%c0_42, %c8] : memref<256x36xbf16, #tpu.memory_space<vmem>>, vector<256x4xbf16>
    tpu.vector_store %arg9[%c0_42, %c8], %22 {strides = array<i32>} : memref<256x36xbf16, #tpu.memory_space<vmem>>, vector<256x4xbf16>,
    %c1_43 = arith.constant 1 : index
    %c0_44 = arith.constant 0 : index
    %c0_45 = arith.constant 0 : index
    %24 = vector.load %arg7[%c1_43, %c0_44, %c0_45] : memref<18x18x4xbf16, #tpu.memory_space<vmem>>, vector<16x16x4xbf16>
    %25 = vector.shape_cast %24 : vector<16x16x4xbf16> to vector<256x4xbf16>
    %c0_46 = arith.constant 0 : index
    %c12 = arith.constant 12 : index
    %26 = vector.load %arg9[%c0_46, %c12] : memref<256x36xbf16, #tpu.memory_space<vmem>>, vector<256x4xbf16>
    tpu.vector_store %arg9[%c0_46, %c12], %25 {strides = array<i32>} : memref<256x36xbf16, #tpu.memory_space<vmem>>, vector<256x4xbf16>,
    %c1_47 = arith.constant 1 : index
    %c1_48 = arith.constant 1 : index
    %c0_49 = arith.constant 0 : index
    %27 = vector.load %arg7[%c1_47, %c1_48, %c0_49] : memref<18x18x4xbf16, #tpu.memory_space<vmem>>, vector<16x16x4xbf16>
    %28 = vector.shape_cast %27 : vector<16x16x4xbf16> to vector<256x4xbf16>
    %c0_50 = arith.constant 0 : index
    %c16 = arith.constant 16 : index
    %29 = vector.load %arg9[%c0_50, %c16] : memref<256x36xbf16, #tpu.memory_space<vmem>>, vector<256x4xbf16>
    tpu.vector_store %arg9[%c0_50, %c16], %28 {strides = array<i32>} : memref<256x36xbf16, #tpu.memory_space<vmem>>, vector<256x4xbf16>,
    %c1_51 = arith.constant 1 : index
    %c2_52 = arith.constant 2 : index
    %c0_53 = arith.constant 0 : index
    %30 = vector.load %arg7[%c1_51, %c2_52, %c0_53] : memref<18x18x4xbf16, #tpu.memory_space<vmem>>, vector<16x16x4xbf16>
    %31 = vector.shape_cast %30 : vector<16x16x4xbf16> to vector<256x4xbf16>
    %c0_54 = arith.constant 0 : index
    %c20 = arith.constant 20 : index
    %32 = vector.load %arg9[%c0_54, %c20] : memref<256x36xbf16, #tpu.memory_space<vmem>>, vector<256x4xbf16>
    tpu.vector_store %arg9[%c0_54, %c20], %31 {strides = array<i32>} : memref<256x36xbf16, #tpu.memory_space<vmem>>, vector<256x4xbf16>,
    %c2_55 = arith.constant 2 : index
    %c0_56 = arith.constant 0 : index
    %c0_57 = arith.constant 0 : index
    %33 = vector.load %arg7[%c2_55, %c0_56, %c0_57] : memref<18x18x4xbf16, #tpu.memory_space<vmem>>, vector<16x16x4xbf16>
    %34 = vector.shape_cast %33 : vector<16x16x4xbf16> to vector<256x4xbf16>
    %c0_58 = arith.constant 0 : index
    %c24 = arith.constant 24 : index
    %35 = vector.load %arg9[%c0_58, %c24] : memref<256x36xbf16, #tpu.memory_space<vmem>>, vector<256x4xbf16>
    tpu.vector_store %arg9[%c0_58, %c24], %34 {strides = array<i32>} : memref<256x36xbf16, #tpu.memory_space<vmem>>, vector<256x4xbf16>,
    %c2_59 = arith.constant 2 : index
    %c1_60 = arith.constant 1 : index
    %c0_61 = arith.constant 0 : index
    %36 = vector.load %arg7[%c2_59, %c1_60, %c0_61] : memref<18x18x4xbf16, #tpu.memory_space<vmem>>, vector<16x16x4xbf16>
    %37 = vector.shape_cast %36 : vector<16x16x4xbf16> to vector<256x4xbf16>
    %c0_62 = arith.constant 0 : index
    %c28 = arith.constant 28 : index
    %38 = vector.load %arg9[%c0_62, %c28] : memref<256x36xbf16, #tpu.memory_space<vmem>>, vector<256x4xbf16>
    tpu.vector_store %arg9[%c0_62, %c28], %37 {strides = array<i32>} : memref<256x36xbf16, #tpu.memory_space<vmem>>, vector<256x4xbf16>,
    %c2_63 = arith.constant 2 : index
    %c2_64 = arith.constant 2 : index
    %c0_65 = arith.constant 0 : index
    %39 = vector.load %arg7[%c2_63, %c2_64, %c0_65] : memref<18x18x4xbf16, #tpu.memory_space<vmem>>, vector<16x16x4xbf16>
    %40 = vector.shape_cast %39 : vector<16x16x4xbf16> to vector<256x4xbf16>
    %c0_66 = arith.constant 0 : index
    %c32 = arith.constant 32 : index
    %41 = vector.load %arg9[%c0_66, %c32] : memref<256x36xbf16, #tpu.memory_space<vmem>>, vector<256x4xbf16>
    tpu.vector_store %arg9[%c0_66, %c32], %40 {strides = array<i32>} : memref<256x36xbf16, #tpu.memory_space<vmem>>, vector<256x4xbf16>,
    %c0_67 = arith.constant 0 : index
    %c0_68 = arith.constant 0 : index
    %42 = vector.load %arg9[%c0_67, %c0_68] : memref<256x36xbf16, #tpu.memory_space<vmem>>, vector<256x36xbf16>
    %c0_69 = arith.constant 0 : index
    %c0_70 = arith.constant 0 : index
    %43 = vector.load %arg2[%c0_69, %c0_70] : memref<36x8xbf16, #tpu.memory_space<vmem>>, vector<36x8xbf16>
    %cst_71 = arith.constant dense<0.000000e+00> : vector<256x8xf32>
    %44 = tpu.matmul %42, %43, %cst_71 {dimension_numbers = #tpu.dot_dimension_numbers<[1], [0], [0], [1], [0, 0, 1, 1], [], []>} : vector<256x36xbf16>, vector<36x8xbf16>, vector<256x8xf32> -> vector<256x8xf32>
    %c0_72 = arith.constant 0 : index
    %c0_73 = arith.constant 0 : index
    %45 = vector.load %arg4[%c0_72, %c0_73] : memref<1x8xf32, #tpu.memory_space<vmem>>, vector<1x8xf32>
    %46 = vector.shape_cast %45 : vector<1x8xf32> to vector<8xf32>
    %47 = vector.shape_cast %46 : vector<8xf32> to vector<1x8xf32>
    %48 = vector.broadcast %47 : vector<1x8xf32> to vector<256x8xf32>
    %49 = arith.addf %44, %48 : vector<256x8xf32>
    %cst_74 = arith.constant 0.000000e+00 : f32
    %50 = vector.broadcast %cst_74 : f32 to vector<256x8xf32>
    %51 = arith.maximumf %49, %50 : vector<256x8xf32>
    %52 = arith.truncf %51 : vector<256x8xf32> to vector<256x8xbf16>
    %53 = vector.shape_cast %52 : vector<256x8xbf16> to vector<16x16x8xbf16>
    %c1_75 = arith.constant 1 : index
    %c1_76 = arith.constant 1 : index
    %c0_77 = arith.constant 0 : index
    %54 = vector.load %arg8[%c1_75, %c1_76, %c0_77] : memref<18x18x8xbf16, #tpu.memory_space<vmem>>, vector<16x16x8xbf16>
    tpu.vector_store %arg8[%c1_75, %c1_76, %c0_77], %53 {strides = array<i32>} : memref<18x18x8xbf16, #tpu.memory_space<vmem>>, vector<16x16x8xbf16>,
    %c0_78 = arith.constant 0 : index
    %c0_79 = arith.constant 0 : index
    %c0_80 = arith.constant 0 : index
    %55 = vector.load %arg8[%c0_78, %c0_79, %c0_80] : memref<18x18x8xbf16, #tpu.memory_space<vmem>>, vector<16x16x8xbf16>
    %56 = vector.shape_cast %55 : vector<16x16x8xbf16> to vector<256x8xbf16>
    %c0_81 = arith.constant 0 : index
    %c0_82 = arith.constant 0 : index
    %57 = vector.load %arg10[%c0_81, %c0_82] : memref<256x72xbf16, #tpu.memory_space<vmem>>, vector<256x8xbf16>
    tpu.vector_store %arg10[%c0_81, %c0_82], %56 {strides = array<i32>} : memref<256x72xbf16, #tpu.memory_space<vmem>>, vector<256x8xbf16>,
    %c0_83 = arith.constant 0 : index
    %c1_84 = arith.constant 1 : index
    %c0_85 = arith.constant 0 : index
    %58 = vector.load %arg8[%c0_83, %c1_84, %c0_85] : memref<18x18x8xbf16, #tpu.memory_space<vmem>>, vector<16x16x8xbf16>
    %59 = vector.shape_cast %58 : vector<16x16x8xbf16> to vector<256x8xbf16>
    %c0_86 = arith.constant 0 : index
    %c8_87 = arith.constant 8 : index
    %60 = vector.load %arg10[%c0_86, %c8_87] : memref<256x72xbf16, #tpu.memory_space<vmem>>, vector<256x8xbf16>
    tpu.vector_store %arg10[%c0_86, %c8_87], %59 {strides = array<i32>} : memref<256x72xbf16, #tpu.memory_space<vmem>>, vector<256x8xbf16>,
    %c0_88 = arith.constant 0 : index
    %c2_89 = arith.constant 2 : index
    %c0_90 = arith.constant 0 : index
    %61 = vector.load %arg8[%c0_88, %c2_89, %c0_90] : memref<18x18x8xbf16, #tpu.memory_space<vmem>>, vector<16x16x8xbf16>
    %62 = vector.shape_cast %61 : vector<16x16x8xbf16> to vector<256x8xbf16>
    %c0_91 = arith.constant 0 : index
    %c16_92 = arith.constant 16 : index
    %63 = vector.load %arg10[%c0_91, %c16_92] : memref<256x72xbf16, #tpu.memory_space<vmem>>, vector<256x8xbf16>
    tpu.vector_store %arg10[%c0_91, %c16_92], %62 {strides = array<i32>} : memref<256x72xbf16, #tpu.memory_space<vmem>>, vector<256x8xbf16>,
    %c1_93 = arith.constant 1 : index
    %c0_94 = arith.constant 0 : index
    %c0_95 = arith.constant 0 : index
    %64 = vector.load %arg8[%c1_93, %c0_94, %c0_95] : memref<18x18x8xbf16, #tpu.memory_space<vmem>>, vector<16x16x8xbf16>
    %65 = vector.shape_cast %64 : vector<16x16x8xbf16> to vector<256x8xbf16>
    %c0_96 = arith.constant 0 : index
    %c24_97 = arith.constant 24 : index
    %66 = vector.load %arg10[%c0_96, %c24_97] : memref<256x72xbf16, #tpu.memory_space<vmem>>, vector<256x8xbf16>
    tpu.vector_store %arg10[%c0_96, %c24_97], %65 {strides = array<i32>} : memref<256x72xbf16, #tpu.memory_space<vmem>>, vector<256x8xbf16>,
    %c1_98 = arith.constant 1 : index
    %c1_99 = arith.constant 1 : index
    %c0_100 = arith.constant 0 : index
    %67 = vector.load %arg8[%c1_98, %c1_99, %c0_100] : memref<18x18x8xbf16, #tpu.memory_space<vmem>>, vector<16x16x8xbf16>
    %68 = vector.shape_cast %67 : vector<16x16x8xbf16> to vector<256x8xbf16>
    %c0_101 = arith.constant 0 : index
    %c32_102 = arith.constant 32 : index
    %69 = vector.load %arg10[%c0_101, %c32_102] : memref<256x72xbf16, #tpu.memory_space<vmem>>, vector<256x8xbf16>
    tpu.vector_store %arg10[%c0_101, %c32_102], %68 {strides = array<i32>} : memref<256x72xbf16, #tpu.memory_space<vmem>>, vector<256x8xbf16>,
    %c1_103 = arith.constant 1 : index
    %c2_104 = arith.constant 2 : index
    %c0_105 = arith.constant 0 : index
    %70 = vector.load %arg8[%c1_103, %c2_104, %c0_105] : memref<18x18x8xbf16, #tpu.memory_space<vmem>>, vector<16x16x8xbf16>
    %71 = vector.shape_cast %70 : vector<16x16x8xbf16> to vector<256x8xbf16>
    %c0_106 = arith.constant 0 : index
    %c40 = arith.constant 40 : index
    %72 = vector.load %arg10[%c0_106, %c40] : memref<256x72xbf16, #tpu.memory_space<vmem>>, vector<256x8xbf16>
    tpu.vector_store %arg10[%c0_106, %c40], %71 {strides = array<i32>} : memref<256x72xbf16, #tpu.memory_space<vmem>>, vector<256x8xbf16>,
    %c2_107 = arith.constant 2 : index
    %c0_108 = arith.constant 0 : index
    %c0_109 = arith.constant 0 : index
    %73 = vector.load %arg8[%c2_107, %c0_108, %c0_109] : memref<18x18x8xbf16, #tpu.memory_space<vmem>>, vector<16x16x8xbf16>
    %74 = vector.shape_cast %73 : vector<16x16x8xbf16> to vector<256x8xbf16>
    %c0_110 = arith.constant 0 : index
    %c48 = arith.constant 48 : index
    %75 = vector.load %arg10[%c0_110, %c48] : memref<256x72xbf16, #tpu.memory_space<vmem>>, vector<256x8xbf16>
    tpu.vector_store %arg10[%c0_110, %c48], %74 {strides = array<i32>} : memref<256x72xbf16, #tpu.memory_space<vmem>>, vector<256x8xbf16>,
    %c2_111 = arith.constant 2 : index
    %c1_112 = arith.constant 1 : index
    %c0_113 = arith.constant 0 : index
    %76 = vector.load %arg8[%c2_111, %c1_112, %c0_113] : memref<18x18x8xbf16, #tpu.memory_space<vmem>>, vector<16x16x8xbf16>
    %77 = vector.shape_cast %76 : vector<16x16x8xbf16> to vector<256x8xbf16>
    %c0_114 = arith.constant 0 : index
    %c56 = arith.constant 56 : index
    %78 = vector.load %arg10[%c0_114, %c56] : memref<256x72xbf16, #tpu.memory_space<vmem>>, vector<256x8xbf16>
    tpu.vector_store %arg10[%c0_114, %c56], %77 {strides = array<i32>} : memref<256x72xbf16, #tpu.memory_space<vmem>>, vector<256x8xbf16>,
    %c2_115 = arith.constant 2 : index
    %c2_116 = arith.constant 2 : index
    %c0_117 = arith.constant 0 : index
    %79 = vector.load %arg8[%c2_115, %c2_116, %c0_117] : memref<18x18x8xbf16, #tpu.memory_space<vmem>>, vector<16x16x8xbf16>
    %80 = vector.shape_cast %79 : vector<16x16x8xbf16> to vector<256x8xbf16>
    %c0_118 = arith.constant 0 : index
    %c64 = arith.constant 64 : index
    %81 = vector.load %arg10[%c0_118, %c64] : memref<256x72xbf16, #tpu.memory_space<vmem>>, vector<256x8xbf16>
    tpu.vector_store %arg10[%c0_118, %c64], %80 {strides = array<i32>} : memref<256x72xbf16, #tpu.memory_space<vmem>>, vector<256x8xbf16>,
    %c0_119 = arith.constant 0 : index
    %c0_120 = arith.constant 0 : index
    %82 = vector.load %arg10[%c0_119, %c0_120] : memref<256x72xbf16, #tpu.memory_space<vmem>>, vector<256x72xbf16>
    %c0_121 = arith.constant 0 : index
    %c0_122 = arith.constant 0 : index
    %83 = vector.load %arg3[%c0_121, %c0_122] : memref<72x8xbf16, #tpu.memory_space<vmem>>, vector<72x8xbf16>
    %cst_123 = arith.constant dense<0.000000e+00> : vector<256x8xf32>
    %84 = tpu.matmul %82, %83, %cst_123 {dimension_numbers = #tpu.dot_dimension_numbers<[1], [0], [0], [1], [0, 0, 1, 1], [], []>} : vector<256x72xbf16>, vector<72x8xbf16>, vector<256x8xf32> -> vector<256x8xf32>
    %c0_124 = arith.constant 0 : index
    %c0_125 = arith.constant 0 : index
    %85 = vector.load %arg5[%c0_124, %c0_125] : memref<1x8xf32, #tpu.memory_space<vmem>>, vector<1x8xf32>
    %86 = vector.shape_cast %85 : vector<1x8xf32> to vector<8xf32>
    %87 = vector.shape_cast %86 : vector<8xf32> to vector<1x8xf32>
    %88 = vector.broadcast %87 : vector<1x8xf32> to vector<256x8xf32>
    %89 = arith.addf %84, %88 : vector<256x8xf32>
    %c0_126 = arith.constant 0 : index
    %c0_127 = arith.constant 0 : index
    %c0_128 = arith.constant 0 : index
    %90 = vector.load %arg6[%c0_126, %c0_127, %c0_128] : memref<1x256x8xf32, #tpu.memory_space<vmem>>, vector<1x256x8xf32>
    %91 = vector.shape_cast %90 : vector<1x256x8xf32> to vector<256x8xf32>
    %92 = vector.shape_cast %89 : vector<256x8xf32> to vector<1x256x8xf32>
    tpu.vector_store %arg6[%c0_126, %c0_127, %c0_128], %92 {strides = array<i32>} : memref<1x256x8xf32, #tpu.memory_space<vmem>>, vector<1x256x8xf32>,
    return
  }
  func.func @transform_0(%arg0: i32) -> (i32, i32, i32, i32) {
    %c0_i32 = arith.constant 0 : i32
    %c0_i32_0 = arith.constant 0 : i32
    %c0_i32_1 = arith.constant 0 : i32
    %c0_i32_2 = arith.constant 0 : i32
    return %arg0, %c0_i32, %c0_i32_0, %c0_i32_1 : i32, i32, i32, i32
  }
  func.func @transform_1(%arg0: i32) -> (i32, i32) {
    %c0_i32 = arith.constant 0 : i32
    %c0_i32_0 = arith.constant 0 : i32
    %c0_i32_1 = arith.constant 0 : i32
    return %c0_i32, %c0_i32_0 : i32, i32
  }
  func.func @transform_2(%arg0: i32) -> (i32, i32) {
    %c0_i32 = arith.constant 0 : i32
    %c0_i32_0 = arith.constant 0 : i32
    %c0_i32_1 = arith.constant 0 : i32
    return %c0_i32, %c0_i32_0 : i32, i32
  }
  func.func @transform_3(%arg0: i32) -> (i32, i32) {
    %c0_i32 = arith.constant 0 : i32
    %c0_i32_0 = arith.constant 0 : i32
    %c0_i32_1 = arith.constant 0 : i32
    return %c0_i32, %c0_i32_0 : i32, i32
  }
  func.func @transform_4(%arg0: i32) -> (i32, i32) {
    %c0_i32 = arith.constant 0 : i32
    %c0_i32_0 = arith.constant 0 : i32
    %c0_i32_1 = arith.constant 0 : i32
    return %c0_i32, %c0_i32_0 : i32, i32
  }
  func.func @transform_5(%arg0: i32) -> (i32, i32, i32) {
    %c0_i32 = arith.constant 0 : i32
    %c0_i32_0 = arith.constant 0 : i32
    %c0_i32_1 = arith.constant 0 : i32
    return %arg0, %c0_i32, %c0_i32_0 : i32, i32, i32
  }
}

</mosaic_0001>

<llo_original>
// kernel: basic_block_forward.1
$region0: #{basic_block_forward.1}
  #allocation0 [shape = 'u32[]', space=smem, size = 0x4, offset = 0x4, fixed_abs, tag = 'smem constant byte address 0x4 - core index']
  #allocation1 [shape = 'u32[72,128]{1,0:T(1,128)}', space=vmem, size = 0x9000, scoped, tag = 'internal scratch']
  #allocation2 [shape = 'bf16[18,18,4]{2,1,0:T(8,128)(2,1)}', space=vmem, size = 0x1b000, scoped, tag = 'scratch operand']
  #allocation3 [shape = 'bf16[18,18,8]{2,1,0:T(8,128)(2,1)}', space=vmem, size = 0x1b000, scoped, tag = 'scratch operand']
  #allocation4 [shape = 'bf16[256,36]{1,0:T(8,128)(2,1)}', space=vmem, size = 0x10000, scoped, tag = 'scratch operand']
  #allocation5 [shape = 'bf16[256,72]{1,0:T(8,128)(2,1)}', space=vmem, size = 0x10000, scoped, tag = 'scratch operand']
  %s0 = inlined_call_operand.vmem [shape: bf16[2,16,16,4], index: 0, kind: input, shape index: {}]
  %s1 = inlined_call_operand.vmem [shape: bf16[36,8], index: 1, kind: input, shape index: {}]
  %s2 = inlined_call_operand.vmem [shape: bf16[72,8], index: 2, kind: input, shape index: {}]
  %s3 = inlined_call_operand.vmem [shape: f32[1,8], index: 3, kind: input, shape index: {}]
  %s4 = inlined_call_operand.vmem [shape: f32[1,8], index: 4, kind: input, shape index: {}]
  %s5 = inlined_call_operand.vmem [shape: f32[2,256,8], index: 5, kind: output, shape index: {}]
  %s6 = sld [smem:[#allocation0]]
  $region53: #{basic_block_forward.1} parent=0
    _
  %s8 = ssub.s32 1, %s6
  %s9 = scalar_select 0, %s8, %s6
  loop: start=0, step=1, limit=4
  $region2: #{basic_block_forward.1} parent=0 // loop_pre_header
    _
  $region3: #{basic_block_forward.1} parent=0 // loop_header
    %s11 = sphi 0, %s15
    %p12 = scmp.ge.s32.totalorder %s11, 4
    %s21 = sphi 0, %s23
    %s24 = sphi 0, %s21
    %s25 = sphi 0, %s24
    %s41 = sphi 0, %s25
    %s45 = sphi 0, %s45
    %s47 = sphi 0, %s45
    %s48 = sphi 0, %s47
    %s62 = sphi 0, %s48
    %s66 = sphi 0, %s66
    %s68 = sphi 0, %s66
    %s69 = sphi 0, %s68
    %s83 = sphi 0, %s69
    %s87 = sphi 0, %s87
    %s89 = sphi 0, %s87
    %s90 = sphi 0, %s89
    %s104 = sphi 0, %s90
    %s108 = sphi 0, %s108
    %s110 = sphi 0, %s108
    %s111 = sphi 0, %s110
    %s125 = sphi 0, %s111
    %s131 = sphi 0, %s133
    %s134 = sphi 0, %s131
    %s135 = sphi 0, %s134
    %s151 = sphi 0, %s135
  $region4: #{basic_block_forward.1} parent=0 // loop_header_branch
    %14 = sbr.rel (%p12) target = $region8
  $region5: #{basic_block_forward.1} parent=0 // loop_body
    %s16 = ssub.s32 %s11, 1
    %s17 = ssub.s32 %s11, 2
    %s18 = sadd.s32 %s11, 1
    %s19 = ssub.s32 %s11, %s18
    %p20 = scmp.eq.s32.totalorder %s19, 0
    %s22 = sadd.s32 %s21, 1
    %s23 = scalar_select %p20, %s21, %s22
    %p26 = pneg %p20
    %p27 = scmp.eq.s32.totalorder %s11, 1
    %p28 = por %p26, %p27
    %p29 = scmp.ne.s32.totalorder %s21, %s24
    %p30 = scmp.eq.s32.totalorder %s11, 0
    %p31 = por %p29, %p30
    %p32 = scmp.ne.s32.totalorder %s21, %s24
    %p33 = scmp.eq.s32.totalorder %s16, 1
    %p34 = por %p32, %p33
    %p35 = scmp.ne.s32.totalorder %s24, %s25
    %p36 = scmp.eq.s32.totalorder %s16, 0
    %p37 = por %p35, %p36
    %p38 = scmp.ne.s32.totalorder %s24, %s25
    %p39 = scmp.eq.s32.totalorder %s17, 1
    %p40 = por %p38, %p39
    %p42 = scmp.ne.s32.totalorder %s25, %s41
    %p43 = scmp.eq.s32.totalorder %s17, 0
    %p44 = por %p42, %p43
    %s46 = sadd.s32 %s45, 1
    %p49 = scmp.eq.s32.totalorder %s11, 1
    %p50 = scmp.ne.s32.totalorder %s45, %s47
    %p51 = scmp.eq.s32.totalorder %s11, 0
    %p52 = por %p50, %p51
    %p53 = scmp.ne.s32.totalorder %s45, %s47
    %p54 = scmp.eq.s32.totalorder %s16, 1
    %p55 = por %p53, %p54
    %p56 = scmp.ne.s32.totalorder %s47, %s48
    %p57 = scmp.eq.s32.totalorder %s16, 0
    %p58 = por %p56, %p57
    %p59 = scmp.ne.s32.totalorder %s47, %s48
    %p60 = scmp.eq.s32.totalorder %s17, 1
    %p61 = por %p59, %p60
    %p63 = scmp.ne.s32.totalorder %s48, %s62
    %p64 = scmp.eq.s32.totalorder %s17, 0
    %p65 = por %p63, %p64
    %s67 = sadd.s32 %s66, 1
    %p70 = scmp.eq.s32.totalorder %s11, 1
    %p71 = scmp.ne.s32.totalorder %s66, %s68
    %p72 = scmp.eq.s32.totalorder %s11, 0
    %p73 = por %p71, %p72
    %p74 = scmp.ne.s32.totalorder %s66, %s68
    %p75 = scmp.eq.s32.totalorder %s16, 1
    %p76 = por %p74, %p75
    %p77 = scmp.ne.s32.totalorder %s68, %s69
    %p78 = scmp.eq.s32.totalorder %s16, 0
    %p79 = por %p77, %p78
    %p80 = scmp.ne.s32.totalorder %s68, %s69
    %p81 = scmp.eq.s32.totalorder %s17, 1
    %p82 = por %p80, %p81
    %p84 = scmp.ne.s32.totalorder %s69, %s83
    %p85 = scmp.eq.s32.totalorder %s17, 0
    %p86 = por %p84, %p85
    %s88 = sadd.s32 %s87, 1
    %p91 = scmp.eq.s32.totalorder %s11, 1
    %p92 = scmp.ne.s32.totalorder %s87, %s89
    %p93 = scmp.eq.s32.totalorder %s11, 0
    %p94 = por %p92, %p93
    %p95 = scmp.ne.s32.totalorder %s87, %s89
    %p96 = scmp.eq.s32.totalorder %s16, 1
    %p97 = por %p95, %p96
    %p98 = scmp.ne.s32.totalorder %s89, %s90
    %p99 = scmp.eq.s32.totalorder %s16, 0
    %p100 = por %p98, %p99
    %p101 = scmp.ne.s32.totalorder %s89, %s90
    %p102 = scmp.eq.s32.totalorder %s17, 1
    %p103 = por %p101, %p102
    %p105 = scmp.ne.s32.totalorder %s90, %s104
    %p106 = scmp.eq.s32.totalorder %s17, 0
    %p107 = por %p105, %p106
    %s109 = sadd.s32 %s108, 1
    %p112 = scmp.eq.s32.totalorder %s11, 1
    %p113 = scmp.ne.s32.totalorder %s108, %s110
    %p114 = scmp.eq.s32.totalorder %s11, 0
    %p115 = por %p113, %p114
    %p116 = scmp.ne.s32.totalorder %s108, %s110
    %p117 = scmp.eq.s32.totalorder %s16, 1
    %p118 = por %p116, %p117
    %p119 = scmp.ne.s32.totalorder %s110, %s111
    %p120 = scmp.eq.s32.totalorder %s16, 0
    %p121 = por %p119, %p120
    %p122 = scmp.ne.s32.totalorder %s110, %s111
    %p123 = scmp.eq.s32.totalorder %s17, 1
    %p124 = por %p122, %p123
    %p126 = scmp.ne.s32.totalorder %s111, %s125
    %p127 = scmp.eq.s32.totalorder %s17, 0
    %p128 = por %p126, %p127
    %s129 = ssub.s32 %s11, %s18
    %p130 = scmp.eq.s32.totalorder %s129, 0
    %s132 = sadd.s32 %s131, 1
    %s133 = scalar_select %p130, %s131, %s132
    %p136 = pneg %p130
    %p137 = scmp.eq.s32.totalorder %s11, 1
    %p138 = por %p136, %p137
    %p139 = scmp.ne.s32.totalorder %s131, %s134
    %p140 = scmp.eq.s32.totalorder %s11, 0
    %p141 = por %p139, %p140
    %p142 = scmp.ne.s32.totalorder %s131, %s134
    %p143 = scmp.eq.s32.totalorder %s16, 1
    %p144 = por %p142, %p143
    %p145 = scmp.ne.s32.totalorder %s134, %s135
    %p146 = scmp.eq.s32.totalorder %s16, 0
    %p147 = por %p145, %p146
    %p148 = scmp.ne.s32.totalorder %s134, %s135
    %p149 = scmp.eq.s32.totalorder %s17, 1
    %p150 = por %p148, %p149
    %p152 = scmp.ne.s32.totalorder %s135, %s151
    %p153 = scmp.eq.s32.totalorder %s17, 0
    %p154 = por %p152, %p153
    %p155 = scmp.le.s32.totalorder 1, %s11
    %p156 = scmp.lt.s32.totalorder %s11, 3
    %p157 = pnand %p155, %p156
    %p158 = pneg %p157
    // Predicated region
    $region9: #{basic_block_forward.1} parent=5 // pred_check
      _
    $region10: #{basic_block_forward.1} parent=5 // pred_check_branch
      %160 = sbr.rel (%p157) target = $region12
    $region11: #{basic_block_forward.1} parent=5 // pred_region
      %s161 = ssub.s32 %s11, 1
      // Predicated region
      $region13: #{basic_block_forward.1} parent=11 // pred_check
        %p162 = pneg %p58
      $region14: #{basic_block_forward.1} parent=11 // pred_check_branch
        %164 = sbr.rel (%p162) target = $region16
      $region15: #{basic_block_forward.1} parent=11 // pred_region
        _
      $region16: #{basic_block_forward.1} parent=11 // pred_fallthru
        _
      // Predicated region
      $region17: #{basic_block_forward.1} parent=11 // pred_check
        %p165 = pneg %p79
      $region18: #{basic_block_forward.1} parent=11 // pred_check_branch
        %167 = sbr.rel (%p165) target = $region20
      $region19: #{basic_block_forward.1} parent=11 // pred_region
        _
      $region20: #{basic_block_forward.1} parent=11 // pred_fallthru
        _
      // Predicated region
      $region21: #{basic_block_forward.1} parent=11 // pred_check
        %p168 = pneg %p100
      $region22: #{basic_block_forward.1} parent=11 // pred_check_branch
        %170 = sbr.rel (%p168) target = $region24
      $region23: #{basic_block_forward.1} parent=11 // pred_region
        _
      $region24: #{basic_block_forward.1} parent=11 // pred_fallthru
        _
      // Predicated region
      $region25: #{basic_block_forward.1} parent=11 // pred_check
        %p171 = pneg %p121
      $region26: #{basic_block_forward.1} parent=11 // pred_check_branch
        %173 = sbr.rel (%p171) target = $region28
      $region27: #{basic_block_forward.1} parent=11 // pred_region
        _
      $region28: #{basic_block_forward.1} parent=11 // pred_fallthru
        _
    $region12: #{basic_block_forward.1} parent=5 // pred_fallthru
      _
    %p174 = scmp.lt.s32.totalorder %s11, 2
    // Predicated region
    $region29: #{basic_block_forward.1} parent=5 // pred_check
      %p175 = pneg %p174
    $region30: #{basic_block_forward.1} parent=5 // pred_check_branch
      %177 = sbr.rel (%p175) target = $region32
    $region31: #{basic_block_forward.1} parent=5 // pred_region
      // Predicated region
      $region33: #{basic_block_forward.1} parent=31 // pred_check
        %p178 = pneg %p31
      $region34: #{basic_block_forward.1} parent=31 // pred_check_branch
        %180 = sbr.rel (%p178) target = $region36
      $region35: #{basic_block_forward.1} parent=31 // pred_region
        %p181 = scmp.lt.s32.totalorder %s11, 1
        %s182 = scalar_select %p181, %s11, 1
        %s183 = smul.addr %s182, 32
        %s184 = smul.addr %s183, 4
        %s185 = scalar_lea.vmem %s0, %s184
      $region36: #{basic_block_forward.1} parent=31 // pred_fallthru
        _
    $region32: #{basic_block_forward.1} parent=5 // pred_fallthru
      _
    %p186 = scmp.le.s32.totalorder 1, %s11
    %p187 = scmp.lt.s32.totalorder %s11, 3
    %p188 = pnand %p186, %p187
    %p189 = pneg %p188
    // Predicated region
    $region37: #{basic_block_forward.1} parent=5 // pred_check
      _
    $region38: #{basic_block_forward.1} parent=5 // pred_check_branch
      %191 = sbr.rel (%p188) target = $region40
    $region39: #{basic_block_forward.1} parent=5 // pred_region
      %s192 = ssub.s32 %s11, 1
      %p193 = scmp.lt.s32.totalorder %s16, 1
      %s194 = scalar_select %p193, %s16, 1
      %s195 = smul.addr %s194, 32
      %s196 = smul.addr %s195, 4
      %s197 = scalar_lea.vmem %s0, %s196
      %p198 = pneg %p37
      %p199 = pneg %p34
      %p200 = pneg %p58
      %p201 = pneg %p55
      %p202 = pneg %p79
      %p203 = pneg %p76
      %p204 = pneg %p100
      %p205 = pneg %p97
      %p206 = pneg %p121
      %p207 = pneg %p118
      %p208 = pneg %p147
      %p209 = pneg %p144
      %p210 = scmp.lt.s32.totalorder %s16, 1
      %s211 = scalar_select %p210, %s16, 1
      %s212 = smul.addr %s211, 32
      %s213 = smul.addr %s212, 8
      %s214 = scalar_lea.vmem %s5, %s213
      %p215 = scmp.lt.s32.totalorder %s16, 1
      %s216 = scalar_select %p215, %s16, 1
      %s217 = smul.addr %s216, 32
      %s218 = smul.addr %s217, 4
      %s219 = scalar_lea.vmem %s0, %s218
      %p220 = scmp.lt.s32.totalorder %s16, 1
      %s221 = scalar_select %p220, %s16, 1
      %s222 = smul.addr %s221, 32
      %s223 = smul.addr %s222, 8
      %s224 = scalar_lea.vmem %s5, %s223
      %vm226 = vcmask 27648
      %227 = vst.msk [vmem:[#allocation2] sm:$0xf] %vm226, 0
      %228 = vst.msk [vmem:[#allocation2 + $0x4] sm:$0xf] %vm226, 0
      %vm229 = vcmask 24576
      %230 = vst.msk [vmem:[#allocation2 + $0x8] sm:$0x1] %vm229, 0
      %s231 = scalar_lea.vmem [#allocation2], 204
      %232 = vst.msk [vmem:[%s231] sm:$0xf] %vm226, 0
      %233 = vst.msk [vmem:[%s231 + $0x4] sm:$0xf] %vm226, 0
      %234 = vst.msk [vmem:[%s231 + $0x8] sm:$0x1] %vm229, 0
      %vm235 = vcmask 24576
      %vm236 = vsmask.f32 256
      %vm237 = vmand %vm235, %vm236
      %v238 = vld [vmem:[#allocation2] sm:$0x1]
      %v239 = vsel %vm237, 0, %v238
      %240 = vst [vmem:[#allocation2] sm:$0x1] %v239
      %v241 = vld [vmem:[#allocation2 + $0xc] sm:$0x1]
      %v242 = vsel %vm237, 0, %v241
      %243 = vst [vmem:[#allocation2 + $0xc] sm:$0x1] %v242
      %v244 = vld [vmem:[#allocation2 + $0x18] sm:$0x1]
      %v245 = vsel %vm237, 0, %v244
      %246 = vst [vmem:[#allocation2 + $0x18] sm:$0x1] %v245
      %v247 = vld [vmem:[#allocation2 + $0x24] sm:$0x1]
      %v248 = vsel %vm237, 0, %v247
      %249 = vst [vmem:[#allocation2 + $0x24] sm:$0x1] %v248
      %v250 = vld [vmem:[#allocation2 + $0x30] sm:$0x1]
      %v251 = vsel %vm237, 0, %v250
      %252 = vst [vmem:[#allocation2 + $0x30] sm:$0x1] %v251
      %v253 = vld [vmem:[#allocation2 + $0x3c] sm:$0x1]
      %v254 = vsel %vm237, 0, %v253
      %255 = vst [vmem:[#allocation2 + $0x3c] sm:$0x1] %v254
      %v256 = vld [vmem:[#allocation2 + $0x48] sm:$0x1]
      %v257 = vsel %vm237, 0, %v256
      %258 = vst [vmem:[#allocation2 + $0x48] sm:$0x1] %v257
      %v259 = vld [vmem:[#allocation2 + $0x54] sm:$0x1]
      %v260 = vsel %vm237, 0, %v259
      %261 = vst [vmem:[#allocation2 + $0x54] sm:$0x1] %v260
      %v262 = vld [vmem:[#allocation2 + $0x60] sm:$0x1]
      %v263 = vsel %vm237, 0, %v262
      %264 = vst [vmem:[#allocation2 + $0x60] sm:$0x1] %v263
      %v265 = vld [vmem:[#allocation2 + $0x6c] sm:$0x1]
      %v266 = vsel %vm237, 0, %v265
      %267 = vst [vmem:[#allocation2 + $0x6c] sm:$0x1] %v266
      %v268 = vld [vmem:[#allocation2 + $0x78] sm:$0x1]
      %v269 = vsel %vm237, 0, %v268
      %270 = vst [vmem:[#allocation2 + $0x78] sm:$0x1] %v269
      %v271 = vld [vmem:[#allocation2 + $0x84] sm:$0x1]
      %v272 = vsel %vm237, 0, %v271
      %273 = vst [vmem:[#allocation2 + $0x84] sm:$0x1] %v272
      %v274 = vld [vmem:[#allocation2 + $0x90] sm:$0x1]
      %v275 = vsel %vm237, 0, %v274
      %276 = vst [vmem:[#allocation2 + $0x90] sm:$0x1] %v275
      %v277 = vld [vmem:[#allocation2 + $0x9c] sm:$0x1]
      %v278 = vsel %vm237, 0, %v277
      %279 = vst [vmem:[#allocation2 + $0x9c] sm:$0x1] %v278
      %v280 = vld [vmem:[#allocation2 + $0xa8] sm:$0x1]
      %v281 = vsel %vm237, 0, %v280
      %282 = vst [vmem:[#allocation2 + $0xa8] sm:$0x1] %v281
      %v283 = vld [vmem:[#allocation2 + $0xb4] sm:$0x1]
      %v284 = vsel %vm237, 0, %v283
      %285 = vst [vmem:[#allocation2 + $0xb4] sm:$0x1] %v284
      %v286 = vld [vmem:[#allocation2 + $0xc0] sm:$0x1]
      %v287 = vsel %vm237, 0, %v286
      %288 = vst [vmem:[#allocation2 + $0xc0] sm:$0x1] %v287
      %v289 = vld [vmem:[#allocation2 + $0xcc] sm:$0x1]
      %v290 = vsel %vm237, 0, %v289
      %291 = vst [vmem:[#allocation2 + $0xcc] sm:$0x1] %v290
      %vm292 = vsmask.f32 7938
      %vm293 = vmand %vm235, %vm292
      %v294 = vld [vmem:[#allocation2 + $0x8] sm:$0x1]
      %v295 = vsel %vm293, 0, %v294
      %296 = vst [vmem:[#allocation2 + $0x8] sm:$0x1] %v295
      %v297 = vld [vmem:[#allocation2 + $0x14] sm:$0x1]
      %v298 = vsel %vm293, 0, %v297
      %299 = vst [vmem:[#allocation2 + $0x14] sm:$0x1] %v298
      %v300 = vld [vmem:[#allocation2 + $0x20] sm:$0x1]
      %v301 = vsel %vm293, 0, %v300
      %302 = vst [vmem:[#allocation2 + $0x20] sm:$0x1] %v301
      %v303 = vld [vmem:[#allocation2 + $0x2c] sm:$0x1]
      %v304 = vsel %vm293, 0, %v303
      %305 = vst [vmem:[#allocation2 + $0x2c] sm:$0x1] %v304
      %v306 = vld [vmem:[#allocation2 + $0x38] sm:$0x1]
      %v307 = vsel %vm293, 0, %v306
      %308 = vst [vmem:[#allocation2 + $0x38] sm:$0x1] %v307
      %v309 = vld [vmem:[#allocation2 + $0x44] sm:$0x1]
      %v310 = vsel %vm293, 0, %v309
      %311 = vst [vmem:[#allocation2 + $0x44] sm:$0x1] %v310
      %v312 = vld [vmem:[#allocation2 + $0x50] sm:$0x1]
      %v313 = vsel %vm293, 0, %v312
      %314 = vst [vmem:[#allocation2 + $0x50] sm:$0x1] %v313
      %v315 = vld [vmem:[#allocation2 + $0x5c] sm:$0x1]
      %v316 = vsel %vm293, 0, %v315
      %317 = vst [vmem:[#allocation2 + $0x5c] sm:$0x1] %v316
      %v318 = vld [vmem:[#allocation2 + $0x68] sm:$0x1]
      %v319 = vsel %vm293, 0, %v318
      %320 = vst [vmem:[#allocation2 + $0x68] sm:$0x1] %v319
      %v321 = vld [vmem:[#allocation2 + $0x74] sm:$0x1]
      %v322 = vsel %vm293, 0, %v321
      %323 = vst [vmem:[#allocation2 + $0x74] sm:$0x1] %v322
      %v324 = vld [vmem:[#allocation2 + $0x80] sm:$0x1]
      %v325 = vsel %vm293, 0, %v324
      %326 = vst [vmem:[#allocation2 + $0x80] sm:$0x1] %v325
      %v327 = vld [vmem:[#allocation2 + $0x8c] sm:$0x1]
      %v328 = vsel %vm293, 0, %v327
      %329 = vst [vmem:[#allocation2 + $0x8c] sm:$0x1] %v328
      %v330 = vld [vmem:[#allocation2 + $0x98] sm:$0x1]
      %v331 = vsel %vm293, 0, %v330
      %332 = vst [vmem:[#allocation2 + $0x98] sm:$0x1] %v331
      %v333 = vld [vmem:[#allocation2 + $0xa4] sm:$0x1]
      %v334 = vsel %vm293, 0, %v333
      %335 = vst [vmem:[#allocation2 + $0xa4] sm:$0x1] %v334
      %v336 = vld [vmem:[#allocation2 + $0xb0] sm:$0x1]
      %v337 = vsel %vm293, 0, %v336
      %338 = vst [vmem:[#allocation2 + $0xb0] sm:$0x1] %v337
      %v339 = vld [vmem:[#allocation2 + $0xbc] sm:$0x1]
      %v340 = vsel %vm293, 0, %v339
      %341 = vst [vmem:[#allocation2 + $0xbc] sm:$0x1] %v340
      %v342 = vld [vmem:[#allocation2 + $0xc8] sm:$0x1]
      %v343 = vsel %vm293, 0, %v342
      %344 = vst [vmem:[#allocation2 + $0xc8] sm:$0x1] %v343
      %v345 = vld [vmem:[#allocation2 + $0xd4] sm:$0x1]
      %v346 = vsel %vm293, 0, %v345
      %347 = vst [vmem:[#allocation2 + $0xd4] sm:$0x1] %v346
      %vm348 = vcmask 60416
      %349 = vst.msk [vmem:[#allocation3] sm:$0xf] %vm348, 0
      %350 = vst.msk [vmem:[#allocation3 + $0x4] sm:$0xf] %vm348, 0
      %vm351 = vcmask 57344
      %352 = vst.msk [vmem:[#allocation3 + $0x8] sm:$0x1] %vm351, 0
      %s353 = scalar_lea.vmem [#allocation3], 204
      %354 = vst.msk [vmem:[%s353] sm:$0xf] %vm348, 0
      %355 = vst.msk [vmem:[%s353 + $0x4] sm:$0xf] %vm348, 0
      %356 = vst.msk [vmem:[%s353 + $0x8] sm:$0x1] %vm351, 0
      %vm357 = vcmask 57344
      %vm358 = vmand %vm357, %vm236
      %v359 = vld [vmem:[#allocation3] sm:$0x1]
      %v360 = vsel %vm358, 0, %v359
      %361 = vst [vmem:[#allocation3] sm:$0x1] %v360
      %v362 = vld [vmem:[#allocation3 + $0xc] sm:$0x1]
      %v363 = vsel %vm358, 0, %v362
      %364 = vst [vmem:[#allocation3 + $0xc] sm:$0x1] %v363
      %v365 = vld [vmem:[#allocation3 + $0x18] sm:$0x1]
      %v366 = vsel %vm358, 0, %v365
      %367 = vst [vmem:[#allocation3 + $0x18] sm:$0x1] %v366
      %v368 = vld [vmem:[#allocation3 + $0x24] sm:$0x1]
      %v369 = vsel %vm358, 0, %v368
      %370 = vst [vmem:[#allocation3 + $0x24] sm:$0x1] %v369
      %v371 = vld [vmem:[#allocation3 + $0x30] sm:$0x1]
      %v372 = vsel %vm358, 0, %v371
      %373 = vst [vmem:[#allocation3 + $0x30] sm:$0x1] %v372
      %v374 = vld [vmem:[#allocation3 + $0x3c] sm:$0x1]
      %v375 = vsel %vm358, 0, %v374
      %376 = vst [vmem:[#allocation3 + $0x3c] sm:$0x1] %v375
      %v377 = vld [vmem:[#allocation3 + $0x48] sm:$0x1]
      %v378 = vsel %vm358, 0, %v377
      %379 = vst [vmem:[#allocation3 + $0x48] sm:$0x1] %v378
      %v380 = vld [vmem:[#allocation3 + $0x54] sm:$0x1]
      %v381 = vsel %vm358, 0, %v380
      %382 = vst [vmem:[#allocation3 + $0x54] sm:$0x1] %v381
      %v383 = vld [vmem:[#allocation3 + $0x60] sm:$0x1]
      %v384 = vsel %vm358, 0, %v383
      %385 = vst [vmem:[#allocation3 + $0x60] sm:$0x1] %v384
      %v386 = vld [vmem:[#allocation3 + $0x6c] sm:$0x1]
      %v387 = vsel %vm358, 0, %v386
      %388 = vst [vmem:[#allocation3 + $0x6c] sm:$0x1] %v387
      %v389 = vld [vmem:[#allocation3 + $0x78] sm:$0x1]
      %v390 = vsel %vm358, 0, %v389
      %391 = vst [vmem:[#allocation3 + $0x78] sm:$0x1] %v390
      %v392 = vld [vmem:[#allocation3 + $0x84] sm:$0x1]
      %v393 = vsel %vm358, 0, %v392
      %394 = vst [vmem:[#allocation3 + $0x84] sm:$0x1] %v393
      %v395 = vld [vmem:[#allocation3 + $0x90] sm:$0x1]
      %v396 = vsel %vm358, 0, %v395
      %397 = vst [vmem:[#allocation3 + $0x90] sm:$0x1] %v396
      %v398 = vld [vmem:[#allocation3 + $0x9c] sm:$0x1]
      %v399 = vsel %vm358, 0, %v398
      %400 = vst [vmem:[#allocation3 + $0x9c] sm:$0x1] %v399
      %v401 = vld [vmem:[#allocation3 + $0xa8] sm:$0x1]
      %v402 = vsel %vm358, 0, %v401
      %403 = vst [vmem:[#allocation3 + $0xa8] sm:$0x1] %v402
      %v404 = vld [vmem:[#allocation3 + $0xb4] sm:$0x1]
      %v405 = vsel %vm358, 0, %v404
      %406 = vst [vmem:[#allocation3 + $0xb4] sm:$0x1] %v405
      %v407 = vld [vmem:[#allocation3 + $0xc0] sm:$0x1]
      %v408 = vsel %vm358, 0, %v407
      %409 = vst [vmem:[#allocation3 + $0xc0] sm:$0x1] %v408
      %v410 = vld [vmem:[#allocation3 + $0xcc] sm:$0x1]
      %v411 = vsel %vm358, 0, %v410
      %412 = vst [vmem:[#allocation3 + $0xcc] sm:$0x1] %v411
      %vm413 = vmand %vm357, %vm292
      %v414 = vld [vmem:[#allocation3 + $0x8] sm:$0x1]
      %v415 = vsel %vm413, 0, %v414
      %416 = vst [vmem:[#allocation3 + $0x8] sm:$0x1] %v415
      %v417 = vld [vmem:[#allocation3 + $0x14] sm:$0x1]
      %v418 = vsel %vm413, 0, %v417
      %419 = vst [vmem:[#allocation3 + $0x14] sm:$0x1] %v418
      %v420 = vld [vmem:[#allocation3 + $0x20] sm:$0x1]
      %v421 = vsel %vm413, 0, %v420
      %422 = vst [vmem:[#allocation3 + $0x20] sm:$0x1] %v421
      %v423 = vld [vmem:[#allocation3 + $0x2c] sm:$0x1]
      %v424 = vsel %vm413, 0, %v423
      %425 = vst [vmem:[#allocation3 + $0x2c] sm:$0x1] %v424
      %v426 = vld [vmem:[#allocation3 + $0x38] sm:$0x1]
      %v427 = vsel %vm413, 0, %v426
      %428 = vst [vmem:[#allocation3 + $0x38] sm:$0x1] %v427
      %v429 = vld [vmem:[#allocation3 + $0x44] sm:$0x1]
      %v430 = vsel %vm413, 0, %v429
      %431 = vst [vmem:[#allocation3 + $0x44] sm:$0x1] %v430
      %v432 = vld [vmem:[#allocation3 + $0x50] sm:$0x1]
      %v433 = vsel %vm413, 0, %v432
      %434 = vst [vmem:[#allocation3 + $0x50] sm:$0x1] %v433
      %v435 = vld [vmem:[#allocation3 + $0x5c] sm:$0x1]
      %v436 = vsel %vm413, 0, %v435
      %437 = vst [vmem:[#allocation3 + $0x5c] sm:$0x1] %v436
      %v438 = vld [vmem:[#allocation3 + $0x68] sm:$0x1]
      %v439 = vsel %vm413, 0, %v438
      %440 = vst [vmem:[#allocation3 + $0x68] sm:$0x1] %v439
      %v441 = vld [vmem:[#allocation3 + $0x74] sm:$0x1]
      %v442 = vsel %vm413, 0, %v441
      %443 = vst [vmem:[#allocation3 + $0x74] sm:$0x1] %v442
      %v444 = vld [vmem:[#allocation3 + $0x80] sm:$0x1]
      %v445 = vsel %vm413, 0, %v444
      %446 = vst [vmem:[#allocation3 + $0x80] sm:$0x1] %v445
      %v447 = vld [vmem:[#allocation3 + $0x8c] sm:$0x1]
      %v448 = vsel %vm413, 0, %v447
      %449 = vst [vmem:[#allocation3 + $0x8c] sm:$0x1] %v448
      %v450 = vld [vmem:[#allocation3 + $0x98] sm:$0x1]
      %v451 = vsel %vm413, 0, %v450
      %452 = vst [vmem:[#allocation3 + $0x98] sm:$0x1] %v451
      %v453 = vld [vmem:[#allocation3 + $0xa4] sm:$0x1]
      %v454 = vsel %vm413, 0, %v453
      %455 = vst [vmem:[#allocation3 + $0xa4] sm:$0x1] %v454
      %v456 = vld [vmem:[#allocation3 + $0xb0] sm:$0x1]
      %v457 = vsel %vm413, 0, %v456
      %458 = vst [vmem:[#allocation3 + $0xb0] sm:$0x1] %v457
      %v459 = vld [vmem:[#allocation3 + $0xbc] sm:$0x1]
      %v460 = vsel %vm413, 0, %v459
      %461 = vst [vmem:[#allocation3 + $0xbc] sm:$0x1] %v460
      %v462 = vld [vmem:[#allocation3 + $0xc8] sm:$0x1]
      %v463 = vsel %vm413, 0, %v462
      %464 = vst [vmem:[#allocation3 + $0xc8] sm:$0x1] %v463
      %v465 = vld [vmem:[#allocation3 + $0xd4] sm:$0x1]
      %v466 = vsel %vm413, 0, %v465
      %467 = vst [vmem:[#allocation3 + $0xd4] sm:$0x1] %v466
      %v468 = vld [vmem:[%s219] sm:$0xf]
      %v469 = vld [vmem:[%s219 + $0x4] sm:$0xf]
      %v470 = vld [vmem:[%s219 + $0x8] sm:$0xf]
      %v471 = vld [vmem:[%s219 + $0xc] sm:$0xf]
      %v472 = vld [vmem:[%s219 + $0x10] sm:$0xf]
      %v473 = vld [vmem:[%s219 + $0x14] sm:$0xf]
      %v474 = vld [vmem:[%s219 + $0x18] sm:$0xf]
      %v475 = vld [vmem:[%s219 + $0x1c] sm:$0xf]
      %v476 = vld [vmem:[%s219 + $0x20] sm:$0xf]
      %v477 = vld [vmem:[%s219 + $0x24] sm:$0xf]
      %v478 = vld [vmem:[%s219 + $0x28] sm:$0xf]
      %v479 = vld [vmem:[%s219 + $0x2c] sm:$0xf]
      %v480 = vld [vmem:[%s219 + $0x30] sm:$0xf]
      %v481 = vld [vmem:[%s219 + $0x34] sm:$0xf]
      %v482 = vld [vmem:[%s219 + $0x38] sm:$0xf]
      %v483 = vld [vmem:[%s219 + $0x3c] sm:$0xf]
      %v484 = vld [vmem:[%s219 + $0x40] sm:$0xf]
      %v485 = vld [vmem:[%s219 + $0x44] sm:$0xf]
      %v486 = vld [vmem:[%s219 + $0x48] sm:$0xf]
      %v487 = vld [vmem:[%s219 + $0x4c] sm:$0xf]
      %v488 = vld [vmem:[%s219 + $0x50] sm:$0xf]
      %v489 = vld [vmem:[%s219 + $0x54] sm:$0xf]
      %v490 = vld [vmem:[%s219 + $0x58] sm:$0xf]
      %v491 = vld [vmem:[%s219 + $0x5c] sm:$0xf]
      %v492 = vld [vmem:[%s219 + $0x60] sm:$0xf]
      %v493 = vld [vmem:[%s219 + $0x64] sm:$0xf]
      %v494 = vld [vmem:[%s219 + $0x68] sm:$0xf]
      %v495 = vld [vmem:[%s219 + $0x6c] sm:$0xf]
      %v496 = vld [vmem:[%s219 + $0x70] sm:$0xf]
      %v497 = vld [vmem:[%s219 + $0x74] sm:$0xf]
      %v498 = vld [vmem:[%s219 + $0x78] sm:$0xf]
      %v499 = vld [vmem:[%s219 + $0x7c] sm:$0xf]
      %vm500 = vsmask.f32 4368
      %vm501 = vmor %vm236, %vm500
      %v503 = vshrl.u32 %v468, 16
      %v505 = vrot.slane %v503, 7
      %v506 = vshll.u32 %v468, 16
      %v508 = vor.u32 %v505, %v506
      %v509 = vrot.slane %v505, 4
      %v511 = vshrl.u32 %v469, 16
      %v513 = vrot.slane %v511, 7
      %v514 = vshll.u32 %v469, 16
      %v516 = vor.u32 %v513, %v514
      %v517 = vsel %vm501, %v509, %v516
      %v518 = vrot.slane %v513, 4
      %v520 = vshrl.u32 %v470, 16
      %v522 = vrot.slane %v520, 7
      %v523 = vshll.u32 %v470, 16
      %v525 = vor.u32 %v522, %v523
      %v526 = vrot.slane %v522, 4
      %v528 = vshrl.u32 %v471, 16
      %v530 = vrot.slane %v528, 7
      %v531 = vshll.u32 %v471, 16
      %v533 = vor.u32 %v530, %v531
      %v534 = vsel %vm501, %v526, %v533
      %v535 = vrot.slane %v530, 4
      %v537 = vshrl.u32 %v472, 16
      %v539 = vrot.slane %v537, 7
      %v540 = vshll.u32 %v472, 16
      %v542 = vor.u32 %v539, %v540
      %v543 = vrot.slane %v539, 4
      %v545 = vshrl.u32 %v473, 16
      %v547 = vrot.slane %v545, 7
      %v548 = vshll.u32 %v473, 16
      %v550 = vor.u32 %v547, %v548
      %v551 = vsel %vm501, %v543, %v550
      %v552 = vrot.slane %v547, 4
      %v554 = vshrl.u32 %v474, 16
      %v556 = vrot.slane %v554, 7
      %v557 = vshll.u32 %v474, 16
      %v559 = vor.u32 %v556, %v557
      %v560 = vrot.slane %v556, 4
      %v562 = vshrl.u32 %v475, 16
      %v564 = vrot.slane %v562, 7
      %v565 = vshll.u32 %v475, 16
      %v567 = vor.u32 %v564, %v565
      %v568 = vsel %vm501, %v560, %v567
      %v569 = vrot.slane %v564, 4
      %v571 = vshrl.u32 %v476, 16
      %v573 = vrot.slane %v571, 7
      %v574 = vshll.u32 %v476, 16
      %v576 = vor.u32 %v573, %v574
      %v577 = vrot.slane %v573, 4
      %v579 = vshrl.u32 %v477, 16
      %v581 = vrot.slane %v579, 7
      %v582 = vshll.u32 %v477, 16
      %v584 = vor.u32 %v581, %v582
      %v585 = vsel %vm501, %v577, %v584
      %v586 = vrot.slane %v581, 4
      %v588 = vshrl.u32 %v478, 16
      %v590 = vrot.slane %v588, 7
      %v591 = vshll.u32 %v478, 16
      %v593 = vor.u32 %v590, %v591
      %v594 = vrot.slane %v590, 4
      %v596 = vshrl.u32 %v479, 16
      %v598 = vrot.slane %v596, 7
      %v599 = vshll.u32 %v479, 16
      %v601 = vor.u32 %v598, %v599
      %v602 = vsel %vm501, %v594, %v601
      %v603 = vrot.slane %v598, 4
      %v605 = vshrl.u32 %v480, 16
      %v607 = vrot.slane %v605, 7
      %v608 = vshll.u32 %v480, 16
      %v610 = vor.u32 %v607, %v608
      %v611 = vrot.slane %v607, 4
      %v613 = vshrl.u32 %v481, 16
      %v615 = vrot.slane %v613, 7
      %v616 = vshll.u32 %v481, 16
      %v618 = vor.u32 %v615, %v616
      %v619 = vsel %vm501, %v611, %v618
      %v620 = vrot.slane %v615, 4
      %v622 = vshrl.u32 %v482, 16
      %v624 = vrot.slane %v622, 7
      %v625 = vshll.u32 %v482, 16
      %v627 = vor.u32 %v624, %v625
      %v628 = vrot.slane %v624, 4
      %v630 = vshrl.u32 %v483, 16
      %v632 = vrot.slane %v630, 7
      %v633 = vshll.u32 %v483, 16
      %v635 = vor.u32 %v632, %v633
      %v636 = vsel %vm501, %v628, %v635
      %v637 = vrot.slane %v632, 4
      %v639 = vshrl.u32 %v484, 16
      %v641 = vrot.slane %v639, 7
      %v642 = vshll.u32 %v484, 16
      %v644 = vor.u32 %v641, %v642
      %v645 = vrot.slane %v641, 4
      %v647 = vshrl.u32 %v485, 16
      %v649 = vrot.slane %v647, 7
      %v650 = vshll.u32 %v485, 16
      %v652 = vor.u32 %v649, %v650
      %v653 = vsel %vm501, %v645, %v652
      %v654 = vrot.slane %v649, 4
      %v656 = vshrl.u32 %v486, 16
      %v658 = vrot.slane %v656, 7
      %v659 = vshll.u32 %v486, 16
      %v661 = vor.u32 %v658, %v659
      %v662 = vrot.slane %v658, 4
      %v664 = vshrl.u32 %v487, 16
      %v666 = vrot.slane %v664, 7
      %v667 = vshll.u32 %v487, 16
      %v669 = vor.u32 %v666, %v667
      %v670 = vsel %vm501, %v662, %v669
      %v671 = vrot.slane %v666, 4
      %v673 = vshrl.u32 %v488, 16
      %v675 = vrot.slane %v673, 7
      %v676 = vshll.u32 %v488, 16
      %v678 = vor.u32 %v675, %v676
      %v679 = vrot.slane %v675, 4
      %v681 = vshrl.u32 %v489, 16
      %v683 = vrot.slane %v681, 7
      %v684 = vshll.u32 %v489, 16
      %v686 = vor.u32 %v683, %v684
      %v687 = vsel %vm501, %v679, %v686
      %v688 = vrot.slane %v683, 4
      %v690 = vshrl.u32 %v490, 16
      %v692 = vrot.slane %v690, 7
      %v693 = vshll.u32 %v490, 16
      %v695 = vor.u32 %v692, %v693
      %v696 = vrot.slane %v692, 4
      %v698 = vshrl.u32 %v491, 16
      %v700 = vrot.slane %v698, 7
      %v701 = vshll.u32 %v491, 16
      %v703 = vor.u32 %v700, %v701
      %v704 = vsel %vm501, %v696, %v703
      %v705 = vrot.slane %v700, 4
      %v707 = vshrl.u32 %v492, 16
      %v709 = vrot.slane %v707, 7
      %v710 = vshll.u32 %v492, 16
      %v712 = vor.u32 %v709, %v710
      %v713 = vrot.slane %v709, 4
      %v715 = vshrl.u32 %v493, 16
      %v717 = vrot.slane %v715, 7
      %v718 = vshll.u32 %v493, 16
      %v720 = vor.u32 %v717, %v718
      %v721 = vsel %vm501, %v713, %v720
      %v722 = vrot.slane %v717, 4
      %v724 = vshrl.u32 %v494, 16
      %v726 = vrot.slane %v724, 7
      %v727 = vshll.u32 %v494, 16
      %v729 = vor.u32 %v726, %v727
      %v730 = vrot.slane %v726, 4
      %v732 = vshrl.u32 %v495, 16
      %v734 = vrot.slane %v732, 7
      %v735 = vshll.u32 %v495, 16
      %v737 = vor.u32 %v734, %v735
      %v738 = vsel %vm501, %v730, %v737
      %v739 = vrot.slane %v734, 4
      %v741 = vshrl.u32 %v496, 16
      %v743 = vrot.slane %v741, 7
      %v744 = vshll.u32 %v496, 16
      %v746 = vor.u32 %v743, %v744
      %v747 = vrot.slane %v743, 4
      %v749 = vshrl.u32 %v497, 16
      %v751 = vrot.slane %v749, 7
      %v752 = vshll.u32 %v497, 16
      %v754 = vor.u32 %v751, %v752
      %v755 = vsel %vm501, %v747, %v754
      %v756 = vrot.slane %v751, 4
      %v758 = vshrl.u32 %v498, 16
      %v760 = vrot.slane %v758, 7
      %v761 = vshll.u32 %v498, 16
      %v763 = vor.u32 %v760, %v761
      %v764 = vrot.slane %v760, 4
      %v766 = vshrl.u32 %v499, 16
      %v768 = vrot.slane %v766, 7
      %v769 = vshll.u32 %v499, 16
      %v771 = vor.u32 %v768, %v769
      %v772 = vsel %vm501, %v764, %v771
      %v773 = vrot.slane %v768, 4
      %s822 = scalar_lea.vmem [#allocation2], 12
      %vm823 = vcmask 27648
      %vm824 = vmand %vm823, %vm292
      %v825 = vld [vmem:[%s822] sm:$0xf]
      %v826 = vsel %vm824, %v508, %v825
      %827 = vst [vmem:[%s822] sm:$0xf] %v826
      %828 = vst.msk [vmem:[%s822 + $0x4] sm:$0xf] %vm226, %v517
      %v829 = vld [vmem:[%s822 + $0x8] sm:$0x1]
      %v830 = vsel %vm237, %v518, %v829
      %831 = vst [vmem:[%s822 + $0x8] sm:$0x1] %v830
      %v832 = vld [vmem:[%s822 + $0xc] sm:$0xf]
      %v833 = vsel %vm824, %v525, %v832
      %834 = vst [vmem:[%s822 + $0xc] sm:$0xf] %v833
      %835 = vst.msk [vmem:[%s822 + $0x10] sm:$0xf] %vm226, %v534
      %v836 = vld [vmem:[%s822 + $0x14] sm:$0x1]
      %v837 = vsel %vm237, %v535, %v836
      %838 = vst [vmem:[%s822 + $0x14] sm:$0x1] %v837
      %v839 = vld [vmem:[%s822 + $0x18] sm:$0xf]
      %v840 = vsel %vm824, %v542, %v839
      %841 = vst [vmem:[%s822 + $0x18] sm:$0xf] %v840
      %842 = vst.msk [vmem:[%s822 + $0x1c] sm:$0xf] %vm226, %v551
      %v843 = vld [vmem:[%s822 + $0x20] sm:$0x1]
      %v844 = vsel %vm237, %v552, %v843
      %845 = vst [vmem:[%s822 + $0x20] sm:$0x1] %v844
      %v846 = vld [vmem:[%s822 + $0x24] sm:$0xf]
      %v847 = vsel %vm824, %v559, %v846
      %848 = vst [vmem:[%s822 + $0x24] sm:$0xf] %v847
      %849 = vst.msk [vmem:[%s822 + $0x28] sm:$0xf] %vm226, %v568
      %v850 = vld [vmem:[%s822 + $0x2c] sm:$0x1]
      %v851 = vsel %vm237, %v569, %v850
      %852 = vst [vmem:[%s822 + $0x2c] sm:$0x1] %v851
      %v853 = vld [vmem:[%s822 + $0x30] sm:$0xf]
      %v854 = vsel %vm824, %v576, %v853
      %855 = vst [vmem:[%s822 + $0x30] sm:$0xf] %v854
      %856 = vst.msk [vmem:[%s822 + $0x34] sm:$0xf] %vm226, %v585
      %v857 = vld [vmem:[%s822 + $0x38] sm:$0x1]
      %v858 = vsel %vm237, %v586, %v857
      %859 = vst [vmem:[%s822 + $0x38] sm:$0x1] %v858
      %v860 = vld [vmem:[%s822 + $0x3c] sm:$0xf]
      %v861 = vsel %vm824, %v593, %v860
      %862 = vst [vmem:[%s822 + $0x3c] sm:$0xf] %v861
      %863 = vst.msk [vmem:[%s822 + $0x40] sm:$0xf] %vm226, %v602
      %v864 = vld [vmem:[%s822 + $0x44] sm:$0x1]
      %v865 = vsel %vm237, %v603, %v864
      %866 = vst [vmem:[%s822 + $0x44] sm:$0x1] %v865
      %v867 = vld [vmem:[%s822 + $0x48] sm:$0xf]
      %v868 = vsel %vm824, %v610, %v867
      %869 = vst [vmem:[%s822 + $0x48] sm:$0xf] %v868
      %870 = vst.msk [vmem:[%s822 + $0x4c] sm:$0xf] %vm226, %v619
      %v871 = vld [vmem:[%s822 + $0x50] sm:$0x1]
      %v872 = vsel %vm237, %v620, %v871
      %873 = vst [vmem:[%s822 + $0x50] sm:$0x1] %v872
      %v874 = vld [vmem:[%s822 + $0x54] sm:$0xf]
      %v875 = vsel %vm824, %v627, %v874
      %876 = vst [vmem:[%s822 + $0x54] sm:$0xf] %v875
      %877 = vst.msk [vmem:[%s822 + $0x58] sm:$0xf] %vm226, %v636
      %v878 = vld [vmem:[%s822 + $0x5c] sm:$0x1]
      %v879 = vsel %vm237, %v637, %v878
      %880 = vst [vmem:[%s822 + $0x5c] sm:$0x1] %v879
      %v881 = vld [vmem:[%s822 + $0x60] sm:$0xf]
      %v882 = vsel %vm824, %v644, %v881
      %883 = vst [vmem:[%s822 + $0x60] sm:$0xf] %v882
      %884 = vst.msk [vmem:[%s822 + $0x64] sm:$0xf] %vm226, %v653
      %v885 = vld [vmem:[%s822 + $0x68] sm:$0x1]
      %v886 = vsel %vm237, %v654, %v885
      %887 = vst [vmem:[%s822 + $0x68] sm:$0x1] %v886
      %v888 = vld [vmem:[%s822 + $0x6c] sm:$0xf]
      %v889 = vsel %vm824, %v661, %v888
      %890 = vst [vmem:[%s822 + $0x6c] sm:$0xf] %v889
      %891 = vst.msk [vmem:[%s822 + $0x70] sm:$0xf] %vm226, %v670
      %v892 = vld [vmem:[%s822 + $0x74] sm:$0x1]
      %v893 = vsel %vm237, %v671, %v892
      %894 = vst [vmem:[%s822 + $0x74] sm:$0x1] %v893
      %v895 = vld [vmem:[%s822 + $0x78] sm:$0xf]
      %v896 = vsel %vm824, %v678, %v895
      %897 = vst [vmem:[%s822 + $0x78] sm:$0xf] %v896
      %898 = vst.msk [vmem:[%s822 + $0x7c] sm:$0xf] %vm226, %v687
      %v899 = vld [vmem:[%s822 + $0x80] sm:$0x1]
      %v900 = vsel %vm237, %v688, %v899
      %901 = vst [vmem:[%s822 + $0x80] sm:$0x1] %v900
      %v902 = vld [vmem:[%s822 + $0x84] sm:$0xf]
      %v903 = vsel %vm824, %v695, %v902
      %904 = vst [vmem:[%s822 + $0x84] sm:$0xf] %v903
      %905 = vst.msk [vmem:[%s822 + $0x88] sm:$0xf] %vm226, %v704
      %v906 = vld [vmem:[%s822 + $0x8c] sm:$0x1]
      %v907 = vsel %vm237, %v705, %v906
      %908 = vst [vmem:[%s822 + $0x8c] sm:$0x1] %v907
      %v909 = vld [vmem:[%s822 + $0x90] sm:$0xf]
      %v910 = vsel %vm824, %v712, %v909
      %911 = vst [vmem:[%s822 + $0x90] sm:$0xf] %v910
      %912 = vst.msk [vmem:[%s822 + $0x94] sm:$0xf] %vm226, %v721
      %v913 = vld [vmem:[%s822 + $0x98] sm:$0x1]
      %v914 = vsel %vm237, %v722, %v913
      %915 = vst [vmem:[%s822 + $0x98] sm:$0x1] %v914
      %v916 = vld [vmem:[%s822 + $0x9c] sm:$0xf]
      %v917 = vsel %vm824, %v729, %v916
      %918 = vst [vmem:[%s822 + $0x9c] sm:$0xf] %v917
      %919 = vst.msk [vmem:[%s822 + $0xa0] sm:$0xf] %vm226, %v738
      %v920 = vld [vmem:[%s822 + $0xa4] sm:$0x1]
      %v921 = vsel %vm237, %v739, %v920
      %922 = vst [vmem:[%s822 + $0xa4] sm:$0x1] %v921
      %v923 = vld [vmem:[%s822 + $0xa8] sm:$0xf]
      %v924 = vsel %vm824, %v746, %v923
      %925 = vst [vmem:[%s822 + $0xa8] sm:$0xf] %v924
      %926 = vst.msk [vmem:[%s822 + $0xac] sm:$0xf] %vm226, %v755
      %v927 = vld [vmem:[%s822 + $0xb0] sm:$0x1]
      %v928 = vsel %vm237, %v756, %v927
      %929 = vst [vmem:[%s822 + $0xb0] sm:$0x1] %v928
      %v930 = vld [vmem:[%s822 + $0xb4] sm:$0xf]
      %v931 = vsel %vm824, %v763, %v930
      %932 = vst [vmem:[%s822 + $0xb4] sm:$0xf] %v931
      %933 = vst.msk [vmem:[%s822 + $0xb8] sm:$0xf] %vm226, %v772
      %v934 = vld [vmem:[%s822 + $0xbc] sm:$0x1]
      %v935 = vsel %vm237, %v773, %v934
      %936 = vst [vmem:[%s822 + $0xbc] sm:$0x1] %v935
      %v937 = vld [vmem:[#allocation2] sm:$0xf]
      %v938 = vld [vmem:[#allocation2 + $0x4] sm:$0xf]
      %v939 = vld [vmem:[#allocation2 + $0xc] sm:$0xf]
      %v940 = vld [vmem:[#allocation2 + $0x10] sm:$0xf]
      %v941 = vld [vmem:[#allocation2 + $0x18] sm:$0xf]
      %v942 = vld [vmem:[#allocation2 + $0x1c] sm:$0xf]
      %v943 = vld [vmem:[#allocation2 + $0x24] sm:$0xf]
      %v944 = vld [vmem:[#allocation2 + $0x28] sm:$0xf]
      %v945 = vld [vmem:[#allocation2 + $0x30] sm:$0xf]
      %v946 = vld [vmem:[#allocation2 + $0x34] sm:$0xf]
      %v947 = vld [vmem:[#allocation2 + $0x3c] sm:$0xf]
      %v948 = vld [vmem:[#allocation2 + $0x40] sm:$0xf]
      %v949 = vld [vmem:[#allocation2 + $0x48] sm:$0xf]
      %v950 = vld [vmem:[#allocation2 + $0x4c] sm:$0xf]
      %v951 = vld [vmem:[#allocation2 + $0x54] sm:$0xf]
      %v952 = vld [vmem:[#allocation2 + $0x58] sm:$0xf]
      %v953 = vld [vmem:[#allocation2 + $0x60] sm:$0xf]
      %v954 = vld [vmem:[#allocation2 + $0x64] sm:$0xf]
      %v955 = vld [vmem:[#allocation2 + $0x6c] sm:$0xf]
      %v956 = vld [vmem:[#allocation2 + $0x70] sm:$0xf]
      %v957 = vld [vmem:[#allocation2 + $0x78] sm:$0xf]
      %v958 = vld [vmem:[#allocation2 + $0x7c] sm:$0xf]
      %v959 = vld [vmem:[#allocation2 + $0x84] sm:$0xf]
      %v960 = vld [vmem:[#allocation2 + $0x88] sm:$0xf]
      %v961 = vld [vmem:[#allocation2 + $0x90] sm:$0xf]
      %v962 = vld [vmem:[#allocation2 + $0x94] sm:$0xf]
      %v963 = vld [vmem:[#allocation2 + $0x9c] sm:$0xf]
      %v964 = vld [vmem:[#allocation2 + $0xa0] sm:$0xf]
      %v965 = vld [vmem:[#allocation2 + $0xa8] sm:$0xf]
      %v966 = vld [vmem:[#allocation2 + $0xac] sm:$0xf]
      %v967 = vld [vmem:[#allocation2 + $0xb4] sm:$0xf]
      %v968 = vld [vmem:[#allocation2 + $0xb8] sm:$0xf]
      %969 = vst.msk [vmem:[#allocation4] sm:$0xf] %vm226, %v937
      %970 = vst.msk [vmem:[#allocation4 + $0x4] sm:$0xf] %vm226, %v938
      %971 = vst.msk [vmem:[#allocation4 + $0x8] sm:$0xf] %vm226, %v939
      %972 = vst.msk [vmem:[#allocation4 + $0xc] sm:$0xf] %vm226, %v940
      %973 = vst.msk [vmem:[#allocation4 + $0x10] sm:$0xf] %vm226, %v941
      %974 = vst.msk [vmem:[#allocation4 + $0x14] sm:$0xf] %vm226, %v942
      %975 = vst.msk [vmem:[#allocation4 + $0x18] sm:$0xf] %vm226, %v943
      %976 = vst.msk [vmem:[#allocation4 + $0x1c] sm:$0xf] %vm226, %v944
      %977 = vst.msk [vmem:[#allocation4 + $0x20] sm:$0xf] %vm226, %v945
      %978 = vst.msk [vmem:[#allocation4 + $0x24] sm:$0xf] %vm226, %v946
      %979 = vst.msk [vmem:[#allocation4 + $0x28] sm:$0xf] %vm226, %v947
      %980 = vst.msk [vmem:[#allocation4 + $0x2c] sm:$0xf] %vm226, %v948
      %981 = vst.msk [vmem:[#allocation4 + $0x30] sm:$0xf] %vm226, %v949
      %982 = vst.msk [vmem:[#allocation4 + $0x34] sm:$0xf] %vm226, %v950
      %983 = vst.msk [vmem:[#allocation4 + $0x38] sm:$0xf] %vm226, %v951
      %984 = vst.msk [vmem:[#allocation4 + $0x3c] sm:$0xf] %vm226, %v952
      %985 = vst.msk [vmem:[#allocation4 + $0x40] sm:$0xf] %vm226, %v953
      %986 = vst.msk [vmem:[#allocation4 + $0x44] sm:$0xf] %vm226, %v954
      %987 = vst.msk [vmem:[#allocation4 + $0x48] sm:$0xf] %vm226, %v955
      %988 = vst.msk [vmem:[#allocation4 + $0x4c] sm:$0xf] %vm226, %v956
      %989 = vst.msk [vmem:[#allocation4 + $0x50] sm:$0xf] %vm226, %v957
      %990 = vst.msk [vmem:[#allocation4 + $0x54] sm:$0xf] %vm226, %v958
      %991 = vst.msk [vmem:[#allocation4 + $0x58] sm:$0xf] %vm226, %v959
      %992 = vst.msk [vmem:[#allocation4 + $0x5c] sm:$0xf] %vm226, %v960
      %993 = vst.msk [vmem:[#allocation4 + $0x60] sm:$0xf] %vm226, %v961
      %994 = vst.msk [vmem:[#allocation4 + $0x64] sm:$0xf] %vm226, %v962
      %995 = vst.msk [vmem:[#allocation4 + $0x68] sm:$0xf] %vm226, %v963
      %996 = vst.msk [vmem:[#allocation4 + $0x6c] sm:$0xf] %vm226, %v964
      %997 = vst.msk [vmem:[#allocation4 + $0x70] sm:$0xf] %vm226, %v965
      %998 = vst.msk [vmem:[#allocation4 + $0x74] sm:$0xf] %vm226, %v966
      %999 = vst.msk [vmem:[#allocation4 + $0x78] sm:$0xf] %vm226, %v967
      %1000 = vst.msk [vmem:[#allocation4 + $0x7c] sm:$0xf] %vm226, %v968
      %v1001 = vld [vmem:[#allocation2] sm:$0xf]
      %v1002 = vld [vmem:[#allocation2 + $0x4] sm:$0xf]
      %v1003 = vld [vmem:[#allocation2 + $0x8] sm:$0x1]
      %v1004 = vld [vmem:[#allocation2 + $0xc] sm:$0xf]
      %v1005 = vld [vmem:[#allocation2 + $0x10] sm:$0xf]
      %v1006 = vld [vmem:[#allocation2 + $0x14] sm:$0x1]
      %v1007 = vld [vmem:[#allocation2 + $0x18] sm:$0xf]
      %v1008 = vld [vmem:[#allocation2 + $0x1c] sm:$0xf]
      %v1009 = vld [vmem:[#allocation2 + $0x20] sm:$0x1]
      %v1010 = vld [vmem:[#allocation2 + $0x24] sm:$0xf]
      %v1011 = vld [vmem:[#allocation2 + $0x28] sm:$0xf]
      %v1012 = vld [vmem:[#allocation2 + $0x2c] sm:$0x1]
      %v1013 = vld [vmem:[#allocation2 + $0x30] sm:$0xf]
      %v1014 = vld [vmem:[#allocation2 + $0x34] sm:$0xf]
      %v1015 = vld [vmem:[#allocation2 + $0x38] sm:$0x1]
      %v1016 = vld [vmem:[#allocation2 + $0x3c] sm:$0xf]
      %v1017 = vld [vmem:[#allocation2 + $0x40] sm:$0xf]
      %v1018 = vld [vmem:[#allocation2 + $0x44] sm:$0x1]
      %v1019 = vld [vmem:[#allocation2 + $0x48] sm:$0xf]
      %v1020 = vld [vmem:[#allocation2 + $0x4c] sm:$0xf]
      %v1021 = vld [vmem:[#allocation2 + $0x50] sm:$0x1]
      %v1022 = vld [vmem:[#allocation2 + $0x54] sm:$0xf]
      %v1023 = vld [vmem:[#allocation2 + $0x58] sm:$0xf]
      %v1024 = vld [vmem:[#allocation2 + $0x5c] sm:$0x1]
      %v1025 = vld [vmem:[#allocation2 + $0x60] sm:$0xf]
      %v1026 = vld [vmem:[#allocation2 + $0x64] sm:$0xf]
      %v1027 = vld [vmem:[#allocation2 + $0x68] sm:$0x1]
      %v1028 = vld [vmem:[#allocation2 + $0x6c] sm:$0xf]
      %v1029 = vld [vmem:[#allocation2 + $0x70] sm:$0xf]
      %v1030 = vld [vmem:[#allocation2 + $0x74] sm:$0x1]
      %v1031 = vld [vmem:[#allocation2 + $0x78] sm:$0xf]
      %v1032 = vld [vmem:[#allocation2 + $0x7c] sm:$0xf]
      %v1033 = vld [vmem:[#allocation2 + $0x80] sm:$0x1]
      %v1034 = vld [vmem:[#allocation2 + $0x84] sm:$0xf]
      %v1035 = vld [vmem:[#allocation2 + $0x88] sm:$0xf]
      %v1036 = vld [vmem:[#allocation2 + $0x8c] sm:$0x1]
      %v1037 = vld [vmem:[#allocation2 + $0x90] sm:$0xf]
      %v1038 = vld [vmem:[#allocation2 + $0x94] sm:$0xf]
      %v1039 = vld [vmem:[#allocation2 + $0x98] sm:$0x1]
      %v1040 = vld [vmem:[#allocation2 + $0x9c] sm:$0xf]
      %v1041 = vld [vmem:[#allocation2 + $0xa0] sm:$0xf]
      %v1042 = vld [vmem:[#allocation2 + $0xa4] sm:$0x1]
      %v1043 = vld [vmem:[#allocation2 + $0xa8] sm:$0xf]
      %v1044 = vld [vmem:[#allocation2 + $0xac] sm:$0xf]
      %v1045 = vld [vmem:[#allocation2 + $0xb0] sm:$0x1]
      %v1046 = vld [vmem:[#allocation2 + $0xb4] sm:$0xf]
      %v1047 = vld [vmem:[#allocation2 + $0xb8] sm:$0xf]
      %v1048 = vld [vmem:[#allocation2 + $0xbc] sm:$0x1]
      %vm1049 = vsmask.f32 3328
      %vm1050 = vsmask.f32 7440
      %vm1051 = vmor %vm1049, %vm1050
      %v1053 = vshrl.u32 %v1001, 16
      %v1055 = vrot.slane %v1053, 4
      %v1056 = vshll.u32 %v1001, 16
      %v1058 = vrot.slane %v1056, 5
      %v1059 = vor.u32 %v1055, %v1058
      %v1060 = vrot.slane %v1059, 4
      %v1062 = vshll.u32 %v1002, 16
      %v1064 = vrot.slane %v1062, 5
      %v1065 = vsel %vm1051, %v1060, %v1064
      %v1066 = vshrl.u32 %v1002, 16
      %v1068 = vrot.slane %v1066, 4
      %v1069 = vor.u32 %v1068, %v1064
      %v1070 = vrot.slane %v1069, 4
      %v1072 = vshll.u32 %v1003, 16
      %v1074 = vrot.slane %v1072, 5
      %v1075 = vsel %vm1051, %v1070, %v1074
      %v1077 = vshrl.u32 %v1004, 16
      %v1079 = vrot.slane %v1077, 4
      %v1080 = vshll.u32 %v1004, 16
      %v1082 = vrot.slane %v1080, 5
      %v1083 = vor.u32 %v1079, %v1082
      %v1084 = vrot.slane %v1083, 4
      %v1086 = vshll.u32 %v1005, 16
      %v1088 = vrot.slane %v1086, 5
      %v1089 = vsel %vm1051, %v1084, %v1088
      %v1090 = vshrl.u32 %v1005, 16
      %v1092 = vrot.slane %v1090, 4
      %v1093 = vor.u32 %v1092, %v1088
      %v1094 = vrot.slane %v1093, 4
      %v1096 = vshll.u32 %v1006, 16
      %v1098 = vrot.slane %v1096, 5
      %v1099 = vsel %vm1051, %v1094, %v1098
      %v1101 = vshrl.u32 %v1007, 16
      %v1103 = vrot.slane %v1101, 4
      %v1104 = vshll.u32 %v1007, 16
      %v1106 = vrot.slane %v1104, 5
      %v1107 = vor.u32 %v1103, %v1106
      %v1108 = vrot.slane %v1107, 4
      %v1110 = vshll.u32 %v1008, 16
      %v1112 = vrot.slane %v1110, 5
      %v1113 = vsel %vm1051, %v1108, %v1112
      %v1114 = vshrl.u32 %v1008, 16
      %v1116 = vrot.slane %v1114, 4
      %v1117 = vor.u32 %v1116, %v1112
      %v1118 = vrot.slane %v1117, 4
      %v1120 = vshll.u32 %v1009, 16
      %v1122 = vrot.slane %v1120, 5
      %v1123 = vsel %vm1051, %v1118, %v1122
      %v1125 = vshrl.u32 %v1010, 16
      %v1127 = vrot.slane %v1125, 4
      %v1128 = vshll.u32 %v1010, 16
      %v1130 = vrot.slane %v1128, 5
      %v1131 = vor.u32 %v1127, %v1130
      %v1132 = vrot.slane %v1131, 4
      %v1134 = vshll.u32 %v1011, 16
      %v1136 = vrot.slane %v1134, 5
      %v1137 = vsel %vm1051, %v1132, %v1136
      %v1138 = vshrl.u32 %v1011, 16
      %v1140 = vrot.slane %v1138, 4
      %v1141 = vor.u32 %v1140, %v1136
      %v1142 = vrot.slane %v1141, 4
      %v1144 = vshll.u32 %v1012, 16
      %v1146 = vrot.slane %v1144, 5
      %v1147 = vsel %vm1051, %v1142, %v1146
      %v1149 = vshrl.u32 %v1013, 16
      %v1151 = vrot.slane %v1149, 4
      %v1152 = vshll.u32 %v1013, 16
      %v1154 = vrot.slane %v1152, 5
      %v1155 = vor.u32 %v1151, %v1154
      %v1156 = vrot.slane %v1155, 4
      %v1158 = vshll.u32 %v1014, 16
      %v1160 = vrot.slane %v1158, 5
      %v1161 = vsel %vm1051, %v1156, %v1160
      %v1162 = vshrl.u32 %v1014, 16
      %v1164 = vrot.slane %v1162, 4
      %v1165 = vor.u32 %v1164, %v1160
      %v1166 = vrot.slane %v1165, 4
      %v1168 = vshll.u32 %v1015, 16
      %v1170 = vrot.slane %v1168, 5
      %v1171 = vsel %vm1051, %v1166, %v1170
      %v1173 = vshrl.u32 %v1016, 16
      %v1175 = vrot.slane %v1173, 4
      %v1176 = vshll.u32 %v1016, 16
      %v1178 = vrot.slane %v1176, 5
      %v1179 = vor.u32 %v1175, %v1178
      %v1180 = vrot.slane %v1179, 4
      %v1182 = vshll.u32 %v1017, 16
      %v1184 = vrot.slane %v1182, 5
      %v1185 = vsel %vm1051, %v1180, %v1184
      %v1186 = vshrl.u32 %v1017, 16
      %v1188 = vrot.slane %v1186, 4
      %v1189 = vor.u32 %v1188, %v1184
      %v1190 = vrot.slane %v1189, 4
      %v1192 = vshll.u32 %v1018, 16
      %v1194 = vrot.slane %v1192, 5
      %v1195 = vsel %vm1051, %v1190, %v1194
      %v1197 = vshrl.u32 %v1019, 16
      %v1199 = vrot.slane %v1197, 4
      %v1200 = vshll.u32 %v1019, 16
      %v1202 = vrot.slane %v1200, 5
      %v1203 = vor.u32 %v1199, %v1202
      %v1204 = vrot.slane %v1203, 4
      %v1206 = vshll.u32 %v1020, 16
      %v1208 = vrot.slane %v1206, 5
      %v1209 = vsel %vm1051, %v1204, %v1208
      %v1210 = vshrl.u32 %v1020, 16
      %v1212 = vrot.slane %v1210, 4
      %v1213 = vor.u32 %v1212, %v1208
      %v1214 = vrot.slane %v1213, 4
      %v1216 = vshll.u32 %v1021, 16
      %v1218 = vrot.slane %v1216, 5
      %v1219 = vsel %vm1051, %v1214, %v1218
      %v1221 = vshrl.u32 %v1022, 16
      %v1223 = vrot.slane %v1221, 4
      %v1224 = vshll.u32 %v1022, 16
      %v1226 = vrot.slane %v1224, 5
      %v1227 = vor.u32 %v1223, %v1226
      %v1228 = vrot.slane %v1227, 4
      %v1230 = vshll.u32 %v1023, 16
      %v1232 = vrot.slane %v1230, 5
      %v1233 = vsel %vm1051, %v1228, %v1232
      %v1234 = vshrl.u32 %v1023, 16
      %v1236 = vrot.slane %v1234, 4
      %v1237 = vor.u32 %v1236, %v1232
      %v1238 = vrot.slane %v1237, 4
      %v1240 = vshll.u32 %v1024, 16
      %v1242 = vrot.slane %v1240, 5
      %v1243 = vsel %vm1051, %v1238, %v1242
      %v1245 = vshrl.u32 %v1025, 16
      %v1247 = vrot.slane %v1245, 4
      %v1248 = vshll.u32 %v1025, 16
      %v1250 = vrot.slane %v1248, 5
      %v1251 = vor.u32 %v1247, %v1250
      %v1252 = vrot.slane %v1251, 4
      %v1254 = vshll.u32 %v1026, 16
      %v1256 = vrot.slane %v1254, 5
      %v1257 = vsel %vm1051, %v1252, %v1256
      %v1258 = vshrl.u32 %v1026, 16
      %v1260 = vrot.slane %v1258, 4
      %v1261 = vor.u32 %v1260, %v1256
      %v1262 = vrot.slane %v1261, 4
      %v1264 = vshll.u32 %v1027, 16
      %v1266 = vrot.slane %v1264, 5
      %v1267 = vsel %vm1051, %v1262, %v1266
      %v1269 = vshrl.u32 %v1028, 16
      %v1271 = vrot.slane %v1269, 4
      %v1272 = vshll.u32 %v1028, 16
      %v1274 = vrot.slane %v1272, 5
      %v1275 = vor.u32 %v1271, %v1274
      %v1276 = vrot.slane %v1275, 4
      %v1278 = vshll.u32 %v1029, 16
      %v1280 = vrot.slane %v1278, 5
      %v1281 = vsel %vm1051, %v1276, %v1280
      %v1282 = vshrl.u32 %v1029, 16
      %v1284 = vrot.slane %v1282, 4
      %v1285 = vor.u32 %v1284, %v1280
      %v1286 = vrot.slane %v1285, 4
      %v1288 = vshll.u32 %v1030, 16
      %v1290 = vrot.slane %v1288, 5
      %v1291 = vsel %vm1051, %v1286, %v1290
      %v1293 = vshrl.u32 %v1031, 16
      %v1295 = vrot.slane %v1293, 4
      %v1296 = vshll.u32 %v1031, 16
      %v1298 = vrot.slane %v1296, 5
      %v1299 = vor.u32 %v1295, %v1298
      %v1300 = vrot.slane %v1299, 4
      %v1302 = vshll.u32 %v1032, 16
      %v1304 = vrot.slane %v1302, 5
      %v1305 = vsel %vm1051, %v1300, %v1304
      %v1306 = vshrl.u32 %v1032, 16
      %v1308 = vrot.slane %v1306, 4
      %v1309 = vor.u32 %v1308, %v1304
      %v1310 = vrot.slane %v1309, 4
      %v1312 = vshll.u32 %v1033, 16
      %v1314 = vrot.slane %v1312, 5
      %v1315 = vsel %vm1051, %v1310, %v1314
      %v1317 = vshrl.u32 %v1034, 16
      %v1319 = vrot.slane %v1317, 4
      %v1320 = vshll.u32 %v1034, 16
      %v1322 = vrot.slane %v1320, 5
      %v1323 = vor.u32 %v1319, %v1322
      %v1324 = vrot.slane %v1323, 4
      %v1326 = vshll.u32 %v1035, 16
      %v1328 = vrot.slane %v1326, 5
      %v1329 = vsel %vm1051, %v1324, %v1328
      %v1330 = vshrl.u32 %v1035, 16
      %v1332 = vrot.slane %v1330, 4
      %v1333 = vor.u32 %v1332, %v1328
      %v1334 = vrot.slane %v1333, 4
      %v1336 = vshll.u32 %v1036, 16
      %v1338 = vrot.slane %v1336, 5
      %v1339 = vsel %vm1051, %v1334, %v1338
      %v1341 = vshrl.u32 %v1037, 16
      %v1343 = vrot.slane %v1341, 4
      %v1344 = vshll.u32 %v1037, 16
      %v1346 = vrot.slane %v1344, 5
      %v1347 = vor.u32 %v1343, %v1346
      %v1348 = vrot.slane %v1347, 4
      %v1350 = vshll.u32 %v1038, 16
      %v1352 = vrot.slane %v1350, 5
      %v1353 = vsel %vm1051, %v1348, %v1352
      %v1354 = vshrl.u32 %v1038, 16
      %v1356 = vrot.slane %v1354, 4
      %v1357 = vor.u32 %v1356, %v1352
      %v1358 = vrot.slane %v1357, 4
      %v1360 = vshll.u32 %v1039, 16
      %v1362 = vrot.slane %v1360, 5
      %v1363 = vsel %vm1051, %v1358, %v1362
      %v1365 = vshrl.u32 %v1040, 16
      %v1367 = vrot.slane %v1365, 4
      %v1368 = vshll.u32 %v1040, 16
      %v1370 = vrot.slane %v1368, 5
      %v1371 = vor.u32 %v1367, %v1370
      %v1372 = vrot.slane %v1371, 4
      %v1374 = vshll.u32 %v1041, 16
      %v1376 = vrot.slane %v1374, 5
      %v1377 = vsel %vm1051, %v1372, %v1376
      %v1378 = vshrl.u32 %v1041, 16
      %v1380 = vrot.slane %v1378, 4
      %v1381 = vor.u32 %v1380, %v1376
      %v1382 = vrot.slane %v1381, 4
      %v1384 = vshll.u32 %v1042, 16
      %v1386 = vrot.slane %v1384, 5
      %v1387 = vsel %vm1051, %v1382, %v1386
      %v1389 = vshrl.u32 %v1043, 16
      %v1391 = vrot.slane %v1389, 4
      %v1392 = vshll.u32 %v1043, 16
      %v1394 = vrot.slane %v1392, 5
      %v1395 = vor.u32 %v1391, %v1394
      %v1396 = vrot.slane %v1395, 4
      %v1398 = vshll.u32 %v1044, 16
      %v1400 = vrot.slane %v1398, 5
      %v1401 = vsel %vm1051, %v1396, %v1400
      %v1402 = vshrl.u32 %v1044, 16
      %v1404 = vrot.slane %v1402, 4
      %v1405 = vor.u32 %v1404, %v1400
      %v1406 = vrot.slane %v1405, 4
      %v1408 = vshll.u32 %v1045, 16
      %v1410 = vrot.slane %v1408, 5
      %v1411 = vsel %vm1051, %v1406, %v1410
      %v1413 = vshrl.u32 %v1046, 16
      %v1415 = vrot.slane %v1413, 4
      %v1416 = vshll.u32 %v1046, 16
      %v1418 = vrot.slane %v1416, 5
      %v1419 = vor.u32 %v1415, %v1418
      %v1420 = vrot.slane %v1419, 4
      %v1422 = vshll.u32 %v1047, 16
      %v1424 = vrot.slane %v1422, 5
      %v1425 = vsel %vm1051, %v1420, %v1424
      %v1426 = vshrl.u32 %v1047, 16
      %v1428 = vrot.slane %v1426, 4
      %v1429 = vor.u32 %v1428, %v1424
      %v1430 = vrot.slane %v1429, 4
      %v1432 = vshll.u32 %v1048, 16
      %v1434 = vrot.slane %v1432, 5
      %v1435 = vsel %vm1051, %v1430, %v1434
      %1436 = vrot.lane.b32.xlu0 %v1065, 4
      %v1437 = vpop.permute.xlu0 %1436
      %1438 = vrot.lane.b32.xlu0 %v1075, 4
      %v1439 = vpop.permute.xlu0 %1438
      %1440 = vrot.lane.b32.xlu0 %v1089, 4
      %v1441 = vpop.permute.xlu0 %1440
      %1442 = vrot.lane.b32.xlu0 %v1099, 4
      %v1443 = vpop.permute.xlu0 %1442
      %1444 = vrot.lane.b32.xlu0 %v1113, 4
      %v1445 = vpop.permute.xlu0 %1444
      %1446 = vrot.lane.b32.xlu0 %v1123, 4
      %v1447 = vpop.permute.xlu0 %1446
      %1448 = vrot.lane.b32.xlu0 %v1137, 4
      %v1449 = vpop.permute.xlu0 %1448
      %1450 = vrot.lane.b32.xlu0 %v1147, 4
      %v1451 = vpop.permute.xlu0 %1450
      %1452 = vrot.lane.b32.xlu0 %v1161, 4
      %v1453 = vpop.permute.xlu0 %1452
      %1454 = vrot.lane.b32.xlu0 %v1171, 4
      %v1455 = vpop.permute.xlu0 %1454
      %1456 = vrot.lane.b32.xlu0 %v1185, 4
      %v1457 = vpop.permute.xlu0 %1456
      %1458 = vrot.lane.b32.xlu0 %v1195, 4
      %v1459 = vpop.permute.xlu0 %1458
      %1460 = vrot.lane.b32.xlu0 %v1209, 4
      %v1461 = vpop.permute.xlu0 %1460
      %1462 = vrot.lane.b32.xlu0 %v1219, 4
      %v1463 = vpop.permute.xlu0 %1462
      %1464 = vrot.lane.b32.xlu0 %v1233, 4
      %v1465 = vpop.permute.xlu0 %1464
      %1466 = vrot.lane.b32.xlu0 %v1243, 4
      %v1467 = vpop.permute.xlu0 %1466
      %1468 = vrot.lane.b32.xlu0 %v1257, 4
      %v1469 = vpop.permute.xlu0 %1468
      %1470 = vrot.lane.b32.xlu0 %v1267, 4
      %v1471 = vpop.permute.xlu0 %1470
      %1472 = vrot.lane.b32.xlu0 %v1281, 4
      %v1473 = vpop.permute.xlu0 %1472
      %1474 = vrot.lane.b32.xlu0 %v1291, 4
      %v1475 = vpop.permute.xlu0 %1474
      %1476 = vrot.lane.b32.xlu0 %v1305, 4
      %v1477 = vpop.permute.xlu0 %1476
      %1478 = vrot.lane.b32.xlu0 %v1315, 4
      %v1479 = vpop.permute.xlu0 %1478
      %1480 = vrot.lane.b32.xlu0 %v1329, 4
      %v1481 = vpop.permute.xlu0 %1480
      %1482 = vrot.lane.b32.xlu0 %v1339, 4
      %v1483 = vpop.permute.xlu0 %1482
      %1484 = vrot.lane.b32.xlu0 %v1353, 4
      %v1485 = vpop.permute.xlu0 %1484
      %1486 = vrot.lane.b32.xlu0 %v1363, 4
      %v1487 = vpop.permute.xlu0 %1486
      %1488 = vrot.lane.b32.xlu0 %v1377, 4
      %v1489 = vpop.permute.xlu0 %1488
      %1490 = vrot.lane.b32.xlu0 %v1387, 4
      %v1491 = vpop.permute.xlu0 %1490
      %1492 = vrot.lane.b32.xlu0 %v1401, 4
      %v1493 = vpop.permute.xlu0 %1492
      %1494 = vrot.lane.b32.xlu0 %v1411, 4
      %v1495 = vpop.permute.xlu0 %1494
      %1496 = vrot.lane.b32.xlu0 %v1425, 4
      %v1497 = vpop.permute.xlu0 %1496
      %1498 = vrot.lane.b32.xlu0 %v1435, 4
      %v1499 = vpop.permute.xlu0 %1498
      %vm1532 = vcmask 60448
      %1533 = vst.msk [vmem:[#allocation4] sm:$0xf] %vm1532, %v1437
      %1534 = vst.msk [vmem:[#allocation4 + $0x4] sm:$0xf] %vm1532, %v1439
      %1535 = vst.msk [vmem:[#allocation4 + $0x8] sm:$0xf] %vm1532, %v1441
      %1536 = vst.msk [vmem:[#allocation4 + $0xc] sm:$0xf] %vm1532, %v1443
      %1537 = vst.msk [vmem:[#allocation4 + $0x10] sm:$0xf] %vm1532, %v1445
      %1538 = vst.msk [vmem:[#allocation4 + $0x14] sm:$0xf] %vm1532, %v1447
      %1539 = vst.msk [vmem:[#allocation4 + $0x18] sm:$0xf] %vm1532, %v1449
      %1540 = vst.msk [vmem:[#allocation4 + $0x1c] sm:$0xf] %vm1532, %v1451
      %1541 = vst.msk [vmem:[#allocation4 + $0x20] sm:$0xf] %vm1532, %v1453
      %1542 = vst.msk [vmem:[#allocation4 + $0x24] sm:$0xf] %vm1532, %v1455
      %1543 = vst.msk [vmem:[#allocation4 + $0x28] sm:$0xf] %vm1532, %v1457
      %1544 = vst.msk [vmem:[#allocation4 + $0x2c] sm:$0xf] %vm1532, %v1459
      %1545 = vst.msk [vmem:[#allocation4 + $0x30] sm:$0xf] %vm1532, %v1461
      %1546 = vst.msk [vmem:[#allocation4 + $0x34] sm:$0xf] %vm1532, %v1463
      %1547 = vst.msk [vmem:[#allocation4 + $0x38] sm:$0xf] %vm1532, %v1465
      %1548 = vst.msk [vmem:[#allocation4 + $0x3c] sm:$0xf] %vm1532, %v1467
      %1549 = vst.msk [vmem:[#allocation4 + $0x40] sm:$0xf] %vm1532, %v1469
      %1550 = vst.msk [vmem:[#allocation4 + $0x44] sm:$0xf] %vm1532, %v1471
      %1551 = vst.msk [vmem:[#allocation4 + $0x48] sm:$0xf] %vm1532, %v1473
      %1552 = vst.msk [vmem:[#allocation4 + $0x4c] sm:$0xf] %vm1532, %v1475
      %1553 = vst.msk [vmem:[#allocation4 + $0x50] sm:$0xf] %vm1532, %v1477
      %1554 = vst.msk [vmem:[#allocation4 + $0x54] sm:$0xf] %vm1532, %v1479
      %1555 = vst.msk [vmem:[#allocation4 + $0x58] sm:$0xf] %vm1532, %v1481
      %1556 = vst.msk [vmem:[#allocation4 + $0x5c] sm:$0xf] %vm1532, %v1483
      %1557 = vst.msk [vmem:[#allocation4 + $0x60] sm:$0xf] %vm1532, %v1485
      %1558 = vst.msk [vmem:[#allocation4 + $0x64] sm:$0xf] %vm1532, %v1487
      %1559 = vst.msk [vmem:[#allocation4 + $0x68] sm:$0xf] %vm1532, %v1489
      %1560 = vst.msk [vmem:[#allocation4 + $0x6c] sm:$0xf] %vm1532, %v1491
      %1561 = vst.msk [vmem:[#allocation4 + $0x70] sm:$0xf] %vm1532, %v1493
      %1562 = vst.msk [vmem:[#allocation4 + $0x74] sm:$0xf] %vm1532, %v1495
      %1563 = vst.msk [vmem:[#allocation4 + $0x78] sm:$0xf] %vm1532, %v1497
      %1564 = vst.msk [vmem:[#allocation4 + $0x7c] sm:$0xf] %vm1532, %v1499
      %v1565 = vld [vmem:[#allocation2] sm:$0xe]
      %v1566 = vld [vmem:[#allocation2 + $0x4] sm:$0xf]
      %v1567 = vld [vmem:[#allocation2 + $0x8] sm:$0x1]
      %v1568 = vld [vmem:[#allocation2 + $0xc] sm:$0xe]
      %v1569 = vld [vmem:[#allocation2 + $0x10] sm:$0xf]
      %v1570 = vld [vmem:[#allocation2 + $0x14] sm:$0x1]
      %v1571 = vld [vmem:[#allocation2 + $0x18] sm:$0xe]
      %v1572 = vld [vmem:[#allocation2 + $0x1c] sm:$0xf]
      %v1573 = vld [vmem:[#allocation2 + $0x20] sm:$0x1]
      %v1574 = vld [vmem:[#allocation2 + $0x24] sm:$0xe]
      %v1575 = vld [vmem:[#allocation2 + $0x28] sm:$0xf]
      %v1576 = vld [vmem:[#allocation2 + $0x2c] sm:$0x1]
      %v1577 = vld [vmem:[#allocation2 + $0x30] sm:$0xe]
      %v1578 = vld [vmem:[#allocation2 + $0x34] sm:$0xf]
      %v1579 = vld [vmem:[#allocation2 + $0x38] sm:$0x1]
      %v1580 = vld [vmem:[#allocation2 + $0x3c] sm:$0xe]
      %v1581 = vld [vmem:[#allocation2 + $0x40] sm:$0xf]
      %v1582 = vld [vmem:[#allocation2 + $0x44] sm:$0x1]
      %v1583 = vld [vmem:[#allocation2 + $0x48] sm:$0xe]
      %v1584 = vld [vmem:[#allocation2 + $0x4c] sm:$0xf]
      %v1585 = vld [vmem:[#allocation2 + $0x50] sm:$0x1]
      %v1586 = vld [vmem:[#allocation2 + $0x54] sm:$0xe]
      %v1587 = vld [vmem:[#allocation2 + $0x58] sm:$0xf]
      %v1588 = vld [vmem:[#allocation2 + $0x5c] sm:$0x1]
      %v1589 = vld [vmem:[#allocation2 + $0x60] sm:$0xe]
      %v1590 = vld [vmem:[#allocation2 + $0x64] sm:$0xf]
      %v1591 = vld [vmem:[#allocation2 + $0x68] sm:$0x1]
      %v1592 = vld [vmem:[#allocation2 + $0x6c] sm:$0xe]
      %v1593 = vld [vmem:[#allocation2 + $0x70] sm:$0xf]
      %v1594 = vld [vmem:[#allocation2 + $0x74] sm:$0x1]
      %v1595 = vld [vmem:[#allocation2 + $0x78] sm:$0xe]
      %v1596 = vld [vmem:[#allocation2 + $0x7c] sm:$0xf]
      %v1597 = vld [vmem:[#allocation2 + $0x80] sm:$0x1]
      %v1598 = vld [vmem:[#allocation2 + $0x84] sm:$0xe]
      %v1599 = vld [vmem:[#allocation2 + $0x88] sm:$0xf]
      %v1600 = vld [vmem:[#allocation2 + $0x8c] sm:$0x1]
      %v1601 = vld [vmem:[#allocation2 + $0x90] sm:$0xe]
      %v1602 = vld [vmem:[#allocation2 + $0x94] sm:$0xf]
      %v1603 = vld [vmem:[#allocation2 + $0x98] sm:$0x1]
      %v1604 = vld [vmem:[#allocation2 + $0x9c] sm:$0xe]
      %v1605 = vld [vmem:[#allocation2 + $0xa0] sm:$0xf]
      %v1606 = vld [vmem:[#allocation2 + $0xa4] sm:$0x1]
      %v1607 = vld [vmem:[#allocation2 + $0xa8] sm:$0xe]
      %v1608 = vld [vmem:[#allocation2 + $0xac] sm:$0xf]
      %v1609 = vld [vmem:[#allocation2 + $0xb0] sm:$0x1]
      %v1610 = vld [vmem:[#allocation2 + $0xb4] sm:$0xe]
      %v1611 = vld [vmem:[#allocation2 + $0xb8] sm:$0xf]
      %v1612 = vld [vmem:[#allocation2 + $0xbc] sm:$0x1]
      %vm1661 = vcmask 1042432
      %vm1662 = vcmask 1046532
      %vm1663 = vmor %vm1661, %vm1662
      %v1664 = vrot.slane %v1565, 5
      %v1665 = vrot.slane %v1664, 4
      %v1666 = vrot.slane %v1566, 5
      %v1667 = vsel %vm1663, %v1665, %v1666
      %v1668 = vrot.slane %v1666, 4
      %v1669 = vrot.slane %v1567, 5
      %v1670 = vsel %vm1663, %v1668, %v1669
      %v1671 = vrot.slane %v1568, 5
      %v1672 = vrot.slane %v1671, 4
      %v1673 = vrot.slane %v1569, 5
      %v1674 = vsel %vm1663, %v1672, %v1673
      %v1675 = vrot.slane %v1673, 4
      %v1676 = vrot.slane %v1570, 5
      %v1677 = vsel %vm1663, %v1675, %v1676
      %v1678 = vrot.slane %v1571, 5
      %v1679 = vrot.slane %v1678, 4
      %v1680 = vrot.slane %v1572, 5
      %v1681 = vsel %vm1663, %v1679, %v1680
      %v1682 = vrot.slane %v1680, 4
      %v1683 = vrot.slane %v1573, 5
      %v1684 = vsel %vm1663, %v1682, %v1683
      %v1685 = vrot.slane %v1574, 5
      %v1686 = vrot.slane %v1685, 4
      %v1687 = vrot.slane %v1575, 5
      %v1688 = vsel %vm1663, %v1686, %v1687
      %v1689 = vrot.slane %v1687, 4
      %v1690 = vrot.slane %v1576, 5
      %v1691 = vsel %vm1663, %v1689, %v1690
      %v1692 = vrot.slane %v1577, 5
      %v1693 = vrot.slane %v1692, 4
      %v1694 = vrot.slane %v1578, 5
      %v1695 = vsel %vm1663, %v1693, %v1694
      %v1696 = vrot.slane %v1694, 4
      %v1697 = vrot.slane %v1579, 5
      %v1698 = vsel %vm1663, %v1696, %v1697
      %v1699 = vrot.slane %v1580, 5
      %v1700 = vrot.slane %v1699, 4
      %v1701 = vrot.slane %v1581, 5
      %v1702 = vsel %vm1663, %v1700, %v1701
      %v1703 = vrot.slane %v1701, 4
      %v1704 = vrot.slane %v1582, 5
      %v1705 = vsel %vm1663, %v1703, %v1704
      %v1706 = vrot.slane %v1583, 5
      %v1707 = vrot.slane %v1706, 4
      %v1708 = vrot.slane %v1584, 5
      %v1709 = vsel %vm1663, %v1707, %v1708
      %v1710 = vrot.slane %v1708, 4
      %v1711 = vrot.slane %v1585, 5
      %v1712 = vsel %vm1663, %v1710, %v1711
      %v1713 = vrot.slane %v1586, 5
      %v1714 = vrot.slane %v1713, 4
      %v1715 = vrot.slane %v1587, 5
      %v1716 = vsel %vm1663, %v1714, %v1715
      %v1717 = vrot.slane %v1715, 4
      %v1718 = vrot.slane %v1588, 5
      %v1719 = vsel %vm1663, %v1717, %v1718
      %v1720 = vrot.slane %v1589, 5
      %v1721 = vrot.slane %v1720, 4
      %v1722 = vrot.slane %v1590, 5
      %v1723 = vsel %vm1663, %v1721, %v1722
      %v1724 = vrot.slane %v1722, 4
      %v1725 = vrot.slane %v1591, 5
      %v1726 = vsel %vm1663, %v1724, %v1725
      %v1727 = vrot.slane %v1592, 5
      %v1728 = vrot.slane %v1727, 4
      %v1729 = vrot.slane %v1593, 5
      %v1730 = vsel %vm1663, %v1728, %v1729
      %v1731 = vrot.slane %v1729, 4
      %v1732 = vrot.slane %v1594, 5
      %v1733 = vsel %vm1663, %v1731, %v1732
      %v1734 = vrot.slane %v1595, 5
      %v1735 = vrot.slane %v1734, 4
      %v1736 = vrot.slane %v1596, 5
      %v1737 = vsel %vm1663, %v1735, %v1736
      %v1738 = vrot.slane %v1736, 4
      %v1739 = vrot.slane %v1597, 5
      %v1740 = vsel %vm1663, %v1738, %v1739
      %v1741 = vrot.slane %v1598, 5
      %v1742 = vrot.slane %v1741, 4
      %v1743 = vrot.slane %v1599, 5
      %v1744 = vsel %vm1663, %v1742, %v1743
      %v1745 = vrot.slane %v1743, 4
      %v1746 = vrot.slane %v1600, 5
      %v1747 = vsel %vm1663, %v1745, %v1746
      %v1748 = vrot.slane %v1601, 5
      %v1749 = vrot.slane %v1748, 4
      %v1750 = vrot.slane %v1602, 5
      %v1751 = vsel %vm1663, %v1749, %v1750
      %v1752 = vrot.slane %v1750, 4
      %v1753 = vrot.slane %v1603, 5
      %v1754 = vsel %vm1663, %v1752, %v1753
      %v1755 = vrot.slane %v1604, 5
      %v1756 = vrot.slane %v1755, 4
      %v1757 = vrot.slane %v1605, 5
      %v1758 = vsel %vm1663, %v1756, %v1757
      %v1759 = vrot.slane %v1757, 4
      %v1760 = vrot.slane %v1606, 5
      %v1761 = vsel %vm1663, %v1759, %v1760
      %v1762 = vrot.slane %v1607, 5
      %v1763 = vrot.slane %v1762, 4
      %v1764 = vrot.slane %v1608, 5
      %v1765 = vsel %vm1663, %v1763, %v1764
      %v1766 = vrot.slane %v1764, 4
      %v1767 = vrot.slane %v1609, 5
      %v1768 = vsel %vm1663, %v1766, %v1767
      %v1769 = vrot.slane %v1610, 5
      %v1770 = vrot.slane %v1769, 4
      %v1771 = vrot.slane %v1611, 5
      %v1772 = vsel %vm1663, %v1770, %v1771
      %v1773 = vrot.slane %v1771, 4
      %v1774 = vrot.slane %v1612, 5
      %v1775 = vsel %vm1663, %v1773, %v1774
      %1776 = vrot.lane.b32.xlu0 %v1667, 8
      %v1777 = vpop.permute.xlu0 %1776
      %1778 = vrot.lane.b32.xlu0 %v1670, 8
      %v1779 = vpop.permute.xlu0 %1778
      %1780 = vrot.lane.b32.xlu0 %v1674, 8
      %v1781 = vpop.permute.xlu0 %1780
      %1782 = vrot.lane.b32.xlu0 %v1677, 8
      %v1783 = vpop.permute.xlu0 %1782
      %1784 = vrot.lane.b32.xlu0 %v1681, 8
      %v1785 = vpop.permute.xlu0 %1784
      %1786 = vrot.lane.b32.xlu0 %v1684, 8
      %v1787 = vpop.permute.xlu0 %1786
      %1788 = vrot.lane.b32.xlu0 %v1688, 8
      %v1789 = vpop.permute.xlu0 %1788
      %1790 = vrot.lane.b32.xlu0 %v1691, 8
      %v1791 = vpop.permute.xlu0 %1790
      %1792 = vrot.lane.b32.xlu0 %v1695, 8
      %v1793 = vpop.permute.xlu0 %1792
      %1794 = vrot.lane.b32.xlu0 %v1698, 8
      %v1795 = vpop.permute.xlu0 %1794
      %1796 = vrot.lane.b32.xlu0 %v1702, 8
      %v1797 = vpop.permute.xlu0 %1796
      %1798 = vrot.lane.b32.xlu0 %v1705, 8
      %v1799 = vpop.permute.xlu0 %1798
      %1800 = vrot.lane.b32.xlu0 %v1709, 8
      %v1801 = vpop.permute.xlu0 %1800
      %1802 = vrot.lane.b32.xlu0 %v1712, 8
      %v1803 = vpop.permute.xlu0 %1802
      %1804 = vrot.lane.b32.xlu0 %v1716, 8
      %v1805 = vpop.permute.xlu0 %1804
      %1806 = vrot.lane.b32.xlu0 %v1719, 8
      %v1807 = vpop.permute.xlu0 %1806
      %1808 = vrot.lane.b32.xlu0 %v1723, 8
      %v1809 = vpop.permute.xlu0 %1808
      %1810 = vrot.lane.b32.xlu0 %v1726, 8
      %v1811 = vpop.permute.xlu0 %1810
      %1812 = vrot.lane.b32.xlu0 %v1730, 8
      %v1813 = vpop.permute.xlu0 %1812
      %1814 = vrot.lane.b32.xlu0 %v1733, 8
      %v1815 = vpop.permute.xlu0 %1814
      %1816 = vrot.lane.b32.xlu0 %v1737, 8
      %v1817 = vpop.permute.xlu0 %1816
      %1818 = vrot.lane.b32.xlu0 %v1740, 8
      %v1819 = vpop.permute.xlu0 %1818
      %1820 = vrot.lane.b32.xlu0 %v1744, 8
      %v1821 = vpop.permute.xlu0 %1820
      %1822 = vrot.lane.b32.xlu0 %v1747, 8
      %v1823 = vpop.permute.xlu0 %1822
      %1824 = vrot.lane.b32.xlu0 %v1751, 8
      %v1825 = vpop.permute.xlu0 %1824
      %1826 = vrot.lane.b32.xlu0 %v1754, 8
      %v1827 = vpop.permute.xlu0 %1826
      %1828 = vrot.lane.b32.xlu0 %v1758, 8
      %v1829 = vpop.permute.xlu0 %1828
      %1830 = vrot.lane.b32.xlu0 %v1761, 8
      %v1831 = vpop.permute.xlu0 %1830
      %1832 = vrot.lane.b32.xlu0 %v1765, 8
      %v1833 = vpop.permute.xlu0 %1832
      %1834 = vrot.lane.b32.xlu0 %v1768, 8
      %v1835 = vpop.permute.xlu0 %1834
      %1836 = vrot.lane.b32.xlu0 %v1772, 8
      %v1837 = vpop.permute.xlu0 %1836
      %1838 = vrot.lane.b32.xlu0 %v1775, 8
      %v1839 = vpop.permute.xlu0 %1838
      %vm1872 = vcmask 93248
      %1873 = vst.msk [vmem:[#allocation4] sm:$0xf] %vm1872, %v1777
      %1874 = vst.msk [vmem:[#allocation4 + $0x4] sm:$0xf] %vm1872, %v1779
      %1875 = vst.msk [vmem:[#allocation4 + $0x8] sm:$0xf] %vm1872, %v1781
      %1876 = vst.msk [vmem:[#allocation4 + $0xc] sm:$0xf] %vm1872, %v1783
      %1877 = vst.msk [vmem:[#allocation4 + $0x10] sm:$0xf] %vm1872, %v1785
      %1878 = vst.msk [vmem:[#allocation4 + $0x14] sm:$0xf] %vm1872, %v1787
      %1879 = vst.msk [vmem:[#allocation4 + $0x18] sm:$0xf] %vm1872, %v1789
      %1880 = vst.msk [vmem:[#allocation4 + $0x1c] sm:$0xf] %vm1872, %v1791
      %1881 = vst.msk [vmem:[#allocation4 + $0x20] sm:$0xf] %vm1872, %v1793
      %1882 = vst.msk [vmem:[#allocation4 + $0x24] sm:$0xf] %vm1872, %v1795
      %1883 = vst.msk [vmem:[#allocation4 + $0x28] sm:$0xf] %vm1872, %v1797
      %1884 = vst.msk [vmem:[#allocation4 + $0x2c] sm:$0xf] %vm1872, %v1799
      %1885 = vst.msk [vmem:[#allocation4 + $0x30] sm:$0xf] %vm1872, %v1801
      %1886 = vst.msk [vmem:[#allocation4 + $0x34] sm:$0xf] %vm1872, %v1803
      %1887 = vst.msk [vmem:[#allocation4 + $0x38] sm:$0xf] %vm1872, %v1805
      %1888 = vst.msk [vmem:[#allocation4 + $0x3c] sm:$0xf] %vm1872, %v1807
      %1889 = vst.msk [vmem:[#allocation4 + $0x40] sm:$0xf] %vm1872, %v1809
      %1890 = vst.msk [vmem:[#allocation4 + $0x44] sm:$0xf] %vm1872, %v1811
      %1891 = vst.msk [vmem:[#allocation4 + $0x48] sm:$0xf] %vm1872, %v1813
      %1892 = vst.msk [vmem:[#allocation4 + $0x4c] sm:$0xf] %vm1872, %v1815
      %1893 = vst.msk [vmem:[#allocation4 + $0x50] sm:$0xf] %vm1872, %v1817
      %1894 = vst.msk [vmem:[#allocation4 + $0x54] sm:$0xf] %vm1872, %v1819
      %1895 = vst.msk [vmem:[#allocation4 + $0x58] sm:$0xf] %vm1872, %v1821
      %1896 = vst.msk [vmem:[#allocation4 + $0x5c] sm:$0xf] %vm1872, %v1823
      %1897 = vst.msk [vmem:[#allocation4 + $0x60] sm:$0xf] %vm1872, %v1825
      %1898 = vst.msk [vmem:[#allocation4 + $0x64] sm:$0xf] %vm1872, %v1827
      %1899 = vst.msk [vmem:[#allocation4 + $0x68] sm:$0xf] %vm1872, %v1829
      %1900 = vst.msk [vmem:[#allocation4 + $0x6c] sm:$0xf] %vm1872, %v1831
      %1901 = vst.msk [vmem:[#allocation4 + $0x70] sm:$0xf] %vm1872, %v1833
      %1902 = vst.msk [vmem:[#allocation4 + $0x74] sm:$0xf] %vm1872, %v1835
      %1903 = vst.msk [vmem:[#allocation4 + $0x78] sm:$0xf] %vm1872, %v1837
      %1904 = vst.msk [vmem:[#allocation4 + $0x7c] sm:$0xf] %vm1872, %v1839
      %v1905 = vld [vmem:[%s822] sm:$0xf]
      %v1906 = vld [vmem:[%s822 + $0x4] sm:$0xf]
      %v1907 = vld [vmem:[%s822 + $0xc] sm:$0xf]
      %v1908 = vld [vmem:[%s822 + $0x10] sm:$0xf]
      %v1909 = vld [vmem:[%s822 + $0x18] sm:$0xf]
      %v1910 = vld [vmem:[%s822 + $0x1c] sm:$0xf]
      %v1911 = vld [vmem:[%s822 + $0x24] sm:$0xf]
      %v1912 = vld [vmem:[%s822 + $0x28] sm:$0xf]
      %v1913 = vld [vmem:[%s822 + $0x30] sm:$0xf]
      %v1914 = vld [vmem:[%s822 + $0x34] sm:$0xf]
      %v1915 = vld [vmem:[%s822 + $0x3c] sm:$0xf]
      %v1916 = vld [vmem:[%s822 + $0x40] sm:$0xf]
      %v1917 = vld [vmem:[%s822 + $0x48] sm:$0xf]
      %v1918 = vld [vmem:[%s822 + $0x4c] sm:$0xf]
      %v1919 = vld [vmem:[%s822 + $0x54] sm:$0xf]
      %v1920 = vld [vmem:[%s822 + $0x58] sm:$0xf]
      %v1921 = vld [vmem:[%s822 + $0x60] sm:$0xf]
      %v1922 = vld [vmem:[%s822 + $0x64] sm:$0xf]
      %v1923 = vld [vmem:[%s822 + $0x6c] sm:$0xf]
      %v1924 = vld [vmem:[%s822 + $0x70] sm:$0xf]
      %v1925 = vld [vmem:[%s822 + $0x78] sm:$0xf]
      %v1926 = vld [vmem:[%s822 + $0x7c] sm:$0xf]
      %v1927 = vld [vmem:[%s822 + $0x84] sm:$0xf]
      %v1928 = vld [vmem:[%s822 + $0x88] sm:$0xf]
      %v1929 = vld [vmem:[%s822 + $0x90] sm:$0xf]
      %v1930 = vld [vmem:[%s822 + $0x94] sm:$0xf]
      %v1931 = vld [vmem:[%s822 + $0x9c] sm:$0xf]
      %v1932 = vld [vmem:[%s822 + $0xa0] sm:$0xf]
      %v1933 = vld [vmem:[%s822 + $0xa8] sm:$0xf]
      %v1934 = vld [vmem:[%s822 + $0xac] sm:$0xf]
      %v1935 = vld [vmem:[%s822 + $0xb4] sm:$0xf]
      %v1936 = vld [vmem:[%s822 + $0xb8] sm:$0xf]
      %1969 = vrot.lane.b32.xlu0 %v1905, 12
      %v1970 = vpop.permute.xlu0 %1969
      %1971 = vrot.lane.b32.xlu0 %v1906, 12
      %v1972 = vpop.permute.xlu0 %1971
      %1973 = vrot.lane.b32.xlu0 %v1907, 12
      %v1974 = vpop.permute.xlu0 %1973
      %1975 = vrot.lane.b32.xlu0 %v1908, 12
      %v1976 = vpop.permute.xlu0 %1975
      %1977 = vrot.lane.b32.xlu0 %v1909, 12
      %v1978 = vpop.permute.xlu0 %1977
      %1979 = vrot.lane.b32.xlu0 %v1910, 12
      %v1980 = vpop.permute.xlu0 %1979
      %1981 = vrot.lane.b32.xlu0 %v1911, 12
      %v1982 = vpop.permute.xlu0 %1981
      %1983 = vrot.lane.b32.xlu0 %v1912, 12
      %v1984 = vpop.permute.xlu0 %1983
      %1985 = vrot.lane.b32.xlu0 %v1913, 12
      %v1986 = vpop.permute.xlu0 %1985
      %1987 = vrot.lane.b32.xlu0 %v1914, 12
      %v1988 = vpop.permute.xlu0 %1987
      %1989 = vrot.lane.b32.xlu0 %v1915, 12
      %v1990 = vpop.permute.xlu0 %1989
      %1991 = vrot.lane.b32.xlu0 %v1916, 12
      %v1992 = vpop.permute.xlu0 %1991
      %1993 = vrot.lane.b32.xlu0 %v1917, 12
      %v1994 = vpop.permute.xlu0 %1993
      %1995 = vrot.lane.b32.xlu0 %v1918, 12
      %v1996 = vpop.permute.xlu0 %1995
      %1997 = vrot.lane.b32.xlu0 %v1919, 12
      %v1998 = vpop.permute.xlu0 %1997
      %1999 = vrot.lane.b32.xlu0 %v1920, 12
      %v2000 = vpop.permute.xlu0 %1999
      %2001 = vrot.lane.b32.xlu0 %v1921, 12
      %v2002 = vpop.permute.xlu0 %2001
      %2003 = vrot.lane.b32.xlu0 %v1922, 12
      %v2004 = vpop.permute.xlu0 %2003
      %2005 = vrot.lane.b32.xlu0 %v1923, 12
      %v2006 = vpop.permute.xlu0 %2005
      %2007 = vrot.lane.b32.xlu0 %v1924, 12
      %v2008 = vpop.permute.xlu0 %2007
      %2009 = vrot.lane.b32.xlu0 %v1925, 12
      %v2010 = vpop.permute.xlu0 %2009
      %2011 = vrot.lane.b32.xlu0 %v1926, 12
      %v2012 = vpop.permute.xlu0 %2011
      %2013 = vrot.lane.b32.xlu0 %v1927, 12
      %v2014 = vpop.permute.xlu0 %2013
      %2015 = vrot.lane.b32.xlu0 %v1928, 12
      %v2016 = vpop.permute.xlu0 %2015
      %2017 = vrot.lane.b32.xlu0 %v1929, 12
      %v2018 = vpop.permute.xlu0 %2017
      %2019 = vrot.lane.b32.xlu0 %v1930, 12
      %v2020 = vpop.permute.xlu0 %2019
      %2021 = vrot.lane.b32.xlu0 %v1931, 12
      %v2022 = vpop.permute.xlu0 %2021
      %2023 = vrot.lane.b32.xlu0 %v1932, 12
      %v2024 = vpop.permute.xlu0 %2023
      %2025 = vrot.lane.b32.xlu0 %v1933, 12
      %v2026 = vpop.permute.xlu0 %2025
      %2027 = vrot.lane.b32.xlu0 %v1934, 12
      %v2028 = vpop.permute.xlu0 %2027
      %2029 = vrot.lane.b32.xlu0 %v1935, 12
      %v2030 = vpop.permute.xlu0 %2029
      %2031 = vrot.lane.b32.xlu0 %v1936, 12
      %v2032 = vpop.permute.xlu0 %2031
      %vm2065 = vcmask 126048
      %2066 = vst.msk [vmem:[#allocation4] sm:$0xf] %vm2065, %v1970
      %2067 = vst.msk [vmem:[#allocation4 + $0x4] sm:$0xf] %vm2065, %v1972
      %2068 = vst.msk [vmem:[#allocation4 + $0x8] sm:$0xf] %vm2065, %v1974
      %2069 = vst.msk [vmem:[#allocation4 + $0xc] sm:$0xf] %vm2065, %v1976
      %2070 = vst.msk [vmem:[#allocation4 + $0x10] sm:$0xf] %vm2065, %v1978
      %2071 = vst.msk [vmem:[#allocation4 + $0x14] sm:$0xf] %vm2065, %v1980
      %2072 = vst.msk [vmem:[#allocation4 + $0x18] sm:$0xf] %vm2065, %v1982
      %2073 = vst.msk [vmem:[#allocation4 + $0x1c] sm:$0xf] %vm2065, %v1984
      %2074 = vst.msk [vmem:[#allocation4 + $0x20] sm:$0xf] %vm2065, %v1986
      %2075 = vst.msk [vmem:[#allocation4 + $0x24] sm:$0xf] %vm2065, %v1988
      %2076 = vst.msk [vmem:[#allocation4 + $0x28] sm:$0xf] %vm2065, %v1990
      %2077 = vst.msk [vmem:[#allocation4 + $0x2c] sm:$0xf] %vm2065, %v1992
      %2078 = vst.msk [vmem:[#allocation4 + $0x30] sm:$0xf] %vm2065, %v1994
      %2079 = vst.msk [vmem:[#allocation4 + $0x34] sm:$0xf] %vm2065, %v1996
      %2080 = vst.msk [vmem:[#allocation4 + $0x38] sm:$0xf] %vm2065, %v1998
      %2081 = vst.msk [vmem:[#allocation4 + $0x3c] sm:$0xf] %vm2065, %v2000
      %2082 = vst.msk [vmem:[#allocation4 + $0x40] sm:$0xf] %vm2065, %v2002
      %2083 = vst.msk [vmem:[#allocation4 + $0x44] sm:$0xf] %vm2065, %v2004
      %2084 = vst.msk [vmem:[#allocation4 + $0x48] sm:$0xf] %vm2065, %v2006
      %2085 = vst.msk [vmem:[#allocation4 + $0x4c] sm:$0xf] %vm2065, %v2008
      %2086 = vst.msk [vmem:[#allocation4 + $0x50] sm:$0xf] %vm2065, %v2010
      %2087 = vst.msk [vmem:[#allocation4 + $0x54] sm:$0xf] %vm2065, %v2012
      %2088 = vst.msk [vmem:[#allocation4 + $0x58] sm:$0xf] %vm2065, %v2014
      %2089 = vst.msk [vmem:[#allocation4 + $0x5c] sm:$0xf] %vm2065, %v2016
      %2090 = vst.msk [vmem:[#allocation4 + $0x60] sm:$0xf] %vm2065, %v2018
      %2091 = vst.msk [vmem:[#allocation4 + $0x64] sm:$0xf] %vm2065, %v2020
      %2092 = vst.msk [vmem:[#allocation4 + $0x68] sm:$0xf] %vm2065, %v2022
      %2093 = vst.msk [vmem:[#allocation4 + $0x6c] sm:$0xf] %vm2065, %v2024
      %2094 = vst.msk [vmem:[#allocation4 + $0x70] sm:$0xf] %vm2065, %v2026
      %2095 = vst.msk [vmem:[#allocation4 + $0x74] sm:$0xf] %vm2065, %v2028
      %2096 = vst.msk [vmem:[#allocation4 + $0x78] sm:$0xf] %vm2065, %v2030
      %2097 = vst.msk [vmem:[#allocation4 + $0x7c] sm:$0xf] %vm2065, %v2032
      %v2098 = vld [vmem:[%s822] sm:$0xf]
      %v2099 = vld [vmem:[%s822 + $0x4] sm:$0xf]
      %v2100 = vld [vmem:[%s822 + $0x8] sm:$0x1]
      %v2101 = vld [vmem:[%s822 + $0xc] sm:$0xf]
      %v2102 = vld [vmem:[%s822 + $0x10] sm:$0xf]
      %v2103 = vld [vmem:[%s822 + $0x14] sm:$0x1]
      %v2104 = vld [vmem:[%s822 + $0x18] sm:$0xf]
      %v2105 = vld [vmem:[%s822 + $0x1c] sm:$0xf]
      %v2106 = vld [vmem:[%s822 + $0x20] sm:$0x1]
      %v2107 = vld [vmem:[%s822 + $0x24] sm:$0xf]
      %v2108 = vld [vmem:[%s822 + $0x28] sm:$0xf]
      %v2109 = vld [vmem:[%s822 + $0x2c] sm:$0x1]
      %v2110 = vld [vmem:[%s822 + $0x30] sm:$0xf]
      %v2111 = vld [vmem:[%s822 + $0x34] sm:$0xf]
      %v2112 = vld [vmem:[%s822 + $0x38] sm:$0x1]
      %v2113 = vld [vmem:[%s822 + $0x3c] sm:$0xf]
      %v2114 = vld [vmem:[%s822 + $0x40] sm:$0xf]
      %v2115 = vld [vmem:[%s822 + $0x44] sm:$0x1]
      %v2116 = vld [vmem:[%s822 + $0x48] sm:$0xf]
      %v2117 = vld [vmem:[%s822 + $0x4c] sm:$0xf]
      %v2118 = vld [vmem:[%s822 + $0x50] sm:$0x1]
      %v2119 = vld [vmem:[%s822 + $0x54] sm:$0xf]
      %v2120 = vld [vmem:[%s822 + $0x58] sm:$0xf]
      %v2121 = vld [vmem:[%s822 + $0x5c] sm:$0x1]
      %v2122 = vld [vmem:[%s822 + $0x60] sm:$0xf]
      %v2123 = vld [vmem:[%s822 + $0x64] sm:$0xf]
      %v2124 = vld [vmem:[%s822 + $0x68] sm:$0x1]
      %v2125 = vld [vmem:[%s822 + $0x6c] sm:$0xf]
      %v2126 = vld [vmem:[%s822 + $0x70] sm:$0xf]
      %v2127 = vld [vmem:[%s822 + $0x74] sm:$0x1]
      %v2128 = vld [vmem:[%s822 + $0x78] sm:$0xf]
      %v2129 = vld [vmem:[%s822 + $0x7c] sm:$0xf]
      %v2130 = vld [vmem:[%s822 + $0x80] sm:$0x1]
      %v2131 = vld [vmem:[%s822 + $0x84] sm:$0xf]
      %v2132 = vld [vmem:[%s822 + $0x88] sm:$0xf]
      %v2133 = vld [vmem:[%s822 + $0x8c] sm:$0x1]
      %v2134 = vld [vmem:[%s822 + $0x90] sm:$0xf]
      %v2135 = vld [vmem:[%s822 + $0x94] sm:$0xf]
      %v2136 = vld [vmem:[%s822 + $0x98] sm:$0x1]
      %v2137 = vld [vmem:[%s822 + $0x9c] sm:$0xf]
      %v2138 = vld [vmem:[%s822 + $0xa0] sm:$0xf]
      %v2139 = vld [vmem:[%s822 + $0xa4] sm:$0x1]
      %v2140 = vld [vmem:[%s822 + $0xa8] sm:$0xf]
      %v2141 = vld [vmem:[%s822 + $0xac] sm:$0xf]
      %v2142 = vld [vmem:[%s822 + $0xb0] sm:$0x1]
      %v2143 = vld [vmem:[%s822 + $0xb4] sm:$0xf]
      %v2144 = vld [vmem:[%s822 + $0xb8] sm:$0xf]
      %v2145 = vld [vmem:[%s822 + $0xbc] sm:$0x1]
      %v2147 = vshrl.u32 %v2098, 16
      %v2149 = vrot.slane %v2147, 4
      %v2150 = vshll.u32 %v2098, 16
      %v2152 = vrot.slane %v2150, 5
      %v2153 = vor.u32 %v2149, %v2152
      %v2154 = vrot.slane %v2153, 4
      %v2156 = vshll.u32 %v2099, 16
      %v2158 = vrot.slane %v2156, 5
      %v2159 = vsel %vm1051, %v2154, %v2158
      %v2160 = vshrl.u32 %v2099, 16
      %v2162 = vrot.slane %v2160, 4
      %v2163 = vor.u32 %v2162, %v2158
      %v2164 = vrot.slane %v2163, 4
      %v2166 = vshll.u32 %v2100, 16
      %v2168 = vrot.slane %v2166, 5
      %v2169 = vsel %vm1051, %v2164, %v2168
      %v2171 = vshrl.u32 %v2101, 16
      %v2173 = vrot.slane %v2171, 4
      %v2174 = vshll.u32 %v2101, 16
      %v2176 = vrot.slane %v2174, 5
      %v2177 = vor.u32 %v2173, %v2176
      %v2178 = vrot.slane %v2177, 4
      %v2180 = vshll.u32 %v2102, 16
      %v2182 = vrot.slane %v2180, 5
      %v2183 = vsel %vm1051, %v2178, %v2182
      %v2184 = vshrl.u32 %v2102, 16
      %v2186 = vrot.slane %v2184, 4
      %v2187 = vor.u32 %v2186, %v2182
      %v2188 = vrot.slane %v2187, 4
      %v2190 = vshll.u32 %v2103, 16
      %v2192 = vrot.slane %v2190, 5
      %v2193 = vsel %vm1051, %v2188, %v2192
      %v2195 = vshrl.u32 %v2104, 16
      %v2197 = vrot.slane %v2195, 4
      %v2198 = vshll.u32 %v2104, 16
      %v2200 = vrot.slane %v2198, 5
      %v2201 = vor.u32 %v2197, %v2200
      %v2202 = vrot.slane %v2201, 4
      %v2204 = vshll.u32 %v2105, 16
      %v2206 = vrot.slane %v2204, 5
      %v2207 = vsel %vm1051, %v2202, %v2206
      %v2208 = vshrl.u32 %v2105, 16
      %v2210 = vrot.slane %v2208, 4
      %v2211 = vor.u32 %v2210, %v2206
      %v2212 = vrot.slane %v2211, 4
      %v2214 = vshll.u32 %v2106, 16
      %v2216 = vrot.slane %v2214, 5
      %v2217 = vsel %vm1051, %v2212, %v2216
      %v2219 = vshrl.u32 %v2107, 16
      %v2221 = vrot.slane %v2219, 4
      %v2222 = vshll.u32 %v2107, 16
      %v2224 = vrot.slane %v2222, 5
      %v2225 = vor.u32 %v2221, %v2224
      %v2226 = vrot.slane %v2225, 4
      %v2228 = vshll.u32 %v2108, 16
      %v2230 = vrot.slane %v2228, 5
      %v2231 = vsel %vm1051, %v2226, %v2230
      %v2232 = vshrl.u32 %v2108, 16
      %v2234 = vrot.slane %v2232, 4
      %v2235 = vor.u32 %v2234, %v2230
      %v2236 = vrot.slane %v2235, 4
      %v2238 = vshll.u32 %v2109, 16
      %v2240 = vrot.slane %v2238, 5
      %v2241 = vsel %vm1051, %v2236, %v2240
      %v2243 = vshrl.u32 %v2110, 16
      %v2245 = vrot.slane %v2243, 4
      %v2246 = vshll.u32 %v2110, 16
      %v2248 = vrot.slane %v2246, 5
      %v2249 = vor.u32 %v2245, %v2248
      %v2250 = vrot.slane %v2249, 4
      %v2252 = vshll.u32 %v2111, 16
      %v2254 = vrot.slane %v2252, 5
      %v2255 = vsel %vm1051, %v2250, %v2254
      %v2256 = vshrl.u32 %v2111, 16
      %v2258 = vrot.slane %v2256, 4
      %v2259 = vor.u32 %v2258, %v2254
      %v2260 = vrot.slane %v2259, 4
      %v2262 = vshll.u32 %v2112, 16
      %v2264 = vrot.slane %v2262, 5
      %v2265 = vsel %vm1051, %v2260, %v2264
      %v2267 = vshrl.u32 %v2113, 16
      %v2269 = vrot.slane %v2267, 4
      %v2270 = vshll.u32 %v2113, 16
      %v2272 = vrot.slane %v2270, 5
      %v2273 = vor.u32 %v2269, %v2272
      %v2274 = vrot.slane %v2273, 4
      %v2276 = vshll.u32 %v2114, 16
      %v2278 = vrot.slane %v2276, 5
      %v2279 = vsel %vm1051, %v2274, %v2278
      %v2280 = vshrl.u32 %v2114, 16
      %v2282 = vrot.slane %v2280, 4
      %v2283 = vor.u32 %v2282, %v2278
      %v2284 = vrot.slane %v2283, 4
      %v2286 = vshll.u32 %v2115, 16
      %v2288 = vrot.slane %v2286, 5
      %v2289 = vsel %vm1051, %v2284, %v2288
      %v2291 = vshrl.u32 %v2116, 16
      %v2293 = vrot.slane %v2291, 4
      %v2294 = vshll.u32 %v2116, 16
      %v2296 = vrot.slane %v2294, 5
      %v2297 = vor.u32 %v2293, %v2296
      %v2298 = vrot.slane %v2297, 4
      %v2300 = vshll.u32 %v2117, 16
      %v2302 = vrot.slane %v2300, 5
      %v2303 = vsel %vm1051, %v2298, %v2302
      %v2304 = vshrl.u32 %v2117, 16
      %v2306 = vrot.slane %v2304, 4
      %v2307 = vor.u32 %v2306, %v2302
      %v2308 = vrot.slane %v2307, 4
      %v2310 = vshll.u32 %v2118, 16
      %v2312 = vrot.slane %v2310, 5
      %v2313 = vsel %vm1051, %v2308, %v2312
      %v2315 = vshrl.u32 %v2119, 16
      %v2317 = vrot.slane %v2315, 4
      %v2318 = vshll.u32 %v2119, 16
      %v2320 = vrot.slane %v2318, 5
      %v2321 = vor.u32 %v2317, %v2320
      %v2322 = vrot.slane %v2321, 4
      %v2324 = vshll.u32 %v2120, 16
      %v2326 = vrot.slane %v2324, 5
      %v2327 = vsel %vm1051, %v2322, %v2326
      %v2328 = vshrl.u32 %v2120, 16
      %v2330 = vrot.slane %v2328, 4
      %v2331 = vor.u32 %v2330, %v2326
      %v2332 = vrot.slane %v2331, 4
      %v2334 = vshll.u32 %v2121, 16
      %v2336 = vrot.slane %v2334, 5
      %v2337 = vsel %vm1051, %v2332, %v2336
      %v2339 = vshrl.u32 %v2122, 16
      %v2341 = vrot.slane %v2339, 4
      %v2342 = vshll.u32 %v2122, 16
      %v2344 = vrot.slane %v2342, 5
      %v2345 = vor.u32 %v2341, %v2344
      %v2346 = vrot.slane %v2345, 4
      %v2348 = vshll.u32 %v2123, 16
      %v2350 = vrot.slane %v2348, 5
      %v2351 = vsel %vm1051, %v2346, %v2350
      %v2352 = vshrl.u32 %v2123, 16
      %v2354 = vrot.slane %v2352, 4
      %v2355 = vor.u32 %v2354, %v2350
      %v2356 = vrot.slane %v2355, 4
      %v2358 = vshll.u32 %v2124, 16
      %v2360 = vrot.slane %v2358, 5
      %v2361 = vsel %vm1051, %v2356, %v2360
      %v2363 = vshrl.u32 %v2125, 16
      %v2365 = vrot.slane %v2363, 4
      %v2366 = vshll.u32 %v2125, 16
      %v2368 = vrot.slane %v2366, 5
      %v2369 = vor.u32 %v2365, %v2368
      %v2370 = vrot.slane %v2369, 4
      %v2372 = vshll.u32 %v2126, 16
      %v2374 = vrot.slane %v2372, 5
      %v2375 = vsel %vm1051, %v2370, %v2374
      %v2376 = vshrl.u32 %v2126, 16
      %v2378 = vrot.slane %v2376, 4
      %v2379 = vor.u32 %v2378, %v2374
      %v2380 = vrot.slane %v2379, 4
      %v2382 = vshll.u32 %v2127, 16
      %v2384 = vrot.slane %v2382, 5
      %v2385 = vsel %vm1051, %v2380, %v2384
      %v2387 = vshrl.u32 %v2128, 16
      %v2389 = vrot.slane %v2387, 4
      %v2390 = vshll.u32 %v2128, 16
      %v2392 = vrot.slane %v2390, 5
      %v2393 = vor.u32 %v2389, %v2392
      %v2394 = vrot.slane %v2393, 4
      %v2396 = vshll.u32 %v2129, 16
      %v2398 = vrot.slane %v2396, 5
      %v2399 = vsel %vm1051, %v2394, %v2398
      %v2400 = vshrl.u32 %v2129, 16
      %v2402 = vrot.slane %v2400, 4
      %v2403 = vor.u32 %v2402, %v2398
      %v2404 = vrot.slane %v2403, 4
      %v2406 = vshll.u32 %v2130, 16
      %v2408 = vrot.slane %v2406, 5
      %v2409 = vsel %vm1051, %v2404, %v2408
      %v2411 = vshrl.u32 %v2131, 16
      %v2413 = vrot.slane %v2411, 4
      %v2414 = vshll.u32 %v2131, 16
      %v2416 = vrot.slane %v2414, 5
      %v2417 = vor.u32 %v2413, %v2416
      %v2418 = vrot.slane %v2417, 4
      %v2420 = vshll.u32 %v2132, 16
      %v2422 = vrot.slane %v2420, 5
      %v2423 = vsel %vm1051, %v2418, %v2422
      %v2424 = vshrl.u32 %v2132, 16
      %v2426 = vrot.slane %v2424, 4
      %v2427 = vor.u32 %v2426, %v2422
      %v2428 = vrot.slane %v2427, 4
      %v2430 = vshll.u32 %v2133, 16
      %v2432 = vrot.slane %v2430, 5
      %v2433 = vsel %vm1051, %v2428, %v2432
      %v2435 = vshrl.u32 %v2134, 16
      %v2437 = vrot.slane %v2435, 4
      %v2438 = vshll.u32 %v2134, 16
      %v2440 = vrot.slane %v2438, 5
      %v2441 = vor.u32 %v2437, %v2440
      %v2442 = vrot.slane %v2441, 4
      %v2444 = vshll.u32 %v2135, 16
      %v2446 = vrot.slane %v2444, 5
      %v2447 = vsel %vm1051, %v2442, %v2446
      %v2448 = vshrl.u32 %v2135, 16
      %v2450 = vrot.slane %v2448, 4
      %v2451 = vor.u32 %v2450, %v2446
      %v2452 = vrot.slane %v2451, 4
      %v2454 = vshll.u32 %v2136, 16
      %v2456 = vrot.slane %v2454, 5
      %v2457 = vsel %vm1051, %v2452, %v2456
      %v2459 = vshrl.u32 %v2137, 16
      %v2461 = vrot.slane %v2459, 4
      %v2462 = vshll.u32 %v2137, 16
      %v2464 = vrot.slane %v2462, 5
      %v2465 = vor.u32 %v2461, %v2464
      %v2466 = vrot.slane %v2465, 4
      %v2468 = vshll.u32 %v2138, 16
      %v2470 = vrot.slane %v2468, 5
      %v2471 = vsel %vm1051, %v2466, %v2470
      %v2472 = vshrl.u32 %v2138, 16
      %v2474 = vrot.slane %v2472, 4
      %v2475 = vor.u32 %v2474, %v2470
      %v2476 = vrot.slane %v2475, 4
      %v2478 = vshll.u32 %v2139, 16
      %v2480 = vrot.slane %v2478, 5
      %v2481 = vsel %vm1051, %v2476, %v2480
      %v2483 = vshrl.u32 %v2140, 16
      %v2485 = vrot.slane %v2483, 4
      %v2486 = vshll.u32 %v2140, 16
      %v2488 = vrot.slane %v2486, 5
      %v2489 = vor.u32 %v2485, %v2488
      %v2490 = vrot.slane %v2489, 4
      %v2492 = vshll.u32 %v2141, 16
      %v2494 = vrot.slane %v2492, 5
      %v2495 = vsel %vm1051, %v2490, %v2494
      %v2496 = vshrl.u32 %v2141, 16
      %v2498 = vrot.slane %v2496, 4
      %v2499 = vor.u32 %v2498, %v2494
      %v2500 = vrot.slane %v2499, 4
      %v2502 = vshll.u32 %v2142, 16
      %v2504 = vrot.slane %v2502, 5
      %v2505 = vsel %vm1051, %v2500, %v2504
      %v2507 = vshrl.u32 %v2143, 16
      %v2509 = vrot.slane %v2507, 4
      %v2510 = vshll.u32 %v2143, 16
      %v2512 = vrot.slane %v2510, 5
      %v2513 = vor.u32 %v2509, %v2512
      %v2514 = vrot.slane %v2513, 4
      %v2516 = vshll.u32 %v2144, 16
      %v2518 = vrot.slane %v2516, 5
      %v2519 = vsel %vm1051, %v2514, %v2518
      %v2520 = vshrl.u32 %v2144, 16
      %v2522 = vrot.slane %v2520, 4
      %v2523 = vor.u32 %v2522, %v2518
      %v2524 = vrot.slane %v2523, 4
      %v2526 = vshll.u32 %v2145, 16
      %v2528 = vrot.slane %v2526, 5
      %v2529 = vsel %vm1051, %v2524, %v2528
      %2530 = vrot.lane.b32.xlu0 %v2159, 16
      %v2531 = vpop.permute.xlu0 %2530
      %2532 = vrot.lane.b32.xlu0 %v2169, 16
      %v2533 = vpop.permute.xlu0 %2532
      %2534 = vrot.lane.b32.xlu0 %v2183, 16
      %v2535 = vpop.permute.xlu0 %2534
      %2536 = vrot.lane.b32.xlu0 %v2193, 16
      %v2537 = vpop.permute.xlu0 %2536
      %2538 = vrot.lane.b32.xlu0 %v2207, 16
      %v2539 = vpop.permute.xlu0 %2538
      %2540 = vrot.lane.b32.xlu0 %v2217, 16
      %v2541 = vpop.permute.xlu0 %2540
      %2542 = vrot.lane.b32.xlu0 %v2231, 16
      %v2543 = vpop.permute.xlu0 %2542
      %2544 = vrot.lane.b32.xlu0 %v2241, 16
      %v2545 = vpop.permute.xlu0 %2544
      %2546 = vrot.lane.b32.xlu0 %v2255, 16
      %v2547 = vpop.permute.xlu0 %2546
      %2548 = vrot.lane.b32.xlu0 %v2265, 16
      %v2549 = vpop.permute.xlu0 %2548
      %2550 = vrot.lane.b32.xlu0 %v2279, 16
      %v2551 = vpop.permute.xlu0 %2550
      %2552 = vrot.lane.b32.xlu0 %v2289, 16
      %v2553 = vpop.permute.xlu0 %2552
      %2554 = vrot.lane.b32.xlu0 %v2303, 16
      %v2555 = vpop.permute.xlu0 %2554
      %2556 = vrot.lane.b32.xlu0 %v2313, 16
      %v2557 = vpop.permute.xlu0 %2556
      %2558 = vrot.lane.b32.xlu0 %v2327, 16
      %v2559 = vpop.permute.xlu0 %2558
      %2560 = vrot.lane.b32.xlu0 %v2337, 16
      %v2561 = vpop.permute.xlu0 %2560
      %2562 = vrot.lane.b32.xlu0 %v2351, 16
      %v2563 = vpop.permute.xlu0 %2562
      %2564 = vrot.lane.b32.xlu0 %v2361, 16
      %v2565 = vpop.permute.xlu0 %2564
      %2566 = vrot.lane.b32.xlu0 %v2375, 16
      %v2567 = vpop.permute.xlu0 %2566
      %2568 = vrot.lane.b32.xlu0 %v2385, 16
      %v2569 = vpop.permute.xlu0 %2568
      %2570 = vrot.lane.b32.xlu0 %v2399, 16
      %v2571 = vpop.permute.xlu0 %2570
      %2572 = vrot.lane.b32.xlu0 %v2409, 16
      %v2573 = vpop.permute.xlu0 %2572
      %2574 = vrot.lane.b32.xlu0 %v2423, 16
      %v2575 = vpop.permute.xlu0 %2574
      %2576 = vrot.lane.b32.xlu0 %v2433, 16
      %v2577 = vpop.permute.xlu0 %2576
      %2578 = vrot.lane.b32.xlu0 %v2447, 16
      %v2579 = vpop.permute.xlu0 %2578
      %2580 = vrot.lane.b32.xlu0 %v2457, 16
      %v2581 = vpop.permute.xlu0 %2580
      %2582 = vrot.lane.b32.xlu0 %v2471, 16
      %v2583 = vpop.permute.xlu0 %2582
      %2584 = vrot.lane.b32.xlu0 %v2481, 16
      %v2585 = vpop.permute.xlu0 %2584
      %2586 = vrot.lane.b32.xlu0 %v2495, 16
      %v2587 = vpop.permute.xlu0 %2586
      %2588 = vrot.lane.b32.xlu0 %v2505, 16
      %v2589 = vpop.permute.xlu0 %2588
      %2590 = vrot.lane.b32.xlu0 %v2519, 16
      %v2591 = vpop.permute.xlu0 %2590
      %2592 = vrot.lane.b32.xlu0 %v2529, 16
      %v2593 = vpop.permute.xlu0 %2592
      %vm2626 = vcmask 158848
      %2627 = vst.msk [vmem:[#allocation4] sm:$0xf] %vm2626, %v2531
      %2628 = vst.msk [vmem:[#allocation4 + $0x4] sm:$0xf] %vm2626, %v2533
      %2629 = vst.msk [vmem:[#allocation4 + $0x8] sm:$0xf] %vm2626, %v2535
      %2630 = vst.msk [vmem:[#allocation4 + $0xc] sm:$0xf] %vm2626, %v2537
      %2631 = vst.msk [vmem:[#allocation4 + $0x10] sm:$0xf] %vm2626, %v2539
      %2632 = vst.msk [vmem:[#allocation4 + $0x14] sm:$0xf] %vm2626, %v2541
      %2633 = vst.msk [vmem:[#allocation4 + $0x18] sm:$0xf] %vm2626, %v2543
      %2634 = vst.msk [vmem:[#allocation4 + $0x1c] sm:$0xf] %vm2626, %v2545
      %2635 = vst.msk [vmem:[#allocation4 + $0x20] sm:$0xf] %vm2626, %v2547
      %2636 = vst.msk [vmem:[#allocation4 + $0x24] sm:$0xf] %vm2626, %v2549
      %2637 = vst.msk [vmem:[#allocation4 + $0x28] sm:$0xf] %vm2626, %v2551
      %2638 = vst.msk [vmem:[#allocation4 + $0x2c] sm:$0xf] %vm2626, %v2553
      %2639 = vst.msk [vmem:[#allocation4 + $0x30] sm:$0xf] %vm2626, %v2555
      %2640 = vst.msk [vmem:[#allocation4 + $0x34] sm:$0xf] %vm2626, %v2557
      %2641 = vst.msk [vmem:[#allocation4 + $0x38] sm:$0xf] %vm2626, %v2559
      %2642 = vst.msk [vmem:[#allocation4 + $0x3c] sm:$0xf] %vm2626, %v2561
      %2643 = vst.msk [vmem:[#allocation4 + $0x40] sm:$0xf] %vm2626, %v2563
      %2644 = vst.msk [vmem:[#allocation4 + $0x44] sm:$0xf] %vm2626, %v2565
      %2645 = vst.msk [vmem:[#allocation4 + $0x48] sm:$0xf] %vm2626, %v2567
      %2646 = vst.msk [vmem:[#allocation4 + $0x4c] sm:$0xf] %vm2626, %v2569
      %2647 = vst.msk [vmem:[#allocation4 + $0x50] sm:$0xf] %vm2626, %v2571
      %2648 = vst.msk [vmem:[#allocation4 + $0x54] sm:$0xf] %vm2626, %v2573
      %2649 = vst.msk [vmem:[#allocation4 + $0x58] sm:$0xf] %vm2626, %v2575
      %2650 = vst.msk [vmem:[#allocation4 + $0x5c] sm:$0xf] %vm2626, %v2577
      %2651 = vst.msk [vmem:[#allocation4 + $0x60] sm:$0xf] %vm2626, %v2579
      %2652 = vst.msk [vmem:[#allocation4 + $0x64] sm:$0xf] %vm2626, %v2581
      %2653 = vst.msk [vmem:[#allocation4 + $0x68] sm:$0xf] %vm2626, %v2583
      %2654 = vst.msk [vmem:[#allocation4 + $0x6c] sm:$0xf] %vm2626, %v2585
      %2655 = vst.msk [vmem:[#allocation4 + $0x70] sm:$0xf] %vm2626, %v2587
      %2656 = vst.msk [vmem:[#allocation4 + $0x74] sm:$0xf] %vm2626, %v2589
      %2657 = vst.msk [vmem:[#allocation4 + $0x78] sm:$0xf] %vm2626, %v2591
      %2658 = vst.msk [vmem:[#allocation4 + $0x7c] sm:$0xf] %vm2626, %v2593
      %v2659 = vld [vmem:[%s822] sm:$0xe]
      %v2660 = vld [vmem:[%s822 + $0x4] sm:$0xf]
      %v2661 = vld [vmem:[%s822 + $0x8] sm:$0x1]
      %v2662 = vld [vmem:[%s822 + $0xc] sm:$0xe]
      %v2663 = vld [vmem:[%s822 + $0x10] sm:$0xf]
      %v2664 = vld [vmem:[%s822 + $0x14] sm:$0x1]
      %v2665 = vld [vmem:[%s822 + $0x18] sm:$0xe]
      %v2666 = vld [vmem:[%s822 + $0x1c] sm:$0xf]
      %v2667 = vld [vmem:[%s822 + $0x20] sm:$0x1]
      %v2668 = vld [vmem:[%s822 + $0x24] sm:$0xe]
      %v2669 = vld [vmem:[%s822 + $0x28] sm:$0xf]
      %v2670 = vld [vmem:[%s822 + $0x2c] sm:$0x1]
      %v2671 = vld [vmem:[%s822 + $0x30] sm:$0xe]
      %v2672 = vld [vmem:[%s822 + $0x34] sm:$0xf]
      %v2673 = vld [vmem:[%s822 + $0x38] sm:$0x1]
      %v2674 = vld [vmem:[%s822 + $0x3c] sm:$0xe]
      %v2675 = vld [vmem:[%s822 + $0x40] sm:$0xf]
      %v2676 = vld [vmem:[%s822 + $0x44] sm:$0x1]
      %v2677 = vld [vmem:[%s822 + $0x48] sm:$0xe]
      %v2678 = vld [vmem:[%s822 + $0x4c] sm:$0xf]
      %v2679 = vld [vmem:[%s822 + $0x50] sm:$0x1]
      %v2680 = vld [vmem:[%s822 + $0x54] sm:$0xe]
      %v2681 = vld [vmem:[%s822 + $0x58] sm:$0xf]
      %v2682 = vld [vmem:[%s822 + $0x5c] sm:$0x1]
      %v2683 = vld [vmem:[%s822 + $0x60] sm:$0xe]
      %v2684 = vld [vmem:[%s822 + $0x64] sm:$0xf]
      %v2685 = vld [vmem:[%s822 + $0x68] sm:$0x1]
      %v2686 = vld [vmem:[%s822 + $0x6c] sm:$0xe]
      %v2687 = vld [vmem:[%s822 + $0x70] sm:$0xf]
      %v2688 = vld [vmem:[%s822 + $0x74] sm:$0x1]
      %v2689 = vld [vmem:[%s822 + $0x78] sm:$0xe]
      %v2690 = vld [vmem:[%s822 + $0x7c] sm:$0xf]
      %v2691 = vld [vmem:[%s822 + $0x80] sm:$0x1]
      %v2692 = vld [vmem:[%s822 + $0x84] sm:$0xe]
      %v2693 = vld [vmem:[%s822 + $0x88] sm:$0xf]
      %v2694 = vld [vmem:[%s822 + $0x8c] sm:$0x1]
      %v2695 = vld [vmem:[%s822 + $0x90] sm:$0xe]
      %v2696 = vld [vmem:[%s822 + $0x94] sm:$0xf]
      %v2697 = vld [vmem:[%s822 + $0x98] sm:$0x1]
      %v2698 = vld [vmem:[%s822 + $0x9c] sm:$0xe]
      %v2699 = vld [vmem:[%s822 + $0xa0] sm:$0xf]
      %v2700 = vld [vmem:[%s822 + $0xa4] sm:$0x1]
      %v2701 = vld [vmem:[%s822 + $0xa8] sm:$0xe]
      %v2702 = vld [vmem:[%s822 + $0xac] sm:$0xf]
      %v2703 = vld [vmem:[%s822 + $0xb0] sm:$0x1]
      %v2704 = vld [vmem:[%s822 + $0xb4] sm:$0xe]
      %v2705 = vld [vmem:[%s822 + $0xb8] sm:$0xf]
      %v2706 = vld [vmem:[%s822 + $0xbc] sm:$0x1]
      %v2755 = vrot.slane %v2659, 5
      %v2756 = vrot.slane %v2755, 4
      %v2757 = vrot.slane %v2660, 5
      %v2758 = vsel %vm1663, %v2756, %v2757
      %v2759 = vrot.slane %v2757, 4
      %v2760 = vrot.slane %v2661, 5
      %v2761 = vsel %vm1663, %v2759, %v2760
      %v2762 = vrot.slane %v2662, 5
      %v2763 = vrot.slane %v2762, 4
      %v2764 = vrot.slane %v2663, 5
      %v2765 = vsel %vm1663, %v2763, %v2764
      %v2766 = vrot.slane %v2764, 4
      %v2767 = vrot.slane %v2664, 5
      %v2768 = vsel %vm1663, %v2766, %v2767
      %v2769 = vrot.slane %v2665, 5
      %v2770 = vrot.slane %v2769, 4
      %v2771 = vrot.slane %v2666, 5
      %v2772 = vsel %vm1663, %v2770, %v2771
      %v2773 = vrot.slane %v2771, 4
      %v2774 = vrot.slane %v2667, 5
      %v2775 = vsel %vm1663, %v2773, %v2774
      %v2776 = vrot.slane %v2668, 5
      %v2777 = vrot.slane %v2776, 4
      %v2778 = vrot.slane %v2669, 5
      %v2779 = vsel %vm1663, %v2777, %v2778
      %v2780 = vrot.slane %v2778, 4
      %v2781 = vrot.slane %v2670, 5
      %v2782 = vsel %vm1663, %v2780, %v2781
      %v2783 = vrot.slane %v2671, 5
      %v2784 = vrot.slane %v2783, 4
      %v2785 = vrot.slane %v2672, 5
      %v2786 = vsel %vm1663, %v2784, %v2785
      %v2787 = vrot.slane %v2785, 4
      %v2788 = vrot.slane %v2673, 5
      %v2789 = vsel %vm1663, %v2787, %v2788
      %v2790 = vrot.slane %v2674, 5
      %v2791 = vrot.slane %v2790, 4
      %v2792 = vrot.slane %v2675, 5
      %v2793 = vsel %vm1663, %v2791, %v2792
      %v2794 = vrot.slane %v2792, 4
      %v2795 = vrot.slane %v2676, 5
      %v2796 = vsel %vm1663, %v2794, %v2795
      %v2797 = vrot.slane %v2677, 5
      %v2798 = vrot.slane %v2797, 4
      %v2799 = vrot.slane %v2678, 5
      %v2800 = vsel %vm1663, %v2798, %v2799
      %v2801 = vrot.slane %v2799, 4
      %v2802 = vrot.slane %v2679, 5
      %v2803 = vsel %vm1663, %v2801, %v2802
      %v2804 = vrot.slane %v2680, 5
      %v2805 = vrot.slane %v2804, 4
      %v2806 = vrot.slane %v2681, 5
      %v2807 = vsel %vm1663, %v2805, %v2806
      %v2808 = vrot.slane %v2806, 4
      %v2809 = vrot.slane %v2682, 5
      %v2810 = vsel %vm1663, %v2808, %v2809
      %v2811 = vrot.slane %v2683, 5
      %v2812 = vrot.slane %v2811, 4
      %v2813 = vrot.slane %v2684, 5
      %v2814 = vsel %vm1663, %v2812, %v2813
      %v2815 = vrot.slane %v2813, 4
      %v2816 = vrot.slane %v2685, 5
      %v2817 = vsel %vm1663, %v2815, %v2816
      %v2818 = vrot.slane %v2686, 5
      %v2819 = vrot.slane %v2818, 4
      %v2820 = vrot.slane %v2687, 5
      %v2821 = vsel %vm1663, %v2819, %v2820
      %v2822 = vrot.slane %v2820, 4
      %v2823 = vrot.slane %v2688, 5
      %v2824 = vsel %vm1663, %v2822, %v2823
      %v2825 = vrot.slane %v2689, 5
      %v2826 = vrot.slane %v2825, 4
      %v2827 = vrot.slane %v2690, 5
      %v2828 = vsel %vm1663, %v2826, %v2827
      %v2829 = vrot.slane %v2827, 4
      %v2830 = vrot.slane %v2691, 5
      %v2831 = vsel %vm1663, %v2829, %v2830
      %v2832 = vrot.slane %v2692, 5
      %v2833 = vrot.slane %v2832, 4
      %v2834 = vrot.slane %v2693, 5
      %v2835 = vsel %vm1663, %v2833, %v2834
      %v2836 = vrot.slane %v2834, 4
      %v2837 = vrot.slane %v2694, 5
      %v2838 = vsel %vm1663, %v2836, %v2837
      %v2839 = vrot.slane %v2695, 5
      %v2840 = vrot.slane %v2839, 4
      %v2841 = vrot.slane %v2696, 5
      %v2842 = vsel %vm1663, %v2840, %v2841
      %v2843 = vrot.slane %v2841, 4
      %v2844 = vrot.slane %v2697, 5
      %v2845 = vsel %vm1663, %v2843, %v2844
      %v2846 = vrot.slane %v2698, 5
      %v2847 = vrot.slane %v2846, 4
      %v2848 = vrot.slane %v2699, 5
      %v2849 = vsel %vm1663, %v2847, %v2848
      %v2850 = vrot.slane %v2848, 4
      %v2851 = vrot.slane %v2700, 5
      %v2852 = vsel %vm1663, %v2850, %v2851
      %v2853 = vrot.slane %v2701, 5
      %v2854 = vrot.slane %v2853, 4
      %v2855 = vrot.slane %v2702, 5
      %v2856 = vsel %vm1663, %v2854, %v2855
      %v2857 = vrot.slane %v2855, 4
      %v2858 = vrot.slane %v2703, 5
      %v2859 = vsel %vm1663, %v2857, %v2858
      %v2860 = vrot.slane %v2704, 5
      %v2861 = vrot.slane %v2860, 4
      %v2862 = vrot.slane %v2705, 5
      %v2863 = vsel %vm1663, %v2861, %v2862
      %v2864 = vrot.slane %v2862, 4
      %v2865 = vrot.slane %v2706, 5
      %v2866 = vsel %vm1663, %v2864, %v2865
      %2867 = vrot.lane.b32.xlu0 %v2758, 20
      %v2868 = vpop.permute.xlu0 %2867
      %2869 = vrot.lane.b32.xlu0 %v2761, 20
      %v2870 = vpop.permute.xlu0 %2869
      %2871 = vrot.lane.b32.xlu0 %v2765, 20
      %v2872 = vpop.permute.xlu0 %2871
      %2873 = vrot.lane.b32.xlu0 %v2768, 20
      %v2874 = vpop.permute.xlu0 %2873
      %2875 = vrot.lane.b32.xlu0 %v2772, 20
      %v2876 = vpop.permute.xlu0 %2875
      %2877 = vrot.lane.b32.xlu0 %v2775, 20
      %v2878 = vpop.permute.xlu0 %2877
      %2879 = vrot.lane.b32.xlu0 %v2779, 20
      %v2880 = vpop.permute.xlu0 %2879
      %2881 = vrot.lane.b32.xlu0 %v2782, 20
      %v2882 = vpop.permute.xlu0 %2881
      %2883 = vrot.lane.b32.xlu0 %v2786, 20
      %v2884 = vpop.permute.xlu0 %2883
      %2885 = vrot.lane.b32.xlu0 %v2789, 20
      %v2886 = vpop.permute.xlu0 %2885
      %2887 = vrot.lane.b32.xlu0 %v2793, 20
      %v2888 = vpop.permute.xlu0 %2887
      %2889 = vrot.lane.b32.xlu0 %v2796, 20
      %v2890 = vpop.permute.xlu0 %2889
      %2891 = vrot.lane.b32.xlu0 %v2800, 20
      %v2892 = vpop.permute.xlu0 %2891
      %2893 = vrot.lane.b32.xlu0 %v2803, 20
      %v2894 = vpop.permute.xlu0 %2893
      %2895 = vrot.lane.b32.xlu0 %v2807, 20
      %v2896 = vpop.permute.xlu0 %2895
      %2897 = vrot.lane.b32.xlu0 %v2810, 20
      %v2898 = vpop.permute.xlu0 %2897
      %2899 = vrot.lane.b32.xlu0 %v2814, 20
      %v2900 = vpop.permute.xlu0 %2899
      %2901 = vrot.lane.b32.xlu0 %v2817, 20
      %v2902 = vpop.permute.xlu0 %2901
      %2903 = vrot.lane.b32.xlu0 %v2821, 20
      %v2904 = vpop.permute.xlu0 %2903
      %2905 = vrot.lane.b32.xlu0 %v2824, 20
      %v2906 = vpop.permute.xlu0 %2905
      %2907 = vrot.lane.b32.xlu0 %v2828, 20
      %v2908 = vpop.permute.xlu0 %2907
      %2909 = vrot.lane.b32.xlu0 %v2831, 20
      %v2910 = vpop.permute.xlu0 %2909
      %2911 = vrot.lane.b32.xlu0 %v2835, 20
      %v2912 = vpop.permute.xlu0 %2911
      %2913 = vrot.lane.b32.xlu0 %v2838, 20
      %v2914 = vpop.permute.xlu0 %2913
      %2915 = vrot.lane.b32.xlu0 %v2842, 20
      %v2916 = vpop.permute.xlu0 %2915
      %2917 = vrot.lane.b32.xlu0 %v2845, 20
      %v2918 = vpop.permute.xlu0 %2917
      %2919 = vrot.lane.b32.xlu0 %v2849, 20
      %v2920 = vpop.permute.xlu0 %2919
      %2921 = vrot.lane.b32.xlu0 %v2852, 20
      %v2922 = vpop.permute.xlu0 %2921
      %2923 = vrot.lane.b32.xlu0 %v2856, 20
      %v2924 = vpop.permute.xlu0 %2923
      %2925 = vrot.lane.b32.xlu0 %v2859, 20
      %v2926 = vpop.permute.xlu0 %2925
      %2927 = vrot.lane.b32.xlu0 %v2863, 20
      %v2928 = vpop.permute.xlu0 %2927
      %2929 = vrot.lane.b32.xlu0 %v2866, 20
      %v2930 = vpop.permute.xlu0 %2929
      %vm2963 = vcmask 191648
      %2964 = vst.msk [vmem:[#allocation4] sm:$0xf] %vm2963, %v2868
      %2965 = vst.msk [vmem:[#allocation4 + $0x4] sm:$0xf] %vm2963, %v2870
      %2966 = vst.msk [vmem:[#allocation4 + $0x8] sm:$0xf] %vm2963, %v2872
      %2967 = vst.msk [vmem:[#allocation4 + $0xc] sm:$0xf] %vm2963, %v2874
      %2968 = vst.msk [vmem:[#allocation4 + $0x10] sm:$0xf] %vm2963, %v2876
      %2969 = vst.msk [vmem:[#allocation4 + $0x14] sm:$0xf] %vm2963, %v2878
      %2970 = vst.msk [vmem:[#allocation4 + $0x18] sm:$0xf] %vm2963, %v2880
      %2971 = vst.msk [vmem:[#allocation4 + $0x1c] sm:$0xf] %vm2963, %v2882
      %2972 = vst.msk [vmem:[#allocation4 + $0x20] sm:$0xf] %vm2963, %v2884
      %2973 = vst.msk [vmem:[#allocation4 + $0x24] sm:$0xf] %vm2963, %v2886
      %2974 = vst.msk [vmem:[#allocation4 + $0x28] sm:$0xf] %vm2963, %v2888
      %2975 = vst.msk [vmem:[#allocation4 + $0x2c] sm:$0xf] %vm2963, %v2890
      %2976 = vst.msk [vmem:[#allocation4 + $0x30] sm:$0xf] %vm2963, %v2892
      %2977 = vst.msk [vmem:[#allocation4 + $0x34] sm:$0xf] %vm2963, %v2894
      %2978 = vst.msk [vmem:[#allocation4 + $0x38] sm:$0xf] %vm2963, %v2896
      %2979 = vst.msk [vmem:[#allocation4 + $0x3c] sm:$0xf] %vm2963, %v2898
      %2980 = vst.msk [vmem:[#allocation4 + $0x40] sm:$0xf] %vm2963, %v2900
      %2981 = vst.msk [vmem:[#allocation4 + $0x44] sm:$0xf] %vm2963, %v2902
      %2982 = vst.msk [vmem:[#allocation4 + $0x48] sm:$0xf] %vm2963, %v2904
      %2983 = vst.msk [vmem:[#allocation4 + $0x4c] sm:$0xf] %vm2963, %v2906
      %2984 = vst.msk [vmem:[#allocation4 + $0x50] sm:$0xf] %vm2963, %v2908
      %2985 = vst.msk [vmem:[#allocation4 + $0x54] sm:$0xf] %vm2963, %v2910
      %2986 = vst.msk [vmem:[#allocation4 + $0x58] sm:$0xf] %vm2963, %v2912
      %2987 = vst.msk [vmem:[#allocation4 + $0x5c] sm:$0xf] %vm2963, %v2914
      %2988 = vst.msk [vmem:[#allocation4 + $0x60] sm:$0xf] %vm2963, %v2916
      %2989 = vst.msk [vmem:[#allocation4 + $0x64] sm:$0xf] %vm2963, %v2918
      %2990 = vst.msk [vmem:[#allocation4 + $0x68] sm:$0xf] %vm2963, %v2920
      %2991 = vst.msk [vmem:[#allocation4 + $0x6c] sm:$0xf] %vm2963, %v2922
      %2992 = vst.msk [vmem:[#allocation4 + $0x70] sm:$0xf] %vm2963, %v2924
      %2993 = vst.msk [vmem:[#allocation4 + $0x74] sm:$0xf] %vm2963, %v2926
      %2994 = vst.msk [vmem:[#allocation4 + $0x78] sm:$0xf] %vm2963, %v2928
      %2995 = vst.msk [vmem:[#allocation4 + $0x7c] sm:$0xf] %vm2963, %v2930
      %s2996 = scalar_lea.vmem [#allocation2], 24
      %v2997 = vld [vmem:[%s2996] sm:$0xf]
      %v2998 = vld [vmem:[%s2996 + $0x4] sm:$0xf]
      %v2999 = vld [vmem:[%s2996 + $0xc] sm:$0xf]
      %v3000 = vld [vmem:[%s2996 + $0x10] sm:$0xf]
      %v3001 = vld [vmem:[%s2996 + $0x18] sm:$0xf]
      %v3002 = vld [vmem:[%s2996 + $0x1c] sm:$0xf]
      %v3003 = vld [vmem:[%s2996 + $0x24] sm:$0xf]
      %v3004 = vld [vmem:[%s2996 + $0x28] sm:$0xf]
      %v3005 = vld [vmem:[%s2996 + $0x30] sm:$0xf]
      %v3006 = vld [vmem:[%s2996 + $0x34] sm:$0xf]
      %v3007 = vld [vmem:[%s2996 + $0x3c] sm:$0xf]
      %v3008 = vld [vmem:[%s2996 + $0x40] sm:$0xf]
      %v3009 = vld [vmem:[%s2996 + $0x48] sm:$0xf]
      %v3010 = vld [vmem:[%s2996 + $0x4c] sm:$0xf]
      %v3011 = vld [vmem:[%s2996 + $0x54] sm:$0xf]
      %v3012 = vld [vmem:[%s2996 + $0x58] sm:$0xf]
      %v3013 = vld [vmem:[%s2996 + $0x60] sm:$0xf]
      %v3014 = vld [vmem:[%s2996 + $0x64] sm:$0xf]
      %v3015 = vld [vmem:[%s2996 + $0x6c] sm:$0xf]
      %v3016 = vld [vmem:[%s2996 + $0x70] sm:$0xf]
      %v3017 = vld [vmem:[%s2996 + $0x78] sm:$0xf]
      %v3018 = vld [vmem:[%s2996 + $0x7c] sm:$0xf]
      %v3019 = vld [vmem:[%s2996 + $0x84] sm:$0xf]
      %v3020 = vld [vmem:[%s2996 + $0x88] sm:$0xf]
      %v3021 = vld [vmem:[%s2996 + $0x90] sm:$0xf]
      %v3022 = vld [vmem:[%s2996 + $0x94] sm:$0xf]
      %v3023 = vld [vmem:[%s2996 + $0x9c] sm:$0xf]
      %v3024 = vld [vmem:[%s2996 + $0xa0] sm:$0xf]
      %v3025 = vld [vmem:[%s2996 + $0xa8] sm:$0xf]
      %v3026 = vld [vmem:[%s2996 + $0xac] sm:$0xf]
      %v3027 = vld [vmem:[%s2996 + $0xb4] sm:$0xf]
      %v3028 = vld [vmem:[%s2996 + $0xb8] sm:$0xf]
      %3061 = vrot.lane.b32.xlu0 %v2997, 24
      %v3062 = vpop.permute.xlu0 %3061
      %3063 = vrot.lane.b32.xlu0 %v2998, 24
      %v3064 = vpop.permute.xlu0 %3063
      %3065 = vrot.lane.b32.xlu0 %v2999, 24
      %v3066 = vpop.permute.xlu0 %3065
      %3067 = vrot.lane.b32.xlu0 %v3000, 24
      %v3068 = vpop.permute.xlu0 %3067
      %3069 = vrot.lane.b32.xlu0 %v3001, 24
      %v3070 = vpop.permute.xlu0 %3069
      %3071 = vrot.lane.b32.xlu0 %v3002, 24
      %v3072 = vpop.permute.xlu0 %3071
      %3073 = vrot.lane.b32.xlu0 %v3003, 24
      %v3074 = vpop.permute.xlu0 %3073
      %3075 = vrot.lane.b32.xlu0 %v3004, 24
      %v3076 = vpop.permute.xlu0 %3075
      %3077 = vrot.lane.b32.xlu0 %v3005, 24
      %v3078 = vpop.permute.xlu0 %3077
      %3079 = vrot.lane.b32.xlu0 %v3006, 24
      %v3080 = vpop.permute.xlu0 %3079
      %3081 = vrot.lane.b32.xlu0 %v3007, 24
      %v3082 = vpop.permute.xlu0 %3081
      %3083 = vrot.lane.b32.xlu0 %v3008, 24
      %v3084 = vpop.permute.xlu0 %3083
      %3085 = vrot.lane.b32.xlu0 %v3009, 24
      %v3086 = vpop.permute.xlu0 %3085
      %3087 = vrot.lane.b32.xlu0 %v3010, 24
      %v3088 = vpop.permute.xlu0 %3087
      %3089 = vrot.lane.b32.xlu0 %v3011, 24
      %v3090 = vpop.permute.xlu0 %3089
      %3091 = vrot.lane.b32.xlu0 %v3012, 24
      %v3092 = vpop.permute.xlu0 %3091
      %3093 = vrot.lane.b32.xlu0 %v3013, 24
      %v3094 = vpop.permute.xlu0 %3093
      %3095 = vrot.lane.b32.xlu0 %v3014, 24
      %v3096 = vpop.permute.xlu0 %3095
      %3097 = vrot.lane.b32.xlu0 %v3015, 24
      %v3098 = vpop.permute.xlu0 %3097
      %3099 = vrot.lane.b32.xlu0 %v3016, 24
      %v3100 = vpop.permute.xlu0 %3099
      %3101 = vrot.lane.b32.xlu0 %v3017, 24
      %v3102 = vpop.permute.xlu0 %3101
      %3103 = vrot.lane.b32.xlu0 %v3018, 24
      %v3104 = vpop.permute.xlu0 %3103
      %3105 = vrot.lane.b32.xlu0 %v3019, 24
      %v3106 = vpop.permute.xlu0 %3105
      %3107 = vrot.lane.b32.xlu0 %v3020, 24
      %v3108 = vpop.permute.xlu0 %3107
      %3109 = vrot.lane.b32.xlu0 %v3021, 24
      %v3110 = vpop.permute.xlu0 %3109
      %3111 = vrot.lane.b32.xlu0 %v3022, 24
      %v3112 = vpop.permute.xlu0 %3111
      %3113 = vrot.lane.b32.xlu0 %v3023, 24
      %v3114 = vpop.permute.xlu0 %3113
      %3115 = vrot.lane.b32.xlu0 %v3024, 24
      %v3116 = vpop.permute.xlu0 %3115
      %3117 = vrot.lane.b32.xlu0 %v3025, 24
      %v3118 = vpop.permute.xlu0 %3117
      %3119 = vrot.lane.b32.xlu0 %v3026, 24
      %v3120 = vpop.permute.xlu0 %3119
      %3121 = vrot.lane.b32.xlu0 %v3027, 24
      %v3122 = vpop.permute.xlu0 %3121
      %3123 = vrot.lane.b32.xlu0 %v3028, 24
      %v3124 = vpop.permute.xlu0 %3123
      %vm3157 = vcmask 224448
      %3158 = vst.msk [vmem:[#allocation4] sm:$0xf] %vm3157, %v3062
      %3159 = vst.msk [vmem:[#allocation4 + $0x4] sm:$0xf] %vm3157, %v3064
      %3160 = vst.msk [vmem:[#allocation4 + $0x8] sm:$0xf] %vm3157, %v3066
      %3161 = vst.msk [vmem:[#allocation4 + $0xc] sm:$0xf] %vm3157, %v3068
      %3162 = vst.msk [vmem:[#allocation4 + $0x10] sm:$0xf] %vm3157, %v3070
      %3163 = vst.msk [vmem:[#allocation4 + $0x14] sm:$0xf] %vm3157, %v3072
      %3164 = vst.msk [vmem:[#allocation4 + $0x18] sm:$0xf] %vm3157, %v3074
      %3165 = vst.msk [vmem:[#allocation4 + $0x1c] sm:$0xf] %vm3157, %v3076
      %3166 = vst.msk [vmem:[#allocation4 + $0x20] sm:$0xf] %vm3157, %v3078
      %3167 = vst.msk [vmem:[#allocation4 + $0x24] sm:$0xf] %vm3157, %v3080
      %3168 = vst.msk [vmem:[#allocation4 + $0x28] sm:$0xf] %vm3157, %v3082
      %3169 = vst.msk [vmem:[#allocation4 + $0x2c] sm:$0xf] %vm3157, %v3084
      %3170 = vst.msk [vmem:[#allocation4 + $0x30] sm:$0xf] %vm3157, %v3086
      %3171 = vst.msk [vmem:[#allocation4 + $0x34] sm:$0xf] %vm3157, %v3088
      %3172 = vst.msk [vmem:[#allocation4 + $0x38] sm:$0xf] %vm3157, %v3090
      %3173 = vst.msk [vmem:[#allocation4 + $0x3c] sm:$0xf] %vm3157, %v3092
      %3174 = vst.msk [vmem:[#allocation4 + $0x40] sm:$0xf] %vm3157, %v3094
      %3175 = vst.msk [vmem:[#allocation4 + $0x44] sm:$0xf] %vm3157, %v3096
      %3176 = vst.msk [vmem:[#allocation4 + $0x48] sm:$0xf] %vm3157, %v3098
      %3177 = vst.msk [vmem:[#allocation4 + $0x4c] sm:$0xf] %vm3157, %v3100
      %3178 = vst.msk [vmem:[#allocation4 + $0x50] sm:$0xf] %vm3157, %v3102
      %3179 = vst.msk [vmem:[#allocation4 + $0x54] sm:$0xf] %vm3157, %v3104
      %3180 = vst.msk [vmem:[#allocation4 + $0x58] sm:$0xf] %vm3157, %v3106
      %3181 = vst.msk [vmem:[#allocation4 + $0x5c] sm:$0xf] %vm3157, %v3108
      %3182 = vst.msk [vmem:[#allocation4 + $0x60] sm:$0xf] %vm3157, %v3110
      %3183 = vst.msk [vmem:[#allocation4 + $0x64] sm:$0xf] %vm3157, %v3112
      %3184 = vst.msk [vmem:[#allocation4 + $0x68] sm:$0xf] %vm3157, %v3114
      %3185 = vst.msk [vmem:[#allocation4 + $0x6c] sm:$0xf] %vm3157, %v3116
      %3186 = vst.msk [vmem:[#allocation4 + $0x70] sm:$0xf] %vm3157, %v3118
      %3187 = vst.msk [vmem:[#allocation4 + $0x74] sm:$0xf] %vm3157, %v3120
      %3188 = vst.msk [vmem:[#allocation4 + $0x78] sm:$0xf] %vm3157, %v3122
      %3189 = vst.msk [vmem:[#allocation4 + $0x7c] sm:$0xf] %vm3157, %v3124
      %v3190 = vld [vmem:[%s2996] sm:$0xf]
      %v3191 = vld [vmem:[%s2996 + $0x4] sm:$0xf]
      %v3192 = vld [vmem:[%s2996 + $0x8] sm:$0x1]
      %v3193 = vld [vmem:[%s2996 + $0xc] sm:$0xf]
      %v3194 = vld [vmem:[%s2996 + $0x10] sm:$0xf]
      %v3195 = vld [vmem:[%s2996 + $0x14] sm:$0x1]
      %v3196 = vld [vmem:[%s2996 + $0x18] sm:$0xf]
      %v3197 = vld [vmem:[%s2996 + $0x1c] sm:$0xf]
      %v3198 = vld [vmem:[%s2996 + $0x20] sm:$0x1]
      %v3199 = vld [vmem:[%s2996 + $0x24] sm:$0xf]
      %v3200 = vld [vmem:[%s2996 + $0x28] sm:$0xf]
      %v3201 = vld [vmem:[%s2996 + $0x2c] sm:$0x1]
      %v3202 = vld [vmem:[%s2996 + $0x30] sm:$0xf]
      %v3203 = vld [vmem:[%s2996 + $0x34] sm:$0xf]
      %v3204 = vld [vmem:[%s2996 + $0x38] sm:$0x1]
      %v3205 = vld [vmem:[%s2996 + $0x3c] sm:$0xf]
      %v3206 = vld [vmem:[%s2996 + $0x40] sm:$0xf]
      %v3207 = vld [vmem:[%s2996 + $0x44] sm:$0x1]
      %v3208 = vld [vmem:[%s2996 + $0x48] sm:$0xf]
      %v3209 = vld [vmem:[%s2996 + $0x4c] sm:$0xf]
      %v3210 = vld [vmem:[%s2996 + $0x50] sm:$0x1]
      %v3211 = vld [vmem:[%s2996 + $0x54] sm:$0xf]
      %v3212 = vld [vmem:[%s2996 + $0x58] sm:$0xf]
      %v3213 = vld [vmem:[%s2996 + $0x5c] sm:$0x1]
      %v3214 = vld [vmem:[%s2996 + $0x60] sm:$0xf]
      %v3215 = vld [vmem:[%s2996 + $0x64] sm:$0xf]
      %v3216 = vld [vmem:[%s2996 + $0x68] sm:$0x1]
      %v3217 = vld [vmem:[%s2996 + $0x6c] sm:$0xf]
      %v3218 = vld [vmem:[%s2996 + $0x70] sm:$0xf]
      %v3219 = vld [vmem:[%s2996 + $0x74] sm:$0x1]
      %v3220 = vld [vmem:[%s2996 + $0x78] sm:$0xf]
      %v3221 = vld [vmem:[%s2996 + $0x7c] sm:$0xf]
      %v3222 = vld [vmem:[%s2996 + $0x80] sm:$0x1]
      %v3223 = vld [vmem:[%s2996 + $0x84] sm:$0xf]
      %v3224 = vld [vmem:[%s2996 + $0x88] sm:$0xf]
      %v3225 = vld [vmem:[%s2996 + $0x8c] sm:$0x1]
      %v3226 = vld [vmem:[%s2996 + $0x90] sm:$0xf]
      %v3227 = vld [vmem:[%s2996 + $0x94] sm:$0xf]
      %v3228 = vld [vmem:[%s2996 + $0x98] sm:$0x1]
      %v3229 = vld [vmem:[%s2996 + $0x9c] sm:$0xf]
      %v3230 = vld [vmem:[%s2996 + $0xa0] sm:$0xf]
      %v3231 = vld [vmem:[%s2996 + $0xa4] sm:$0x1]
      %v3232 = vld [vmem:[%s2996 + $0xa8] sm:$0xf]
      %v3233 = vld [vmem:[%s2996 + $0xac] sm:$0xf]
      %v3234 = vld [vmem:[%s2996 + $0xb0] sm:$0x1]
      %v3235 = vld [vmem:[%s2996 + $0xb4] sm:$0xf]
      %v3236 = vld [vmem:[%s2996 + $0xb8] sm:$0xf]
      %v3237 = vld [vmem:[%s2996 + $0xbc] sm:$0x1]
      %v3239 = vshrl.u32 %v3190, 16
      %v3241 = vrot.slane %v3239, 4
      %v3242 = vshll.u32 %v3190, 16
      %v3244 = vrot.slane %v3242, 5
      %v3245 = vor.u32 %v3241, %v3244
      %v3246 = vrot.slane %v3245, 4
      %v3248 = vshll.u32 %v3191, 16
      %v3250 = vrot.slane %v3248, 5
      %v3251 = vsel %vm1051, %v3246, %v3250
      %v3252 = vshrl.u32 %v3191, 16
      %v3254 = vrot.slane %v3252, 4
      %v3255 = vor.u32 %v3254, %v3250
      %v3256 = vrot.slane %v3255, 4
      %v3258 = vshll.u32 %v3192, 16
      %v3260 = vrot.slane %v3258, 5
      %v3261 = vsel %vm1051, %v3256, %v3260
      %v3263 = vshrl.u32 %v3193, 16
      %v3265 = vrot.slane %v3263, 4
      %v3266 = vshll.u32 %v3193, 16
      %v3268 = vrot.slane %v3266, 5
      %v3269 = vor.u32 %v3265, %v3268
      %v3270 = vrot.slane %v3269, 4
      %v3272 = vshll.u32 %v3194, 16
      %v3274 = vrot.slane %v3272, 5
      %v3275 = vsel %vm1051, %v3270, %v3274
      %v3276 = vshrl.u32 %v3194, 16
      %v3278 = vrot.slane %v3276, 4
      %v3279 = vor.u32 %v3278, %v3274
      %v3280 = vrot.slane %v3279, 4
      %v3282 = vshll.u32 %v3195, 16
      %v3284 = vrot.slane %v3282, 5
      %v3285 = vsel %vm1051, %v3280, %v3284
      %v3287 = vshrl.u32 %v3196, 16
      %v3289 = vrot.slane %v3287, 4
      %v3290 = vshll.u32 %v3196, 16
      %v3292 = vrot.slane %v3290, 5
      %v3293 = vor.u32 %v3289, %v3292
      %v3294 = vrot.slane %v3293, 4
      %v3296 = vshll.u32 %v3197, 16
      %v3298 = vrot.slane %v3296, 5
      %v3299 = vsel %vm1051, %v3294, %v3298
      %v3300 = vshrl.u32 %v3197, 16
      %v3302 = vrot.slane %v3300, 4
      %v3303 = vor.u32 %v3302, %v3298
      %v3304 = vrot.slane %v3303, 4
      %v3306 = vshll.u32 %v3198, 16
      %v3308 = vrot.slane %v3306, 5
      %v3309 = vsel %vm1051, %v3304, %v3308
      %v3311 = vshrl.u32 %v3199, 16
      %v3313 = vrot.slane %v3311, 4
      %v3314 = vshll.u32 %v3199, 16
      %v3316 = vrot.slane %v3314, 5
      %v3317 = vor.u32 %v3313, %v3316
      %v3318 = vrot.slane %v3317, 4
      %v3320 = vshll.u32 %v3200, 16
      %v3322 = vrot.slane %v3320, 5
      %v3323 = vsel %vm1051, %v3318, %v3322
      %v3324 = vshrl.u32 %v3200, 16
      %v3326 = vrot.slane %v3324, 4
      %v3327 = vor.u32 %v3326, %v3322
      %v3328 = vrot.slane %v3327, 4
      %v3330 = vshll.u32 %v3201, 16
      %v3332 = vrot.slane %v3330, 5
      %v3333 = vsel %vm1051, %v3328, %v3332
      %v3335 = vshrl.u32 %v3202, 16
      %v3337 = vrot.slane %v3335, 4
      %v3338 = vshll.u32 %v3202, 16
      %v3340 = vrot.slane %v3338, 5
      %v3341 = vor.u32 %v3337, %v3340
      %v3342 = vrot.slane %v3341, 4
      %v3344 = vshll.u32 %v3203, 16
      %v3346 = vrot.slane %v3344, 5
      %v3347 = vsel %vm1051, %v3342, %v3346
      %v3348 = vshrl.u32 %v3203, 16
      %v3350 = vrot.slane %v3348, 4
      %v3351 = vor.u32 %v3350, %v3346
      %v3352 = vrot.slane %v3351, 4
      %v3354 = vshll.u32 %v3204, 16
      %v3356 = vrot.slane %v3354, 5
      %v3357 = vsel %vm1051, %v3352, %v3356
      %v3359 = vshrl.u32 %v3205, 16
      %v3361 = vrot.slane %v3359, 4
      %v3362 = vshll.u32 %v3205, 16
      %v3364 = vrot.slane %v3362, 5
      %v3365 = vor.u32 %v3361, %v3364
      %v3366 = vrot.slane %v3365, 4
      %v3368 = vshll.u32 %v3206, 16
      %v3370 = vrot.slane %v3368, 5
      %v3371 = vsel %vm1051, %v3366, %v3370
      %v3372 = vshrl.u32 %v3206, 16
      %v3374 = vrot.slane %v3372, 4
      %v3375 = vor.u32 %v3374, %v3370
      %v3376 = vrot.slane %v3375, 4
      %v3378 = vshll.u32 %v3207, 16
      %v3380 = vrot.slane %v3378, 5
      %v3381 = vsel %vm1051, %v3376, %v3380
      %v3383 = vshrl.u32 %v3208, 16
      %v3385 = vrot.slane %v3383, 4
      %v3386 = vshll.u32 %v3208, 16
      %v3388 = vrot.slane %v3386, 5
      %v3389 = vor.u32 %v3385, %v3388
      %v3390 = vrot.slane %v3389, 4
      %v3392 = vshll.u32 %v3209, 16
      %v3394 = vrot.slane %v3392, 5
      %v3395 = vsel %vm1051, %v3390, %v3394
      %v3396 = vshrl.u32 %v3209, 16
      %v3398 = vrot.slane %v3396, 4
      %v3399 = vor.u32 %v3398, %v3394
      %v3400 = vrot.slane %v3399, 4
      %v3402 = vshll.u32 %v3210, 16
      %v3404 = vrot.slane %v3402, 5
      %v3405 = vsel %vm1051, %v3400, %v3404
      %v3407 = vshrl.u32 %v3211, 16
      %v3409 = vrot.slane %v3407, 4
      %v3410 = vshll.u32 %v3211, 16
      %v3412 = vrot.slane %v3410, 5
      %v3413 = vor.u32 %v3409, %v3412
      %v3414 = vrot.slane %v3413, 4
      %v3416 = vshll.u32 %v3212, 16
      %v3418 = vrot.slane %v3416, 5
      %v3419 = vsel %vm1051, %v3414, %v3418
      %v3420 = vshrl.u32 %v3212, 16
      %v3422 = vrot.slane %v3420, 4
      %v3423 = vor.u32 %v3422, %v3418
      %v3424 = vrot.slane %v3423, 4
      %v3426 = vshll.u32 %v3213, 16
      %v3428 = vrot.slane %v3426, 5
      %v3429 = vsel %vm1051, %v3424, %v3428
      %v3431 = vshrl.u32 %v3214, 16
      %v3433 = vrot.slane %v3431, 4
      %v3434 = vshll.u32 %v3214, 16
      %v3436 = vrot.slane %v3434, 5
      %v3437 = vor.u32 %v3433, %v3436
      %v3438 = vrot.slane %v3437, 4
      %v3440 = vshll.u32 %v3215, 16
      %v3442 = vrot.slane %v3440, 5
      %v3443 = vsel %vm1051, %v3438, %v3442
      %v3444 = vshrl.u32 %v3215, 16
      %v3446 = vrot.slane %v3444, 4
      %v3447 = vor.u32 %v3446, %v3442
      %v3448 = vrot.slane %v3447, 4
      %v3450 = vshll.u32 %v3216, 16
      %v3452 = vrot.slane %v3450, 5
      %v3453 = vsel %vm1051, %v3448, %v3452
      %v3455 = vshrl.u32 %v3217, 16
      %v3457 = vrot.slane %v3455, 4
      %v3458 = vshll.u32 %v3217, 16
      %v3460 = vrot.slane %v3458, 5
      %v3461 = vor.u32 %v3457, %v3460
      %v3462 = vrot.slane %v3461, 4
      %v3464 = vshll.u32 %v3218, 16
      %v3466 = vrot.slane %v3464, 5
      %v3467 = vsel %vm1051, %v3462, %v3466
      %v3468 = vshrl.u32 %v3218, 16
      %v3470 = vrot.slane %v3468, 4
      %v3471 = vor.u32 %v3470, %v3466
      %v3472 = vrot.slane %v3471, 4
      %v3474 = vshll.u32 %v3219, 16
      %v3476 = vrot.slane %v3474, 5
      %v3477 = vsel %vm1051, %v3472, %v3476
      %v3479 = vshrl.u32 %v3220, 16
      %v3481 = vrot.slane %v3479, 4
      %v3482 = vshll.u32 %v3220, 16
      %v3484 = vrot.slane %v3482, 5
      %v3485 = vor.u32 %v3481, %v3484
      %v3486 = vrot.slane %v3485, 4
      %v3488 = vshll.u32 %v3221, 16
      %v3490 = vrot.slane %v3488, 5
      %v3491 = vsel %vm1051, %v3486, %v3490
      %v3492 = vshrl.u32 %v3221, 16
      %v3494 = vrot.slane %v3492, 4
      %v3495 = vor.u32 %v3494, %v3490
      %v3496 = vrot.slane %v3495, 4
      %v3498 = vshll.u32 %v3222, 16
      %v3500 = vrot.slane %v3498, 5
      %v3501 = vsel %vm1051, %v3496, %v3500
      %v3503 = vshrl.u32 %v3223, 16
      %v3505 = vrot.slane %v3503, 4
      %v3506 = vshll.u32 %v3223, 16
      %v3508 = vrot.slane %v3506, 5
      %v3509 = vor.u32 %v3505, %v3508
      %v3510 = vrot.slane %v3509, 4
      %v3512 = vshll.u32 %v3224, 16
      %v3514 = vrot.slane %v3512, 5
      %v3515 = vsel %vm1051, %v3510, %v3514
      %v3516 = vshrl.u32 %v3224, 16
      %v3518 = vrot.slane %v3516, 4
      %v3519 = vor.u32 %v3518, %v3514
      %v3520 = vrot.slane %v3519, 4
      %v3522 = vshll.u32 %v3225, 16
      %v3524 = vrot.slane %v3522, 5
      %v3525 = vsel %vm1051, %v3520, %v3524
      %v3527 = vshrl.u32 %v3226, 16
      %v3529 = vrot.slane %v3527, 4
      %v3530 = vshll.u32 %v3226, 16
      %v3532 = vrot.slane %v3530, 5
      %v3533 = vor.u32 %v3529, %v3532
      %v3534 = vrot.slane %v3533, 4
      %v3536 = vshll.u32 %v3227, 16
      %v3538 = vrot.slane %v3536, 5
      %v3539 = vsel %vm1051, %v3534, %v3538
      %v3540 = vshrl.u32 %v3227, 16
      %v3542 = vrot.slane %v3540, 4
      %v3543 = vor.u32 %v3542, %v3538
      %v3544 = vrot.slane %v3543, 4
      %v3546 = vshll.u32 %v3228, 16
      %v3548 = vrot.slane %v3546, 5
      %v3549 = vsel %vm1051, %v3544, %v3548
      %v3551 = vshrl.u32 %v3229, 16
      %v3553 = vrot.slane %v3551, 4
      %v3554 = vshll.u32 %v3229, 16
      %v3556 = vrot.slane %v3554, 5
      %v3557 = vor.u32 %v3553, %v3556
      %v3558 = vrot.slane %v3557, 4
      %v3560 = vshll.u32 %v3230, 16
      %v3562 = vrot.slane %v3560, 5
      %v3563 = vsel %vm1051, %v3558, %v3562
      %v3564 = vshrl.u32 %v3230, 16
      %v3566 = vrot.slane %v3564, 4
      %v3567 = vor.u32 %v3566, %v3562
      %v3568 = vrot.slane %v3567, 4
      %v3570 = vshll.u32 %v3231, 16
      %v3572 = vrot.slane %v3570, 5
      %v3573 = vsel %vm1051, %v3568, %v3572
      %v3575 = vshrl.u32 %v3232, 16
      %v3577 = vrot.slane %v3575, 4
      %v3578 = vshll.u32 %v3232, 16
      %v3580 = vrot.slane %v3578, 5
      %v3581 = vor.u32 %v3577, %v3580
      %v3582 = vrot.slane %v3581, 4
      %v3584 = vshll.u32 %v3233, 16
      %v3586 = vrot.slane %v3584, 5
      %v3587 = vsel %vm1051, %v3582, %v3586
      %v3588 = vshrl.u32 %v3233, 16
      %v3590 = vrot.slane %v3588, 4
      %v3591 = vor.u32 %v3590, %v3586
      %v3592 = vrot.slane %v3591, 4
      %v3594 = vshll.u32 %v3234, 16
      %v3596 = vrot.slane %v3594, 5
      %v3597 = vsel %vm1051, %v3592, %v3596
      %v3599 = vshrl.u32 %v3235, 16
      %v3601 = vrot.slane %v3599, 4
      %v3602 = vshll.u32 %v3235, 16
      %v3604 = vrot.slane %v3602, 5
      %v3605 = vor.u32 %v3601, %v3604
      %v3606 = vrot.slane %v3605, 4
      %v3608 = vshll.u32 %v3236, 16
      %v3610 = vrot.slane %v3608, 5
      %v3611 = vsel %vm1051, %v3606, %v3610
      %v3612 = vshrl.u32 %v3236, 16
      %v3614 = vrot.slane %v3612, 4
      %v3615 = vor.u32 %v3614, %v3610
      %v3616 = vrot.slane %v3615, 4
      %v3618 = vshll.u32 %v3237, 16
      %v3620 = vrot.slane %v3618, 5
      %v3621 = vsel %vm1051, %v3616, %v3620
      %3622 = vrot.lane.b32.xlu0 %v3251, 28
      %v3623 = vpop.permute.xlu0 %3622
      %3624 = vrot.lane.b32.xlu0 %v3261, 28
      %v3625 = vpop.permute.xlu0 %3624
      %3626 = vrot.lane.b32.xlu0 %v3275, 28
      %v3627 = vpop.permute.xlu0 %3626
      %3628 = vrot.lane.b32.xlu0 %v3285, 28
      %v3629 = vpop.permute.xlu0 %3628
      %3630 = vrot.lane.b32.xlu0 %v3299, 28
      %v3631 = vpop.permute.xlu0 %3630
      %3632 = vrot.lane.b32.xlu0 %v3309, 28
      %v3633 = vpop.permute.xlu0 %3632
      %3634 = vrot.lane.b32.xlu0 %v3323, 28
      %v3635 = vpop.permute.xlu0 %3634
      %3636 = vrot.lane.b32.xlu0 %v3333, 28
      %v3637 = vpop.permute.xlu0 %3636
      %3638 = vrot.lane.b32.xlu0 %v3347, 28
      %v3639 = vpop.permute.xlu0 %3638
      %3640 = vrot.lane.b32.xlu0 %v3357, 28
      %v3641 = vpop.permute.xlu0 %3640
      %3642 = vrot.lane.b32.xlu0 %v3371, 28
      %v3643 = vpop.permute.xlu0 %3642
      %3644 = vrot.lane.b32.xlu0 %v3381, 28
      %v3645 = vpop.permute.xlu0 %3644
      %3646 = vrot.lane.b32.xlu0 %v3395, 28
      %v3647 = vpop.permute.xlu0 %3646
      %3648 = vrot.lane.b32.xlu0 %v3405, 28
      %v3649 = vpop.permute.xlu0 %3648
      %3650 = vrot.lane.b32.xlu0 %v3419, 28
      %v3651 = vpop.permute.xlu0 %3650
      %3652 = vrot.lane.b32.xlu0 %v3429, 28
      %v3653 = vpop.permute.xlu0 %3652
      %3654 = vrot.lane.b32.xlu0 %v3443, 28
      %v3655 = vpop.permute.xlu0 %3654
      %3656 = vrot.lane.b32.xlu0 %v3453, 28
      %v3657 = vpop.permute.xlu0 %3656
      %3658 = vrot.lane.b32.xlu0 %v3467, 28
      %v3659 = vpop.permute.xlu0 %3658
      %3660 = vrot.lane.b32.xlu0 %v3477, 28
      %v3661 = vpop.permute.xlu0 %3660
      %3662 = vrot.lane.b32.xlu0 %v3491, 28
      %v3663 = vpop.permute.xlu0 %3662
      %3664 = vrot.lane.b32.xlu0 %v3501, 28
      %v3665 = vpop.permute.xlu0 %3664
      %3666 = vrot.lane.b32.xlu0 %v3515, 28
      %v3667 = vpop.permute.xlu0 %3666
      %3668 = vrot.lane.b32.xlu0 %v3525, 28
      %v3669 = vpop.permute.xlu0 %3668
      %3670 = vrot.lane.b32.xlu0 %v3539, 28
      %v3671 = vpop.permute.xlu0 %3670
      %3672 = vrot.lane.b32.xlu0 %v3549, 28
      %v3673 = vpop.permute.xlu0 %3672
      %3674 = vrot.lane.b32.xlu0 %v3563, 28
      %v3675 = vpop.permute.xlu0 %3674
      %3676 = vrot.lane.b32.xlu0 %v3573, 28
      %v3677 = vpop.permute.xlu0 %3676
      %3678 = vrot.lane.b32.xlu0 %v3587, 28
      %v3679 = vpop.permute.xlu0 %3678
      %3680 = vrot.lane.b32.xlu0 %v3597, 28
      %v3681 = vpop.permute.xlu0 %3680
      %3682 = vrot.lane.b32.xlu0 %v3611, 28
      %v3683 = vpop.permute.xlu0 %3682
      %3684 = vrot.lane.b32.xlu0 %v3621, 28
      %v3685 = vpop.permute.xlu0 %3684
      %vm3718 = vcmask 257248
      %3719 = vst.msk [vmem:[#allocation4] sm:$0xf] %vm3718, %v3623
      %3720 = vst.msk [vmem:[#allocation4 + $0x4] sm:$0xf] %vm3718, %v3625
      %3721 = vst.msk [vmem:[#allocation4 + $0x8] sm:$0xf] %vm3718, %v3627
      %3722 = vst.msk [vmem:[#allocation4 + $0xc] sm:$0xf] %vm3718, %v3629
      %3723 = vst.msk [vmem:[#allocation4 + $0x10] sm:$0xf] %vm3718, %v3631
      %3724 = vst.msk [vmem:[#allocation4 + $0x14] sm:$0xf] %vm3718, %v3633
      %3725 = vst.msk [vmem:[#allocation4 + $0x18] sm:$0xf] %vm3718, %v3635
      %3726 = vst.msk [vmem:[#allocation4 + $0x1c] sm:$0xf] %vm3718, %v3637
      %3727 = vst.msk [vmem:[#allocation4 + $0x20] sm:$0xf] %vm3718, %v3639
      %3728 = vst.msk [vmem:[#allocation4 + $0x24] sm:$0xf] %vm3718, %v3641
      %3729 = vst.msk [vmem:[#allocation4 + $0x28] sm:$0xf] %vm3718, %v3643
      %3730 = vst.msk [vmem:[#allocation4 + $0x2c] sm:$0xf] %vm3718, %v3645
      %3731 = vst.msk [vmem:[#allocation4 + $0x30] sm:$0xf] %vm3718, %v3647
      %3732 = vst.msk [vmem:[#allocation4 + $0x34] sm:$0xf] %vm3718, %v3649
      %3733 = vst.msk [vmem:[#allocation4 + $0x38] sm:$0xf] %vm3718, %v3651
      %3734 = vst.msk [vmem:[#allocation4 + $0x3c] sm:$0xf] %vm3718, %v3653
      %3735 = vst.msk [vmem:[#allocation4 + $0x40] sm:$0xf] %vm3718, %v3655
      %3736 = vst.msk [vmem:[#allocation4 + $0x44] sm:$0xf] %vm3718, %v3657
      %3737 = vst.msk [vmem:[#allocation4 + $0x48] sm:$0xf] %vm3718, %v3659
      %3738 = vst.msk [vmem:[#allocation4 + $0x4c] sm:$0xf] %vm3718, %v3661
      %3739 = vst.msk [vmem:[#allocation4 + $0x50] sm:$0xf] %vm3718, %v3663
      %3740 = vst.msk [vmem:[#allocation4 + $0x54] sm:$0xf] %vm3718, %v3665
      %3741 = vst.msk [vmem:[#allocation4 + $0x58] sm:$0xf] %vm3718, %v3667
      %3742 = vst.msk [vmem:[#allocation4 + $0x5c] sm:$0xf] %vm3718, %v3669
      %3743 = vst.msk [vmem:[#allocation4 + $0x60] sm:$0xf] %vm3718, %v3671
      %3744 = vst.msk [vmem:[#allocation4 + $0x64] sm:$0xf] %vm3718, %v3673
      %3745 = vst.msk [vmem:[#allocation4 + $0x68] sm:$0xf] %vm3718, %v3675
      %3746 = vst.msk [vmem:[#allocation4 + $0x6c] sm:$0xf] %vm3718, %v3677
      %3747 = vst.msk [vmem:[#allocation4 + $0x70] sm:$0xf] %vm3718, %v3679
      %3748 = vst.msk [vmem:[#allocation4 + $0x74] sm:$0xf] %vm3718, %v3681
      %3749 = vst.msk [vmem:[#allocation4 + $0x78] sm:$0xf] %vm3718, %v3683
      %3750 = vst.msk [vmem:[#allocation4 + $0x7c] sm:$0xf] %vm3718, %v3685
      %v3751 = vld [vmem:[%s2996] sm:$0xe]
      %v3752 = vld [vmem:[%s2996 + $0x4] sm:$0xf]
      %v3753 = vld [vmem:[%s2996 + $0x8] sm:$0x1]
      %v3754 = vld [vmem:[%s2996 + $0xc] sm:$0xe]
      %v3755 = vld [vmem:[%s2996 + $0x10] sm:$0xf]
      %v3756 = vld [vmem:[%s2996 + $0x14] sm:$0x1]
      %v3757 = vld [vmem:[%s2996 + $0x18] sm:$0xe]
      %v3758 = vld [vmem:[%s2996 + $0x1c] sm:$0xf]
      %v3759 = vld [vmem:[%s2996 + $0x20] sm:$0x1]
      %v3760 = vld [vmem:[%s2996 + $0x24] sm:$0xe]
      %v3761 = vld [vmem:[%s2996 + $0x28] sm:$0xf]
      %v3762 = vld [vmem:[%s2996 + $0x2c] sm:$0x1]
      %v3763 = vld [vmem:[%s2996 + $0x30] sm:$0xe]
      %v3764 = vld [vmem:[%s2996 + $0x34] sm:$0xf]
      %v3765 = vld [vmem:[%s2996 + $0x38] sm:$0x1]
      %v3766 = vld [vmem:[%s2996 + $0x3c] sm:$0xe]
      %v3767 = vld [vmem:[%s2996 + $0x40] sm:$0xf]
      %v3768 = vld [vmem:[%s2996 + $0x44] sm:$0x1]
      %v3769 = vld [vmem:[%s2996 + $0x48] sm:$0xe]
      %v3770 = vld [vmem:[%s2996 + $0x4c] sm:$0xf]
      %v3771 = vld [vmem:[%s2996 + $0x50] sm:$0x1]
      %v3772 = vld [vmem:[%s2996 + $0x54] sm:$0xe]
      %v3773 = vld [vmem:[%s2996 + $0x58] sm:$0xf]
      %v3774 = vld [vmem:[%s2996 + $0x5c] sm:$0x1]
      %v3775 = vld [vmem:[%s2996 + $0x60] sm:$0xe]
      %v3776 = vld [vmem:[%s2996 + $0x64] sm:$0xf]
      %v3777 = vld [vmem:[%s2996 + $0x68] sm:$0x1]
      %v3778 = vld [vmem:[%s2996 + $0x6c] sm:$0xe]
      %v3779 = vld [vmem:[%s2996 + $0x70] sm:$0xf]
      %v3780 = vld [vmem:[%s2996 + $0x74] sm:$0x1]
      %v3781 = vld [vmem:[%s2996 + $0x78] sm:$0xe]
      %v3782 = vld [vmem:[%s2996 + $0x7c] sm:$0xf]
      %v3783 = vld [vmem:[%s2996 + $0x80] sm:$0x1]
      %v3784 = vld [vmem:[%s2996 + $0x84] sm:$0xe]
      %v3785 = vld [vmem:[%s2996 + $0x88] sm:$0xf]
      %v3786 = vld [vmem:[%s2996 + $0x8c] sm:$0x1]
      %v3787 = vld [vmem:[%s2996 + $0x90] sm:$0xe]
      %v3788 = vld [vmem:[%s2996 + $0x94] sm:$0xf]
      %v3789 = vld [vmem:[%s2996 + $0x98] sm:$0x1]
      %v3790 = vld [vmem:[%s2996 + $0x9c] sm:$0xe]
      %v3791 = vld [vmem:[%s2996 + $0xa0] sm:$0xf]
      %v3792 = vld [vmem:[%s2996 + $0xa4] sm:$0x1]
      %v3793 = vld [vmem:[%s2996 + $0xa8] sm:$0xe]
      %v3794 = vld [vmem:[%s2996 + $0xac] sm:$0xf]
      %v3795 = vld [vmem:[%s2996 + $0xb0] sm:$0x1]
      %v3796 = vld [vmem:[%s2996 + $0xb4] sm:$0xe]
      %v3797 = vld [vmem:[%s2996 + $0xb8] sm:$0xf]
      %v3798 = vld [vmem:[%s2996 + $0xbc] sm:$0x1]
      %v3847 = vrot.slane %v3751, 5
      %v3848 = vrot.slane %v3847, 4
      %v3849 = vrot.slane %v3752, 5
      %v3850 = vsel %vm1663, %v3848, %v3849
      %v3851 = vrot.slane %v3849, 4
      %v3852 = vrot.slane %v3753, 5
      %v3853 = vsel %vm1663, %v3851, %v3852
      %v3854 = vrot.slane %v3754, 5
      %v3855 = vrot.slane %v3854, 4
      %v3856 = vrot.slane %v3755, 5
      %v3857 = vsel %vm1663, %v3855, %v3856
      %v3858 = vrot.slane %v3856, 4
      %v3859 = vrot.slane %v3756, 5
      %v3860 = vsel %vm1663, %v3858, %v3859
      %v3861 = vrot.slane %v3757, 5
      %v3862 = vrot.slane %v3861, 4
      %v3863 = vrot.slane %v3758, 5
      %v3864 = vsel %vm1663, %v3862, %v3863
      %v3865 = vrot.slane %v3863, 4
      %v3866 = vrot.slane %v3759, 5
      %v3867 = vsel %vm1663, %v3865, %v3866
      %v3868 = vrot.slane %v3760, 5
      %v3869 = vrot.slane %v3868, 4
      %v3870 = vrot.slane %v3761, 5
      %v3871 = vsel %vm1663, %v3869, %v3870
      %v3872 = vrot.slane %v3870, 4
      %v3873 = vrot.slane %v3762, 5
      %v3874 = vsel %vm1663, %v3872, %v3873
      %v3875 = vrot.slane %v3763, 5
      %v3876 = vrot.slane %v3875, 4
      %v3877 = vrot.slane %v3764, 5
      %v3878 = vsel %vm1663, %v3876, %v3877
      %v3879 = vrot.slane %v3877, 4
      %v3880 = vrot.slane %v3765, 5
      %v3881 = vsel %vm1663, %v3879, %v3880
      %v3882 = vrot.slane %v3766, 5
      %v3883 = vrot.slane %v3882, 4
      %v3884 = vrot.slane %v3767, 5
      %v3885 = vsel %vm1663, %v3883, %v3884
      %v3886 = vrot.slane %v3884, 4
      %v3887 = vrot.slane %v3768, 5
      %v3888 = vsel %vm1663, %v3886, %v3887
      %v3889 = vrot.slane %v3769, 5
      %v3890 = vrot.slane %v3889, 4
      %v3891 = vrot.slane %v3770, 5
      %v3892 = vsel %vm1663, %v3890, %v3891
      %v3893 = vrot.slane %v3891, 4
      %v3894 = vrot.slane %v3771, 5
      %v3895 = vsel %vm1663, %v3893, %v3894
      %v3896 = vrot.slane %v3772, 5
      %v3897 = vrot.slane %v3896, 4
      %v3898 = vrot.slane %v3773, 5
      %v3899 = vsel %vm1663, %v3897, %v3898
      %v3900 = vrot.slane %v3898, 4
      %v3901 = vrot.slane %v3774, 5
      %v3902 = vsel %vm1663, %v3900, %v3901
      %v3903 = vrot.slane %v3775, 5
      %v3904 = vrot.slane %v3903, 4
      %v3905 = vrot.slane %v3776, 5
      %v3906 = vsel %vm1663, %v3904, %v3905
      %v3907 = vrot.slane %v3905, 4
      %v3908 = vrot.slane %v3777, 5
      %v3909 = vsel %vm1663, %v3907, %v3908
      %v3910 = vrot.slane %v3778, 5
      %v3911 = vrot.slane %v3910, 4
      %v3912 = vrot.slane %v3779, 5
      %v3913 = vsel %vm1663, %v3911, %v3912
      %v3914 = vrot.slane %v3912, 4
      %v3915 = vrot.slane %v3780, 5
      %v3916 = vsel %vm1663, %v3914, %v3915
      %v3917 = vrot.slane %v3781, 5
      %v3918 = vrot.slane %v3917, 4
      %v3919 = vrot.slane %v3782, 5
      %v3920 = vsel %vm1663, %v3918, %v3919
      %v3921 = vrot.slane %v3919, 4
      %v3922 = vrot.slane %v3783, 5
      %v3923 = vsel %vm1663, %v3921, %v3922
      %v3924 = vrot.slane %v3784, 5
      %v3925 = vrot.slane %v3924, 4
      %v3926 = vrot.slane %v3785, 5
      %v3927 = vsel %vm1663, %v3925, %v3926
      %v3928 = vrot.slane %v3926, 4
      %v3929 = vrot.slane %v3786, 5
      %v3930 = vsel %vm1663, %v3928, %v3929
      %v3931 = vrot.slane %v3787, 5
      %v3932 = vrot.slane %v3931, 4
      %v3933 = vrot.slane %v3788, 5
      %v3934 = vsel %vm1663, %v3932, %v3933
      %v3935 = vrot.slane %v3933, 4
      %v3936 = vrot.slane %v3789, 5
      %v3937 = vsel %vm1663, %v3935, %v3936
      %v3938 = vrot.slane %v3790, 5
      %v3939 = vrot.slane %v3938, 4
      %v3940 = vrot.slane %v3791, 5
      %v3941 = vsel %vm1663, %v3939, %v3940
      %v3942 = vrot.slane %v3940, 4
      %v3943 = vrot.slane %v3792, 5
      %v3944 = vsel %vm1663, %v3942, %v3943
      %v3945 = vrot.slane %v3793, 5
      %v3946 = vrot.slane %v3945, 4
      %v3947 = vrot.slane %v3794, 5
      %v3948 = vsel %vm1663, %v3946, %v3947
      %v3949 = vrot.slane %v3947, 4
      %v3950 = vrot.slane %v3795, 5
      %v3951 = vsel %vm1663, %v3949, %v3950
      %v3952 = vrot.slane %v3796, 5
      %v3953 = vrot.slane %v3952, 4
      %v3954 = vrot.slane %v3797, 5
      %v3955 = vsel %vm1663, %v3953, %v3954
      %v3956 = vrot.slane %v3954, 4
      %v3957 = vrot.slane %v3798, 5
      %v3958 = vsel %vm1663, %v3956, %v3957
      %3959 = vrot.lane.b32.xlu0 %v3850, 32
      %v3960 = vpop.permute.xlu0 %3959
      %3961 = vrot.lane.b32.xlu0 %v3853, 32
      %v3962 = vpop.permute.xlu0 %3961
      %3963 = vrot.lane.b32.xlu0 %v3857, 32
      %v3964 = vpop.permute.xlu0 %3963
      %3965 = vrot.lane.b32.xlu0 %v3860, 32
      %v3966 = vpop.permute.xlu0 %3965
      %3967 = vrot.lane.b32.xlu0 %v3864, 32
      %v3968 = vpop.permute.xlu0 %3967
      %3969 = vrot.lane.b32.xlu0 %v3867, 32
      %v3970 = vpop.permute.xlu0 %3969
      %3971 = vrot.lane.b32.xlu0 %v3871, 32
      %v3972 = vpop.permute.xlu0 %3971
      %3973 = vrot.lane.b32.xlu0 %v3874, 32
      %v3974 = vpop.permute.xlu0 %3973
      %3975 = vrot.lane.b32.xlu0 %v3878, 32
      %v3976 = vpop.permute.xlu0 %3975
      %3977 = vrot.lane.b32.xlu0 %v3881, 32
      %v3978 = vpop.permute.xlu0 %3977
      %3979 = vrot.lane.b32.xlu0 %v3885, 32
      %v3980 = vpop.permute.xlu0 %3979
      %3981 = vrot.lane.b32.xlu0 %v3888, 32
      %v3982 = vpop.permute.xlu0 %3981
      %3983 = vrot.lane.b32.xlu0 %v3892, 32
      %v3984 = vpop.permute.xlu0 %3983
      %3985 = vrot.lane.b32.xlu0 %v3895, 32
      %v3986 = vpop.permute.xlu0 %3985
      %3987 = vrot.lane.b32.xlu0 %v3899, 32
      %v3988 = vpop.permute.xlu0 %3987
      %3989 = vrot.lane.b32.xlu0 %v3902, 32
      %v3990 = vpop.permute.xlu0 %3989
      %3991 = vrot.lane.b32.xlu0 %v3906, 32
      %v3992 = vpop.permute.xlu0 %3991
      %3993 = vrot.lane.b32.xlu0 %v3909, 32
      %v3994 = vpop.permute.xlu0 %3993
      %3995 = vrot.lane.b32.xlu0 %v3913, 32
      %v3996 = vpop.permute.xlu0 %3995
      %3997 = vrot.lane.b32.xlu0 %v3916, 32
      %v3998 = vpop.permute.xlu0 %3997
      %3999 = vrot.lane.b32.xlu0 %v3920, 32
      %v4000 = vpop.permute.xlu0 %3999
      %4001 = vrot.lane.b32.xlu0 %v3923, 32
      %v4002 = vpop.permute.xlu0 %4001
      %4003 = vrot.lane.b32.xlu0 %v3927, 32
      %v4004 = vpop.permute.xlu0 %4003
      %4005 = vrot.lane.b32.xlu0 %v3930, 32
      %v4006 = vpop.permute.xlu0 %4005
      %4007 = vrot.lane.b32.xlu0 %v3934, 32
      %v4008 = vpop.permute.xlu0 %4007
      %4009 = vrot.lane.b32.xlu0 %v3937, 32
      %v4010 = vpop.permute.xlu0 %4009
      %4011 = vrot.lane.b32.xlu0 %v3941, 32
      %v4012 = vpop.permute.xlu0 %4011
      %4013 = vrot.lane.b32.xlu0 %v3944, 32
      %v4014 = vpop.permute.xlu0 %4013
      %4015 = vrot.lane.b32.xlu0 %v3948, 32
      %v4016 = vpop.permute.xlu0 %4015
      %4017 = vrot.lane.b32.xlu0 %v3951, 32
      %v4018 = vpop.permute.xlu0 %4017
      %4019 = vrot.lane.b32.xlu0 %v3955, 32
      %v4020 = vpop.permute.xlu0 %4019
      %4021 = vrot.lane.b32.xlu0 %v3958, 32
      %v4022 = vpop.permute.xlu0 %4021
      %vm4055 = vcmask 290048
      %4056 = vst.msk [vmem:[#allocation4] sm:$0xf] %vm4055, %v3960
      %4057 = vst.msk [vmem:[#allocation4 + $0x4] sm:$0xf] %vm4055, %v3962
      %4058 = vst.msk [vmem:[#allocation4 + $0x8] sm:$0xf] %vm4055, %v3964
      %4059 = vst.msk [vmem:[#allocation4 + $0xc] sm:$0xf] %vm4055, %v3966
      %4060 = vst.msk [vmem:[#allocation4 + $0x10] sm:$0xf] %vm4055, %v3968
      %4061 = vst.msk [vmem:[#allocation4 + $0x14] sm:$0xf] %vm4055, %v3970
      %4062 = vst.msk [vmem:[#allocation4 + $0x18] sm:$0xf] %vm4055, %v3972
      %4063 = vst.msk [vmem:[#allocation4 + $0x1c] sm:$0xf] %vm4055, %v3974
      %4064 = vst.msk [vmem:[#allocation4 + $0x20] sm:$0xf] %vm4055, %v3976
      %4065 = vst.msk [vmem:[#allocation4 + $0x24] sm:$0xf] %vm4055, %v3978
      %4066 = vst.msk [vmem:[#allocation4 + $0x28] sm:$0xf] %vm4055, %v3980
      %4067 = vst.msk [vmem:[#allocation4 + $0x2c] sm:$0xf] %vm4055, %v3982
      %4068 = vst.msk [vmem:[#allocation4 + $0x30] sm:$0xf] %vm4055, %v3984
      %4069 = vst.msk [vmem:[#allocation4 + $0x34] sm:$0xf] %vm4055, %v3986
      %4070 = vst.msk [vmem:[#allocation4 + $0x38] sm:$0xf] %vm4055, %v3988
      %4071 = vst.msk [vmem:[#allocation4 + $0x3c] sm:$0xf] %vm4055, %v3990
      %4072 = vst.msk [vmem:[#allocation4 + $0x40] sm:$0xf] %vm4055, %v3992
      %4073 = vst.msk [vmem:[#allocation4 + $0x44] sm:$0xf] %vm4055, %v3994
      %4074 = vst.msk [vmem:[#allocation4 + $0x48] sm:$0xf] %vm4055, %v3996
      %4075 = vst.msk [vmem:[#allocation4 + $0x4c] sm:$0xf] %vm4055, %v3998
      %4076 = vst.msk [vmem:[#allocation4 + $0x50] sm:$0xf] %vm4055, %v4000
      %4077 = vst.msk [vmem:[#allocation4 + $0x54] sm:$0xf] %vm4055, %v4002
      %4078 = vst.msk [vmem:[#allocation4 + $0x58] sm:$0xf] %vm4055, %v4004
      %4079 = vst.msk [vmem:[#allocation4 + $0x5c] sm:$0xf] %vm4055, %v4006
      %4080 = vst.msk [vmem:[#allocation4 + $0x60] sm:$0xf] %vm4055, %v4008
      %4081 = vst.msk [vmem:[#allocation4 + $0x64] sm:$0xf] %vm4055, %v4010
      %4082 = vst.msk [vmem:[#allocation4 + $0x68] sm:$0xf] %vm4055, %v4012
      %4083 = vst.msk [vmem:[#allocation4 + $0x6c] sm:$0xf] %vm4055, %v4014
      %4084 = vst.msk [vmem:[#allocation4 + $0x70] sm:$0xf] %vm4055, %v4016
      %4085 = vst.msk [vmem:[#allocation4 + $0x74] sm:$0xf] %vm4055, %v4018
      %4086 = vst.msk [vmem:[#allocation4 + $0x78] sm:$0xf] %vm4055, %v4020
      %4087 = vst.msk [vmem:[#allocation4 + $0x7c] sm:$0xf] %vm4055, %v4022
      %v4088 = vld [vmem:[#allocation4] sm:$0xf]
      %v4089 = vld [vmem:[#allocation4 + $0x4] sm:$0xf]
      %v4090 = vld [vmem:[#allocation4 + $0x8] sm:$0xf]
      %v4091 = vld [vmem:[#allocation4 + $0xc] sm:$0xf]
      %v4092 = vld [vmem:[#allocation4 + $0x10] sm:$0xf]
      %v4093 = vld [vmem:[#allocation4 + $0x14] sm:$0xf]
      %v4094 = vld [vmem:[#allocation4 + $0x18] sm:$0xf]
      %v4095 = vld [vmem:[#allocation4 + $0x1c] sm:$0xf]
      %v4096 = vld [vmem:[#allocation4 + $0x20] sm:$0xf]
      %v4097 = vld [vmem:[#allocation4 + $0x24] sm:$0xf]
      %v4098 = vld [vmem:[#allocation4 + $0x28] sm:$0xf]
      %v4099 = vld [vmem:[#allocation4 + $0x2c] sm:$0xf]
      %v4100 = vld [vmem:[#allocation4 + $0x30] sm:$0xf]
      %v4101 = vld [vmem:[#allocation4 + $0x34] sm:$0xf]
      %v4102 = vld [vmem:[#allocation4 + $0x38] sm:$0xf]
      %v4103 = vld [vmem:[#allocation4 + $0x3c] sm:$0xf]
      %v4104 = vld [vmem:[#allocation4 + $0x40] sm:$0xf]
      %v4105 = vld [vmem:[#allocation4 + $0x44] sm:$0xf]
      %v4106 = vld [vmem:[#allocation4 + $0x48] sm:$0xf]
      %v4107 = vld [vmem:[#allocation4 + $0x4c] sm:$0xf]
      %v4108 = vld [vmem:[#allocation4 + $0x50] sm:$0xf]
      %v4109 = vld [vmem:[#allocation4 + $0x54] sm:$0xf]
      %v4110 = vld [vmem:[#allocation4 + $0x58] sm:$0xf]
      %v4111 = vld [vmem:[#allocation4 + $0x5c] sm:$0xf]
      %v4112 = vld [vmem:[#allocation4 + $0x60] sm:$0xf]
      %v4113 = vld [vmem:[#allocation4 + $0x64] sm:$0xf]
      %v4114 = vld [vmem:[#allocation4 + $0x68] sm:$0xf]
      %v4115 = vld [vmem:[#allocation4 + $0x6c] sm:$0xf]
      %v4116 = vld [vmem:[#allocation4 + $0x70] sm:$0xf]
      %v4117 = vld [vmem:[#allocation4 + $0x74] sm:$0xf]
      %v4118 = vld [vmem:[#allocation4 + $0x78] sm:$0xf]
      %v4119 = vld [vmem:[#allocation4 + $0x7c] sm:$0xf]
      %v4120 = vld [vmem:[%s1] sm:$0xf]
      %v4121 = vld [vmem:[%s1 + $0x4] sm:$0xf]
      %v4122 = vld [vmem:[%s1 + $0x8] sm:$0xf]
      %v4123 = vld [vmem:[%s1 + $0xc] sm:$0xf]
      %v4124 = vld [vmem:[%s1 + $0x10] sm:$0x3]
      %v4125 = vld [vmem:[%s3] sm:$0x1]
      %v4127 = vperm.slane %v4125, 0
      %v4161 = vunpack.c.l.b16 %v4088
      %v4162 = vunpack.c.l.b16 %v4089
      %v4163 = vunpack.c.l.b16 %v4090
      %v4164 = vunpack.c.l.b16 %v4091
      %v4165 = vunpack.c.l.b16 %v4092
      %v4166 = vunpack.c.l.b16 %v4093
      %v4167 = vunpack.c.l.b16 %v4094
      %v4168 = vunpack.c.l.b16 %v4095
      %v4169 = vunpack.c.l.b16 %v4096
      %v4170 = vunpack.c.l.b16 %v4097
      %v4171 = vunpack.c.l.b16 %v4098
      %v4172 = vunpack.c.l.b16 %v4099
      %v4173 = vunpack.c.l.b16 %v4100
      %v4174 = vunpack.c.l.b16 %v4101
      %v4175 = vunpack.c.l.b16 %v4102
      %v4176 = vunpack.c.l.b16 %v4103
      %v4177 = vunpack.c.l.b16 %v4104
      %v4178 = vunpack.c.l.b16 %v4105
      %v4179 = vunpack.c.l.b16 %v4106
      %v4180 = vunpack.c.l.b16 %v4107
      %v4181 = vunpack.c.l.b16 %v4108
      %v4182 = vunpack.c.l.b16 %v4109
      %v4183 = vunpack.c.l.b16 %v4110
      %v4184 = vunpack.c.l.b16 %v4111
      %v4185 = vunpack.c.l.b16 %v4112
      %v4186 = vunpack.c.l.b16 %v4113
      %v4187 = vunpack.c.l.b16 %v4114
      %v4188 = vunpack.c.l.b16 %v4115
      %v4189 = vunpack.c.l.b16 %v4116
      %v4190 = vunpack.c.l.b16 %v4117
      %v4191 = vunpack.c.l.b16 %v4118
      %v4192 = vunpack.c.l.b16 %v4119
      %v4193 = vpack.c.b16 %v4162, %v4161
      %v4194 = vpack.c.b16 %v4164, %v4163
      %v4195 = vpack.c.b16 %v4166, %v4165
      %v4196 = vpack.c.b16 %v4168, %v4167
      %v4197 = vpack.c.b16 %v4170, %v4169
      %v4198 = vpack.c.b16 %v4172, %v4171
      %v4199 = vpack.c.b16 %v4174, %v4173
      %v4200 = vpack.c.b16 %v4176, %v4175
      %v4201 = vpack.c.b16 %v4178, %v4177
      %v4202 = vpack.c.b16 %v4180, %v4179
      %v4203 = vpack.c.b16 %v4182, %v4181
      %v4204 = vpack.c.b16 %v4184, %v4183
      %v4205 = vpack.c.b16 %v4186, %v4185
      %v4206 = vpack.c.b16 %v4188, %v4187
      %v4207 = vpack.c.b16 %v4190, %v4189
      %v4208 = vpack.c.b16 %v4192, %v4191
      %v4214 = vunpack.c.l.b16 %v4120
      %v4215 = vunpack.c.l.b16 %v4121
      %v4216 = vunpack.c.l.b16 %v4122
      %v4217 = vunpack.c.l.b16 %v4123
      %v4218 = vunpack.c.l.b16 %v4124
      %v4219 = vpack.c.b16 %v4215, %v4214
      %v4220 = vpack.c.b16 %v4217, %v4216
      %v4221 = vpack.c.b16 %v4218, %v4218
      %vm4224 = vcmask 293888
      %v4226 = vsel %vm4224, %v4193, 0
      %v4229 = vsel %vm4224, %v4194, 0
      %v4232 = vsel %vm4224, %v4195, 0
      %v4235 = vsel %vm4224, %v4196, 0
      %v4238 = vsel %vm4224, %v4197, 0
      %v4241 = vsel %vm4224, %v4198, 0
      %v4244 = vsel %vm4224, %v4199, 0
      %v4247 = vsel %vm4224, %v4200, 0
      %v4250 = vsel %vm4224, %v4201, 0
      %v4253 = vsel %vm4224, %v4202, 0
      %v4256 = vsel %vm4224, %v4203, 0
      %v4259 = vsel %vm4224, %v4204, 0
      %v4262 = vsel %vm4224, %v4205, 0
      %v4265 = vsel %vm4224, %v4206, 0
      %v4268 = vsel %vm4224, %v4207, 0
      %v4271 = vsel %vm4224, %v4208, 0
      %vm4273 = vcmask 1041408
      %v4275 = vsel %vm4273, %v4221, 0
      %4277 = vmatpush.bf16.msra.mxu0 0
      %4278 = vmatpush.bf16.msra.mxu0 0
      %4279 = vmatpush.bf16.msra.mxu0 0
      %4280 = vmatpush.bf16.msra.mxu0 0
      %4281 = vmatpush.bf16.msra.mxu0 0
      %4282 = vmatpush.bf16.msra.mxu0 %v4275
      %4283 = vmatpush.bf16.msra.mxu0 %v4220
      %4284 = vmatpush.bf16.msra.mxu0 %v4219
      %4285 = vmatmul.bf16.gmra.mxu0 %v4226
      %v4286 = vpop.f32.mrf.mxu0
      %v4287 = vadd.f32 %v4127, %v4286
      %v4288 = vpop.f32.mrf.mxu0
      %v4289 = vadd.f32 %v4127, %v4288
      %4290 = vmatmul.bf16.gmra.mxu0 %v4229
      %v4291 = vpop.f32.mrf.mxu0
      %v4292 = vadd.f32 %v4127, %v4291
      %v4293 = vpop.f32.mrf.mxu0
      %v4294 = vadd.f32 %v4127, %v4293
      %4295 = vmatmul.bf16.gmra.mxu0 %v4232
      %v4296 = vpop.f32.mrf.mxu0
      %v4297 = vadd.f32 %v4127, %v4296
      %v4298 = vpop.f32.mrf.mxu0
      %v4299 = vadd.f32 %v4127, %v4298
      %4300 = vmatmul.bf16.gmra.mxu0 %v4235
      %v4301 = vpop.f32.mrf.mxu0
      %v4302 = vadd.f32 %v4127, %v4301
      %v4303 = vpop.f32.mrf.mxu0
      %v4304 = vadd.f32 %v4127, %v4303
      %4305 = vmatmul.bf16.gmra.mxu0 %v4238
      %v4306 = vpop.f32.mrf.mxu0
      %v4307 = vadd.f32 %v4127, %v4306
      %v4308 = vpop.f32.mrf.mxu0
      %v4309 = vadd.f32 %v4127, %v4308
      %4310 = vmatmul.bf16.gmra.mxu0 %v4241
      %v4311 = vpop.f32.mrf.mxu0
      %v4312 = vadd.f32 %v4127, %v4311
      %v4313 = vpop.f32.mrf.mxu0
      %v4314 = vadd.f32 %v4127, %v4313
      %4315 = vmatmul.bf16.gmra.mxu0 %v4244
      %v4316 = vpop.f32.mrf.mxu0
      %v4317 = vadd.f32 %v4127, %v4316
      %v4318 = vpop.f32.mrf.mxu0
      %v4319 = vadd.f32 %v4127, %v4318
      %4320 = vmatmul.bf16.gmra.mxu0 %v4247
      %v4321 = vpop.f32.mrf.mxu0
      %v4322 = vadd.f32 %v4127, %v4321
      %v4323 = vpop.f32.mrf.mxu0
      %v4324 = vadd.f32 %v4127, %v4323
      %4325 = vmatmul.bf16.gmra.mxu0 %v4250
      %v4326 = vpop.f32.mrf.mxu0
      %v4327 = vadd.f32 %v4127, %v4326
      %v4328 = vpop.f32.mrf.mxu0
      %v4329 = vadd.f32 %v4127, %v4328
      %4330 = vmatmul.bf16.gmra.mxu0 %v4253
      %v4331 = vpop.f32.mrf.mxu0
      %v4332 = vadd.f32 %v4127, %v4331
      %v4333 = vpop.f32.mrf.mxu0
      %v4334 = vadd.f32 %v4127, %v4333
      %4335 = vmatmul.bf16.gmra.mxu0 %v4256
      %v4336 = vpop.f32.mrf.mxu0
      %v4337 = vadd.f32 %v4127, %v4336
      %v4338 = vpop.f32.mrf.mxu0
      %v4339 = vadd.f32 %v4127, %v4338
      %4340 = vmatmul.bf16.gmra.mxu0 %v4259
      %v4341 = vpop.f32.mrf.mxu0
      %v4342 = vadd.f32 %v4127, %v4341
      %v4343 = vpop.f32.mrf.mxu0
      %v4344 = vadd.f32 %v4127, %v4343
      %4345 = vmatmul.bf16.gmra.mxu0 %v4262
      %v4346 = vpop.f32.mrf.mxu0
      %v4347 = vadd.f32 %v4127, %v4346
      %v4348 = vpop.f32.mrf.mxu0
      %v4349 = vadd.f32 %v4127, %v4348
      %4350 = vmatmul.bf16.gmra.mxu0 %v4265
      %v4351 = vpop.f32.mrf.mxu0
      %v4352 = vadd.f32 %v4127, %v4351
      %v4353 = vpop.f32.mrf.mxu0
      %v4354 = vadd.f32 %v4127, %v4353
      %4355 = vmatmul.bf16.gmra.mxu0 %v4268
      %v4356 = vpop.f32.mrf.mxu0
      %v4357 = vadd.f32 %v4127, %v4356
      %v4358 = vpop.f32.mrf.mxu0
      %v4359 = vadd.f32 %v4127, %v4358
      %4360 = vmatmul.bf16.gmra.mxu0 %v4271
      %v4361 = vpop.f32.mrf.mxu0
      %v4362 = vadd.f32 %v4127, %v4361
      %v4363 = vpop.f32.mrf.mxu0
      %v4364 = vadd.f32 %v4127, %v4363
      %4365 = vdwg.mxu0
      %v4366 = vmax.f32 %v4287, 0.0
      %v4367 = vmax.f32 %v4289, 0.0
      %v4368 = vmax.f32 %v4292, 0.0
      %v4369 = vmax.f32 %v4294, 0.0
      %v4370 = vmax.f32 %v4297, 0.0
      %v4371 = vmax.f32 %v4299, 0.0
      %v4372 = vmax.f32 %v4302, 0.0
      %v4373 = vmax.f32 %v4304, 0.0
      %v4374 = vmax.f32 %v4307, 0.0
      %v4375 = vmax.f32 %v4309, 0.0
      %v4376 = vmax.f32 %v4312, 0.0
      %v4377 = vmax.f32 %v4314, 0.0
      %v4378 = vmax.f32 %v4317, 0.0
      %v4379 = vmax.f32 %v4319, 0.0
      %v4380 = vmax.f32 %v4322, 0.0
      %v4381 = vmax.f32 %v4324, 0.0
      %v4382 = vmax.f32 %v4327, 0.0
      %v4383 = vmax.f32 %v4329, 0.0
      %v4384 = vmax.f32 %v4332, 0.0
      %v4385 = vmax.f32 %v4334, 0.0
      %v4386 = vmax.f32 %v4337, 0.0
      %v4387 = vmax.f32 %v4339, 0.0
      %v4388 = vmax.f32 %v4342, 0.0
      %v4389 = vmax.f32 %v4344, 0.0
      %v4390 = vmax.f32 %v4347, 0.0
      %v4391 = vmax.f32 %v4349, 0.0
      %v4392 = vmax.f32 %v4352, 0.0
      %v4393 = vmax.f32 %v4354, 0.0
      %v4394 = vmax.f32 %v4357, 0.0
      %v4395 = vmax.f32 %v4359, 0.0
      %v4396 = vmax.f32 %v4362, 0.0
      %v4397 = vmax.f32 %v4364, 0.0
      %v4398 = vpack.c.bf16 %v4366, %v4366
      %v4399 = vpack.c.bf16 %v4367, %v4367
      %v4400 = vpack.c.bf16 %v4368, %v4368
      %v4401 = vpack.c.bf16 %v4369, %v4369
      %v4402 = vpack.c.bf16 %v4370, %v4370
      %v4403 = vpack.c.bf16 %v4371, %v4371
      %v4404 = vpack.c.bf16 %v4372, %v4372
      %v4405 = vpack.c.bf16 %v4373, %v4373
      %v4406 = vpack.c.bf16 %v4374, %v4374
      %v4407 = vpack.c.bf16 %v4375, %v4375
      %v4408 = vpack.c.bf16 %v4376, %v4376
      %v4409 = vpack.c.bf16 %v4377, %v4377
      %v4410 = vpack.c.bf16 %v4378, %v4378
      %v4411 = vpack.c.bf16 %v4379, %v4379
      %v4412 = vpack.c.bf16 %v4380, %v4380
      %v4413 = vpack.c.bf16 %v4381, %v4381
      %v4414 = vpack.c.bf16 %v4382, %v4382
      %v4415 = vpack.c.bf16 %v4383, %v4383
      %v4416 = vpack.c.bf16 %v4384, %v4384
      %v4417 = vpack.c.bf16 %v4385, %v4385
      %v4418 = vpack.c.bf16 %v4386, %v4386
      %v4419 = vpack.c.bf16 %v4387, %v4387
      %v4420 = vpack.c.bf16 %v4388, %v4388
      %v4421 = vpack.c.bf16 %v4389, %v4389
      %v4422 = vpack.c.bf16 %v4390, %v4390
      %v4423 = vpack.c.bf16 %v4391, %v4391
      %v4424 = vpack.c.bf16 %v4392, %v4392
      %v4425 = vpack.c.bf16 %v4393, %v4393
      %v4426 = vpack.c.bf16 %v4394, %v4394
      %v4427 = vpack.c.bf16 %v4395, %v4395
      %v4428 = vpack.c.bf16 %v4396, %v4396
      %v4429 = vpack.c.bf16 %v4397, %v4397
      %v4431 = vshrl.u32 %v4398, 16
      %v4433 = vrot.slane %v4431, 7
      %v4434 = vshll.u32 %v4398, 16
      %v4436 = vor.u32 %v4433, %v4434
      %v4437 = vrot.slane %v4433, 4
      %v4439 = vshrl.u32 %v4399, 16
      %v4441 = vrot.slane %v4439, 7
      %v4442 = vshll.u32 %v4399, 16
      %v4444 = vor.u32 %v4441, %v4442
      %v4445 = vsel %vm501, %v4437, %v4444
      %v4446 = vrot.slane %v4441, 4
      %v4448 = vshrl.u32 %v4400, 16
      %v4450 = vrot.slane %v4448, 7
      %v4451 = vshll.u32 %v4400, 16
      %v4453 = vor.u32 %v4450, %v4451
      %v4454 = vrot.slane %v4450, 4
      %v4456 = vshrl.u32 %v4401, 16
      %v4458 = vrot.slane %v4456, 7
      %v4459 = vshll.u32 %v4401, 16
      %v4461 = vor.u32 %v4458, %v4459
      %v4462 = vsel %vm501, %v4454, %v4461
      %v4463 = vrot.slane %v4458, 4
      %v4465 = vshrl.u32 %v4402, 16
      %v4467 = vrot.slane %v4465, 7
      %v4468 = vshll.u32 %v4402, 16
      %v4470 = vor.u32 %v4467, %v4468
      %v4471 = vrot.slane %v4467, 4
      %v4473 = vshrl.u32 %v4403, 16
      %v4475 = vrot.slane %v4473, 7
      %v4476 = vshll.u32 %v4403, 16
      %v4478 = vor.u32 %v4475, %v4476
      %v4479 = vsel %vm501, %v4471, %v4478
      %v4480 = vrot.slane %v4475, 4
      %v4482 = vshrl.u32 %v4404, 16
      %v4484 = vrot.slane %v4482, 7
      %v4485 = vshll.u32 %v4404, 16
      %v4487 = vor.u32 %v4484, %v4485
      %v4488 = vrot.slane %v4484, 4
      %v4490 = vshrl.u32 %v4405, 16
      %v4492 = vrot.slane %v4490, 7
      %v4493 = vshll.u32 %v4405, 16
      %v4495 = vor.u32 %v4492, %v4493
      %v4496 = vsel %vm501, %v4488, %v4495
      %v4497 = vrot.slane %v4492, 4
      %v4499 = vshrl.u32 %v4406, 16
      %v4501 = vrot.slane %v4499, 7
      %v4502 = vshll.u32 %v4406, 16
      %v4504 = vor.u32 %v4501, %v4502
      %v4505 = vrot.slane %v4501, 4
      %v4507 = vshrl.u32 %v4407, 16
      %v4509 = vrot.slane %v4507, 7
      %v4510 = vshll.u32 %v4407, 16
      %v4512 = vor.u32 %v4509, %v4510
      %v4513 = vsel %vm501, %v4505, %v4512
      %v4514 = vrot.slane %v4509, 4
      %v4516 = vshrl.u32 %v4408, 16
      %v4518 = vrot.slane %v4516, 7
      %v4519 = vshll.u32 %v4408, 16
      %v4521 = vor.u32 %v4518, %v4519
      %v4522 = vrot.slane %v4518, 4
      %v4524 = vshrl.u32 %v4409, 16
      %v4526 = vrot.slane %v4524, 7
      %v4527 = vshll.u32 %v4409, 16
      %v4529 = vor.u32 %v4526, %v4527
      %v4530 = vsel %vm501, %v4522, %v4529
      %v4531 = vrot.slane %v4526, 4
      %v4533 = vshrl.u32 %v4410, 16
      %v4535 = vrot.slane %v4533, 7
      %v4536 = vshll.u32 %v4410, 16
      %v4538 = vor.u32 %v4535, %v4536
      %v4539 = vrot.slane %v4535, 4
      %v4541 = vshrl.u32 %v4411, 16
      %v4543 = vrot.slane %v4541, 7
      %v4544 = vshll.u32 %v4411, 16
      %v4546 = vor.u32 %v4543, %v4544
      %v4547 = vsel %vm501, %v4539, %v4546
      %v4548 = vrot.slane %v4543, 4
      %v4550 = vshrl.u32 %v4412, 16
      %v4552 = vrot.slane %v4550, 7
      %v4553 = vshll.u32 %v4412, 16
      %v4555 = vor.u32 %v4552, %v4553
      %v4556 = vrot.slane %v4552, 4
      %v4558 = vshrl.u32 %v4413, 16
      %v4560 = vrot.slane %v4558, 7
      %v4561 = vshll.u32 %v4413, 16
      %v4563 = vor.u32 %v4560, %v4561
      %v4564 = vsel %vm501, %v4556, %v4563
      %v4565 = vrot.slane %v4560, 4
      %v4567 = vshrl.u32 %v4414, 16
      %v4569 = vrot.slane %v4567, 7
      %v4570 = vshll.u32 %v4414, 16
      %v4572 = vor.u32 %v4569, %v4570
      %v4573 = vrot.slane %v4569, 4
      %v4575 = vshrl.u32 %v4415, 16
      %v4577 = vrot.slane %v4575, 7
      %v4578 = vshll.u32 %v4415, 16
      %v4580 = vor.u32 %v4577, %v4578
      %v4581 = vsel %vm501, %v4573, %v4580
      %v4582 = vrot.slane %v4577, 4
      %v4584 = vshrl.u32 %v4416, 16
      %v4586 = vrot.slane %v4584, 7
      %v4587 = vshll.u32 %v4416, 16
      %v4589 = vor.u32 %v4586, %v4587
      %v4590 = vrot.slane %v4586, 4
      %v4592 = vshrl.u32 %v4417, 16
      %v4594 = vrot.slane %v4592, 7
      %v4595 = vshll.u32 %v4417, 16
      %v4597 = vor.u32 %v4594, %v4595
      %v4598 = vsel %vm501, %v4590, %v4597
      %v4599 = vrot.slane %v4594, 4
      %v4601 = vshrl.u32 %v4418, 16
      %v4603 = vrot.slane %v4601, 7
      %v4604 = vshll.u32 %v4418, 16
      %v4606 = vor.u32 %v4603, %v4604
      %v4607 = vrot.slane %v4603, 4
      %v4609 = vshrl.u32 %v4419, 16
      %v4611 = vrot.slane %v4609, 7
      %v4612 = vshll.u32 %v4419, 16
      %v4614 = vor.u32 %v4611, %v4612
      %v4615 = vsel %vm501, %v4607, %v4614
      %v4616 = vrot.slane %v4611, 4
      %v4618 = vshrl.u32 %v4420, 16
      %v4620 = vrot.slane %v4618, 7
      %v4621 = vshll.u32 %v4420, 16
      %v4623 = vor.u32 %v4620, %v4621
      %v4624 = vrot.slane %v4620, 4
      %v4626 = vshrl.u32 %v4421, 16
      %v4628 = vrot.slane %v4626, 7
      %v4629 = vshll.u32 %v4421, 16
      %v4631 = vor.u32 %v4628, %v4629
      %v4632 = vsel %vm501, %v4624, %v4631
      %v4633 = vrot.slane %v4628, 4
      %v4635 = vshrl.u32 %v4422, 16
      %v4637 = vrot.slane %v4635, 7
      %v4638 = vshll.u32 %v4422, 16
      %v4640 = vor.u32 %v4637, %v4638
      %v4641 = vrot.slane %v4637, 4
      %v4643 = vshrl.u32 %v4423, 16
      %v4645 = vrot.slane %v4643, 7
      %v4646 = vshll.u32 %v4423, 16
      %v4648 = vor.u32 %v4645, %v4646
      %v4649 = vsel %vm501, %v4641, %v4648
      %v4650 = vrot.slane %v4645, 4
      %v4652 = vshrl.u32 %v4424, 16
      %v4654 = vrot.slane %v4652, 7
      %v4655 = vshll.u32 %v4424, 16
      %v4657 = vor.u32 %v4654, %v4655
      %v4658 = vrot.slane %v4654, 4
      %v4660 = vshrl.u32 %v4425, 16
      %v4662 = vrot.slane %v4660, 7
      %v4663 = vshll.u32 %v4425, 16
      %v4665 = vor.u32 %v4662, %v4663
      %v4666 = vsel %vm501, %v4658, %v4665
      %v4667 = vrot.slane %v4662, 4
      %v4669 = vshrl.u32 %v4426, 16
      %v4671 = vrot.slane %v4669, 7
      %v4672 = vshll.u32 %v4426, 16
      %v4674 = vor.u32 %v4671, %v4672
      %v4675 = vrot.slane %v4671, 4
      %v4677 = vshrl.u32 %v4427, 16
      %v4679 = vrot.slane %v4677, 7
      %v4680 = vshll.u32 %v4427, 16
      %v4682 = vor.u32 %v4679, %v4680
      %v4683 = vsel %vm501, %v4675, %v4682
      %v4684 = vrot.slane %v4679, 4
      %v4686 = vshrl.u32 %v4428, 16
      %v4688 = vrot.slane %v4686, 7
      %v4689 = vshll.u32 %v4428, 16
      %v4691 = vor.u32 %v4688, %v4689
      %v4692 = vrot.slane %v4688, 4
      %v4694 = vshrl.u32 %v4429, 16
      %v4696 = vrot.slane %v4694, 7
      %v4697 = vshll.u32 %v4429, 16
      %v4699 = vor.u32 %v4696, %v4697
      %v4700 = vsel %vm501, %v4692, %v4699
      %v4701 = vrot.slane %v4696, 4
      %s4750 = scalar_lea.vmem [#allocation3], 12
      %vm4751 = vcmask 60416
      %vm4752 = vmand %vm4751, %vm292
      %v4753 = vld [vmem:[%s4750] sm:$0xf]
      %v4754 = vsel %vm4752, %v4436, %v4753
      %4755 = vst [vmem:[%s4750] sm:$0xf] %v4754
      %4756 = vst.msk [vmem:[%s4750 + $0x4] sm:$0xf] %vm348, %v4445
      %v4757 = vld [vmem:[%s4750 + $0x8] sm:$0x1]
      %v4758 = vsel %vm358, %v4446, %v4757
      %4759 = vst [vmem:[%s4750 + $0x8] sm:$0x1] %v4758
      %v4760 = vld [vmem:[%s4750 + $0xc] sm:$0xf]
      %v4761 = vsel %vm4752, %v4453, %v4760
      %4762 = vst [vmem:[%s4750 + $0xc] sm:$0xf] %v4761
      %4763 = vst.msk [vmem:[%s4750 + $0x10] sm:$0xf] %vm348, %v4462
      %v4764 = vld [vmem:[%s4750 + $0x14] sm:$0x1]
      %v4765 = vsel %vm358, %v4463, %v4764
      %4766 = vst [vmem:[%s4750 + $0x14] sm:$0x1] %v4765
      %v4767 = vld [vmem:[%s4750 + $0x18] sm:$0xf]
      %v4768 = vsel %vm4752, %v4470, %v4767
      %4769 = vst [vmem:[%s4750 + $0x18] sm:$0xf] %v4768
      %4770 = vst.msk [vmem:[%s4750 + $0x1c] sm:$0xf] %vm348, %v4479
      %v4771 = vld [vmem:[%s4750 + $0x20] sm:$0x1]
      %v4772 = vsel %vm358, %v4480, %v4771
      %4773 = vst [vmem:[%s4750 + $0x20] sm:$0x1] %v4772
      %v4774 = vld [vmem:[%s4750 + $0x24] sm:$0xf]
      %v4775 = vsel %vm4752, %v4487, %v4774
      %4776 = vst [vmem:[%s4750 + $0x24] sm:$0xf] %v4775
      %4777 = vst.msk [vmem:[%s4750 + $0x28] sm:$0xf] %vm348, %v4496
      %v4778 = vld [vmem:[%s4750 + $0x2c] sm:$0x1]
      %v4779 = vsel %vm358, %v4497, %v4778
      %4780 = vst [vmem:[%s4750 + $0x2c] sm:$0x1] %v4779
      %v4781 = vld [vmem:[%s4750 + $0x30] sm:$0xf]
      %v4782 = vsel %vm4752, %v4504, %v4781
      %4783 = vst [vmem:[%s4750 + $0x30] sm:$0xf] %v4782
      %4784 = vst.msk [vmem:[%s4750 + $0x34] sm:$0xf] %vm348, %v4513
      %v4785 = vld [vmem:[%s4750 + $0x38] sm:$0x1]
      %v4786 = vsel %vm358, %v4514, %v4785
      %4787 = vst [vmem:[%s4750 + $0x38] sm:$0x1] %v4786
      %v4788 = vld [vmem:[%s4750 + $0x3c] sm:$0xf]
      %v4789 = vsel %vm4752, %v4521, %v4788
      %4790 = vst [vmem:[%s4750 + $0x3c] sm:$0xf] %v4789
      %4791 = vst.msk [vmem:[%s4750 + $0x40] sm:$0xf] %vm348, %v4530
      %v4792 = vld [vmem:[%s4750 + $0x44] sm:$0x1]
      %v4793 = vsel %vm358, %v4531, %v4792
      %4794 = vst [vmem:[%s4750 + $0x44] sm:$0x1] %v4793
      %v4795 = vld [vmem:[%s4750 + $0x48] sm:$0xf]
      %v4796 = vsel %vm4752, %v4538, %v4795
      %4797 = vst [vmem:[%s4750 + $0x48] sm:$0xf] %v4796
      %4798 = vst.msk [vmem:[%s4750 + $0x4c] sm:$0xf] %vm348, %v4547
      %v4799 = vld [vmem:[%s4750 + $0x50] sm:$0x1]
      %v4800 = vsel %vm358, %v4548, %v4799
      %4801 = vst [vmem:[%s4750 + $0x50] sm:$0x1] %v4800
      %v4802 = vld [vmem:[%s4750 + $0x54] sm:$0xf]
      %v4803 = vsel %vm4752, %v4555, %v4802
      %4804 = vst [vmem:[%s4750 + $0x54] sm:$0xf] %v4803
      %4805 = vst.msk [vmem:[%s4750 + $0x58] sm:$0xf] %vm348, %v4564
      %v4806 = vld [vmem:[%s4750 + $0x5c] sm:$0x1]
      %v4807 = vsel %vm358, %v4565, %v4806
      %4808 = vst [vmem:[%s4750 + $0x5c] sm:$0x1] %v4807
      %v4809 = vld [vmem:[%s4750 + $0x60] sm:$0xf]
      %v4810 = vsel %vm4752, %v4572, %v4809
      %4811 = vst [vmem:[%s4750 + $0x60] sm:$0xf] %v4810
      %4812 = vst.msk [vmem:[%s4750 + $0x64] sm:$0xf] %vm348, %v4581
      %v4813 = vld [vmem:[%s4750 + $0x68] sm:$0x1]
      %v4814 = vsel %vm358, %v4582, %v4813
      %4815 = vst [vmem:[%s4750 + $0x68] sm:$0x1] %v4814
      %v4816 = vld [vmem:[%s4750 + $0x6c] sm:$0xf]
      %v4817 = vsel %vm4752, %v4589, %v4816
      %4818 = vst [vmem:[%s4750 + $0x6c] sm:$0xf] %v4817
      %4819 = vst.msk [vmem:[%s4750 + $0x70] sm:$0xf] %vm348, %v4598
      %v4820 = vld [vmem:[%s4750 + $0x74] sm:$0x1]
      %v4821 = vsel %vm358, %v4599, %v4820
      %4822 = vst [vmem:[%s4750 + $0x74] sm:$0x1] %v4821
      %v4823 = vld [vmem:[%s4750 + $0x78] sm:$0xf]
      %v4824 = vsel %vm4752, %v4606, %v4823
      %4825 = vst [vmem:[%s4750 + $0x78] sm:$0xf] %v4824
      %4826 = vst.msk [vmem:[%s4750 + $0x7c] sm:$0xf] %vm348, %v4615
      %v4827 = vld [vmem:[%s4750 + $0x80] sm:$0x1]
      %v4828 = vsel %vm358, %v4616, %v4827
      %4829 = vst [vmem:[%s4750 + $0x80] sm:$0x1] %v4828
      %v4830 = vld [vmem:[%s4750 + $0x84] sm:$0xf]
      %v4831 = vsel %vm4752, %v4623, %v4830
      %4832 = vst [vmem:[%s4750 + $0x84] sm:$0xf] %v4831
      %4833 = vst.msk [vmem:[%s4750 + $0x88] sm:$0xf] %vm348, %v4632
      %v4834 = vld [vmem:[%s4750 + $0x8c] sm:$0x1]
      %v4835 = vsel %vm358, %v4633, %v4834
      %4836 = vst [vmem:[%s4750 + $0x8c] sm:$0x1] %v4835
      %v4837 = vld [vmem:[%s4750 + $0x90] sm:$0xf]
      %v4838 = vsel %vm4752, %v4640, %v4837
      %4839 = vst [vmem:[%s4750 + $0x90] sm:$0xf] %v4838
      %4840 = vst.msk [vmem:[%s4750 + $0x94] sm:$0xf] %vm348, %v4649
      %v4841 = vld [vmem:[%s4750 + $0x98] sm:$0x1]
      %v4842 = vsel %vm358, %v4650, %v4841
      %4843 = vst [vmem:[%s4750 + $0x98] sm:$0x1] %v4842
      %v4844 = vld [vmem:[%s4750 + $0x9c] sm:$0xf]
      %v4845 = vsel %vm4752, %v4657, %v4844
      %4846 = vst [vmem:[%s4750 + $0x9c] sm:$0xf] %v4845
      %4847 = vst.msk [vmem:[%s4750 + $0xa0] sm:$0xf] %vm348, %v4666
      %v4848 = vld [vmem:[%s4750 + $0xa4] sm:$0x1]
      %v4849 = vsel %vm358, %v4667, %v4848
      %4850 = vst [vmem:[%s4750 + $0xa4] sm:$0x1] %v4849
      %v4851 = vld [vmem:[%s4750 + $0xa8] sm:$0xf]
      %v4852 = vsel %vm4752, %v4674, %v4851
      %4853 = vst [vmem:[%s4750 + $0xa8] sm:$0xf] %v4852
      %4854 = vst.msk [vmem:[%s4750 + $0xac] sm:$0xf] %vm348, %v4683
      %v4855 = vld [vmem:[%s4750 + $0xb0] sm:$0x1]
      %v4856 = vsel %vm358, %v4684, %v4855
      %4857 = vst [vmem:[%s4750 + $0xb0] sm:$0x1] %v4856
      %v4858 = vld [vmem:[%s4750 + $0xb4] sm:$0xf]
      %v4859 = vsel %vm4752, %v4691, %v4858
      %4860 = vst [vmem:[%s4750 + $0xb4] sm:$0xf] %v4859
      %4861 = vst.msk [vmem:[%s4750 + $0xb8] sm:$0xf] %vm348, %v4700
      %v4862 = vld [vmem:[%s4750 + $0xbc] sm:$0x1]
      %v4863 = vsel %vm358, %v4701, %v4862
      %4864 = vst [vmem:[%s4750 + $0xbc] sm:$0x1] %v4863
      %v4865 = vld [vmem:[#allocation3] sm:$0xf]
      %v4866 = vld [vmem:[#allocation3 + $0x4] sm:$0xf]
      %v4867 = vld [vmem:[#allocation3 + $0xc] sm:$0xf]
      %v4868 = vld [vmem:[#allocation3 + $0x10] sm:$0xf]
      %v4869 = vld [vmem:[#allocation3 + $0x18] sm:$0xf]
      %v4870 = vld [vmem:[#allocation3 + $0x1c] sm:$0xf]
      %v4871 = vld [vmem:[#allocation3 + $0x24] sm:$0xf]
      %v4872 = vld [vmem:[#allocation3 + $0x28] sm:$0xf]
      %v4873 = vld [vmem:[#allocation3 + $0x30] sm:$0xf]
      %v4874 = vld [vmem:[#allocation3 + $0x34] sm:$0xf]
      %v4875 = vld [vmem:[#allocation3 + $0x3c] sm:$0xf]
      %v4876 = vld [vmem:[#allocation3 + $0x40] sm:$0xf]
      %v4877 = vld [vmem:[#allocation3 + $0x48] sm:$0xf]
      %v4878 = vld [vmem:[#allocation3 + $0x4c] sm:$0xf]
      %v4879 = vld [vmem:[#allocation3 + $0x54] sm:$0xf]
      %v4880 = vld [vmem:[#allocation3 + $0x58] sm:$0xf]
      %v4881 = vld [vmem:[#allocation3 + $0x60] sm:$0xf]
      %v4882 = vld [vmem:[#allocation3 + $0x64] sm:$0xf]
      %v4883 = vld [vmem:[#allocation3 + $0x6c] sm:$0xf]
      %v4884 = vld [vmem:[#allocation3 + $0x70] sm:$0xf]
      %v4885 = vld [vmem:[#allocation3 + $0x78] sm:$0xf]
      %v4886 = vld [vmem:[#allocation3 + $0x7c] sm:$0xf]
      %v4887 = vld [vmem:[#allocation3 + $0x84] sm:$0xf]
      %v4888 = vld [vmem:[#allocation3 + $0x88] sm:$0xf]
      %v4889 = vld [vmem:[#allocation3 + $0x90] sm:$0xf]
      %v4890 = vld [vmem:[#allocation3 + $0x94] sm:$0xf]
      %v4891 = vld [vmem:[#allocation3 + $0x9c] sm:$0xf]
      %v4892 = vld [vmem:[#allocation3 + $0xa0] sm:$0xf]
      %v4893 = vld [vmem:[#allocation3 + $0xa8] sm:$0xf]
      %v4894 = vld [vmem:[#allocation3 + $0xac] sm:$0xf]
      %v4895 = vld [vmem:[#allocation3 + $0xb4] sm:$0xf]
      %v4896 = vld [vmem:[#allocation3 + $0xb8] sm:$0xf]
      %4897 = vst.msk [vmem:[#allocation5] sm:$0xf] %vm348, %v4865
      %4898 = vst.msk [vmem:[#allocation5 + $0x4] sm:$0xf] %vm348, %v4866
      %4899 = vst.msk [vmem:[#allocation5 + $0x8] sm:$0xf] %vm348, %v4867
      %4900 = vst.msk [vmem:[#allocation5 + $0xc] sm:$0xf] %vm348, %v4868
      %4901 = vst.msk [vmem:[#allocation5 + $0x10] sm:$0xf] %vm348, %v4869
      %4902 = vst.msk [vmem:[#allocation5 + $0x14] sm:$0xf] %vm348, %v4870
      %4903 = vst.msk [vmem:[#allocation5 + $0x18] sm:$0xf] %vm348, %v4871
      %4904 = vst.msk [vmem:[#allocation5 + $0x1c] sm:$0xf] %vm348, %v4872
      %4905 = vst.msk [vmem:[#allocation5 + $0x20] sm:$0xf] %vm348, %v4873
      %4906 = vst.msk [vmem:[#allocation5 + $0x24] sm:$0xf] %vm348, %v4874
      %4907 = vst.msk [vmem:[#allocation5 + $0x28] sm:$0xf] %vm348, %v4875
      %4908 = vst.msk [vmem:[#allocation5 + $0x2c] sm:$0xf] %vm348, %v4876
      %4909 = vst.msk [vmem:[#allocation5 + $0x30] sm:$0xf] %vm348, %v4877
      %4910 = vst.msk [vmem:[#allocation5 + $0x34] sm:$0xf] %vm348, %v4878
      %4911 = vst.msk [vmem:[#allocation5 + $0x38] sm:$0xf] %vm348, %v4879
      %4912 = vst.msk [vmem:[#allocation5 + $0x3c] sm:$0xf] %vm348, %v4880
      %4913 = vst.msk [vmem:[#allocation5 + $0x40] sm:$0xf] %vm348, %v4881
      %4914 = vst.msk [vmem:[#allocation5 + $0x44] sm:$0xf] %vm348, %v4882
      %4915 = vst.msk [vmem:[#allocation5 + $0x48] sm:$0xf] %vm348, %v4883
      %4916 = vst.msk [vmem:[#allocation5 + $0x4c] sm:$0xf] %vm348, %v4884
      %4917 = vst.msk [vmem:[#allocation5 + $0x50] sm:$0xf] %vm348, %v4885
      %4918 = vst.msk [vmem:[#allocation5 + $0x54] sm:$0xf] %vm348, %v4886
      %4919 = vst.msk [vmem:[#allocation5 + $0x58] sm:$0xf] %vm348, %v4887
      %4920 = vst.msk [vmem:[#allocation5 + $0x5c] sm:$0xf] %vm348, %v4888
      %4921 = vst.msk [vmem:[#allocation5 + $0x60] sm:$0xf] %vm348, %v4889
      %4922 = vst.msk [vmem:[#allocation5 + $0x64] sm:$0xf] %vm348, %v4890
      %4923 = vst.msk [vmem:[#allocation5 + $0x68] sm:$0xf] %vm348, %v4891
      %4924 = vst.msk [vmem:[#allocation5 + $0x6c] sm:$0xf] %vm348, %v4892
      %4925 = vst.msk [vmem:[#allocation5 + $0x70] sm:$0xf] %vm348, %v4893
      %4926 = vst.msk [vmem:[#allocation5 + $0x74] sm:$0xf] %vm348, %v4894
      %4927 = vst.msk [vmem:[#allocation5 + $0x78] sm:$0xf] %vm348, %v4895
      %4928 = vst.msk [vmem:[#allocation5 + $0x7c] sm:$0xf] %vm348, %v4896
      %v4929 = vld [vmem:[#allocation3] sm:$0xf]
      %v4930 = vld [vmem:[#allocation3 + $0x4] sm:$0xf]
      %v4931 = vld [vmem:[#allocation3 + $0x8] sm:$0x1]
      %v4932 = vld [vmem:[#allocation3 + $0xc] sm:$0xf]
      %v4933 = vld [vmem:[#allocation3 + $0x10] sm:$0xf]
      %v4934 = vld [vmem:[#allocation3 + $0x14] sm:$0x1]
      %v4935 = vld [vmem:[#allocation3 + $0x18] sm:$0xf]
      %v4936 = vld [vmem:[#allocation3 + $0x1c] sm:$0xf]
      %v4937 = vld [vmem:[#allocation3 + $0x20] sm:$0x1]
      %v4938 = vld [vmem:[#allocation3 + $0x24] sm:$0xf]
      %v4939 = vld [vmem:[#allocation3 + $0x28] sm:$0xf]
      %v4940 = vld [vmem:[#allocation3 + $0x2c] sm:$0x1]
      %v4941 = vld [vmem:[#allocation3 + $0x30] sm:$0xf]
      %v4942 = vld [vmem:[#allocation3 + $0x34] sm:$0xf]
      %v4943 = vld [vmem:[#allocation3 + $0x38] sm:$0x1]
      %v4944 = vld [vmem:[#allocation3 + $0x3c] sm:$0xf]
      %v4945 = vld [vmem:[#allocation3 + $0x40] sm:$0xf]
      %v4946 = vld [vmem:[#allocation3 + $0x44] sm:$0x1]
      %v4947 = vld [vmem:[#allocation3 + $0x48] sm:$0xf]
      %v4948 = vld [vmem:[#allocation3 + $0x4c] sm:$0xf]
      %v4949 = vld [vmem:[#allocation3 + $0x50] sm:$0x1]
      %v4950 = vld [vmem:[#allocation3 + $0x54] sm:$0xf]
      %v4951 = vld [vmem:[#allocation3 + $0x58] sm:$0xf]
      %v4952 = vld [vmem:[#allocation3 + $0x5c] sm:$0x1]
      %v4953 = vld [vmem:[#allocation3 + $0x60] sm:$0xf]
      %v4954 = vld [vmem:[#allocation3 + $0x64] sm:$0xf]
      %v4955 = vld [vmem:[#allocation3 + $0x68] sm:$0x1]
      %v4956 = vld [vmem:[#allocation3 + $0x6c] sm:$0xf]
      %v4957 = vld [vmem:[#allocation3 + $0x70] sm:$0xf]
      %v4958 = vld [vmem:[#allocation3 + $0x74] sm:$0x1]
      %v4959 = vld [vmem:[#allocation3 + $0x78] sm:$0xf]
      %v4960 = vld [vmem:[#allocation3 + $0x7c] sm:$0xf]
      %v4961 = vld [vmem:[#allocation3 + $0x80] sm:$0x1]
      %v4962 = vld [vmem:[#allocation3 + $0x84] sm:$0xf]
      %v4963 = vld [vmem:[#allocation3 + $0x88] sm:$0xf]
      %v4964 = vld [vmem:[#allocation3 + $0x8c] sm:$0x1]
      %v4965 = vld [vmem:[#allocation3 + $0x90] sm:$0xf]
      %v4966 = vld [vmem:[#allocation3 + $0x94] sm:$0xf]
      %v4967 = vld [vmem:[#allocation3 + $0x98] sm:$0x1]
      %v4968 = vld [vmem:[#allocation3 + $0x9c] sm:$0xf]
      %v4969 = vld [vmem:[#allocation3 + $0xa0] sm:$0xf]
      %v4970 = vld [vmem:[#allocation3 + $0xa4] sm:$0x1]
      %v4971 = vld [vmem:[#allocation3 + $0xa8] sm:$0xf]
      %v4972 = vld [vmem:[#allocation3 + $0xac] sm:$0xf]
      %v4973 = vld [vmem:[#allocation3 + $0xb0] sm:$0x1]
      %v4974 = vld [vmem:[#allocation3 + $0xb4] sm:$0xf]
      %v4975 = vld [vmem:[#allocation3 + $0xb8] sm:$0xf]
      %v4976 = vld [vmem:[#allocation3 + $0xbc] sm:$0x1]
      %v4978 = vshrl.u32 %v4929, 16
      %v4980 = vrot.slane %v4978, 4
      %v4981 = vshll.u32 %v4929, 16
      %v4983 = vrot.slane %v4981, 5
      %v4984 = vor.u32 %v4980, %v4983
      %v4985 = vrot.slane %v4984, 4
      %v4987 = vshll.u32 %v4930, 16
      %v4989 = vrot.slane %v4987, 5
      %v4990 = vsel %vm1051, %v4985, %v4989
      %v4991 = vshrl.u32 %v4930, 16
      %v4993 = vrot.slane %v4991, 4
      %v4994 = vor.u32 %v4993, %v4989
      %v4995 = vrot.slane %v4994, 4
      %v4997 = vshll.u32 %v4931, 16
      %v4999 = vrot.slane %v4997, 5
      %v5000 = vsel %vm1051, %v4995, %v4999
      %v5002 = vshrl.u32 %v4932, 16
      %v5004 = vrot.slane %v5002, 4
      %v5005 = vshll.u32 %v4932, 16
      %v5007 = vrot.slane %v5005, 5
      %v5008 = vor.u32 %v5004, %v5007
      %v5009 = vrot.slane %v5008, 4
      %v5011 = vshll.u32 %v4933, 16
      %v5013 = vrot.slane %v5011, 5
      %v5014 = vsel %vm1051, %v5009, %v5013
      %v5015 = vshrl.u32 %v4933, 16
      %v5017 = vrot.slane %v5015, 4
      %v5018 = vor.u32 %v5017, %v5013
      %v5019 = vrot.slane %v5018, 4
      %v5021 = vshll.u32 %v4934, 16
      %v5023 = vrot.slane %v5021, 5
      %v5024 = vsel %vm1051, %v5019, %v5023
      %v5026 = vshrl.u32 %v4935, 16
      %v5028 = vrot.slane %v5026, 4
      %v5029 = vshll.u32 %v4935, 16
      %v5031 = vrot.slane %v5029, 5
      %v5032 = vor.u32 %v5028, %v5031
      %v5033 = vrot.slane %v5032, 4
      %v5035 = vshll.u32 %v4936, 16
      %v5037 = vrot.slane %v5035, 5
      %v5038 = vsel %vm1051, %v5033, %v5037
      %v5039 = vshrl.u32 %v4936, 16
      %v5041 = vrot.slane %v5039, 4
      %v5042 = vor.u32 %v5041, %v5037
      %v5043 = vrot.slane %v5042, 4
      %v5045 = vshll.u32 %v4937, 16
      %v5047 = vrot.slane %v5045, 5
      %v5048 = vsel %vm1051, %v5043, %v5047
      %v5050 = vshrl.u32 %v4938, 16
      %v5052 = vrot.slane %v5050, 4
      %v5053 = vshll.u32 %v4938, 16
      %v5055 = vrot.slane %v5053, 5
      %v5056 = vor.u32 %v5052, %v5055
      %v5057 = vrot.slane %v5056, 4
      %v5059 = vshll.u32 %v4939, 16
      %v5061 = vrot.slane %v5059, 5
      %v5062 = vsel %vm1051, %v5057, %v5061
      %v5063 = vshrl.u32 %v4939, 16
      %v5065 = vrot.slane %v5063, 4
      %v5066 = vor.u32 %v5065, %v5061
      %v5067 = vrot.slane %v5066, 4
      %v5069 = vshll.u32 %v4940, 16
      %v5071 = vrot.slane %v5069, 5
      %v5072 = vsel %vm1051, %v5067, %v5071
      %v5074 = vshrl.u32 %v4941, 16
      %v5076 = vrot.slane %v5074, 4
      %v5077 = vshll.u32 %v4941, 16
      %v5079 = vrot.slane %v5077, 5
      %v5080 = vor.u32 %v5076, %v5079
      %v5081 = vrot.slane %v5080, 4
      %v5083 = vshll.u32 %v4942, 16
      %v5085 = vrot.slane %v5083, 5
      %v5086 = vsel %vm1051, %v5081, %v5085
      %v5087 = vshrl.u32 %v4942, 16
      %v5089 = vrot.slane %v5087, 4
      %v5090 = vor.u32 %v5089, %v5085
      %v5091 = vrot.slane %v5090, 4
      %v5093 = vshll.u32 %v4943, 16
      %v5095 = vrot.slane %v5093, 5
      %v5096 = vsel %vm1051, %v5091, %v5095
      %v5098 = vshrl.u32 %v4944, 16
      %v5100 = vrot.slane %v5098, 4
      %v5101 = vshll.u32 %v4944, 16
      %v5103 = vrot.slane %v5101, 5
      %v5104 = vor.u32 %v5100, %v5103
      %v5105 = vrot.slane %v5104, 4
      %v5107 = vshll.u32 %v4945, 16
      %v5109 = vrot.slane %v5107, 5
      %v5110 = vsel %vm1051, %v5105, %v5109
      %v5111 = vshrl.u32 %v4945, 16
      %v5113 = vrot.slane %v5111, 4
      %v5114 = vor.u32 %v5113, %v5109
      %v5115 = vrot.slane %v5114, 4
      %v5117 = vshll.u32 %v4946, 16
      %v5119 = vrot.slane %v5117, 5
      %v5120 = vsel %vm1051, %v5115, %v5119
      %v5122 = vshrl.u32 %v4947, 16
      %v5124 = vrot.slane %v5122, 4
      %v5125 = vshll.u32 %v4947, 16
      %v5127 = vrot.slane %v5125, 5
      %v5128 = vor.u32 %v5124, %v5127
      %v5129 = vrot.slane %v5128, 4
      %v5131 = vshll.u32 %v4948, 16
      %v5133 = vrot.slane %v5131, 5
      %v5134 = vsel %vm1051, %v5129, %v5133
      %v5135 = vshrl.u32 %v4948, 16
      %v5137 = vrot.slane %v5135, 4
      %v5138 = vor.u32 %v5137, %v5133
      %v5139 = vrot.slane %v5138, 4
      %v5141 = vshll.u32 %v4949, 16
      %v5143 = vrot.slane %v5141, 5
      %v5144 = vsel %vm1051, %v5139, %v5143
      %v5146 = vshrl.u32 %v4950, 16
      %v5148 = vrot.slane %v5146, 4
      %v5149 = vshll.u32 %v4950, 16
      %v5151 = vrot.slane %v5149, 5
      %v5152 = vor.u32 %v5148, %v5151
      %v5153 = vrot.slane %v5152, 4
      %v5155 = vshll.u32 %v4951, 16
      %v5157 = vrot.slane %v5155, 5
      %v5158 = vsel %vm1051, %v5153, %v5157
      %v5159 = vshrl.u32 %v4951, 16
      %v5161 = vrot.slane %v5159, 4
      %v5162 = vor.u32 %v5161, %v5157
      %v5163 = vrot.slane %v5162, 4
      %v5165 = vshll.u32 %v4952, 16
      %v5167 = vrot.slane %v5165, 5
      %v5168 = vsel %vm1051, %v5163, %v5167
      %v5170 = vshrl.u32 %v4953, 16
      %v5172 = vrot.slane %v5170, 4
      %v5173 = vshll.u32 %v4953, 16
      %v5175 = vrot.slane %v5173, 5
      %v5176 = vor.u32 %v5172, %v5175
      %v5177 = vrot.slane %v5176, 4
      %v5179 = vshll.u32 %v4954, 16
      %v5181 = vrot.slane %v5179, 5
      %v5182 = vsel %vm1051, %v5177, %v5181
      %v5183 = vshrl.u32 %v4954, 16
      %v5185 = vrot.slane %v5183, 4
      %v5186 = vor.u32 %v5185, %v5181
      %v5187 = vrot.slane %v5186, 4
      %v5189 = vshll.u32 %v4955, 16
      %v5191 = vrot.slane %v5189, 5
      %v5192 = vsel %vm1051, %v5187, %v5191
      %v5194 = vshrl.u32 %v4956, 16
      %v5196 = vrot.slane %v5194, 4
      %v5197 = vshll.u32 %v4956, 16
      %v5199 = vrot.slane %v5197, 5
      %v5200 = vor.u32 %v5196, %v5199
      %v5201 = vrot.slane %v5200, 4
      %v5203 = vshll.u32 %v4957, 16
      %v5205 = vrot.slane %v5203, 5
      %v5206 = vsel %vm1051, %v5201, %v5205
      %v5207 = vshrl.u32 %v4957, 16
      %v5209 = vrot.slane %v5207, 4
      %v5210 = vor.u32 %v5209, %v5205
      %v5211 = vrot.slane %v5210, 4
      %v5213 = vshll.u32 %v4958, 16
      %v5215 = vrot.slane %v5213, 5
      %v5216 = vsel %vm1051, %v5211, %v5215
      %v5218 = vshrl.u32 %v4959, 16
      %v5220 = vrot.slane %v5218, 4
      %v5221 = vshll.u32 %v4959, 16
      %v5223 = vrot.slane %v5221, 5
      %v5224 = vor.u32 %v5220, %v5223
      %v5225 = vrot.slane %v5224, 4
      %v5227 = vshll.u32 %v4960, 16
      %v5229 = vrot.slane %v5227, 5
      %v5230 = vsel %vm1051, %v5225, %v5229
      %v5231 = vshrl.u32 %v4960, 16
      %v5233 = vrot.slane %v5231, 4
      %v5234 = vor.u32 %v5233, %v5229
      %v5235 = vrot.slane %v5234, 4
      %v5237 = vshll.u32 %v4961, 16
      %v5239 = vrot.slane %v5237, 5
      %v5240 = vsel %vm1051, %v5235, %v5239
      %v5242 = vshrl.u32 %v4962, 16
      %v5244 = vrot.slane %v5242, 4
      %v5245 = vshll.u32 %v4962, 16
      %v5247 = vrot.slane %v5245, 5
      %v5248 = vor.u32 %v5244, %v5247
      %v5249 = vrot.slane %v5248, 4
      %v5251 = vshll.u32 %v4963, 16
      %v5253 = vrot.slane %v5251, 5
      %v5254 = vsel %vm1051, %v5249, %v5253
      %v5255 = vshrl.u32 %v4963, 16
      %v5257 = vrot.slane %v5255, 4
      %v5258 = vor.u32 %v5257, %v5253
      %v5259 = vrot.slane %v5258, 4
      %v5261 = vshll.u32 %v4964, 16
      %v5263 = vrot.slane %v5261, 5
      %v5264 = vsel %vm1051, %v5259, %v5263
      %v5266 = vshrl.u32 %v4965, 16
      %v5268 = vrot.slane %v5266, 4
      %v5269 = vshll.u32 %v4965, 16
      %v5271 = vrot.slane %v5269, 5
      %v5272 = vor.u32 %v5268, %v5271
      %v5273 = vrot.slane %v5272, 4
      %v5275 = vshll.u32 %v4966, 16
      %v5277 = vrot.slane %v5275, 5
      %v5278 = vsel %vm1051, %v5273, %v5277
      %v5279 = vshrl.u32 %v4966, 16
      %v5281 = vrot.slane %v5279, 4
      %v5282 = vor.u32 %v5281, %v5277
      %v5283 = vrot.slane %v5282, 4
      %v5285 = vshll.u32 %v4967, 16
      %v5287 = vrot.slane %v5285, 5
      %v5288 = vsel %vm1051, %v5283, %v5287
      %v5290 = vshrl.u32 %v4968, 16
      %v5292 = vrot.slane %v5290, 4
      %v5293 = vshll.u32 %v4968, 16
      %v5295 = vrot.slane %v5293, 5
      %v5296 = vor.u32 %v5292, %v5295
      %v5297 = vrot.slane %v5296, 4
      %v5299 = vshll.u32 %v4969, 16
      %v5301 = vrot.slane %v5299, 5
      %v5302 = vsel %vm1051, %v5297, %v5301
      %v5303 = vshrl.u32 %v4969, 16
      %v5305 = vrot.slane %v5303, 4
      %v5306 = vor.u32 %v5305, %v5301
      %v5307 = vrot.slane %v5306, 4
      %v5309 = vshll.u32 %v4970, 16
      %v5311 = vrot.slane %v5309, 5
      %v5312 = vsel %vm1051, %v5307, %v5311
      %v5314 = vshrl.u32 %v4971, 16
      %v5316 = vrot.slane %v5314, 4
      %v5317 = vshll.u32 %v4971, 16
      %v5319 = vrot.slane %v5317, 5
      %v5320 = vor.u32 %v5316, %v5319
      %v5321 = vrot.slane %v5320, 4
      %v5323 = vshll.u32 %v4972, 16
      %v5325 = vrot.slane %v5323, 5
      %v5326 = vsel %vm1051, %v5321, %v5325
      %v5327 = vshrl.u32 %v4972, 16
      %v5329 = vrot.slane %v5327, 4
      %v5330 = vor.u32 %v5329, %v5325
      %v5331 = vrot.slane %v5330, 4
      %v5333 = vshll.u32 %v4973, 16
      %v5335 = vrot.slane %v5333, 5
      %v5336 = vsel %vm1051, %v5331, %v5335
      %v5338 = vshrl.u32 %v4974, 16
      %v5340 = vrot.slane %v5338, 4
      %v5341 = vshll.u32 %v4974, 16
      %v5343 = vrot.slane %v5341, 5
      %v5344 = vor.u32 %v5340, %v5343
      %v5345 = vrot.slane %v5344, 4
      %v5347 = vshll.u32 %v4975, 16
      %v5349 = vrot.slane %v5347, 5
      %v5350 = vsel %vm1051, %v5345, %v5349
      %v5351 = vshrl.u32 %v4975, 16
      %v5353 = vrot.slane %v5351, 4
      %v5354 = vor.u32 %v5353, %v5349
      %v5355 = vrot.slane %v5354, 4
      %v5357 = vshll.u32 %v4976, 16
      %v5359 = vrot.slane %v5357, 5
      %v5360 = vsel %vm1051, %v5355, %v5359
      %5361 = vrot.lane.b32.xlu0 %v4990, 8
      %v5362 = vpop.permute.xlu0 %5361
      %5363 = vrot.lane.b32.xlu0 %v5000, 8
      %v5364 = vpop.permute.xlu0 %5363
      %5365 = vrot.lane.b32.xlu0 %v5014, 8
      %v5366 = vpop.permute.xlu0 %5365
      %5367 = vrot.lane.b32.xlu0 %v5024, 8
      %v5368 = vpop.permute.xlu0 %5367
      %5369 = vrot.lane.b32.xlu0 %v5038, 8
      %v5370 = vpop.permute.xlu0 %5369
      %5371 = vrot.lane.b32.xlu0 %v5048, 8
      %v5372 = vpop.permute.xlu0 %5371
      %5373 = vrot.lane.b32.xlu0 %v5062, 8
      %v5374 = vpop.permute.xlu0 %5373
      %5375 = vrot.lane.b32.xlu0 %v5072, 8
      %v5376 = vpop.permute.xlu0 %5375
      %5377 = vrot.lane.b32.xlu0 %v5086, 8
      %v5378 = vpop.permute.xlu0 %5377
      %5379 = vrot.lane.b32.xlu0 %v5096, 8
      %v5380 = vpop.permute.xlu0 %5379
      %5381 = vrot.lane.b32.xlu0 %v5110, 8
      %v5382 = vpop.permute.xlu0 %5381
      %5383 = vrot.lane.b32.xlu0 %v5120, 8
      %v5384 = vpop.permute.xlu0 %5383
      %5385 = vrot.lane.b32.xlu0 %v5134, 8
      %v5386 = vpop.permute.xlu0 %5385
      %5387 = vrot.lane.b32.xlu0 %v5144, 8
      %v5388 = vpop.permute.xlu0 %5387
      %5389 = vrot.lane.b32.xlu0 %v5158, 8
      %v5390 = vpop.permute.xlu0 %5389
      %5391 = vrot.lane.b32.xlu0 %v5168, 8
      %v5392 = vpop.permute.xlu0 %5391
      %5393 = vrot.lane.b32.xlu0 %v5182, 8
      %v5394 = vpop.permute.xlu0 %5393
      %5395 = vrot.lane.b32.xlu0 %v5192, 8
      %v5396 = vpop.permute.xlu0 %5395
      %5397 = vrot.lane.b32.xlu0 %v5206, 8
      %v5398 = vpop.permute.xlu0 %5397
      %5399 = vrot.lane.b32.xlu0 %v5216, 8
      %v5400 = vpop.permute.xlu0 %5399
      %5401 = vrot.lane.b32.xlu0 %v5230, 8
      %v5402 = vpop.permute.xlu0 %5401
      %5403 = vrot.lane.b32.xlu0 %v5240, 8
      %v5404 = vpop.permute.xlu0 %5403
      %5405 = vrot.lane.b32.xlu0 %v5254, 8
      %v5406 = vpop.permute.xlu0 %5405
      %5407 = vrot.lane.b32.xlu0 %v5264, 8
      %v5408 = vpop.permute.xlu0 %5407
      %5409 = vrot.lane.b32.xlu0 %v5278, 8
      %v5410 = vpop.permute.xlu0 %5409
      %5411 = vrot.lane.b32.xlu0 %v5288, 8
      %v5412 = vpop.permute.xlu0 %5411
      %5413 = vrot.lane.b32.xlu0 %v5302, 8
      %v5414 = vpop.permute.xlu0 %5413
      %5415 = vrot.lane.b32.xlu0 %v5312, 8
      %v5416 = vpop.permute.xlu0 %5415
      %5417 = vrot.lane.b32.xlu0 %v5326, 8
      %v5418 = vpop.permute.xlu0 %5417
      %5419 = vrot.lane.b32.xlu0 %v5336, 8
      %v5420 = vpop.permute.xlu0 %5419
      %5421 = vrot.lane.b32.xlu0 %v5350, 8
      %v5422 = vpop.permute.xlu0 %5421
      %5423 = vrot.lane.b32.xlu0 %v5360, 8
      %v5424 = vpop.permute.xlu0 %5423
      %vm5457 = vcmask 126016
      %5458 = vst.msk [vmem:[#allocation5] sm:$0xf] %vm5457, %v5362
      %5459 = vst.msk [vmem:[#allocation5 + $0x4] sm:$0xf] %vm5457, %v5364
      %5460 = vst.msk [vmem:[#allocation5 + $0x8] sm:$0xf] %vm5457, %v5366
      %5461 = vst.msk [vmem:[#allocation5 + $0xc] sm:$0xf] %vm5457, %v5368
      %5462 = vst.msk [vmem:[#allocation5 + $0x10] sm:$0xf] %vm5457, %v5370
      %5463 = vst.msk [vmem:[#allocation5 + $0x14] sm:$0xf] %vm5457, %v5372
      %5464 = vst.msk [vmem:[#allocation5 + $0x18] sm:$0xf] %vm5457, %v5374
      %5465 = vst.msk [vmem:[#allocation5 + $0x1c] sm:$0xf] %vm5457, %v5376
      %5466 = vst.msk [vmem:[#allocation5 + $0x20] sm:$0xf] %vm5457, %v5378
      %5467 = vst.msk [vmem:[#allocation5 + $0x24] sm:$0xf] %vm5457, %v5380
      %5468 = vst.msk [vmem:[#allocation5 + $0x28] sm:$0xf] %vm5457, %v5382
      %5469 = vst.msk [vmem:[#allocation5 + $0x2c] sm:$0xf] %vm5457, %v5384
      %5470 = vst.msk [vmem:[#allocation5 + $0x30] sm:$0xf] %vm5457, %v5386
      %5471 = vst.msk [vmem:[#allocation5 + $0x34] sm:$0xf] %vm5457, %v5388
      %5472 = vst.msk [vmem:[#allocation5 + $0x38] sm:$0xf] %vm5457, %v5390
      %5473 = vst.msk [vmem:[#allocation5 + $0x3c] sm:$0xf] %vm5457, %v5392
      %5474 = vst.msk [vmem:[#allocation5 + $0x40] sm:$0xf] %vm5457, %v5394
      %5475 = vst.msk [vmem:[#allocation5 + $0x44] sm:$0xf] %vm5457, %v5396
      %5476 = vst.msk [vmem:[#allocation5 + $0x48] sm:$0xf] %vm5457, %v5398
      %5477 = vst.msk [vmem:[#allocation5 + $0x4c] sm:$0xf] %vm5457, %v5400
      %5478 = vst.msk [vmem:[#allocation5 + $0x50] sm:$0xf] %vm5457, %v5402
      %5479 = vst.msk [vmem:[#allocation5 + $0x54] sm:$0xf] %vm5457, %v5404
      %5480 = vst.msk [vmem:[#allocation5 + $0x58] sm:$0xf] %vm5457, %v5406
      %5481 = vst.msk [vmem:[#allocation5 + $0x5c] sm:$0xf] %vm5457, %v5408
      %5482 = vst.msk [vmem:[#allocation5 + $0x60] sm:$0xf] %vm5457, %v5410
      %5483 = vst.msk [vmem:[#allocation5 + $0x64] sm:$0xf] %vm5457, %v5412
      %5484 = vst.msk [vmem:[#allocation5 + $0x68] sm:$0xf] %vm5457, %v5414
      %5485 = vst.msk [vmem:[#allocation5 + $0x6c] sm:$0xf] %vm5457, %v5416
      %5486 = vst.msk [vmem:[#allocation5 + $0x70] sm:$0xf] %vm5457, %v5418
      %5487 = vst.msk [vmem:[#allocation5 + $0x74] sm:$0xf] %vm5457, %v5420
      %5488 = vst.msk [vmem:[#allocation5 + $0x78] sm:$0xf] %vm5457, %v5422
      %5489 = vst.msk [vmem:[#allocation5 + $0x7c] sm:$0xf] %vm5457, %v5424
      %v5490 = vld [vmem:[#allocation3] sm:$0xe]
      %v5491 = vld [vmem:[#allocation3 + $0x4] sm:$0xf]
      %v5492 = vld [vmem:[#allocation3 + $0x8] sm:$0x1]
      %v5493 = vld [vmem:[#allocation3 + $0xc] sm:$0xe]
      %v5494 = vld [vmem:[#allocation3 + $0x10] sm:$0xf]
      %v5495 = vld [vmem:[#allocation3 + $0x14] sm:$0x1]
      %v5496 = vld [vmem:[#allocation3 + $0x18] sm:$0xe]
      %v5497 = vld [vmem:[#allocation3 + $0x1c] sm:$0xf]
      %v5498 = vld [vmem:[#allocation3 + $0x20] sm:$0x1]
      %v5499 = vld [vmem:[#allocation3 + $0x24] sm:$0xe]
      %v5500 = vld [vmem:[#allocation3 + $0x28] sm:$0xf]
      %v5501 = vld [vmem:[#allocation3 + $0x2c] sm:$0x1]
      %v5502 = vld [vmem:[#allocation3 + $0x30] sm:$0xe]
      %v5503 = vld [vmem:[#allocation3 + $0x34] sm:$0xf]
      %v5504 = vld [vmem:[#allocation3 + $0x38] sm:$0x1]
      %v5505 = vld [vmem:[#allocation3 + $0x3c] sm:$0xe]
      %v5506 = vld [vmem:[#allocation3 + $0x40] sm:$0xf]
      %v5507 = vld [vmem:[#allocation3 + $0x44] sm:$0x1]
      %v5508 = vld [vmem:[#allocation3 + $0x48] sm:$0xe]
      %v5509 = vld [vmem:[#allocation3 + $0x4c] sm:$0xf]
      %v5510 = vld [vmem:[#allocation3 + $0x50] sm:$0x1]
      %v5511 = vld [vmem:[#allocation3 + $0x54] sm:$0xe]
      %v5512 = vld [vmem:[#allocation3 + $0x58] sm:$0xf]
      %v5513 = vld [vmem:[#allocation3 + $0x5c] sm:$0x1]
      %v5514 = vld [vmem:[#allocation3 + $0x60] sm:$0xe]
      %v5515 = vld [vmem:[#allocation3 + $0x64] sm:$0xf]
      %v5516 = vld [vmem:[#allocation3 + $0x68] sm:$0x1]
      %v5517 = vld [vmem:[#allocation3 + $0x6c] sm:$0xe]
      %v5518 = vld [vmem:[#allocation3 + $0x70] sm:$0xf]
      %v5519 = vld [vmem:[#allocation3 + $0x74] sm:$0x1]
      %v5520 = vld [vmem:[#allocation3 + $0x78] sm:$0xe]
      %v5521 = vld [vmem:[#allocation3 + $0x7c] sm:$0xf]
      %v5522 = vld [vmem:[#allocation3 + $0x80] sm:$0x1]
      %v5523 = vld [vmem:[#allocation3 + $0x84] sm:$0xe]
      %v5524 = vld [vmem:[#allocation3 + $0x88] sm:$0xf]
      %v5525 = vld [vmem:[#allocation3 + $0x8c] sm:$0x1]
      %v5526 = vld [vmem:[#allocation3 + $0x90] sm:$0xe]
      %v5527 = vld [vmem:[#allocation3 + $0x94] sm:$0xf]
      %v5528 = vld [vmem:[#allocation3 + $0x98] sm:$0x1]
      %v5529 = vld [vmem:[#allocation3 + $0x9c] sm:$0xe]
      %v5530 = vld [vmem:[#allocation3 + $0xa0] sm:$0xf]
      %v5531 = vld [vmem:[#allocation3 + $0xa4] sm:$0x1]
      %v5532 = vld [vmem:[#allocation3 + $0xa8] sm:$0xe]
      %v5533 = vld [vmem:[#allocation3 + $0xac] sm:$0xf]
      %v5534 = vld [vmem:[#allocation3 + $0xb0] sm:$0x1]
      %v5535 = vld [vmem:[#allocation3 + $0xb4] sm:$0xe]
      %v5536 = vld [vmem:[#allocation3 + $0xb8] sm:$0xf]
      %v5537 = vld [vmem:[#allocation3 + $0xbc] sm:$0x1]
      %v5586 = vrot.slane %v5490, 5
      %v5587 = vrot.slane %v5586, 4
      %v5588 = vrot.slane %v5491, 5
      %v5589 = vsel %vm1663, %v5587, %v5588
      %v5590 = vrot.slane %v5588, 4
      %v5591 = vrot.slane %v5492, 5
      %v5592 = vsel %vm1663, %v5590, %v5591
      %v5593 = vrot.slane %v5493, 5
      %v5594 = vrot.slane %v5593, 4
      %v5595 = vrot.slane %v5494, 5
      %v5596 = vsel %vm1663, %v5594, %v5595
      %v5597 = vrot.slane %v5595, 4
      %v5598 = vrot.slane %v5495, 5
      %v5599 = vsel %vm1663, %v5597, %v5598
      %v5600 = vrot.slane %v5496, 5
      %v5601 = vrot.slane %v5600, 4
      %v5602 = vrot.slane %v5497, 5
      %v5603 = vsel %vm1663, %v5601, %v5602
      %v5604 = vrot.slane %v5602, 4
      %v5605 = vrot.slane %v5498, 5
      %v5606 = vsel %vm1663, %v5604, %v5605
      %v5607 = vrot.slane %v5499, 5
      %v5608 = vrot.slane %v5607, 4
      %v5609 = vrot.slane %v5500, 5
      %v5610 = vsel %vm1663, %v5608, %v5609
      %v5611 = vrot.slane %v5609, 4
      %v5612 = vrot.slane %v5501, 5
      %v5613 = vsel %vm1663, %v5611, %v5612
      %v5614 = vrot.slane %v5502, 5
      %v5615 = vrot.slane %v5614, 4
      %v5616 = vrot.slane %v5503, 5
      %v5617 = vsel %vm1663, %v5615, %v5616
      %v5618 = vrot.slane %v5616, 4
      %v5619 = vrot.slane %v5504, 5
      %v5620 = vsel %vm1663, %v5618, %v5619
      %v5621 = vrot.slane %v5505, 5
      %v5622 = vrot.slane %v5621, 4
      %v5623 = vrot.slane %v5506, 5
      %v5624 = vsel %vm1663, %v5622, %v5623
      %v5625 = vrot.slane %v5623, 4
      %v5626 = vrot.slane %v5507, 5
      %v5627 = vsel %vm1663, %v5625, %v5626
      %v5628 = vrot.slane %v5508, 5
      %v5629 = vrot.slane %v5628, 4
      %v5630 = vrot.slane %v5509, 5
      %v5631 = vsel %vm1663, %v5629, %v5630
      %v5632 = vrot.slane %v5630, 4
      %v5633 = vrot.slane %v5510, 5
      %v5634 = vsel %vm1663, %v5632, %v5633
      %v5635 = vrot.slane %v5511, 5
      %v5636 = vrot.slane %v5635, 4
      %v5637 = vrot.slane %v5512, 5
      %v5638 = vsel %vm1663, %v5636, %v5637
      %v5639 = vrot.slane %v5637, 4
      %v5640 = vrot.slane %v5513, 5
      %v5641 = vsel %vm1663, %v5639, %v5640
      %v5642 = vrot.slane %v5514, 5
      %v5643 = vrot.slane %v5642, 4
      %v5644 = vrot.slane %v5515, 5
      %v5645 = vsel %vm1663, %v5643, %v5644
      %v5646 = vrot.slane %v5644, 4
      %v5647 = vrot.slane %v5516, 5
      %v5648 = vsel %vm1663, %v5646, %v5647
      %v5649 = vrot.slane %v5517, 5
      %v5650 = vrot.slane %v5649, 4
      %v5651 = vrot.slane %v5518, 5
      %v5652 = vsel %vm1663, %v5650, %v5651
      %v5653 = vrot.slane %v5651, 4
      %v5654 = vrot.slane %v5519, 5
      %v5655 = vsel %vm1663, %v5653, %v5654
      %v5656 = vrot.slane %v5520, 5
      %v5657 = vrot.slane %v5656, 4
      %v5658 = vrot.slane %v5521, 5
      %v5659 = vsel %vm1663, %v5657, %v5658
      %v5660 = vrot.slane %v5658, 4
      %v5661 = vrot.slane %v5522, 5
      %v5662 = vsel %vm1663, %v5660, %v5661
      %v5663 = vrot.slane %v5523, 5
      %v5664 = vrot.slane %v5663, 4
      %v5665 = vrot.slane %v5524, 5
      %v5666 = vsel %vm1663, %v5664, %v5665
      %v5667 = vrot.slane %v5665, 4
      %v5668 = vrot.slane %v5525, 5
      %v5669 = vsel %vm1663, %v5667, %v5668
      %v5670 = vrot.slane %v5526, 5
      %v5671 = vrot.slane %v5670, 4
      %v5672 = vrot.slane %v5527, 5
      %v5673 = vsel %vm1663, %v5671, %v5672
      %v5674 = vrot.slane %v5672, 4
      %v5675 = vrot.slane %v5528, 5
      %v5676 = vsel %vm1663, %v5674, %v5675
      %v5677 = vrot.slane %v5529, 5
      %v5678 = vrot.slane %v5677, 4
      %v5679 = vrot.slane %v5530, 5
      %v5680 = vsel %vm1663, %v5678, %v5679
      %v5681 = vrot.slane %v5679, 4
      %v5682 = vrot.slane %v5531, 5
      %v5683 = vsel %vm1663, %v5681, %v5682
      %v5684 = vrot.slane %v5532, 5
      %v5685 = vrot.slane %v5684, 4
      %v5686 = vrot.slane %v5533, 5
      %v5687 = vsel %vm1663, %v5685, %v5686
      %v5688 = vrot.slane %v5686, 4
      %v5689 = vrot.slane %v5534, 5
      %v5690 = vsel %vm1663, %v5688, %v5689
      %v5691 = vrot.slane %v5535, 5
      %v5692 = vrot.slane %v5691, 4
      %v5693 = vrot.slane %v5536, 5
      %v5694 = vsel %vm1663, %v5692, %v5693
      %v5695 = vrot.slane %v5693, 4
      %v5696 = vrot.slane %v5537, 5
      %v5697 = vsel %vm1663, %v5695, %v5696
      %5698 = vrot.lane.b32.xlu0 %v5589, 16
      %v5699 = vpop.permute.xlu0 %5698
      %5700 = vrot.lane.b32.xlu0 %v5592, 16
      %v5701 = vpop.permute.xlu0 %5700
      %5702 = vrot.lane.b32.xlu0 %v5596, 16
      %v5703 = vpop.permute.xlu0 %5702
      %5704 = vrot.lane.b32.xlu0 %v5599, 16
      %v5705 = vpop.permute.xlu0 %5704
      %5706 = vrot.lane.b32.xlu0 %v5603, 16
      %v5707 = vpop.permute.xlu0 %5706
      %5708 = vrot.lane.b32.xlu0 %v5606, 16
      %v5709 = vpop.permute.xlu0 %5708
      %5710 = vrot.lane.b32.xlu0 %v5610, 16
      %v5711 = vpop.permute.xlu0 %5710
      %5712 = vrot.lane.b32.xlu0 %v5613, 16
      %v5713 = vpop.permute.xlu0 %5712
      %5714 = vrot.lane.b32.xlu0 %v5617, 16
      %v5715 = vpop.permute.xlu0 %5714
      %5716 = vrot.lane.b32.xlu0 %v5620, 16
      %v5717 = vpop.permute.xlu0 %5716
      %5718 = vrot.lane.b32.xlu0 %v5624, 16
      %v5719 = vpop.permute.xlu0 %5718
      %5720 = vrot.lane.b32.xlu0 %v5627, 16
      %v5721 = vpop.permute.xlu0 %5720
      %5722 = vrot.lane.b32.xlu0 %v5631, 16
      %v5723 = vpop.permute.xlu0 %5722
      %5724 = vrot.lane.b32.xlu0 %v5634, 16
      %v5725 = vpop.permute.xlu0 %5724
      %5726 = vrot.lane.b32.xlu0 %v5638, 16
      %v5727 = vpop.permute.xlu0 %5726
      %5728 = vrot.lane.b32.xlu0 %v5641, 16
      %v5729 = vpop.permute.xlu0 %5728
      %5730 = vrot.lane.b32.xlu0 %v5645, 16
      %v5731 = vpop.permute.xlu0 %5730
      %5732 = vrot.lane.b32.xlu0 %v5648, 16
      %v5733 = vpop.permute.xlu0 %5732
      %5734 = vrot.lane.b32.xlu0 %v5652, 16
      %v5735 = vpop.permute.xlu0 %5734
      %5736 = vrot.lane.b32.xlu0 %v5655, 16
      %v5737 = vpop.permute.xlu0 %5736
      %5738 = vrot.lane.b32.xlu0 %v5659, 16
      %v5739 = vpop.permute.xlu0 %5738
      %5740 = vrot.lane.b32.xlu0 %v5662, 16
      %v5741 = vpop.permute.xlu0 %5740
      %5742 = vrot.lane.b32.xlu0 %v5666, 16
      %v5743 = vpop.permute.xlu0 %5742
      %5744 = vrot.lane.b32.xlu0 %v5669, 16
      %v5745 = vpop.permute.xlu0 %5744
      %5746 = vrot.lane.b32.xlu0 %v5673, 16
      %v5747 = vpop.permute.xlu0 %5746
      %5748 = vrot.lane.b32.xlu0 %v5676, 16
      %v5749 = vpop.permute.xlu0 %5748
      %5750 = vrot.lane.b32.xlu0 %v5680, 16
      %v5751 = vpop.permute.xlu0 %5750
      %5752 = vrot.lane.b32.xlu0 %v5683, 16
      %v5753 = vpop.permute.xlu0 %5752
      %5754 = vrot.lane.b32.xlu0 %v5687, 16
      %v5755 = vpop.permute.xlu0 %5754
      %5756 = vrot.lane.b32.xlu0 %v5690, 16
      %v5757 = vpop.permute.xlu0 %5756
      %5758 = vrot.lane.b32.xlu0 %v5694, 16
      %v5759 = vpop.permute.xlu0 %5758
      %5760 = vrot.lane.b32.xlu0 %v5697, 16
      %v5761 = vpop.permute.xlu0 %5760
      %vm5794 = vcmask 191616
      %5795 = vst.msk [vmem:[#allocation5] sm:$0xf] %vm5794, %v5699
      %5796 = vst.msk [vmem:[#allocation5 + $0x4] sm:$0xf] %vm5794, %v5701
      %5797 = vst.msk [vmem:[#allocation5 + $0x8] sm:$0xf] %vm5794, %v5703
      %5798 = vst.msk [vmem:[#allocation5 + $0xc] sm:$0xf] %vm5794, %v5705
      %5799 = vst.msk [vmem:[#allocation5 + $0x10] sm:$0xf] %vm5794, %v5707
      %5800 = vst.msk [vmem:[#allocation5 + $0x14] sm:$0xf] %vm5794, %v5709
      %5801 = vst.msk [vmem:[#allocation5 + $0x18] sm:$0xf] %vm5794, %v5711
      %5802 = vst.msk [vmem:[#allocation5 + $0x1c] sm:$0xf] %vm5794, %v5713
      %5803 = vst.msk [vmem:[#allocation5 + $0x20] sm:$0xf] %vm5794, %v5715
      %5804 = vst.msk [vmem:[#allocation5 + $0x24] sm:$0xf] %vm5794, %v5717
      %5805 = vst.msk [vmem:[#allocation5 + $0x28] sm:$0xf] %vm5794, %v5719
      %5806 = vst.msk [vmem:[#allocation5 + $0x2c] sm:$0xf] %vm5794, %v5721
      %5807 = vst.msk [vmem:[#allocation5 + $0x30] sm:$0xf] %vm5794, %v5723
      %5808 = vst.msk [vmem:[#allocation5 + $0x34] sm:$0xf] %vm5794, %v5725
      %5809 = vst.msk [vmem:[#allocation5 + $0x38] sm:$0xf] %vm5794, %v5727
      %5810 = vst.msk [vmem:[#allocation5 + $0x3c] sm:$0xf] %vm5794, %v5729
      %5811 = vst.msk [vmem:[#allocation5 + $0x40] sm:$0xf] %vm5794, %v5731
      %5812 = vst.msk [vmem:[#allocation5 + $0x44] sm:$0xf] %vm5794, %v5733
      %5813 = vst.msk [vmem:[#allocation5 + $0x48] sm:$0xf] %vm5794, %v5735
      %5814 = vst.msk [vmem:[#allocation5 + $0x4c] sm:$0xf] %vm5794, %v5737
      %5815 = vst.msk [vmem:[#allocation5 + $0x50] sm:$0xf] %vm5794, %v5739
      %5816 = vst.msk [vmem:[#allocation5 + $0x54] sm:$0xf] %vm5794, %v5741
      %5817 = vst.msk [vmem:[#allocation5 + $0x58] sm:$0xf] %vm5794, %v5743
      %5818 = vst.msk [vmem:[#allocation5 + $0x5c] sm:$0xf] %vm5794, %v5745
      %5819 = vst.msk [vmem:[#allocation5 + $0x60] sm:$0xf] %vm5794, %v5747
      %5820 = vst.msk [vmem:[#allocation5 + $0x64] sm:$0xf] %vm5794, %v5749
      %5821 = vst.msk [vmem:[#allocation5 + $0x68] sm:$0xf] %vm5794, %v5751
      %5822 = vst.msk [vmem:[#allocation5 + $0x6c] sm:$0xf] %vm5794, %v5753
      %5823 = vst.msk [vmem:[#allocation5 + $0x70] sm:$0xf] %vm5794, %v5755
      %5824 = vst.msk [vmem:[#allocation5 + $0x74] sm:$0xf] %vm5794, %v5757
      %5825 = vst.msk [vmem:[#allocation5 + $0x78] sm:$0xf] %vm5794, %v5759
      %5826 = vst.msk [vmem:[#allocation5 + $0x7c] sm:$0xf] %vm5794, %v5761
      %v5827 = vld [vmem:[%s4750] sm:$0xf]
      %v5828 = vld [vmem:[%s4750 + $0x4] sm:$0xf]
      %v5829 = vld [vmem:[%s4750 + $0xc] sm:$0xf]
      %v5830 = vld [vmem:[%s4750 + $0x10] sm:$0xf]
      %v5831 = vld [vmem:[%s4750 + $0x18] sm:$0xf]
      %v5832 = vld [vmem:[%s4750 + $0x1c] sm:$0xf]
      %v5833 = vld [vmem:[%s4750 + $0x24] sm:$0xf]
      %v5834 = vld [vmem:[%s4750 + $0x28] sm:$0xf]
      %v5835 = vld [vmem:[%s4750 + $0x30] sm:$0xf]
      %v5836 = vld [vmem:[%s4750 + $0x34] sm:$0xf]
      %v5837 = vld [vmem:[%s4750 + $0x3c] sm:$0xf]
      %v5838 = vld [vmem:[%s4750 + $0x40] sm:$0xf]
      %v5839 = vld [vmem:[%s4750 + $0x48] sm:$0xf]
      %v5840 = vld [vmem:[%s4750 + $0x4c] sm:$0xf]
      %v5841 = vld [vmem:[%s4750 + $0x54] sm:$0xf]
      %v5842 = vld [vmem:[%s4750 + $0x58] sm:$0xf]
      %v5843 = vld [vmem:[%s4750 + $0x60] sm:$0xf]
      %v5844 = vld [vmem:[%s4750 + $0x64] sm:$0xf]
      %v5845 = vld [vmem:[%s4750 + $0x6c] sm:$0xf]
      %v5846 = vld [vmem:[%s4750 + $0x70] sm:$0xf]
      %v5847 = vld [vmem:[%s4750 + $0x78] sm:$0xf]
      %v5848 = vld [vmem:[%s4750 + $0x7c] sm:$0xf]
      %v5849 = vld [vmem:[%s4750 + $0x84] sm:$0xf]
      %v5850 = vld [vmem:[%s4750 + $0x88] sm:$0xf]
      %v5851 = vld [vmem:[%s4750 + $0x90] sm:$0xf]
      %v5852 = vld [vmem:[%s4750 + $0x94] sm:$0xf]
      %v5853 = vld [vmem:[%s4750 + $0x9c] sm:$0xf]
      %v5854 = vld [vmem:[%s4750 + $0xa0] sm:$0xf]
      %v5855 = vld [vmem:[%s4750 + $0xa8] sm:$0xf]
      %v5856 = vld [vmem:[%s4750 + $0xac] sm:$0xf]
      %v5857 = vld [vmem:[%s4750 + $0xb4] sm:$0xf]
      %v5858 = vld [vmem:[%s4750 + $0xb8] sm:$0xf]
      %5891 = vrot.lane.b32.xlu0 %v5827, 24
      %v5892 = vpop.permute.xlu0 %5891
      %5893 = vrot.lane.b32.xlu0 %v5828, 24
      %v5894 = vpop.permute.xlu0 %5893
      %5895 = vrot.lane.b32.xlu0 %v5829, 24
      %v5896 = vpop.permute.xlu0 %5895
      %5897 = vrot.lane.b32.xlu0 %v5830, 24
      %v5898 = vpop.permute.xlu0 %5897
      %5899 = vrot.lane.b32.xlu0 %v5831, 24
      %v5900 = vpop.permute.xlu0 %5899
      %5901 = vrot.lane.b32.xlu0 %v5832, 24
      %v5902 = vpop.permute.xlu0 %5901
      %5903 = vrot.lane.b32.xlu0 %v5833, 24
      %v5904 = vpop.permute.xlu0 %5903
      %5905 = vrot.lane.b32.xlu0 %v5834, 24
      %v5906 = vpop.permute.xlu0 %5905
      %5907 = vrot.lane.b32.xlu0 %v5835, 24
      %v5908 = vpop.permute.xlu0 %5907
      %5909 = vrot.lane.b32.xlu0 %v5836, 24
      %v5910 = vpop.permute.xlu0 %5909
      %5911 = vrot.lane.b32.xlu0 %v5837, 24
      %v5912 = vpop.permute.xlu0 %5911
      %5913 = vrot.lane.b32.xlu0 %v5838, 24
      %v5914 = vpop.permute.xlu0 %5913
      %5915 = vrot.lane.b32.xlu0 %v5839, 24
      %v5916 = vpop.permute.xlu0 %5915
      %5917 = vrot.lane.b32.xlu0 %v5840, 24
      %v5918 = vpop.permute.xlu0 %5917
      %5919 = vrot.lane.b32.xlu0 %v5841, 24
      %v5920 = vpop.permute.xlu0 %5919
      %5921 = vrot.lane.b32.xlu0 %v5842, 24
      %v5922 = vpop.permute.xlu0 %5921
      %5923 = vrot.lane.b32.xlu0 %v5843, 24
      %v5924 = vpop.permute.xlu0 %5923
      %5925 = vrot.lane.b32.xlu0 %v5844, 24
      %v5926 = vpop.permute.xlu0 %5925
      %5927 = vrot.lane.b32.xlu0 %v5845, 24
      %v5928 = vpop.permute.xlu0 %5927
      %5929 = vrot.lane.b32.xlu0 %v5846, 24
      %v5930 = vpop.permute.xlu0 %5929
      %5931 = vrot.lane.b32.xlu0 %v5847, 24
      %v5932 = vpop.permute.xlu0 %5931
      %5933 = vrot.lane.b32.xlu0 %v5848, 24
      %v5934 = vpop.permute.xlu0 %5933
      %5935 = vrot.lane.b32.xlu0 %v5849, 24
      %v5936 = vpop.permute.xlu0 %5935
      %5937 = vrot.lane.b32.xlu0 %v5850, 24
      %v5938 = vpop.permute.xlu0 %5937
      %5939 = vrot.lane.b32.xlu0 %v5851, 24
      %v5940 = vpop.permute.xlu0 %5939
      %5941 = vrot.lane.b32.xlu0 %v5852, 24
      %v5942 = vpop.permute.xlu0 %5941
      %5943 = vrot.lane.b32.xlu0 %v5853, 24
      %v5944 = vpop.permute.xlu0 %5943
      %5945 = vrot.lane.b32.xlu0 %v5854, 24
      %v5946 = vpop.permute.xlu0 %5945
      %5947 = vrot.lane.b32.xlu0 %v5855, 24
      %v5948 = vpop.permute.xlu0 %5947
      %5949 = vrot.lane.b32.xlu0 %v5856, 24
      %v5950 = vpop.permute.xlu0 %5949
      %5951 = vrot.lane.b32.xlu0 %v5857, 24
      %v5952 = vpop.permute.xlu0 %5951
      %5953 = vrot.lane.b32.xlu0 %v5858, 24
      %v5954 = vpop.permute.xlu0 %5953
      %vm5987 = vcmask 257216
      %5988 = vst.msk [vmem:[#allocation5] sm:$0xf] %vm5987, %v5892
      %5989 = vst.msk [vmem:[#allocation5 + $0x4] sm:$0xf] %vm5987, %v5894
      %5990 = vst.msk [vmem:[#allocation5 + $0x8] sm:$0xf] %vm5987, %v5896
      %5991 = vst.msk [vmem:[#allocation5 + $0xc] sm:$0xf] %vm5987, %v5898
      %5992 = vst.msk [vmem:[#allocation5 + $0x10] sm:$0xf] %vm5987, %v5900
      %5993 = vst.msk [vmem:[#allocation5 + $0x14] sm:$0xf] %vm5987, %v5902
      %5994 = vst.msk [vmem:[#allocation5 + $0x18] sm:$0xf] %vm5987, %v5904
      %5995 = vst.msk [vmem:[#allocation5 + $0x1c] sm:$0xf] %vm5987, %v5906
      %5996 = vst.msk [vmem:[#allocation5 + $0x20] sm:$0xf] %vm5987, %v5908
      %5997 = vst.msk [vmem:[#allocation5 + $0x24] sm:$0xf] %vm5987, %v5910
      %5998 = vst.msk [vmem:[#allocation5 + $0x28] sm:$0xf] %vm5987, %v5912
      %5999 = vst.msk [vmem:[#allocation5 + $0x2c] sm:$0xf] %vm5987, %v5914
      %6000 = vst.msk [vmem:[#allocation5 + $0x30] sm:$0xf] %vm5987, %v5916
      %6001 = vst.msk [vmem:[#allocation5 + $0x34] sm:$0xf] %vm5987, %v5918
      %6002 = vst.msk [vmem:[#allocation5 + $0x38] sm:$0xf] %vm5987, %v5920
      %6003 = vst.msk [vmem:[#allocation5 + $0x3c] sm:$0xf] %vm5987, %v5922
      %6004 = vst.msk [vmem:[#allocation5 + $0x40] sm:$0xf] %vm5987, %v5924
      %6005 = vst.msk [vmem:[#allocation5 + $0x44] sm:$0xf] %vm5987, %v5926
      %6006 = vst.msk [vmem:[#allocation5 + $0x48] sm:$0xf] %vm5987, %v5928
      %6007 = vst.msk [vmem:[#allocation5 + $0x4c] sm:$0xf] %vm5987, %v5930
      %6008 = vst.msk [vmem:[#allocation5 + $0x50] sm:$0xf] %vm5987, %v5932
      %6009 = vst.msk [vmem:[#allocation5 + $0x54] sm:$0xf] %vm5987, %v5934
      %6010 = vst.msk [vmem:[#allocation5 + $0x58] sm:$0xf] %vm5987, %v5936
      %6011 = vst.msk [vmem:[#allocation5 + $0x5c] sm:$0xf] %vm5987, %v5938
      %6012 = vst.msk [vmem:[#allocation5 + $0x60] sm:$0xf] %vm5987, %v5940
      %6013 = vst.msk [vmem:[#allocation5 + $0x64] sm:$0xf] %vm5987, %v5942
      %6014 = vst.msk [vmem:[#allocation5 + $0x68] sm:$0xf] %vm5987, %v5944
      %6015 = vst.msk [vmem:[#allocation5 + $0x6c] sm:$0xf] %vm5987, %v5946
      %6016 = vst.msk [vmem:[#allocation5 + $0x70] sm:$0xf] %vm5987, %v5948
      %6017 = vst.msk [vmem:[#allocation5 + $0x74] sm:$0xf] %vm5987, %v5950
      %6018 = vst.msk [vmem:[#allocation5 + $0x78] sm:$0xf] %vm5987, %v5952
      %6019 = vst.msk [vmem:[#allocation5 + $0x7c] sm:$0xf] %vm5987, %v5954
      %v6020 = vld [vmem:[%s4750] sm:$0xf]
      %v6021 = vld [vmem:[%s4750 + $0x4] sm:$0xf]
      %v6022 = vld [vmem:[%s4750 + $0x8] sm:$0x1]
      %v6023 = vld [vmem:[%s4750 + $0xc] sm:$0xf]
      %v6024 = vld [vmem:[%s4750 + $0x10] sm:$0xf]
      %v6025 = vld [vmem:[%s4750 + $0x14] sm:$0x1]
      %v6026 = vld [vmem:[%s4750 + $0x18] sm:$0xf]
      %v6027 = vld [vmem:[%s4750 + $0x1c] sm:$0xf]
      %v6028 = vld [vmem:[%s4750 + $0x20] sm:$0x1]
      %v6029 = vld [vmem:[%s4750 + $0x24] sm:$0xf]
      %v6030 = vld [vmem:[%s4750 + $0x28] sm:$0xf]
      %v6031 = vld [vmem:[%s4750 + $0x2c] sm:$0x1]
      %v6032 = vld [vmem:[%s4750 + $0x30] sm:$0xf]
      %v6033 = vld [vmem:[%s4750 + $0x34] sm:$0xf]
      %v6034 = vld [vmem:[%s4750 + $0x38] sm:$0x1]
      %v6035 = vld [vmem:[%s4750 + $0x3c] sm:$0xf]
      %v6036 = vld [vmem:[%s4750 + $0x40] sm:$0xf]
      %v6037 = vld [vmem:[%s4750 + $0x44] sm:$0x1]
      %v6038 = vld [vmem:[%s4750 + $0x48] sm:$0xf]
      %v6039 = vld [vmem:[%s4750 + $0x4c] sm:$0xf]
      %v6040 = vld [vmem:[%s4750 + $0x50] sm:$0x1]
      %v6041 = vld [vmem:[%s4750 + $0x54] sm:$0xf]
      %v6042 = vld [vmem:[%s4750 + $0x58] sm:$0xf]
      %v6043 = vld [vmem:[%s4750 + $0x5c] sm:$0x1]
      %v6044 = vld [vmem:[%s4750 + $0x60] sm:$0xf]
      %v6045 = vld [vmem:[%s4750 + $0x64] sm:$0xf]
      %v6046 = vld [vmem:[%s4750 + $0x68] sm:$0x1]
      %v6047 = vld [vmem:[%s4750 + $0x6c] sm:$0xf]
      %v6048 = vld [vmem:[%s4750 + $0x70] sm:$0xf]
      %v6049 = vld [vmem:[%s4750 + $0x74] sm:$0x1]
      %v6050 = vld [vmem:[%s4750 + $0x78] sm:$0xf]
      %v6051 = vld [vmem:[%s4750 + $0x7c] sm:$0xf]
      %v6052 = vld [vmem:[%s4750 + $0x80] sm:$0x1]
      %v6053 = vld [vmem:[%s4750 + $0x84] sm:$0xf]
      %v6054 = vld [vmem:[%s4750 + $0x88] sm:$0xf]
      %v6055 = vld [vmem:[%s4750 + $0x8c] sm:$0x1]
      %v6056 = vld [vmem:[%s4750 + $0x90] sm:$0xf]
      %v6057 = vld [vmem:[%s4750 + $0x94] sm:$0xf]
      %v6058 = vld [vmem:[%s4750 + $0x98] sm:$0x1]
      %v6059 = vld [vmem:[%s4750 + $0x9c] sm:$0xf]
      %v6060 = vld [vmem:[%s4750 + $0xa0] sm:$0xf]
      %v6061 = vld [vmem:[%s4750 + $0xa4] sm:$0x1]
      %v6062 = vld [vmem:[%s4750 + $0xa8] sm:$0xf]
      %v6063 = vld [vmem:[%s4750 + $0xac] sm:$0xf]
      %v6064 = vld [vmem:[%s4750 + $0xb0] sm:$0x1]
      %v6065 = vld [vmem:[%s4750 + $0xb4] sm:$0xf]
      %v6066 = vld [vmem:[%s4750 + $0xb8] sm:$0xf]
      %v6067 = vld [vmem:[%s4750 + $0xbc] sm:$0x1]
      %v6069 = vshrl.u32 %v6020, 16
      %v6071 = vrot.slane %v6069, 4
      %v6072 = vshll.u32 %v6020, 16
      %v6074 = vrot.slane %v6072, 5
      %v6075 = vor.u32 %v6071, %v6074
      %v6076 = vrot.slane %v6075, 4
      %v6078 = vshll.u32 %v6021, 16
      %v6080 = vrot.slane %v6078, 5
      %v6081 = vsel %vm1051, %v6076, %v6080
      %v6082 = vshrl.u32 %v6021, 16
      %v6084 = vrot.slane %v6082, 4
      %v6085 = vor.u32 %v6084, %v6080
      %v6086 = vrot.slane %v6085, 4
      %v6088 = vshll.u32 %v6022, 16
      %v6090 = vrot.slane %v6088, 5
      %v6091 = vsel %vm1051, %v6086, %v6090
      %v6093 = vshrl.u32 %v6023, 16
      %v6095 = vrot.slane %v6093, 4
      %v6096 = vshll.u32 %v6023, 16
      %v6098 = vrot.slane %v6096, 5
      %v6099 = vor.u32 %v6095, %v6098
      %v6100 = vrot.slane %v6099, 4
      %v6102 = vshll.u32 %v6024, 16
      %v6104 = vrot.slane %v6102, 5
      %v6105 = vsel %vm1051, %v6100, %v6104
      %v6106 = vshrl.u32 %v6024, 16
      %v6108 = vrot.slane %v6106, 4
      %v6109 = vor.u32 %v6108, %v6104
      %v6110 = vrot.slane %v6109, 4
      %v6112 = vshll.u32 %v6025, 16
      %v6114 = vrot.slane %v6112, 5
      %v6115 = vsel %vm1051, %v6110, %v6114
      %v6117 = vshrl.u32 %v6026, 16
      %v6119 = vrot.slane %v6117, 4
      %v6120 = vshll.u32 %v6026, 16
      %v6122 = vrot.slane %v6120, 5
      %v6123 = vor.u32 %v6119, %v6122
      %v6124 = vrot.slane %v6123, 4
      %v6126 = vshll.u32 %v6027, 16
      %v6128 = vrot.slane %v6126, 5
      %v6129 = vsel %vm1051, %v6124, %v6128
      %v6130 = vshrl.u32 %v6027, 16
      %v6132 = vrot.slane %v6130, 4
      %v6133 = vor.u32 %v6132, %v6128
      %v6134 = vrot.slane %v6133, 4
      %v6136 = vshll.u32 %v6028, 16
      %v6138 = vrot.slane %v6136, 5
      %v6139 = vsel %vm1051, %v6134, %v6138
      %v6141 = vshrl.u32 %v6029, 16
      %v6143 = vrot.slane %v6141, 4
      %v6144 = vshll.u32 %v6029, 16
      %v6146 = vrot.slane %v6144, 5
      %v6147 = vor.u32 %v6143, %v6146
      %v6148 = vrot.slane %v6147, 4
      %v6150 = vshll.u32 %v6030, 16
      %v6152 = vrot.slane %v6150, 5
      %v6153 = vsel %vm1051, %v6148, %v6152
      %v6154 = vshrl.u32 %v6030, 16
      %v6156 = vrot.slane %v6154, 4
      %v6157 = vor.u32 %v6156, %v6152
      %v6158 = vrot.slane %v6157, 4
      %v6160 = vshll.u32 %v6031, 16
      %v6162 = vrot.slane %v6160, 5
      %v6163 = vsel %vm1051, %v6158, %v6162
      %v6165 = vshrl.u32 %v6032, 16
      %v6167 = vrot.slane %v6165, 4
      %v6168 = vshll.u32 %v6032, 16
      %v6170 = vrot.slane %v6168, 5
      %v6171 = vor.u32 %v6167, %v6170
      %v6172 = vrot.slane %v6171, 4
      %v6174 = vshll.u32 %v6033, 16
      %v6176 = vrot.slane %v6174, 5
      %v6177 = vsel %vm1051, %v6172, %v6176
      %v6178 = vshrl.u32 %v6033, 16
      %v6180 = vrot.slane %v6178, 4
      %v6181 = vor.u32 %v6180, %v6176
      %v6182 = vrot.slane %v6181, 4
      %v6184 = vshll.u32 %v6034, 16
      %v6186 = vrot.slane %v6184, 5
      %v6187 = vsel %vm1051, %v6182, %v6186
      %v6189 = vshrl.u32 %v6035, 16
      %v6191 = vrot.slane %v6189, 4
      %v6192 = vshll.u32 %v6035, 16
      %v6194 = vrot.slane %v6192, 5
      %v6195 = vor.u32 %v6191, %v6194
      %v6196 = vrot.slane %v6195, 4
      %v6198 = vshll.u32 %v6036, 16
      %v6200 = vrot.slane %v6198, 5
      %v6201 = vsel %vm1051, %v6196, %v6200
      %v6202 = vshrl.u32 %v6036, 16
      %v6204 = vrot.slane %v6202, 4
      %v6205 = vor.u32 %v6204, %v6200
      %v6206 = vrot.slane %v6205, 4
      %v6208 = vshll.u32 %v6037, 16
      %v6210 = vrot.slane %v6208, 5
      %v6211 = vsel %vm1051, %v6206, %v6210
      %v6213 = vshrl.u32 %v6038, 16
      %v6215 = vrot.slane %v6213, 4
      %v6216 = vshll.u32 %v6038, 16
      %v6218 = vrot.slane %v6216, 5
      %v6219 = vor.u32 %v6215, %v6218
      %v6220 = vrot.slane %v6219, 4
      %v6222 = vshll.u32 %v6039, 16
      %v6224 = vrot.slane %v6222, 5
      %v6225 = vsel %vm1051, %v6220, %v6224
      %v6226 = vshrl.u32 %v6039, 16
      %v6228 = vrot.slane %v6226, 4
      %v6229 = vor.u32 %v6228, %v6224
      %v6230 = vrot.slane %v6229, 4
      %v6232 = vshll.u32 %v6040, 16
      %v6234 = vrot.slane %v6232, 5
      %v6235 = vsel %vm1051, %v6230, %v6234
      %v6237 = vshrl.u32 %v6041, 16
      %v6239 = vrot.slane %v6237, 4
      %v6240 = vshll.u32 %v6041, 16
      %v6242 = vrot.slane %v6240, 5
      %v6243 = vor.u32 %v6239, %v6242
      %v6244 = vrot.slane %v6243, 4
      %v6246 = vshll.u32 %v6042, 16
      %v6248 = vrot.slane %v6246, 5
      %v6249 = vsel %vm1051, %v6244, %v6248
      %v6250 = vshrl.u32 %v6042, 16
      %v6252 = vrot.slane %v6250, 4
      %v6253 = vor.u32 %v6252, %v6248
      %v6254 = vrot.slane %v6253, 4
      %v6256 = vshll.u32 %v6043, 16
      %v6258 = vrot.slane %v6256, 5
      %v6259 = vsel %vm1051, %v6254, %v6258
      %v6261 = vshrl.u32 %v6044, 16
      %v6263 = vrot.slane %v6261, 4
      %v6264 = vshll.u32 %v6044, 16
      %v6266 = vrot.slane %v6264, 5
      %v6267 = vor.u32 %v6263, %v6266
      %v6268 = vrot.slane %v6267, 4
      %v6270 = vshll.u32 %v6045, 16
      %v6272 = vrot.slane %v6270, 5
      %v6273 = vsel %vm1051, %v6268, %v6272
      %v6274 = vshrl.u32 %v6045, 16
      %v6276 = vrot.slane %v6274, 4
      %v6277 = vor.u32 %v6276, %v6272
      %v6278 = vrot.slane %v6277, 4
      %v6280 = vshll.u32 %v6046, 16
      %v6282 = vrot.slane %v6280, 5
      %v6283 = vsel %vm1051, %v6278, %v6282
      %v6285 = vshrl.u32 %v6047, 16
      %v6287 = vrot.slane %v6285, 4
      %v6288 = vshll.u32 %v6047, 16
      %v6290 = vrot.slane %v6288, 5
      %v6291 = vor.u32 %v6287, %v6290
      %v6292 = vrot.slane %v6291, 4
      %v6294 = vshll.u32 %v6048, 16
      %v6296 = vrot.slane %v6294, 5
      %v6297 = vsel %vm1051, %v6292, %v6296
      %v6298 = vshrl.u32 %v6048, 16
      %v6300 = vrot.slane %v6298, 4
      %v6301 = vor.u32 %v6300, %v6296
      %v6302 = vrot.slane %v6301, 4
      %v6304 = vshll.u32 %v6049, 16
      %v6306 = vrot.slane %v6304, 5
      %v6307 = vsel %vm1051, %v6302, %v6306
      %v6309 = vshrl.u32 %v6050, 16
      %v6311 = vrot.slane %v6309, 4
      %v6312 = vshll.u32 %v6050, 16
      %v6314 = vrot.slane %v6312, 5
      %v6315 = vor.u32 %v6311, %v6314
      %v6316 = vrot.slane %v6315, 4
      %v6318 = vshll.u32 %v6051, 16
      %v6320 = vrot.slane %v6318, 5
      %v6321 = vsel %vm1051, %v6316, %v6320
      %v6322 = vshrl.u32 %v6051, 16
      %v6324 = vrot.slane %v6322, 4
      %v6325 = vor.u32 %v6324, %v6320
      %v6326 = vrot.slane %v6325, 4
      %v6328 = vshll.u32 %v6052, 16
      %v6330 = vrot.slane %v6328, 5
      %v6331 = vsel %vm1051, %v6326, %v6330
      %v6333 = vshrl.u32 %v6053, 16
      %v6335 = vrot.slane %v6333, 4
      %v6336 = vshll.u32 %v6053, 16
      %v6338 = vrot.slane %v6336, 5
      %v6339 = vor.u32 %v6335, %v6338
      %v6340 = vrot.slane %v6339, 4
      %v6342 = vshll.u32 %v6054, 16
      %v6344 = vrot.slane %v6342, 5
      %v6345 = vsel %vm1051, %v6340, %v6344
      %v6346 = vshrl.u32 %v6054, 16
      %v6348 = vrot.slane %v6346, 4
      %v6349 = vor.u32 %v6348, %v6344
      %v6350 = vrot.slane %v6349, 4
      %v6352 = vshll.u32 %v6055, 16
      %v6354 = vrot.slane %v6352, 5
      %v6355 = vsel %vm1051, %v6350, %v6354
      %v6357 = vshrl.u32 %v6056, 16
      %v6359 = vrot.slane %v6357, 4
      %v6360 = vshll.u32 %v6056, 16
      %v6362 = vrot.slane %v6360, 5
      %v6363 = vor.u32 %v6359, %v6362
      %v6364 = vrot.slane %v6363, 4
      %v6366 = vshll.u32 %v6057, 16
      %v6368 = vrot.slane %v6366, 5
      %v6369 = vsel %vm1051, %v6364, %v6368
      %v6370 = vshrl.u32 %v6057, 16
      %v6372 = vrot.slane %v6370, 4
      %v6373 = vor.u32 %v6372, %v6368
      %v6374 = vrot.slane %v6373, 4
      %v6376 = vshll.u32 %v6058, 16
      %v6378 = vrot.slane %v6376, 5
      %v6379 = vsel %vm1051, %v6374, %v6378
      %v6381 = vshrl.u32 %v6059, 16
      %v6383 = vrot.slane %v6381, 4
      %v6384 = vshll.u32 %v6059, 16
      %v6386 = vrot.slane %v6384, 5
      %v6387 = vor.u32 %v6383, %v6386
      %v6388 = vrot.slane %v6387, 4
      %v6390 = vshll.u32 %v6060, 16
      %v6392 = vrot.slane %v6390, 5
      %v6393 = vsel %vm1051, %v6388, %v6392
      %v6394 = vshrl.u32 %v6060, 16
      %v6396 = vrot.slane %v6394, 4
      %v6397 = vor.u32 %v6396, %v6392
      %v6398 = vrot.slane %v6397, 4
      %v6400 = vshll.u32 %v6061, 16
      %v6402 = vrot.slane %v6400, 5
      %v6403 = vsel %vm1051, %v6398, %v6402
      %v6405 = vshrl.u32 %v6062, 16
      %v6407 = vrot.slane %v6405, 4
      %v6408 = vshll.u32 %v6062, 16
      %v6410 = vrot.slane %v6408, 5
      %v6411 = vor.u32 %v6407, %v6410
      %v6412 = vrot.slane %v6411, 4
      %v6414 = vshll.u32 %v6063, 16
      %v6416 = vrot.slane %v6414, 5
      %v6417 = vsel %vm1051, %v6412, %v6416
      %v6418 = vshrl.u32 %v6063, 16
      %v6420 = vrot.slane %v6418, 4
      %v6421 = vor.u32 %v6420, %v6416
      %v6422 = vrot.slane %v6421, 4
      %v6424 = vshll.u32 %v6064, 16
      %v6426 = vrot.slane %v6424, 5
      %v6427 = vsel %vm1051, %v6422, %v6426
      %v6429 = vshrl.u32 %v6065, 16
      %v6431 = vrot.slane %v6429, 4
      %v6432 = vshll.u32 %v6065, 16
      %v6434 = vrot.slane %v6432, 5
      %v6435 = vor.u32 %v6431, %v6434
      %v6436 = vrot.slane %v6435, 4
      %v6438 = vshll.u32 %v6066, 16
      %v6440 = vrot.slane %v6438, 5
      %v6441 = vsel %vm1051, %v6436, %v6440
      %v6442 = vshrl.u32 %v6066, 16
      %v6444 = vrot.slane %v6442, 4
      %v6445 = vor.u32 %v6444, %v6440
      %v6446 = vrot.slane %v6445, 4
      %v6448 = vshll.u32 %v6067, 16
      %v6450 = vrot.slane %v6448, 5
      %v6451 = vsel %vm1051, %v6446, %v6450
      %6452 = vrot.lane.b32.xlu0 %v6081, 32
      %v6453 = vpop.permute.xlu0 %6452
      %6454 = vrot.lane.b32.xlu0 %v6091, 32
      %v6455 = vpop.permute.xlu0 %6454
      %6456 = vrot.lane.b32.xlu0 %v6105, 32
      %v6457 = vpop.permute.xlu0 %6456
      %6458 = vrot.lane.b32.xlu0 %v6115, 32
      %v6459 = vpop.permute.xlu0 %6458
      %6460 = vrot.lane.b32.xlu0 %v6129, 32
      %v6461 = vpop.permute.xlu0 %6460
      %6462 = vrot.lane.b32.xlu0 %v6139, 32
      %v6463 = vpop.permute.xlu0 %6462
      %6464 = vrot.lane.b32.xlu0 %v6153, 32
      %v6465 = vpop.permute.xlu0 %6464
      %6466 = vrot.lane.b32.xlu0 %v6163, 32
      %v6467 = vpop.permute.xlu0 %6466
      %6468 = vrot.lane.b32.xlu0 %v6177, 32
      %v6469 = vpop.permute.xlu0 %6468
      %6470 = vrot.lane.b32.xlu0 %v6187, 32
      %v6471 = vpop.permute.xlu0 %6470
      %6472 = vrot.lane.b32.xlu0 %v6201, 32
      %v6473 = vpop.permute.xlu0 %6472
      %6474 = vrot.lane.b32.xlu0 %v6211, 32
      %v6475 = vpop.permute.xlu0 %6474
      %6476 = vrot.lane.b32.xlu0 %v6225, 32
      %v6477 = vpop.permute.xlu0 %6476
      %6478 = vrot.lane.b32.xlu0 %v6235, 32
      %v6479 = vpop.permute.xlu0 %6478
      %6480 = vrot.lane.b32.xlu0 %v6249, 32
      %v6481 = vpop.permute.xlu0 %6480
      %6482 = vrot.lane.b32.xlu0 %v6259, 32
      %v6483 = vpop.permute.xlu0 %6482
      %6484 = vrot.lane.b32.xlu0 %v6273, 32
      %v6485 = vpop.permute.xlu0 %6484
      %6486 = vrot.lane.b32.xlu0 %v6283, 32
      %v6487 = vpop.permute.xlu0 %6486
      %6488 = vrot.lane.b32.xlu0 %v6297, 32
      %v6489 = vpop.permute.xlu0 %6488
      %6490 = vrot.lane.b32.xlu0 %v6307, 32
      %v6491 = vpop.permute.xlu0 %6490
      %6492 = vrot.lane.b32.xlu0 %v6321, 32
      %v6493 = vpop.permute.xlu0 %6492
      %6494 = vrot.lane.b32.xlu0 %v6331, 32
      %v6495 = vpop.permute.xlu0 %6494
      %6496 = vrot.lane.b32.xlu0 %v6345, 32
      %v6497 = vpop.permute.xlu0 %6496
      %6498 = vrot.lane.b32.xlu0 %v6355, 32
      %v6499 = vpop.permute.xlu0 %6498
      %6500 = vrot.lane.b32.xlu0 %v6369, 32
      %v6501 = vpop.permute.xlu0 %6500
      %6502 = vrot.lane.b32.xlu0 %v6379, 32
      %v6503 = vpop.permute.xlu0 %6502
      %6504 = vrot.lane.b32.xlu0 %v6393, 32
      %v6505 = vpop.permute.xlu0 %6504
      %6506 = vrot.lane.b32.xlu0 %v6403, 32
      %v6507 = vpop.permute.xlu0 %6506
      %6508 = vrot.lane.b32.xlu0 %v6417, 32
      %v6509 = vpop.permute.xlu0 %6508
      %6510 = vrot.lane.b32.xlu0 %v6427, 32
      %v6511 = vpop.permute.xlu0 %6510
      %6512 = vrot.lane.b32.xlu0 %v6441, 32
      %v6513 = vpop.permute.xlu0 %6512
      %6514 = vrot.lane.b32.xlu0 %v6451, 32
      %v6515 = vpop.permute.xlu0 %6514
      %vm6548 = vcmask 322816
      %6549 = vst.msk [vmem:[#allocation5] sm:$0xf] %vm6548, %v6453
      %6550 = vst.msk [vmem:[#allocation5 + $0x4] sm:$0xf] %vm6548, %v6455
      %6551 = vst.msk [vmem:[#allocation5 + $0x8] sm:$0xf] %vm6548, %v6457
      %6552 = vst.msk [vmem:[#allocation5 + $0xc] sm:$0xf] %vm6548, %v6459
      %6553 = vst.msk [vmem:[#allocation5 + $0x10] sm:$0xf] %vm6548, %v6461
      %6554 = vst.msk [vmem:[#allocation5 + $0x14] sm:$0xf] %vm6548, %v6463
      %6555 = vst.msk [vmem:[#allocation5 + $0x18] sm:$0xf] %vm6548, %v6465
      %6556 = vst.msk [vmem:[#allocation5 + $0x1c] sm:$0xf] %vm6548, %v6467
      %6557 = vst.msk [vmem:[#allocation5 + $0x20] sm:$0xf] %vm6548, %v6469
      %6558 = vst.msk [vmem:[#allocation5 + $0x24] sm:$0xf] %vm6548, %v6471
      %6559 = vst.msk [vmem:[#allocation5 + $0x28] sm:$0xf] %vm6548, %v6473
      %6560 = vst.msk [vmem:[#allocation5 + $0x2c] sm:$0xf] %vm6548, %v6475
      %6561 = vst.msk [vmem:[#allocation5 + $0x30] sm:$0xf] %vm6548, %v6477
      %6562 = vst.msk [vmem:[#allocation5 + $0x34] sm:$0xf] %vm6548, %v6479
      %6563 = vst.msk [vmem:[#allocation5 + $0x38] sm:$0xf] %vm6548, %v6481
      %6564 = vst.msk [vmem:[#allocation5 + $0x3c] sm:$0xf] %vm6548, %v6483
      %6565 = vst.msk [vmem:[#allocation5 + $0x40] sm:$0xf] %vm6548, %v6485
      %6566 = vst.msk [vmem:[#allocation5 + $0x44] sm:$0xf] %vm6548, %v6487
      %6567 = vst.msk [vmem:[#allocation5 + $0x48] sm:$0xf] %vm6548, %v6489
      %6568 = vst.msk [vmem:[#allocation5 + $0x4c] sm:$0xf] %vm6548, %v6491
      %6569 = vst.msk [vmem:[#allocation5 + $0x50] sm:$0xf] %vm6548, %v6493
      %6570 = vst.msk [vmem:[#allocation5 + $0x54] sm:$0xf] %vm6548, %v6495
      %6571 = vst.msk [vmem:[#allocation5 + $0x58] sm:$0xf] %vm6548, %v6497
      %6572 = vst.msk [vmem:[#allocation5 + $0x5c] sm:$0xf] %vm6548, %v6499
      %6573 = vst.msk [vmem:[#allocation5 + $0x60] sm:$0xf] %vm6548, %v6501
      %6574 = vst.msk [vmem:[#allocation5 + $0x64] sm:$0xf] %vm6548, %v6503
      %6575 = vst.msk [vmem:[#allocation5 + $0x68] sm:$0xf] %vm6548, %v6505
      %6576 = vst.msk [vmem:[#allocation5 + $0x6c] sm:$0xf] %vm6548, %v6507
      %6577 = vst.msk [vmem:[#allocation5 + $0x70] sm:$0xf] %vm6548, %v6509
      %6578 = vst.msk [vmem:[#allocation5 + $0x74] sm:$0xf] %vm6548, %v6511
      %6579 = vst.msk [vmem:[#allocation5 + $0x78] sm:$0xf] %vm6548, %v6513
      %6580 = vst.msk [vmem:[#allocation5 + $0x7c] sm:$0xf] %vm6548, %v6515
      %v6581 = vld [vmem:[%s4750] sm:$0xe]
      %v6582 = vld [vmem:[%s4750 + $0x4] sm:$0xf]
      %v6583 = vld [vmem:[%s4750 + $0x8] sm:$0x1]
      %v6584 = vld [vmem:[%s4750 + $0xc] sm:$0xe]
      %v6585 = vld [vmem:[%s4750 + $0x10] sm:$0xf]
      %v6586 = vld [vmem:[%s4750 + $0x14] sm:$0x1]
      %v6587 = vld [vmem:[%s4750 + $0x18] sm:$0xe]
      %v6588 = vld [vmem:[%s4750 + $0x1c] sm:$0xf]
      %v6589 = vld [vmem:[%s4750 + $0x20] sm:$0x1]
      %v6590 = vld [vmem:[%s4750 + $0x24] sm:$0xe]
      %v6591 = vld [vmem:[%s4750 + $0x28] sm:$0xf]
      %v6592 = vld [vmem:[%s4750 + $0x2c] sm:$0x1]
      %v6593 = vld [vmem:[%s4750 + $0x30] sm:$0xe]
      %v6594 = vld [vmem:[%s4750 + $0x34] sm:$0xf]
      %v6595 = vld [vmem:[%s4750 + $0x38] sm:$0x1]
      %v6596 = vld [vmem:[%s4750 + $0x3c] sm:$0xe]
      %v6597 = vld [vmem:[%s4750 + $0x40] sm:$0xf]
      %v6598 = vld [vmem:[%s4750 + $0x44] sm:$0x1]
      %v6599 = vld [vmem:[%s4750 + $0x48] sm:$0xe]
      %v6600 = vld [vmem:[%s4750 + $0x4c] sm:$0xf]
      %v6601 = vld [vmem:[%s4750 + $0x50] sm:$0x1]
      %v6602 = vld [vmem:[%s4750 + $0x54] sm:$0xe]
      %v6603 = vld [vmem:[%s4750 + $0x58] sm:$0xf]
      %v6604 = vld [vmem:[%s4750 + $0x5c] sm:$0x1]
      %v6605 = vld [vmem:[%s4750 + $0x60] sm:$0xe]
      %v6606 = vld [vmem:[%s4750 + $0x64] sm:$0xf]
      %v6607 = vld [vmem:[%s4750 + $0x68] sm:$0x1]
      %v6608 = vld [vmem:[%s4750 + $0x6c] sm:$0xe]
      %v6609 = vld [vmem:[%s4750 + $0x70] sm:$0xf]
      %v6610 = vld [vmem:[%s4750 + $0x74] sm:$0x1]
      %v6611 = vld [vmem:[%s4750 + $0x78] sm:$0xe]
      %v6612 = vld [vmem:[%s4750 + $0x7c] sm:$0xf]
      %v6613 = vld [vmem:[%s4750 + $0x80] sm:$0x1]
      %v6614 = vld [vmem:[%s4750 + $0x84] sm:$0xe]
      %v6615 = vld [vmem:[%s4750 + $0x88] sm:$0xf]
      %v6616 = vld [vmem:[%s4750 + $0x8c] sm:$0x1]
      %v6617 = vld [vmem:[%s4750 + $0x90] sm:$0xe]
      %v6618 = vld [vmem:[%s4750 + $0x94] sm:$0xf]
      %v6619 = vld [vmem:[%s4750 + $0x98] sm:$0x1]
      %v6620 = vld [vmem:[%s4750 + $0x9c] sm:$0xe]
      %v6621 = vld [vmem:[%s4750 + $0xa0] sm:$0xf]
      %v6622 = vld [vmem:[%s4750 + $0xa4] sm:$0x1]
      %v6623 = vld [vmem:[%s4750 + $0xa8] sm:$0xe]
      %v6624 = vld [vmem:[%s4750 + $0xac] sm:$0xf]
      %v6625 = vld [vmem:[%s4750 + $0xb0] sm:$0x1]
      %v6626 = vld [vmem:[%s4750 + $0xb4] sm:$0xe]
      %v6627 = vld [vmem:[%s4750 + $0xb8] sm:$0xf]
      %v6628 = vld [vmem:[%s4750 + $0xbc] sm:$0x1]
      %v6677 = vrot.slane %v6581, 5
      %v6678 = vrot.slane %v6677, 4
      %v6679 = vrot.slane %v6582, 5
      %v6680 = vsel %vm1663, %v6678, %v6679
      %v6681 = vrot.slane %v6679, 4
      %v6682 = vrot.slane %v6583, 5
      %v6683 = vsel %vm1663, %v6681, %v6682
      %v6684 = vrot.slane %v6584, 5
      %v6685 = vrot.slane %v6684, 4
      %v6686 = vrot.slane %v6585, 5
      %v6687 = vsel %vm1663, %v6685, %v6686
      %v6688 = vrot.slane %v6686, 4
      %v6689 = vrot.slane %v6586, 5
      %v6690 = vsel %vm1663, %v6688, %v6689
      %v6691 = vrot.slane %v6587, 5
      %v6692 = vrot.slane %v6691, 4
      %v6693 = vrot.slane %v6588, 5
      %v6694 = vsel %vm1663, %v6692, %v6693
      %v6695 = vrot.slane %v6693, 4
      %v6696 = vrot.slane %v6589, 5
      %v6697 = vsel %vm1663, %v6695, %v6696
      %v6698 = vrot.slane %v6590, 5
      %v6699 = vrot.slane %v6698, 4
      %v6700 = vrot.slane %v6591, 5
      %v6701 = vsel %vm1663, %v6699, %v6700
      %v6702 = vrot.slane %v6700, 4
      %v6703 = vrot.slane %v6592, 5
      %v6704 = vsel %vm1663, %v6702, %v6703
      %v6705 = vrot.slane %v6593, 5
      %v6706 = vrot.slane %v6705, 4
      %v6707 = vrot.slane %v6594, 5
      %v6708 = vsel %vm1663, %v6706, %v6707
      %v6709 = vrot.slane %v6707, 4
      %v6710 = vrot.slane %v6595, 5
      %v6711 = vsel %vm1663, %v6709, %v6710
      %v6712 = vrot.slane %v6596, 5
      %v6713 = vrot.slane %v6712, 4
      %v6714 = vrot.slane %v6597, 5
      %v6715 = vsel %vm1663, %v6713, %v6714
      %v6716 = vrot.slane %v6714, 4
      %v6717 = vrot.slane %v6598, 5
      %v6718 = vsel %vm1663, %v6716, %v6717
      %v6719 = vrot.slane %v6599, 5
      %v6720 = vrot.slane %v6719, 4
      %v6721 = vrot.slane %v6600, 5
      %v6722 = vsel %vm1663, %v6720, %v6721
      %v6723 = vrot.slane %v6721, 4
      %v6724 = vrot.slane %v6601, 5
      %v6725 = vsel %vm1663, %v6723, %v6724
      %v6726 = vrot.slane %v6602, 5
      %v6727 = vrot.slane %v6726, 4
      %v6728 = vrot.slane %v6603, 5
      %v6729 = vsel %vm1663, %v6727, %v6728
      %v6730 = vrot.slane %v6728, 4
      %v6731 = vrot.slane %v6604, 5
      %v6732 = vsel %vm1663, %v6730, %v6731
      %v6733 = vrot.slane %v6605, 5
      %v6734 = vrot.slane %v6733, 4
      %v6735 = vrot.slane %v6606, 5
      %v6736 = vsel %vm1663, %v6734, %v6735
      %v6737 = vrot.slane %v6735, 4
      %v6738 = vrot.slane %v6607, 5
      %v6739 = vsel %vm1663, %v6737, %v6738
      %v6740 = vrot.slane %v6608, 5
      %v6741 = vrot.slane %v6740, 4
      %v6742 = vrot.slane %v6609, 5
      %v6743 = vsel %vm1663, %v6741, %v6742
      %v6744 = vrot.slane %v6742, 4
      %v6745 = vrot.slane %v6610, 5
      %v6746 = vsel %vm1663, %v6744, %v6745
      %v6747 = vrot.slane %v6611, 5
      %v6748 = vrot.slane %v6747, 4
      %v6749 = vrot.slane %v6612, 5
      %v6750 = vsel %vm1663, %v6748, %v6749
      %v6751 = vrot.slane %v6749, 4
      %v6752 = vrot.slane %v6613, 5
      %v6753 = vsel %vm1663, %v6751, %v6752
      %v6754 = vrot.slane %v6614, 5
      %v6755 = vrot.slane %v6754, 4
      %v6756 = vrot.slane %v6615, 5
      %v6757 = vsel %vm1663, %v6755, %v6756
      %v6758 = vrot.slane %v6756, 4
      %v6759 = vrot.slane %v6616, 5
      %v6760 = vsel %vm1663, %v6758, %v6759
      %v6761 = vrot.slane %v6617, 5
      %v6762 = vrot.slane %v6761, 4
      %v6763 = vrot.slane %v6618, 5
      %v6764 = vsel %vm1663, %v6762, %v6763
      %v6765 = vrot.slane %v6763, 4
      %v6766 = vrot.slane %v6619, 5
      %v6767 = vsel %vm1663, %v6765, %v6766
      %v6768 = vrot.slane %v6620, 5
      %v6769 = vrot.slane %v6768, 4
      %v6770 = vrot.slane %v6621, 5
      %v6771 = vsel %vm1663, %v6769, %v6770
      %v6772 = vrot.slane %v6770, 4
      %v6773 = vrot.slane %v6622, 5
      %v6774 = vsel %vm1663, %v6772, %v6773
      %v6775 = vrot.slane %v6623, 5
      %v6776 = vrot.slane %v6775, 4
      %v6777 = vrot.slane %v6624, 5
      %v6778 = vsel %vm1663, %v6776, %v6777
      %v6779 = vrot.slane %v6777, 4
      %v6780 = vrot.slane %v6625, 5
      %v6781 = vsel %vm1663, %v6779, %v6780
      %v6782 = vrot.slane %v6626, 5
      %v6783 = vrot.slane %v6782, 4
      %v6784 = vrot.slane %v6627, 5
      %v6785 = vsel %vm1663, %v6783, %v6784
      %v6786 = vrot.slane %v6784, 4
      %v6787 = vrot.slane %v6628, 5
      %v6788 = vsel %vm1663, %v6786, %v6787
      %6789 = vrot.lane.b32.xlu0 %v6680, 40
      %v6790 = vpop.permute.xlu0 %6789
      %6791 = vrot.lane.b32.xlu0 %v6683, 40
      %v6792 = vpop.permute.xlu0 %6791
      %6793 = vrot.lane.b32.xlu0 %v6687, 40
      %v6794 = vpop.permute.xlu0 %6793
      %6795 = vrot.lane.b32.xlu0 %v6690, 40
      %v6796 = vpop.permute.xlu0 %6795
      %6797 = vrot.lane.b32.xlu0 %v6694, 40
      %v6798 = vpop.permute.xlu0 %6797
      %6799 = vrot.lane.b32.xlu0 %v6697, 40
      %v6800 = vpop.permute.xlu0 %6799
      %6801 = vrot.lane.b32.xlu0 %v6701, 40
      %v6802 = vpop.permute.xlu0 %6801
      %6803 = vrot.lane.b32.xlu0 %v6704, 40
      %v6804 = vpop.permute.xlu0 %6803
      %6805 = vrot.lane.b32.xlu0 %v6708, 40
      %v6806 = vpop.permute.xlu0 %6805
      %6807 = vrot.lane.b32.xlu0 %v6711, 40
      %v6808 = vpop.permute.xlu0 %6807
      %6809 = vrot.lane.b32.xlu0 %v6715, 40
      %v6810 = vpop.permute.xlu0 %6809
      %6811 = vrot.lane.b32.xlu0 %v6718, 40
      %v6812 = vpop.permute.xlu0 %6811
      %6813 = vrot.lane.b32.xlu0 %v6722, 40
      %v6814 = vpop.permute.xlu0 %6813
      %6815 = vrot.lane.b32.xlu0 %v6725, 40
      %v6816 = vpop.permute.xlu0 %6815
      %6817 = vrot.lane.b32.xlu0 %v6729, 40
      %v6818 = vpop.permute.xlu0 %6817
      %6819 = vrot.lane.b32.xlu0 %v6732, 40
      %v6820 = vpop.permute.xlu0 %6819
      %6821 = vrot.lane.b32.xlu0 %v6736, 40
      %v6822 = vpop.permute.xlu0 %6821
      %6823 = vrot.lane.b32.xlu0 %v6739, 40
      %v6824 = vpop.permute.xlu0 %6823
      %6825 = vrot.lane.b32.xlu0 %v6743, 40
      %v6826 = vpop.permute.xlu0 %6825
      %6827 = vrot.lane.b32.xlu0 %v6746, 40
      %v6828 = vpop.permute.xlu0 %6827
      %6829 = vrot.lane.b32.xlu0 %v6750, 40
      %v6830 = vpop.permute.xlu0 %6829
      %6831 = vrot.lane.b32.xlu0 %v6753, 40
      %v6832 = vpop.permute.xlu0 %6831
      %6833 = vrot.lane.b32.xlu0 %v6757, 40
      %v6834 = vpop.permute.xlu0 %6833
      %6835 = vrot.lane.b32.xlu0 %v6760, 40
      %v6836 = vpop.permute.xlu0 %6835
      %6837 = vrot.lane.b32.xlu0 %v6764, 40
      %v6838 = vpop.permute.xlu0 %6837
      %6839 = vrot.lane.b32.xlu0 %v6767, 40
      %v6840 = vpop.permute.xlu0 %6839
      %6841 = vrot.lane.b32.xlu0 %v6771, 40
      %v6842 = vpop.permute.xlu0 %6841
      %6843 = vrot.lane.b32.xlu0 %v6774, 40
      %v6844 = vpop.permute.xlu0 %6843
      %6845 = vrot.lane.b32.xlu0 %v6778, 40
      %v6846 = vpop.permute.xlu0 %6845
      %6847 = vrot.lane.b32.xlu0 %v6781, 40
      %v6848 = vpop.permute.xlu0 %6847
      %6849 = vrot.lane.b32.xlu0 %v6785, 40
      %v6850 = vpop.permute.xlu0 %6849
      %6851 = vrot.lane.b32.xlu0 %v6788, 40
      %v6852 = vpop.permute.xlu0 %6851
      %vm6885 = vcmask 388416
      %6886 = vst.msk [vmem:[#allocation5] sm:$0xf] %vm6885, %v6790
      %6887 = vst.msk [vmem:[#allocation5 + $0x4] sm:$0xf] %vm6885, %v6792
      %6888 = vst.msk [vmem:[#allocation5 + $0x8] sm:$0xf] %vm6885, %v6794
      %6889 = vst.msk [vmem:[#allocation5 + $0xc] sm:$0xf] %vm6885, %v6796
      %6890 = vst.msk [vmem:[#allocation5 + $0x10] sm:$0xf] %vm6885, %v6798
      %6891 = vst.msk [vmem:[#allocation5 + $0x14] sm:$0xf] %vm6885, %v6800
      %6892 = vst.msk [vmem:[#allocation5 + $0x18] sm:$0xf] %vm6885, %v6802
      %6893 = vst.msk [vmem:[#allocation5 + $0x1c] sm:$0xf] %vm6885, %v6804
      %6894 = vst.msk [vmem:[#allocation5 + $0x20] sm:$0xf] %vm6885, %v6806
      %6895 = vst.msk [vmem:[#allocation5 + $0x24] sm:$0xf] %vm6885, %v6808
      %6896 = vst.msk [vmem:[#allocation5 + $0x28] sm:$0xf] %vm6885, %v6810
      %6897 = vst.msk [vmem:[#allocation5 + $0x2c] sm:$0xf] %vm6885, %v6812
      %6898 = vst.msk [vmem:[#allocation5 + $0x30] sm:$0xf] %vm6885, %v6814
      %6899 = vst.msk [vmem:[#allocation5 + $0x34] sm:$0xf] %vm6885, %v6816
      %6900 = vst.msk [vmem:[#allocation5 + $0x38] sm:$0xf] %vm6885, %v6818
      %6901 = vst.msk [vmem:[#allocation5 + $0x3c] sm:$0xf] %vm6885, %v6820
      %6902 = vst.msk [vmem:[#allocation5 + $0x40] sm:$0xf] %vm6885, %v6822
      %6903 = vst.msk [vmem:[#allocation5 + $0x44] sm:$0xf] %vm6885, %v6824
      %6904 = vst.msk [vmem:[#allocation5 + $0x48] sm:$0xf] %vm6885, %v6826
      %6905 = vst.msk [vmem:[#allocation5 + $0x4c] sm:$0xf] %vm6885, %v6828
      %6906 = vst.msk [vmem:[#allocation5 + $0x50] sm:$0xf] %vm6885, %v6830
      %6907 = vst.msk [vmem:[#allocation5 + $0x54] sm:$0xf] %vm6885, %v6832
      %6908 = vst.msk [vmem:[#allocation5 + $0x58] sm:$0xf] %vm6885, %v6834
      %6909 = vst.msk [vmem:[#allocation5 + $0x5c] sm:$0xf] %vm6885, %v6836
      %6910 = vst.msk [vmem:[#allocation5 + $0x60] sm:$0xf] %vm6885, %v6838
      %6911 = vst.msk [vmem:[#allocation5 + $0x64] sm:$0xf] %vm6885, %v6840
      %6912 = vst.msk [vmem:[#allocation5 + $0x68] sm:$0xf] %vm6885, %v6842
      %6913 = vst.msk [vmem:[#allocation5 + $0x6c] sm:$0xf] %vm6885, %v6844
      %6914 = vst.msk [vmem:[#allocation5 + $0x70] sm:$0xf] %vm6885, %v6846
      %6915 = vst.msk [vmem:[#allocation5 + $0x74] sm:$0xf] %vm6885, %v6848
      %6916 = vst.msk [vmem:[#allocation5 + $0x78] sm:$0xf] %vm6885, %v6850
      %6917 = vst.msk [vmem:[#allocation5 + $0x7c] sm:$0xf] %vm6885, %v6852
      %s6918 = scalar_lea.vmem [#allocation3], 24
      %v6919 = vld [vmem:[%s6918] sm:$0xf]
      %v6920 = vld [vmem:[%s6918 + $0x4] sm:$0xf]
      %v6921 = vld [vmem:[%s6918 + $0xc] sm:$0xf]
      %v6922 = vld [vmem:[%s6918 + $0x10] sm:$0xf]
      %v6923 = vld [vmem:[%s6918 + $0x18] sm:$0xf]
      %v6924 = vld [vmem:[%s6918 + $0x1c] sm:$0xf]
      %v6925 = vld [vmem:[%s6918 + $0x24] sm:$0xf]
      %v6926 = vld [vmem:[%s6918 + $0x28] sm:$0xf]
      %v6927 = vld [vmem:[%s6918 + $0x30] sm:$0xf]
      %v6928 = vld [vmem:[%s6918 + $0x34] sm:$0xf]
      %v6929 = vld [vmem:[%s6918 + $0x3c] sm:$0xf]
      %v6930 = vld [vmem:[%s6918 + $0x40] sm:$0xf]
      %v6931 = vld [vmem:[%s6918 + $0x48] sm:$0xf]
      %v6932 = vld [vmem:[%s6918 + $0x4c] sm:$0xf]
      %v6933 = vld [vmem:[%s6918 + $0x54] sm:$0xf]
      %v6934 = vld [vmem:[%s6918 + $0x58] sm:$0xf]
      %v6935 = vld [vmem:[%s6918 + $0x60] sm:$0xf]
      %v6936 = vld [vmem:[%s6918 + $0x64] sm:$0xf]
      %v6937 = vld [vmem:[%s6918 + $0x6c] sm:$0xf]
      %v6938 = vld [vmem:[%s6918 + $0x70] sm:$0xf]
      %v6939 = vld [vmem:[%s6918 + $0x78] sm:$0xf]
      %v6940 = vld [vmem:[%s6918 + $0x7c] sm:$0xf]
      %v6941 = vld [vmem:[%s6918 + $0x84] sm:$0xf]
      %v6942 = vld [vmem:[%s6918 + $0x88] sm:$0xf]
      %v6943 = vld [vmem:[%s6918 + $0x90] sm:$0xf]
      %v6944 = vld [vmem:[%s6918 + $0x94] sm:$0xf]
      %v6945 = vld [vmem:[%s6918 + $0x9c] sm:$0xf]
      %v6946 = vld [vmem:[%s6918 + $0xa0] sm:$0xf]
      %v6947 = vld [vmem:[%s6918 + $0xa8] sm:$0xf]
      %v6948 = vld [vmem:[%s6918 + $0xac] sm:$0xf]
      %v6949 = vld [vmem:[%s6918 + $0xb4] sm:$0xf]
      %v6950 = vld [vmem:[%s6918 + $0xb8] sm:$0xf]
      %6983 = vrot.lane.b32.xlu0 %v6919, 48
      %v6984 = vpop.permute.xlu0 %6983
      %6985 = vrot.lane.b32.xlu0 %v6920, 48
      %v6986 = vpop.permute.xlu0 %6985
      %6987 = vrot.lane.b32.xlu0 %v6921, 48
      %v6988 = vpop.permute.xlu0 %6987
      %6989 = vrot.lane.b32.xlu0 %v6922, 48
      %v6990 = vpop.permute.xlu0 %6989
      %6991 = vrot.lane.b32.xlu0 %v6923, 48
      %v6992 = vpop.permute.xlu0 %6991
      %6993 = vrot.lane.b32.xlu0 %v6924, 48
      %v6994 = vpop.permute.xlu0 %6993
      %6995 = vrot.lane.b32.xlu0 %v6925, 48
      %v6996 = vpop.permute.xlu0 %6995
      %6997 = vrot.lane.b32.xlu0 %v6926, 48
      %v6998 = vpop.permute.xlu0 %6997
      %6999 = vrot.lane.b32.xlu0 %v6927, 48
      %v7000 = vpop.permute.xlu0 %6999
      %7001 = vrot.lane.b32.xlu0 %v6928, 48
      %v7002 = vpop.permute.xlu0 %7001
      %7003 = vrot.lane.b32.xlu0 %v6929, 48
      %v7004 = vpop.permute.xlu0 %7003
      %7005 = vrot.lane.b32.xlu0 %v6930, 48
      %v7006 = vpop.permute.xlu0 %7005
      %7007 = vrot.lane.b32.xlu0 %v6931, 48
      %v7008 = vpop.permute.xlu0 %7007
      %7009 = vrot.lane.b32.xlu0 %v6932, 48
      %v7010 = vpop.permute.xlu0 %7009
      %7011 = vrot.lane.b32.xlu0 %v6933, 48
      %v7012 = vpop.permute.xlu0 %7011
      %7013 = vrot.lane.b32.xlu0 %v6934, 48
      %v7014 = vpop.permute.xlu0 %7013
      %7015 = vrot.lane.b32.xlu0 %v6935, 48
      %v7016 = vpop.permute.xlu0 %7015
      %7017 = vrot.lane.b32.xlu0 %v6936, 48
      %v7018 = vpop.permute.xlu0 %7017
      %7019 = vrot.lane.b32.xlu0 %v6937, 48
      %v7020 = vpop.permute.xlu0 %7019
      %7021 = vrot.lane.b32.xlu0 %v6938, 48
      %v7022 = vpop.permute.xlu0 %7021
      %7023 = vrot.lane.b32.xlu0 %v6939, 48
      %v7024 = vpop.permute.xlu0 %7023
      %7025 = vrot.lane.b32.xlu0 %v6940, 48
      %v7026 = vpop.permute.xlu0 %7025
      %7027 = vrot.lane.b32.xlu0 %v6941, 48
      %v7028 = vpop.permute.xlu0 %7027
      %7029 = vrot.lane.b32.xlu0 %v6942, 48
      %v7030 = vpop.permute.xlu0 %7029
      %7031 = vrot.lane.b32.xlu0 %v6943, 48
      %v7032 = vpop.permute.xlu0 %7031
      %7033 = vrot.lane.b32.xlu0 %v6944, 48
      %v7034 = vpop.permute.xlu0 %7033
      %7035 = vrot.lane.b32.xlu0 %v6945, 48
      %v7036 = vpop.permute.xlu0 %7035
      %7037 = vrot.lane.b32.xlu0 %v6946, 48
      %v7038 = vpop.permute.xlu0 %7037
      %7039 = vrot.lane.b32.xlu0 %v6947, 48
      %v7040 = vpop.permute.xlu0 %7039
      %7041 = vrot.lane.b32.xlu0 %v6948, 48
      %v7042 = vpop.permute.xlu0 %7041
      %7043 = vrot.lane.b32.xlu0 %v6949, 48
      %v7044 = vpop.permute.xlu0 %7043
      %7045 = vrot.lane.b32.xlu0 %v6950, 48
      %v7046 = vpop.permute.xlu0 %7045
      %vm7079 = vcmask 454016
      %7080 = vst.msk [vmem:[#allocation5] sm:$0xf] %vm7079, %v6984
      %7081 = vst.msk [vmem:[#allocation5 + $0x4] sm:$0xf] %vm7079, %v6986
      %7082 = vst.msk [vmem:[#allocation5 + $0x8] sm:$0xf] %vm7079, %v6988
      %7083 = vst.msk [vmem:[#allocation5 + $0xc] sm:$0xf] %vm7079, %v6990
      %7084 = vst.msk [vmem:[#allocation5 + $0x10] sm:$0xf] %vm7079, %v6992
      %7085 = vst.msk [vmem:[#allocation5 + $0x14] sm:$0xf] %vm7079, %v6994
      %7086 = vst.msk [vmem:[#allocation5 + $0x18] sm:$0xf] %vm7079, %v6996
      %7087 = vst.msk [vmem:[#allocation5 + $0x1c] sm:$0xf] %vm7079, %v6998
      %7088 = vst.msk [vmem:[#allocation5 + $0x20] sm:$0xf] %vm7079, %v7000
      %7089 = vst.msk [vmem:[#allocation5 + $0x24] sm:$0xf] %vm7079, %v7002
      %7090 = vst.msk [vmem:[#allocation5 + $0x28] sm:$0xf] %vm7079, %v7004
      %7091 = vst.msk [vmem:[#allocation5 + $0x2c] sm:$0xf] %vm7079, %v7006
      %7092 = vst.msk [vmem:[#allocation5 + $0x30] sm:$0xf] %vm7079, %v7008
      %7093 = vst.msk [vmem:[#allocation5 + $0x34] sm:$0xf] %vm7079, %v7010
      %7094 = vst.msk [vmem:[#allocation5 + $0x38] sm:$0xf] %vm7079, %v7012
      %7095 = vst.msk [vmem:[#allocation5 + $0x3c] sm:$0xf] %vm7079, %v7014
      %7096 = vst.msk [vmem:[#allocation5 + $0x40] sm:$0xf] %vm7079, %v7016
      %7097 = vst.msk [vmem:[#allocation5 + $0x44] sm:$0xf] %vm7079, %v7018
      %7098 = vst.msk [vmem:[#allocation5 + $0x48] sm:$0xf] %vm7079, %v7020
      %7099 = vst.msk [vmem:[#allocation5 + $0x4c] sm:$0xf] %vm7079, %v7022
      %7100 = vst.msk [vmem:[#allocation5 + $0x50] sm:$0xf] %vm7079, %v7024
      %7101 = vst.msk [vmem:[#allocation5 + $0x54] sm:$0xf] %vm7079, %v7026
      %7102 = vst.msk [vmem:[#allocation5 + $0x58] sm:$0xf] %vm7079, %v7028
      %7103 = vst.msk [vmem:[#allocation5 + $0x5c] sm:$0xf] %vm7079, %v7030
      %7104 = vst.msk [vmem:[#allocation5 + $0x60] sm:$0xf] %vm7079, %v7032
      %7105 = vst.msk [vmem:[#allocation5 + $0x64] sm:$0xf] %vm7079, %v7034
      %7106 = vst.msk [vmem:[#allocation5 + $0x68] sm:$0xf] %vm7079, %v7036
      %7107 = vst.msk [vmem:[#allocation5 + $0x6c] sm:$0xf] %vm7079, %v7038
      %7108 = vst.msk [vmem:[#allocation5 + $0x70] sm:$0xf] %vm7079, %v7040
      %7109 = vst.msk [vmem:[#allocation5 + $0x74] sm:$0xf] %vm7079, %v7042
      %7110 = vst.msk [vmem:[#allocation5 + $0x78] sm:$0xf] %vm7079, %v7044
      %7111 = vst.msk [vmem:[#allocation5 + $0x7c] sm:$0xf] %vm7079, %v7046
      %v7112 = vld [vmem:[%s6918] sm:$0xf]
      %v7113 = vld [vmem:[%s6918 + $0x4] sm:$0xf]
      %v7114 = vld [vmem:[%s6918 + $0x8] sm:$0x1]
      %v7115 = vld [vmem:[%s6918 + $0xc] sm:$0xf]
      %v7116 = vld [vmem:[%s6918 + $0x10] sm:$0xf]
      %v7117 = vld [vmem:[%s6918 + $0x14] sm:$0x1]
      %v7118 = vld [vmem:[%s6918 + $0x18] sm:$0xf]
      %v7119 = vld [vmem:[%s6918 + $0x1c] sm:$0xf]
      %v7120 = vld [vmem:[%s6918 + $0x20] sm:$0x1]
      %v7121 = vld [vmem:[%s6918 + $0x24] sm:$0xf]
      %v7122 = vld [vmem:[%s6918 + $0x28] sm:$0xf]
      %v7123 = vld [vmem:[%s6918 + $0x2c] sm:$0x1]
      %v7124 = vld [vmem:[%s6918 + $0x30] sm:$0xf]
      %v7125 = vld [vmem:[%s6918 + $0x34] sm:$0xf]
      %v7126 = vld [vmem:[%s6918 + $0x38] sm:$0x1]
      %v7127 = vld [vmem:[%s6918 + $0x3c] sm:$0xf]
      %v7128 = vld [vmem:[%s6918 + $0x40] sm:$0xf]
      %v7129 = vld [vmem:[%s6918 + $0x44] sm:$0x1]
      %v7130 = vld [vmem:[%s6918 + $0x48] sm:$0xf]
      %v7131 = vld [vmem:[%s6918 + $0x4c] sm:$0xf]
      %v7132 = vld [vmem:[%s6918 + $0x50] sm:$0x1]
      %v7133 = vld [vmem:[%s6918 + $0x54] sm:$0xf]
      %v7134 = vld [vmem:[%s6918 + $0x58] sm:$0xf]
      %v7135 = vld [vmem:[%s6918 + $0x5c] sm:$0x1]
      %v7136 = vld [vmem:[%s6918 + $0x60] sm:$0xf]
      %v7137 = vld [vmem:[%s6918 + $0x64] sm:$0xf]
      %v7138 = vld [vmem:[%s6918 + $0x68] sm:$0x1]
      %v7139 = vld [vmem:[%s6918 + $0x6c] sm:$0xf]
      %v7140 = vld [vmem:[%s6918 + $0x70] sm:$0xf]
      %v7141 = vld [vmem:[%s6918 + $0x74] sm:$0x1]
      %v7142 = vld [vmem:[%s6918 + $0x78] sm:$0xf]
      %v7143 = vld [vmem:[%s6918 + $0x7c] sm:$0xf]
      %v7144 = vld [vmem:[%s6918 + $0x80] sm:$0x1]
      %v7145 = vld [vmem:[%s6918 + $0x84] sm:$0xf]
      %v7146 = vld [vmem:[%s6918 + $0x88] sm:$0xf]
      %v7147 = vld [vmem:[%s6918 + $0x8c] sm:$0x1]
      %v7148 = vld [vmem:[%s6918 + $0x90] sm:$0xf]
      %v7149 = vld [vmem:[%s6918 + $0x94] sm:$0xf]
      %v7150 = vld [vmem:[%s6918 + $0x98] sm:$0x1]
      %v7151 = vld [vmem:[%s6918 + $0x9c] sm:$0xf]
      %v7152 = vld [vmem:[%s6918 + $0xa0] sm:$0xf]
      %v7153 = vld [vmem:[%s6918 + $0xa4] sm:$0x1]
      %v7154 = vld [vmem:[%s6918 + $0xa8] sm:$0xf]
      %v7155 = vld [vmem:[%s6918 + $0xac] sm:$0xf]
      %v7156 = vld [vmem:[%s6918 + $0xb0] sm:$0x1]
      %v7157 = vld [vmem:[%s6918 + $0xb4] sm:$0xf]
      %v7158 = vld [vmem:[%s6918 + $0xb8] sm:$0xf]
      %v7159 = vld [vmem:[%s6918 + $0xbc] sm:$0x1]
      %v7161 = vshrl.u32 %v7112, 16
      %v7163 = vrot.slane %v7161, 4
      %v7164 = vshll.u32 %v7112, 16
      %v7166 = vrot.slane %v7164, 5
      %v7167 = vor.u32 %v7163, %v7166
      %v7168 = vrot.slane %v7167, 4
      %v7170 = vshll.u32 %v7113, 16
      %v7172 = vrot.slane %v7170, 5
      %v7173 = vsel %vm1051, %v7168, %v7172
      %v7174 = vshrl.u32 %v7113, 16
      %v7176 = vrot.slane %v7174, 4
      %v7177 = vor.u32 %v7176, %v7172
      %v7178 = vrot.slane %v7177, 4
      %v7180 = vshll.u32 %v7114, 16
      %v7182 = vrot.slane %v7180, 5
      %v7183 = vsel %vm1051, %v7178, %v7182
      %v7185 = vshrl.u32 %v7115, 16
      %v7187 = vrot.slane %v7185, 4
      %v7188 = vshll.u32 %v7115, 16
      %v7190 = vrot.slane %v7188, 5
      %v7191 = vor.u32 %v7187, %v7190
      %v7192 = vrot.slane %v7191, 4
      %v7194 = vshll.u32 %v7116, 16
      %v7196 = vrot.slane %v7194, 5
      %v7197 = vsel %vm1051, %v7192, %v7196
      %v7198 = vshrl.u32 %v7116, 16
      %v7200 = vrot.slane %v7198, 4
      %v7201 = vor.u32 %v7200, %v7196
      %v7202 = vrot.slane %v7201, 4
      %v7204 = vshll.u32 %v7117, 16
      %v7206 = vrot.slane %v7204, 5
      %v7207 = vsel %vm1051, %v7202, %v7206
      %v7209 = vshrl.u32 %v7118, 16
      %v7211 = vrot.slane %v7209, 4
      %v7212 = vshll.u32 %v7118, 16
      %v7214 = vrot.slane %v7212, 5
      %v7215 = vor.u32 %v7211, %v7214
      %v7216 = vrot.slane %v7215, 4
      %v7218 = vshll.u32 %v7119, 16
      %v7220 = vrot.slane %v7218, 5
      %v7221 = vsel %vm1051, %v7216, %v7220
      %v7222 = vshrl.u32 %v7119, 16
      %v7224 = vrot.slane %v7222, 4
      %v7225 = vor.u32 %v7224, %v7220
      %v7226 = vrot.slane %v7225, 4
      %v7228 = vshll.u32 %v7120, 16
      %v7230 = vrot.slane %v7228, 5
      %v7231 = vsel %vm1051, %v7226, %v7230
      %v7233 = vshrl.u32 %v7121, 16
      %v7235 = vrot.slane %v7233, 4
      %v7236 = vshll.u32 %v7121, 16
      %v7238 = vrot.slane %v7236, 5
      %v7239 = vor.u32 %v7235, %v7238
      %v7240 = vrot.slane %v7239, 4
      %v7242 = vshll.u32 %v7122, 16
      %v7244 = vrot.slane %v7242, 5
      %v7245 = vsel %vm1051, %v7240, %v7244
      %v7246 = vshrl.u32 %v7122, 16
      %v7248 = vrot.slane %v7246, 4
      %v7249 = vor.u32 %v7248, %v7244
      %v7250 = vrot.slane %v7249, 4
      %v7252 = vshll.u32 %v7123, 16
      %v7254 = vrot.slane %v7252, 5
      %v7255 = vsel %vm1051, %v7250, %v7254
      %v7257 = vshrl.u32 %v7124, 16
      %v7259 = vrot.slane %v7257, 4
      %v7260 = vshll.u32 %v7124, 16
      %v7262 = vrot.slane %v7260, 5
      %v7263 = vor.u32 %v7259, %v7262
      %v7264 = vrot.slane %v7263, 4
      %v7266 = vshll.u32 %v7125, 16
      %v7268 = vrot.slane %v7266, 5
      %v7269 = vsel %vm1051, %v7264, %v7268
      %v7270 = vshrl.u32 %v7125, 16
      %v7272 = vrot.slane %v7270, 4
      %v7273 = vor.u32 %v7272, %v7268
      %v7274 = vrot.slane %v7273, 4
      %v7276 = vshll.u32 %v7126, 16
      %v7278 = vrot.slane %v7276, 5
      %v7279 = vsel %vm1051, %v7274, %v7278
      %v7281 = vshrl.u32 %v7127, 16
      %v7283 = vrot.slane %v7281, 4
      %v7284 = vshll.u32 %v7127, 16
      %v7286 = vrot.slane %v7284, 5
      %v7287 = vor.u32 %v7283, %v7286
      %v7288 = vrot.slane %v7287, 4
      %v7290 = vshll.u32 %v7128, 16
      %v7292 = vrot.slane %v7290, 5
      %v7293 = vsel %vm1051, %v7288, %v7292
      %v7294 = vshrl.u32 %v7128, 16
      %v7296 = vrot.slane %v7294, 4
      %v7297 = vor.u32 %v7296, %v7292
      %v7298 = vrot.slane %v7297, 4
      %v7300 = vshll.u32 %v7129, 16
      %v7302 = vrot.slane %v7300, 5
      %v7303 = vsel %vm1051, %v7298, %v7302
      %v7305 = vshrl.u32 %v7130, 16
      %v7307 = vrot.slane %v7305, 4
      %v7308 = vshll.u32 %v7130, 16
      %v7310 = vrot.slane %v7308, 5
      %v7311 = vor.u32 %v7307, %v7310
      %v7312 = vrot.slane %v7311, 4
      %v7314 = vshll.u32 %v7131, 16
      %v7316 = vrot.slane %v7314, 5
      %v7317 = vsel %vm1051, %v7312, %v7316
      %v7318 = vshrl.u32 %v7131, 16
      %v7320 = vrot.slane %v7318, 4
      %v7321 = vor.u32 %v7320, %v7316
      %v7322 = vrot.slane %v7321, 4
      %v7324 = vshll.u32 %v7132, 16
      %v7326 = vrot.slane %v7324, 5
      %v7327 = vsel %vm1051, %v7322, %v7326
      %v7329 = vshrl.u32 %v7133, 16
      %v7331 = vrot.slane %v7329, 4
      %v7332 = vshll.u32 %v7133, 16
      %v7334 = vrot.slane %v7332, 5
      %v7335 = vor.u32 %v7331, %v7334
      %v7336 = vrot.slane %v7335, 4
      %v7338 = vshll.u32 %v7134, 16
      %v7340 = vrot.slane %v7338, 5
      %v7341 = vsel %vm1051, %v7336, %v7340
      %v7342 = vshrl.u32 %v7134, 16
      %v7344 = vrot.slane %v7342, 4
      %v7345 = vor.u32 %v7344, %v7340
      %v7346 = vrot.slane %v7345, 4
      %v7348 = vshll.u32 %v7135, 16
      %v7350 = vrot.slane %v7348, 5
      %v7351 = vsel %vm1051, %v7346, %v7350
      %v7353 = vshrl.u32 %v7136, 16
      %v7355 = vrot.slane %v7353, 4
      %v7356 = vshll.u32 %v7136, 16
      %v7358 = vrot.slane %v7356, 5
      %v7359 = vor.u32 %v7355, %v7358
      %v7360 = vrot.slane %v7359, 4
      %v7362 = vshll.u32 %v7137, 16
      %v7364 = vrot.slane %v7362, 5
      %v7365 = vsel %vm1051, %v7360, %v7364
      %v7366 = vshrl.u32 %v7137, 16
      %v7368 = vrot.slane %v7366, 4
      %v7369 = vor.u32 %v7368, %v7364
      %v7370 = vrot.slane %v7369, 4
      %v7372 = vshll.u32 %v7138, 16
      %v7374 = vrot.slane %v7372, 5
      %v7375 = vsel %vm1051, %v7370, %v7374
      %v7377 = vshrl.u32 %v7139, 16
      %v7379 = vrot.slane %v7377, 4
      %v7380 = vshll.u32 %v7139, 16
      %v7382 = vrot.slane %v7380, 5
      %v7383 = vor.u32 %v7379, %v7382
      %v7384 = vrot.slane %v7383, 4
      %v7386 = vshll.u32 %v7140, 16
      %v7388 = vrot.slane %v7386, 5
      %v7389 = vsel %vm1051, %v7384, %v7388
      %v7390 = vshrl.u32 %v7140, 16
      %v7392 = vrot.slane %v7390, 4
      %v7393 = vor.u32 %v7392, %v7388
      %v7394 = vrot.slane %v7393, 4
      %v7396 = vshll.u32 %v7141, 16
      %v7398 = vrot.slane %v7396, 5
      %v7399 = vsel %vm1051, %v7394, %v7398
      %v7401 = vshrl.u32 %v7142, 16
      %v7403 = vrot.slane %v7401, 4
      %v7404 = vshll.u32 %v7142, 16
      %v7406 = vrot.slane %v7404, 5
      %v7407 = vor.u32 %v7403, %v7406
      %v7408 = vrot.slane %v7407, 4
      %v7410 = vshll.u32 %v7143, 16
      %v7412 = vrot.slane %v7410, 5
      %v7413 = vsel %vm1051, %v7408, %v7412
      %v7414 = vshrl.u32 %v7143, 16
      %v7416 = vrot.slane %v7414, 4
      %v7417 = vor.u32 %v7416, %v7412
      %v7418 = vrot.slane %v7417, 4
      %v7420 = vshll.u32 %v7144, 16
      %v7422 = vrot.slane %v7420, 5
      %v7423 = vsel %vm1051, %v7418, %v7422
      %v7425 = vshrl.u32 %v7145, 16
      %v7427 = vrot.slane %v7425, 4
      %v7428 = vshll.u32 %v7145, 16
      %v7430 = vrot.slane %v7428, 5
      %v7431 = vor.u32 %v7427, %v7430
      %v7432 = vrot.slane %v7431, 4
      %v7434 = vshll.u32 %v7146, 16
      %v7436 = vrot.slane %v7434, 5
      %v7437 = vsel %vm1051, %v7432, %v7436
      %v7438 = vshrl.u32 %v7146, 16
      %v7440 = vrot.slane %v7438, 4
      %v7441 = vor.u32 %v7440, %v7436
      %v7442 = vrot.slane %v7441, 4
      %v7444 = vshll.u32 %v7147, 16
      %v7446 = vrot.slane %v7444, 5
      %v7447 = vsel %vm1051, %v7442, %v7446
      %v7449 = vshrl.u32 %v7148, 16
      %v7451 = vrot.slane %v7449, 4
      %v7452 = vshll.u32 %v7148, 16
      %v7454 = vrot.slane %v7452, 5
      %v7455 = vor.u32 %v7451, %v7454
      %v7456 = vrot.slane %v7455, 4
      %v7458 = vshll.u32 %v7149, 16
      %v7460 = vrot.slane %v7458, 5
      %v7461 = vsel %vm1051, %v7456, %v7460
      %v7462 = vshrl.u32 %v7149, 16
      %v7464 = vrot.slane %v7462, 4
      %v7465 = vor.u32 %v7464, %v7460
      %v7466 = vrot.slane %v7465, 4
      %v7468 = vshll.u32 %v7150, 16
      %v7470 = vrot.slane %v7468, 5
      %v7471 = vsel %vm1051, %v7466, %v7470
      %v7473 = vshrl.u32 %v7151, 16
      %v7475 = vrot.slane %v7473, 4
      %v7476 = vshll.u32 %v7151, 16
      %v7478 = vrot.slane %v7476, 5
      %v7479 = vor.u32 %v7475, %v7478
      %v7480 = vrot.slane %v7479, 4
      %v7482 = vshll.u32 %v7152, 16
      %v7484 = vrot.slane %v7482, 5
      %v7485 = vsel %vm1051, %v7480, %v7484
      %v7486 = vshrl.u32 %v7152, 16
      %v7488 = vrot.slane %v7486, 4
      %v7489 = vor.u32 %v7488, %v7484
      %v7490 = vrot.slane %v7489, 4
      %v7492 = vshll.u32 %v7153, 16
      %v7494 = vrot.slane %v7492, 5
      %v7495 = vsel %vm1051, %v7490, %v7494
      %v7497 = vshrl.u32 %v7154, 16
      %v7499 = vrot.slane %v7497, 4
      %v7500 = vshll.u32 %v7154, 16
      %v7502 = vrot.slane %v7500, 5
      %v7503 = vor.u32 %v7499, %v7502
      %v7504 = vrot.slane %v7503, 4
      %v7506 = vshll.u32 %v7155, 16
      %v7508 = vrot.slane %v7506, 5
      %v7509 = vsel %vm1051, %v7504, %v7508
      %v7510 = vshrl.u32 %v7155, 16
      %v7512 = vrot.slane %v7510, 4
      %v7513 = vor.u32 %v7512, %v7508
      %v7514 = vrot.slane %v7513, 4
      %v7516 = vshll.u32 %v7156, 16
      %v7518 = vrot.slane %v7516, 5
      %v7519 = vsel %vm1051, %v7514, %v7518
      %v7521 = vshrl.u32 %v7157, 16
      %v7523 = vrot.slane %v7521, 4
      %v7524 = vshll.u32 %v7157, 16
      %v7526 = vrot.slane %v7524, 5
      %v7527 = vor.u32 %v7523, %v7526
      %v7528 = vrot.slane %v7527, 4
      %v7530 = vshll.u32 %v7158, 16
      %v7532 = vrot.slane %v7530, 5
      %v7533 = vsel %vm1051, %v7528, %v7532
      %v7534 = vshrl.u32 %v7158, 16
      %v7536 = vrot.slane %v7534, 4
      %v7537 = vor.u32 %v7536, %v7532
      %v7538 = vrot.slane %v7537, 4
      %v7540 = vshll.u32 %v7159, 16
      %v7542 = vrot.slane %v7540, 5
      %v7543 = vsel %vm1051, %v7538, %v7542
      %7544 = vrot.lane.b32.xlu0 %v7173, 56
      %v7545 = vpop.permute.xlu0 %7544
      %7546 = vrot.lane.b32.xlu0 %v7183, 56
      %v7547 = vpop.permute.xlu0 %7546
      %7548 = vrot.lane.b32.xlu0 %v7197, 56
      %v7549 = vpop.permute.xlu0 %7548
      %7550 = vrot.lane.b32.xlu0 %v7207, 56
      %v7551 = vpop.permute.xlu0 %7550
      %7552 = vrot.lane.b32.xlu0 %v7221, 56
      %v7553 = vpop.permute.xlu0 %7552
      %7554 = vrot.lane.b32.xlu0 %v7231, 56
      %v7555 = vpop.permute.xlu0 %7554
      %7556 = vrot.lane.b32.xlu0 %v7245, 56
      %v7557 = vpop.permute.xlu0 %7556
      %7558 = vrot.lane.b32.xlu0 %v7255, 56
      %v7559 = vpop.permute.xlu0 %7558
      %7560 = vrot.lane.b32.xlu0 %v7269, 56
      %v7561 = vpop.permute.xlu0 %7560
      %7562 = vrot.lane.b32.xlu0 %v7279, 56
      %v7563 = vpop.permute.xlu0 %7562
      %7564 = vrot.lane.b32.xlu0 %v7293, 56
      %v7565 = vpop.permute.xlu0 %7564
      %7566 = vrot.lane.b32.xlu0 %v7303, 56
      %v7567 = vpop.permute.xlu0 %7566
      %7568 = vrot.lane.b32.xlu0 %v7317, 56
      %v7569 = vpop.permute.xlu0 %7568
      %7570 = vrot.lane.b32.xlu0 %v7327, 56
      %v7571 = vpop.permute.xlu0 %7570
      %7572 = vrot.lane.b32.xlu0 %v7341, 56
      %v7573 = vpop.permute.xlu0 %7572
      %7574 = vrot.lane.b32.xlu0 %v7351, 56
      %v7575 = vpop.permute.xlu0 %7574
      %7576 = vrot.lane.b32.xlu0 %v7365, 56
      %v7577 = vpop.permute.xlu0 %7576
      %7578 = vrot.lane.b32.xlu0 %v7375, 56
      %v7579 = vpop.permute.xlu0 %7578
      %7580 = vrot.lane.b32.xlu0 %v7389, 56
      %v7581 = vpop.permute.xlu0 %7580
      %7582 = vrot.lane.b32.xlu0 %v7399, 56
      %v7583 = vpop.permute.xlu0 %7582
      %7584 = vrot.lane.b32.xlu0 %v7413, 56
      %v7585 = vpop.permute.xlu0 %7584
      %7586 = vrot.lane.b32.xlu0 %v7423, 56
      %v7587 = vpop.permute.xlu0 %7586
      %7588 = vrot.lane.b32.xlu0 %v7437, 56
      %v7589 = vpop.permute.xlu0 %7588
      %7590 = vrot.lane.b32.xlu0 %v7447, 56
      %v7591 = vpop.permute.xlu0 %7590
      %7592 = vrot.lane.b32.xlu0 %v7461, 56
      %v7593 = vpop.permute.xlu0 %7592
      %7594 = vrot.lane.b32.xlu0 %v7471, 56
      %v7595 = vpop.permute.xlu0 %7594
      %7596 = vrot.lane.b32.xlu0 %v7485, 56
      %v7597 = vpop.permute.xlu0 %7596
      %7598 = vrot.lane.b32.xlu0 %v7495, 56
      %v7599 = vpop.permute.xlu0 %7598
      %7600 = vrot.lane.b32.xlu0 %v7509, 56
      %v7601 = vpop.permute.xlu0 %7600
      %7602 = vrot.lane.b32.xlu0 %v7519, 56
      %v7603 = vpop.permute.xlu0 %7602
      %7604 = vrot.lane.b32.xlu0 %v7533, 56
      %v7605 = vpop.permute.xlu0 %7604
      %7606 = vrot.lane.b32.xlu0 %v7543, 56
      %v7607 = vpop.permute.xlu0 %7606
      %vm7640 = vcmask 519616
      %7641 = vst.msk [vmem:[#allocation5] sm:$0xf] %vm7640, %v7545
      %7642 = vst.msk [vmem:[#allocation5 + $0x4] sm:$0xf] %vm7640, %v7547
      %7643 = vst.msk [vmem:[#allocation5 + $0x8] sm:$0xf] %vm7640, %v7549
      %7644 = vst.msk [vmem:[#allocation5 + $0xc] sm:$0xf] %vm7640, %v7551
      %7645 = vst.msk [vmem:[#allocation5 + $0x10] sm:$0xf] %vm7640, %v7553
      %7646 = vst.msk [vmem:[#allocation5 + $0x14] sm:$0xf] %vm7640, %v7555
      %7647 = vst.msk [vmem:[#allocation5 + $0x18] sm:$0xf] %vm7640, %v7557
      %7648 = vst.msk [vmem:[#allocation5 + $0x1c] sm:$0xf] %vm7640, %v7559
      %7649 = vst.msk [vmem:[#allocation5 + $0x20] sm:$0xf] %vm7640, %v7561
      %7650 = vst.msk [vmem:[#allocation5 + $0x24] sm:$0xf] %vm7640, %v7563
      %7651 = vst.msk [vmem:[#allocation5 + $0x28] sm:$0xf] %vm7640, %v7565
      %7652 = vst.msk [vmem:[#allocation5 + $0x2c] sm:$0xf] %vm7640, %v7567
      %7653 = vst.msk [vmem:[#allocation5 + $0x30] sm:$0xf] %vm7640, %v7569
      %7654 = vst.msk [vmem:[#allocation5 + $0x34] sm:$0xf] %vm7640, %v7571
      %7655 = vst.msk [vmem:[#allocation5 + $0x38] sm:$0xf] %vm7640, %v7573
      %7656 = vst.msk [vmem:[#allocation5 + $0x3c] sm:$0xf] %vm7640, %v7575
      %7657 = vst.msk [vmem:[#allocation5 + $0x40] sm:$0xf] %vm7640, %v7577
      %7658 = vst.msk [vmem:[#allocation5 + $0x44] sm:$0xf] %vm7640, %v7579
      %7659 = vst.msk [vmem:[#allocation5 + $0x48] sm:$0xf] %vm7640, %v7581
      %7660 = vst.msk [vmem:[#allocation5 + $0x4c] sm:$0xf] %vm7640, %v7583
      %7661 = vst.msk [vmem:[#allocation5 + $0x50] sm:$0xf] %vm7640, %v7585
      %7662 = vst.msk [vmem:[#allocation5 + $0x54] sm:$0xf] %vm7640, %v7587
      %7663 = vst.msk [vmem:[#allocation5 + $0x58] sm:$0xf] %vm7640, %v7589
      %7664 = vst.msk [vmem:[#allocation5 + $0x5c] sm:$0xf] %vm7640, %v7591
      %7665 = vst.msk [vmem:[#allocation5 + $0x60] sm:$0xf] %vm7640, %v7593
      %7666 = vst.msk [vmem:[#allocation5 + $0x64] sm:$0xf] %vm7640, %v7595
      %7667 = vst.msk [vmem:[#allocation5 + $0x68] sm:$0xf] %vm7640, %v7597
      %7668 = vst.msk [vmem:[#allocation5 + $0x6c] sm:$0xf] %vm7640, %v7599
      %7669 = vst.msk [vmem:[#allocation5 + $0x70] sm:$0xf] %vm7640, %v7601
      %7670 = vst.msk [vmem:[#allocation5 + $0x74] sm:$0xf] %vm7640, %v7603
      %7671 = vst.msk [vmem:[#allocation5 + $0x78] sm:$0xf] %vm7640, %v7605
      %7672 = vst.msk [vmem:[#allocation5 + $0x7c] sm:$0xf] %vm7640, %v7607
      %v7673 = vld [vmem:[%s6918] sm:$0xe]
      %v7674 = vld [vmem:[%s6918 + $0x4] sm:$0xf]
      %v7675 = vld [vmem:[%s6918 + $0x8] sm:$0x1]
      %v7676 = vld [vmem:[%s6918 + $0xc] sm:$0xe]
      %v7677 = vld [vmem:[%s6918 + $0x10] sm:$0xf]
      %v7678 = vld [vmem:[%s6918 + $0x14] sm:$0x1]
      %v7679 = vld [vmem:[%s6918 + $0x18] sm:$0xe]
      %v7680 = vld [vmem:[%s6918 + $0x1c] sm:$0xf]
      %v7681 = vld [vmem:[%s6918 + $0x20] sm:$0x1]
      %v7682 = vld [vmem:[%s6918 + $0x24] sm:$0xe]
      %v7683 = vld [vmem:[%s6918 + $0x28] sm:$0xf]
      %v7684 = vld [vmem:[%s6918 + $0x2c] sm:$0x1]
      %v7685 = vld [vmem:[%s6918 + $0x30] sm:$0xe]
      %v7686 = vld [vmem:[%s6918 + $0x34] sm:$0xf]
      %v7687 = vld [vmem:[%s6918 + $0x38] sm:$0x1]
      %v7688 = vld [vmem:[%s6918 + $0x3c] sm:$0xe]
      %v7689 = vld [vmem:[%s6918 + $0x40] sm:$0xf]
      %v7690 = vld [vmem:[%s6918 + $0x44] sm:$0x1]
      %v7691 = vld [vmem:[%s6918 + $0x48] sm:$0xe]
      %v7692 = vld [vmem:[%s6918 + $0x4c] sm:$0xf]
      %v7693 = vld [vmem:[%s6918 + $0x50] sm:$0x1]
      %v7694 = vld [vmem:[%s6918 + $0x54] sm:$0xe]
      %v7695 = vld [vmem:[%s6918 + $0x58] sm:$0xf]
      %v7696 = vld [vmem:[%s6918 + $0x5c] sm:$0x1]
      %v7697 = vld [vmem:[%s6918 + $0x60] sm:$0xe]
      %v7698 = vld [vmem:[%s6918 + $0x64] sm:$0xf]
      %v7699 = vld [vmem:[%s6918 + $0x68] sm:$0x1]
      %v7700 = vld [vmem:[%s6918 + $0x6c] sm:$0xe]
      %v7701 = vld [vmem:[%s6918 + $0x70] sm:$0xf]
      %v7702 = vld [vmem:[%s6918 + $0x74] sm:$0x1]
      %v7703 = vld [vmem:[%s6918 + $0x78] sm:$0xe]
      %v7704 = vld [vmem:[%s6918 + $0x7c] sm:$0xf]
      %v7705 = vld [vmem:[%s6918 + $0x80] sm:$0x1]
      %v7706 = vld [vmem:[%s6918 + $0x84] sm:$0xe]
      %v7707 = vld [vmem:[%s6918 + $0x88] sm:$0xf]
      %v7708 = vld [vmem:[%s6918 + $0x8c] sm:$0x1]
      %v7709 = vld [vmem:[%s6918 + $0x90] sm:$0xe]
      %v7710 = vld [vmem:[%s6918 + $0x94] sm:$0xf]
      %v7711 = vld [vmem:[%s6918 + $0x98] sm:$0x1]
      %v7712 = vld [vmem:[%s6918 + $0x9c] sm:$0xe]
      %v7713 = vld [vmem:[%s6918 + $0xa0] sm:$0xf]
      %v7714 = vld [vmem:[%s6918 + $0xa4] sm:$0x1]
      %v7715 = vld [vmem:[%s6918 + $0xa8] sm:$0xe]
      %v7716 = vld [vmem:[%s6918 + $0xac] sm:$0xf]
      %v7717 = vld [vmem:[%s6918 + $0xb0] sm:$0x1]
      %v7718 = vld [vmem:[%s6918 + $0xb4] sm:$0xe]
      %v7719 = vld [vmem:[%s6918 + $0xb8] sm:$0xf]
      %v7720 = vld [vmem:[%s6918 + $0xbc] sm:$0x1]
      %v7769 = vrot.slane %v7673, 5
      %v7770 = vrot.slane %v7769, 4
      %v7771 = vrot.slane %v7674, 5
      %v7772 = vsel %vm1663, %v7770, %v7771
      %v7773 = vrot.slane %v7771, 4
      %v7774 = vrot.slane %v7675, 5
      %v7775 = vsel %vm1663, %v7773, %v7774
      %v7776 = vrot.slane %v7676, 5
      %v7777 = vrot.slane %v7776, 4
      %v7778 = vrot.slane %v7677, 5
      %v7779 = vsel %vm1663, %v7777, %v7778
      %v7780 = vrot.slane %v7778, 4
      %v7781 = vrot.slane %v7678, 5
      %v7782 = vsel %vm1663, %v7780, %v7781
      %v7783 = vrot.slane %v7679, 5
      %v7784 = vrot.slane %v7783, 4
      %v7785 = vrot.slane %v7680, 5
      %v7786 = vsel %vm1663, %v7784, %v7785
      %v7787 = vrot.slane %v7785, 4
      %v7788 = vrot.slane %v7681, 5
      %v7789 = vsel %vm1663, %v7787, %v7788
      %v7790 = vrot.slane %v7682, 5
      %v7791 = vrot.slane %v7790, 4
      %v7792 = vrot.slane %v7683, 5
      %v7793 = vsel %vm1663, %v7791, %v7792
      %v7794 = vrot.slane %v7792, 4
      %v7795 = vrot.slane %v7684, 5
      %v7796 = vsel %vm1663, %v7794, %v7795
      %v7797 = vrot.slane %v7685, 5
      %v7798 = vrot.slane %v7797, 4
      %v7799 = vrot.slane %v7686, 5
      %v7800 = vsel %vm1663, %v7798, %v7799
      %v7801 = vrot.slane %v7799, 4
      %v7802 = vrot.slane %v7687, 5
      %v7803 = vsel %vm1663, %v7801, %v7802
      %v7804 = vrot.slane %v7688, 5
      %v7805 = vrot.slane %v7804, 4
      %v7806 = vrot.slane %v7689, 5
      %v7807 = vsel %vm1663, %v7805, %v7806
      %v7808 = vrot.slane %v7806, 4
      %v7809 = vrot.slane %v7690, 5
      %v7810 = vsel %vm1663, %v7808, %v7809
      %v7811 = vrot.slane %v7691, 5
      %v7812 = vrot.slane %v7811, 4
      %v7813 = vrot.slane %v7692, 5
      %v7814 = vsel %vm1663, %v7812, %v7813
      %v7815 = vrot.slane %v7813, 4
      %v7816 = vrot.slane %v7693, 5
      %v7817 = vsel %vm1663, %v7815, %v7816
      %v7818 = vrot.slane %v7694, 5
      %v7819 = vrot.slane %v7818, 4
      %v7820 = vrot.slane %v7695, 5
      %v7821 = vsel %vm1663, %v7819, %v7820
      %v7822 = vrot.slane %v7820, 4
      %v7823 = vrot.slane %v7696, 5
      %v7824 = vsel %vm1663, %v7822, %v7823
      %v7825 = vrot.slane %v7697, 5
      %v7826 = vrot.slane %v7825, 4
      %v7827 = vrot.slane %v7698, 5
      %v7828 = vsel %vm1663, %v7826, %v7827
      %v7829 = vrot.slane %v7827, 4
      %v7830 = vrot.slane %v7699, 5
      %v7831 = vsel %vm1663, %v7829, %v7830
      %v7832 = vrot.slane %v7700, 5
      %v7833 = vrot.slane %v7832, 4
      %v7834 = vrot.slane %v7701, 5
      %v7835 = vsel %vm1663, %v7833, %v7834
      %v7836 = vrot.slane %v7834, 4
      %v7837 = vrot.slane %v7702, 5
      %v7838 = vsel %vm1663, %v7836, %v7837
      %v7839 = vrot.slane %v7703, 5
      %v7840 = vrot.slane %v7839, 4
      %v7841 = vrot.slane %v7704, 5
      %v7842 = vsel %vm1663, %v7840, %v7841
      %v7843 = vrot.slane %v7841, 4
      %v7844 = vrot.slane %v7705, 5
      %v7845 = vsel %vm1663, %v7843, %v7844
      %v7846 = vrot.slane %v7706, 5
      %v7847 = vrot.slane %v7846, 4
      %v7848 = vrot.slane %v7707, 5
      %v7849 = vsel %vm1663, %v7847, %v7848
      %v7850 = vrot.slane %v7848, 4
      %v7851 = vrot.slane %v7708, 5
      %v7852 = vsel %vm1663, %v7850, %v7851
      %v7853 = vrot.slane %v7709, 5
      %v7854 = vrot.slane %v7853, 4
      %v7855 = vrot.slane %v7710, 5
      %v7856 = vsel %vm1663, %v7854, %v7855
      %v7857 = vrot.slane %v7855, 4
      %v7858 = vrot.slane %v7711, 5
      %v7859 = vsel %vm1663, %v7857, %v7858
      %v7860 = vrot.slane %v7712, 5
      %v7861 = vrot.slane %v7860, 4
      %v7862 = vrot.slane %v7713, 5
      %v7863 = vsel %vm1663, %v7861, %v7862
      %v7864 = vrot.slane %v7862, 4
      %v7865 = vrot.slane %v7714, 5
      %v7866 = vsel %vm1663, %v7864, %v7865
      %v7867 = vrot.slane %v7715, 5
      %v7868 = vrot.slane %v7867, 4
      %v7869 = vrot.slane %v7716, 5
      %v7870 = vsel %vm1663, %v7868, %v7869
      %v7871 = vrot.slane %v7869, 4
      %v7872 = vrot.slane %v7717, 5
      %v7873 = vsel %vm1663, %v7871, %v7872
      %v7874 = vrot.slane %v7718, 5
      %v7875 = vrot.slane %v7874, 4
      %v7876 = vrot.slane %v7719, 5
      %v7877 = vsel %vm1663, %v7875, %v7876
      %v7878 = vrot.slane %v7876, 4
      %v7879 = vrot.slane %v7720, 5
      %v7880 = vsel %vm1663, %v7878, %v7879
      %7881 = vrot.lane.b32.xlu0 %v7772, 64
      %v7882 = vpop.permute.xlu0 %7881
      %7883 = vrot.lane.b32.xlu0 %v7775, 64
      %v7884 = vpop.permute.xlu0 %7883
      %7885 = vrot.lane.b32.xlu0 %v7779, 64
      %v7886 = vpop.permute.xlu0 %7885
      %7887 = vrot.lane.b32.xlu0 %v7782, 64
      %v7888 = vpop.permute.xlu0 %7887
      %7889 = vrot.lane.b32.xlu0 %v7786, 64
      %v7890 = vpop.permute.xlu0 %7889
      %7891 = vrot.lane.b32.xlu0 %v7789, 64
      %v7892 = vpop.permute.xlu0 %7891
      %7893 = vrot.lane.b32.xlu0 %v7793, 64
      %v7894 = vpop.permute.xlu0 %7893
      %7895 = vrot.lane.b32.xlu0 %v7796, 64
      %v7896 = vpop.permute.xlu0 %7895
      %7897 = vrot.lane.b32.xlu0 %v7800, 64
      %v7898 = vpop.permute.xlu0 %7897
      %7899 = vrot.lane.b32.xlu0 %v7803, 64
      %v7900 = vpop.permute.xlu0 %7899
      %7901 = vrot.lane.b32.xlu0 %v7807, 64
      %v7902 = vpop.permute.xlu0 %7901
      %7903 = vrot.lane.b32.xlu0 %v7810, 64
      %v7904 = vpop.permute.xlu0 %7903
      %7905 = vrot.lane.b32.xlu0 %v7814, 64
      %v7906 = vpop.permute.xlu0 %7905
      %7907 = vrot.lane.b32.xlu0 %v7817, 64
      %v7908 = vpop.permute.xlu0 %7907
      %7909 = vrot.lane.b32.xlu0 %v7821, 64
      %v7910 = vpop.permute.xlu0 %7909
      %7911 = vrot.lane.b32.xlu0 %v7824, 64
      %v7912 = vpop.permute.xlu0 %7911
      %7913 = vrot.lane.b32.xlu0 %v7828, 64
      %v7914 = vpop.permute.xlu0 %7913
      %7915 = vrot.lane.b32.xlu0 %v7831, 64
      %v7916 = vpop.permute.xlu0 %7915
      %7917 = vrot.lane.b32.xlu0 %v7835, 64
      %v7918 = vpop.permute.xlu0 %7917
      %7919 = vrot.lane.b32.xlu0 %v7838, 64
      %v7920 = vpop.permute.xlu0 %7919
      %7921 = vrot.lane.b32.xlu0 %v7842, 64
      %v7922 = vpop.permute.xlu0 %7921
      %7923 = vrot.lane.b32.xlu0 %v7845, 64
      %v7924 = vpop.permute.xlu0 %7923
      %7925 = vrot.lane.b32.xlu0 %v7849, 64
      %v7926 = vpop.permute.xlu0 %7925
      %7927 = vrot.lane.b32.xlu0 %v7852, 64
      %v7928 = vpop.permute.xlu0 %7927
      %7929 = vrot.lane.b32.xlu0 %v7856, 64
      %v7930 = vpop.permute.xlu0 %7929
      %7931 = vrot.lane.b32.xlu0 %v7859, 64
      %v7932 = vpop.permute.xlu0 %7931
      %7933 = vrot.lane.b32.xlu0 %v7863, 64
      %v7934 = vpop.permute.xlu0 %7933
      %7935 = vrot.lane.b32.xlu0 %v7866, 64
      %v7936 = vpop.permute.xlu0 %7935
      %7937 = vrot.lane.b32.xlu0 %v7870, 64
      %v7938 = vpop.permute.xlu0 %7937
      %7939 = vrot.lane.b32.xlu0 %v7873, 64
      %v7940 = vpop.permute.xlu0 %7939
      %7941 = vrot.lane.b32.xlu0 %v7877, 64
      %v7942 = vpop.permute.xlu0 %7941
      %7943 = vrot.lane.b32.xlu0 %v7880, 64
      %v7944 = vpop.permute.xlu0 %7943
      %vm7977 = vcmask 585216
      %7978 = vst.msk [vmem:[#allocation5] sm:$0xf] %vm7977, %v7882
      %7979 = vst.msk [vmem:[#allocation5 + $0x4] sm:$0xf] %vm7977, %v7884
      %7980 = vst.msk [vmem:[#allocation5 + $0x8] sm:$0xf] %vm7977, %v7886
      %7981 = vst.msk [vmem:[#allocation5 + $0xc] sm:$0xf] %vm7977, %v7888
      %7982 = vst.msk [vmem:[#allocation5 + $0x10] sm:$0xf] %vm7977, %v7890
      %7983 = vst.msk [vmem:[#allocation5 + $0x14] sm:$0xf] %vm7977, %v7892
      %7984 = vst.msk [vmem:[#allocation5 + $0x18] sm:$0xf] %vm7977, %v7894
      %7985 = vst.msk [vmem:[#allocation5 + $0x1c] sm:$0xf] %vm7977, %v7896
      %7986 = vst.msk [vmem:[#allocation5 + $0x20] sm:$0xf] %vm7977, %v7898
      %7987 = vst.msk [vmem:[#allocation5 + $0x24] sm:$0xf] %vm7977, %v7900
      %7988 = vst.msk [vmem:[#allocation5 + $0x28] sm:$0xf] %vm7977, %v7902
      %7989 = vst.msk [vmem:[#allocation5 + $0x2c] sm:$0xf] %vm7977, %v7904
      %7990 = vst.msk [vmem:[#allocation5 + $0x30] sm:$0xf] %vm7977, %v7906
      %7991 = vst.msk [vmem:[#allocation5 + $0x34] sm:$0xf] %vm7977, %v7908
      %7992 = vst.msk [vmem:[#allocation5 + $0x38] sm:$0xf] %vm7977, %v7910
      %7993 = vst.msk [vmem:[#allocation5 + $0x3c] sm:$0xf] %vm7977, %v7912
      %7994 = vst.msk [vmem:[#allocation5 + $0x40] sm:$0xf] %vm7977, %v7914
      %7995 = vst.msk [vmem:[#allocation5 + $0x44] sm:$0xf] %vm7977, %v7916
      %7996 = vst.msk [vmem:[#allocation5 + $0x48] sm:$0xf] %vm7977, %v7918
      %7997 = vst.msk [vmem:[#allocation5 + $0x4c] sm:$0xf] %vm7977, %v7920
      %7998 = vst.msk [vmem:[#allocation5 + $0x50] sm:$0xf] %vm7977, %v7922
      %7999 = vst.msk [vmem:[#allocation5 + $0x54] sm:$0xf] %vm7977, %v7924
      %8000 = vst.msk [vmem:[#allocation5 + $0x58] sm:$0xf] %vm7977, %v7926
      %8001 = vst.msk [vmem:[#allocation5 + $0x5c] sm:$0xf] %vm7977, %v7928
      %8002 = vst.msk [vmem:[#allocation5 + $0x60] sm:$0xf] %vm7977, %v7930
      %8003 = vst.msk [vmem:[#allocation5 + $0x64] sm:$0xf] %vm7977, %v7932
      %8004 = vst.msk [vmem:[#allocation5 + $0x68] sm:$0xf] %vm7977, %v7934
      %8005 = vst.msk [vmem:[#allocation5 + $0x6c] sm:$0xf] %vm7977, %v7936
      %8006 = vst.msk [vmem:[#allocation5 + $0x70] sm:$0xf] %vm7977, %v7938
      %8007 = vst.msk [vmem:[#allocation5 + $0x74] sm:$0xf] %vm7977, %v7940
      %8008 = vst.msk [vmem:[#allocation5 + $0x78] sm:$0xf] %vm7977, %v7942
      %8009 = vst.msk [vmem:[#allocation5 + $0x7c] sm:$0xf] %vm7977, %v7944
      %v8010 = vld [vmem:[#allocation5] sm:$0xf]
      %v8011 = vld [vmem:[#allocation5 + $0x4] sm:$0xf]
      %v8012 = vld [vmem:[#allocation5 + $0x8] sm:$0xf]
      %v8013 = vld [vmem:[#allocation5 + $0xc] sm:$0xf]
      %v8014 = vld [vmem:[#allocation5 + $0x10] sm:$0xf]
      %v8015 = vld [vmem:[#allocation5 + $0x14] sm:$0xf]
      %v8016 = vld [vmem:[#allocation5 + $0x18] sm:$0xf]
      %v8017 = vld [vmem:[#allocation5 + $0x1c] sm:$0xf]
      %v8018 = vld [vmem:[#allocation5 + $0x20] sm:$0xf]
      %v8019 = vld [vmem:[#allocation5 + $0x24] sm:$0xf]
      %v8020 = vld [vmem:[#allocation5 + $0x28] sm:$0xf]
      %v8021 = vld [vmem:[#allocation5 + $0x2c] sm:$0xf]
      %v8022 = vld [vmem:[#allocation5 + $0x30] sm:$0xf]
      %v8023 = vld [vmem:[#allocation5 + $0x34] sm:$0xf]
      %v8024 = vld [vmem:[#allocation5 + $0x38] sm:$0xf]
      %v8025 = vld [vmem:[#allocation5 + $0x3c] sm:$0xf]
      %v8026 = vld [vmem:[#allocation5 + $0x40] sm:$0xf]
      %v8027 = vld [vmem:[#allocation5 + $0x44] sm:$0xf]
      %v8028 = vld [vmem:[#allocation5 + $0x48] sm:$0xf]
      %v8029 = vld [vmem:[#allocation5 + $0x4c] sm:$0xf]
      %v8030 = vld [vmem:[#allocation5 + $0x50] sm:$0xf]
      %v8031 = vld [vmem:[#allocation5 + $0x54] sm:$0xf]
      %v8032 = vld [vmem:[#allocation5 + $0x58] sm:$0xf]
      %v8033 = vld [vmem:[#allocation5 + $0x5c] sm:$0xf]
      %v8034 = vld [vmem:[#allocation5 + $0x60] sm:$0xf]
      %v8035 = vld [vmem:[#allocation5 + $0x64] sm:$0xf]
      %v8036 = vld [vmem:[#allocation5 + $0x68] sm:$0xf]
      %v8037 = vld [vmem:[#allocation5 + $0x6c] sm:$0xf]
      %v8038 = vld [vmem:[#allocation5 + $0x70] sm:$0xf]
      %v8039 = vld [vmem:[#allocation5 + $0x74] sm:$0xf]
      %v8040 = vld [vmem:[#allocation5 + $0x78] sm:$0xf]
      %v8041 = vld [vmem:[#allocation5 + $0x7c] sm:$0xf]
      %v8042 = vld [vmem:[%s2] sm:$0xf]
      %v8043 = vld [vmem:[%s2 + $0x4] sm:$0xf]
      %v8044 = vld [vmem:[%s2 + $0x8] sm:$0xf]
      %v8045 = vld [vmem:[%s2 + $0xc] sm:$0xf]
      %v8046 = vld [vmem:[%s2 + $0x10] sm:$0xf]
      %v8047 = vld [vmem:[%s2 + $0x14] sm:$0xf]
      %v8048 = vld [vmem:[%s2 + $0x18] sm:$0xf]
      %v8049 = vld [vmem:[%s2 + $0x1c] sm:$0xf]
      %v8050 = vld [vmem:[%s2 + $0x20] sm:$0xf]
      %v8051 = vld [vmem:[%s4] sm:$0x1]
      %v8053 = vperm.slane %v8051, 0
      %v8087 = vunpack.c.l.b16 %v8010
      %v8088 = vunpack.c.l.b16 %v8011
      %v8089 = vunpack.c.l.b16 %v8012
      %v8090 = vunpack.c.l.b16 %v8013
      %v8091 = vunpack.c.l.b16 %v8014
      %v8092 = vunpack.c.l.b16 %v8015
      %v8093 = vunpack.c.l.b16 %v8016
      %v8094 = vunpack.c.l.b16 %v8017
      %v8095 = vunpack.c.l.b16 %v8018
      %v8096 = vunpack.c.l.b16 %v8019
      %v8097 = vunpack.c.l.b16 %v8020
      %v8098 = vunpack.c.l.b16 %v8021
      %v8099 = vunpack.c.l.b16 %v8022
      %v8100 = vunpack.c.l.b16 %v8023
      %v8101 = vunpack.c.l.b16 %v8024
      %v8102 = vunpack.c.l.b16 %v8025
      %v8103 = vunpack.c.l.b16 %v8026
      %v8104 = vunpack.c.l.b16 %v8027
      %v8105 = vunpack.c.l.b16 %v8028
      %v8106 = vunpack.c.l.b16 %v8029
      %v8107 = vunpack.c.l.b16 %v8030
      %v8108 = vunpack.c.l.b16 %v8031
      %v8109 = vunpack.c.l.b16 %v8032
      %v8110 = vunpack.c.l.b16 %v8033
      %v8111 = vunpack.c.l.b16 %v8034
      %v8112 = vunpack.c.l.b16 %v8035
      %v8113 = vunpack.c.l.b16 %v8036
      %v8114 = vunpack.c.l.b16 %v8037
      %v8115 = vunpack.c.l.b16 %v8038
      %v8116 = vunpack.c.l.b16 %v8039
      %v8117 = vunpack.c.l.b16 %v8040
      %v8118 = vunpack.c.l.b16 %v8041
      %v8119 = vpack.c.b16 %v8088, %v8087
      %v8120 = vpack.c.b16 %v8090, %v8089
      %v8121 = vpack.c.b16 %v8092, %v8091
      %v8122 = vpack.c.b16 %v8094, %v8093
      %v8123 = vpack.c.b16 %v8096, %v8095
      %v8124 = vpack.c.b16 %v8098, %v8097
      %v8125 = vpack.c.b16 %v8100, %v8099
      %v8126 = vpack.c.b16 %v8102, %v8101
      %v8127 = vpack.c.b16 %v8104, %v8103
      %v8128 = vpack.c.b16 %v8106, %v8105
      %v8129 = vpack.c.b16 %v8108, %v8107
      %v8130 = vpack.c.b16 %v8110, %v8109
      %v8131 = vpack.c.b16 %v8112, %v8111
      %v8132 = vpack.c.b16 %v8114, %v8113
      %v8133 = vpack.c.b16 %v8116, %v8115
      %v8134 = vpack.c.b16 %v8118, %v8117
      %v8144 = vunpack.c.l.b16 %v8042
      %v8145 = vunpack.c.l.b16 %v8043
      %v8146 = vunpack.c.l.b16 %v8044
      %v8147 = vunpack.c.l.b16 %v8045
      %v8148 = vunpack.c.l.b16 %v8046
      %v8149 = vunpack.c.l.b16 %v8047
      %v8150 = vunpack.c.l.b16 %v8048
      %v8151 = vunpack.c.l.b16 %v8049
      %v8152 = vunpack.c.l.b16 %v8050
      %v8153 = vpack.c.b16 %v8145, %v8144
      %v8154 = vpack.c.b16 %v8147, %v8146
      %v8155 = vpack.c.b16 %v8149, %v8148
      %v8156 = vpack.c.b16 %v8151, %v8150
      %v8157 = vpack.c.b16 %v8152, %v8152
      %vm8162 = vcmask 588800
      %v8164 = vsel %vm8162, %v8119, 0
      %v8167 = vsel %vm8162, %v8120, 0
      %v8170 = vsel %vm8162, %v8121, 0
      %v8173 = vsel %vm8162, %v8122, 0
      %v8176 = vsel %vm8162, %v8123, 0
      %v8179 = vsel %vm8162, %v8124, 0
      %v8182 = vsel %vm8162, %v8125, 0
      %v8185 = vsel %vm8162, %v8126, 0
      %v8188 = vsel %vm8162, %v8127, 0
      %v8191 = vsel %vm8162, %v8128, 0
      %v8194 = vsel %vm8162, %v8129, 0
      %v8197 = vsel %vm8162, %v8130, 0
      %v8200 = vsel %vm8162, %v8131, 0
      %v8203 = vsel %vm8162, %v8132, 0
      %v8206 = vsel %vm8162, %v8133, 0
      %v8209 = vsel %vm8162, %v8134, 0
      %vm8211 = vcmask 1043456
      %v8213 = vsel %vm8211, %v8157, 0
      %8215 = vmatpush.bf16.msra.mxu0 0
      %8216 = vmatpush.bf16.msra.mxu0 0
      %8217 = vmatpush.bf16.msra.mxu0 0
      %8218 = vmatpush.bf16.msra.mxu0 %v8213
      %8219 = vmatpush.bf16.msra.mxu0 %v8156
      %8220 = vmatpush.bf16.msra.mxu0 %v8155
      %8221 = vmatpush.bf16.msra.mxu0 %v8154
      %8222 = vmatpush.bf16.msra.mxu0 %v8153
      %8223 = vmatmul.bf16.gmra.mxu0 %v8164
      %v8224 = vpop.f32.mrf.mxu0
      %v8225 = vadd.f32 %v8053, %v8224
      %v8226 = vpop.f32.mrf.mxu0
      %v8227 = vadd.f32 %v8053, %v8226
      %8228 = vmatmul.bf16.gmra.mxu0 %v8167
      %v8229 = vpop.f32.mrf.mxu0
      %v8230 = vadd.f32 %v8053, %v8229
      %v8231 = vpop.f32.mrf.mxu0
      %v8232 = vadd.f32 %v8053, %v8231
      %8233 = vmatmul.bf16.gmra.mxu0 %v8170
      %v8234 = vpop.f32.mrf.mxu0
      %v8235 = vadd.f32 %v8053, %v8234
      %v8236 = vpop.f32.mrf.mxu0
      %v8237 = vadd.f32 %v8053, %v8236
      %8238 = vmatmul.bf16.gmra.mxu0 %v8173
      %v8239 = vpop.f32.mrf.mxu0
      %v8240 = vadd.f32 %v8053, %v8239
      %v8241 = vpop.f32.mrf.mxu0
      %v8242 = vadd.f32 %v8053, %v8241
      %8243 = vmatmul.bf16.gmra.mxu0 %v8176
      %v8244 = vpop.f32.mrf.mxu0
      %v8245 = vadd.f32 %v8053, %v8244
      %v8246 = vpop.f32.mrf.mxu0
      %v8247 = vadd.f32 %v8053, %v8246
      %8248 = vmatmul.bf16.gmra.mxu0 %v8179
      %v8249 = vpop.f32.mrf.mxu0
      %v8250 = vadd.f32 %v8053, %v8249
      %v8251 = vpop.f32.mrf.mxu0
      %v8252 = vadd.f32 %v8053, %v8251
      %8253 = vmatmul.bf16.gmra.mxu0 %v8182
      %v8254 = vpop.f32.mrf.mxu0
      %v8255 = vadd.f32 %v8053, %v8254
      %v8256 = vpop.f32.mrf.mxu0
      %v8257 = vadd.f32 %v8053, %v8256
      %8258 = vmatmul.bf16.gmra.mxu0 %v8185
      %v8259 = vpop.f32.mrf.mxu0
      %v8260 = vadd.f32 %v8053, %v8259
      %v8261 = vpop.f32.mrf.mxu0
      %v8262 = vadd.f32 %v8053, %v8261
      %8263 = vmatmul.bf16.gmra.mxu0 %v8188
      %v8264 = vpop.f32.mrf.mxu0
      %v8265 = vadd.f32 %v8053, %v8264
      %v8266 = vpop.f32.mrf.mxu0
      %v8267 = vadd.f32 %v8053, %v8266
      %8268 = vmatmul.bf16.gmra.mxu0 %v8191
      %v8269 = vpop.f32.mrf.mxu0
      %v8270 = vadd.f32 %v8053, %v8269
      %v8271 = vpop.f32.mrf.mxu0
      %v8272 = vadd.f32 %v8053, %v8271
      %8273 = vmatmul.bf16.gmra.mxu0 %v8194
      %v8274 = vpop.f32.mrf.mxu0
      %v8275 = vadd.f32 %v8053, %v8274
      %v8276 = vpop.f32.mrf.mxu0
      %v8277 = vadd.f32 %v8053, %v8276
      %8278 = vmatmul.bf16.gmra.mxu0 %v8197
      %v8279 = vpop.f32.mrf.mxu0
      %v8280 = vadd.f32 %v8053, %v8279
      %v8281 = vpop.f32.mrf.mxu0
      %v8282 = vadd.f32 %v8053, %v8281
      %8283 = vmatmul.bf16.gmra.mxu0 %v8200
      %v8284 = vpop.f32.mrf.mxu0
      %v8285 = vadd.f32 %v8053, %v8284
      %v8286 = vpop.f32.mrf.mxu0
      %v8287 = vadd.f32 %v8053, %v8286
      %8288 = vmatmul.bf16.gmra.mxu0 %v8203
      %v8289 = vpop.f32.mrf.mxu0
      %v8290 = vadd.f32 %v8053, %v8289
      %v8291 = vpop.f32.mrf.mxu0
      %v8292 = vadd.f32 %v8053, %v8291
      %8293 = vmatmul.bf16.gmra.mxu0 %v8206
      %v8294 = vpop.f32.mrf.mxu0
      %v8295 = vadd.f32 %v8053, %v8294
      %v8296 = vpop.f32.mrf.mxu0
      %v8297 = vadd.f32 %v8053, %v8296
      %8298 = vmatmul.bf16.gmra.mxu0 %v8209
      %v8299 = vpop.f32.mrf.mxu0
      %v8300 = vadd.f32 %v8053, %v8299
      %v8301 = vpop.f32.mrf.mxu0
      %v8302 = vadd.f32 %v8053, %v8301
      %8303 = vdwg.mxu0
      %vm8304 = vcmask 64512
      %8305 = vst.msk [vmem:[%s224] sm:$0xff] %vm8304, %v8225
      %8306 = vst.msk [vmem:[%s224 + $0x8] sm:$0xff] %vm8304, %v8227
      %8307 = vst.msk [vmem:[%s224 + $0x10] sm:$0xff] %vm8304, %v8230
      %8308 = vst.msk [vmem:[%s224 + $0x18] sm:$0xff] %vm8304, %v8232
      %8309 = vst.msk [vmem:[%s224 + $0x20] sm:$0xff] %vm8304, %v8235
      %8310 = vst.msk [vmem:[%s224 + $0x28] sm:$0xff] %vm8304, %v8237
      %8311 = vst.msk [vmem:[%s224 + $0x30] sm:$0xff] %vm8304, %v8240
      %8312 = vst.msk [vmem:[%s224 + $0x38] sm:$0xff] %vm8304, %v8242
      %8313 = vst.msk [vmem:[%s224 + $0x40] sm:$0xff] %vm8304, %v8245
      %8314 = vst.msk [vmem:[%s224 + $0x48] sm:$0xff] %vm8304, %v8247
      %8315 = vst.msk [vmem:[%s224 + $0x50] sm:$0xff] %vm8304, %v8250
      %8316 = vst.msk [vmem:[%s224 + $0x58] sm:$0xff] %vm8304, %v8252
      %8317 = vst.msk [vmem:[%s224 + $0x60] sm:$0xff] %vm8304, %v8255
      %8318 = vst.msk [vmem:[%s224 + $0x68] sm:$0xff] %vm8304, %v8257
      %8319 = vst.msk [vmem:[%s224 + $0x70] sm:$0xff] %vm8304, %v8260
      %8320 = vst.msk [vmem:[%s224 + $0x78] sm:$0xff] %vm8304, %v8262
      %8321 = vst.msk [vmem:[%s224 + $0x80] sm:$0xff] %vm8304, %v8265
      %8322 = vst.msk [vmem:[%s224 + $0x88] sm:$0xff] %vm8304, %v8267
      %8323 = vst.msk [vmem:[%s224 + $0x90] sm:$0xff] %vm8304, %v8270
      %8324 = vst.msk [vmem:[%s224 + $0x98] sm:$0xff] %vm8304, %v8272
      %8325 = vst.msk [vmem:[%s224 + $0xa0] sm:$0xff] %vm8304, %v8275
      %8326 = vst.msk [vmem:[%s224 + $0xa8] sm:$0xff] %vm8304, %v8277
      %8327 = vst.msk [vmem:[%s224 + $0xb0] sm:$0xff] %vm8304, %v8280
      %8328 = vst.msk [vmem:[%s224 + $0xb8] sm:$0xff] %vm8304, %v8282
      %8329 = vst.msk [vmem:[%s224 + $0xc0] sm:$0xff] %vm8304, %v8285
      %8330 = vst.msk [vmem:[%s224 + $0xc8] sm:$0xff] %vm8304, %v8287
      %8331 = vst.msk [vmem:[%s224 + $0xd0] sm:$0xff] %vm8304, %v8290
      %8332 = vst.msk [vmem:[%s224 + $0xd8] sm:$0xff] %vm8304, %v8292
      %8333 = vst.msk [vmem:[%s224 + $0xe0] sm:$0xff] %vm8304, %v8295
      %8334 = vst.msk [vmem:[%s224 + $0xe8] sm:$0xff] %vm8304, %v8297
      %8335 = vst.msk [vmem:[%s224 + $0xf0] sm:$0xff] %vm8304, %v8300
      %8336 = vst.msk [vmem:[%s224 + $0xf8] sm:$0xff] %vm8304, %v8302
      %p8337 = scmp.lt.s32.totalorder %s16, 1
      %s8338 = scalar_select %p8337, %s16, 1
      %s8339 = smul.addr %s8338, 32
      %s8340 = smul.addr %s8339, 8
      %s8341 = scalar_lea.vmem %s5, %s8340
      // Predicated region
      $region41: #{basic_block_forward.1} parent=39 // pred_check
        %p8342 = pneg %p144
      $region42: #{basic_block_forward.1} parent=39 // pred_check_branch
        %8344 = sbr.rel (%p8342) target = $region44
      $region43: #{basic_block_forward.1} parent=39 // pred_region
        _
      $region44: #{basic_block_forward.1} parent=39 // pred_fallthru
        _
    $region40: #{basic_block_forward.1} parent=5 // pred_fallthru
      _
    %p8345 = scmp.le.s32.totalorder 2, %s11
    // Predicated region
    $region45: #{basic_block_forward.1} parent=5 // pred_check
      %p8346 = pneg %p8345
    $region46: #{basic_block_forward.1} parent=5 // pred_check_branch
      %8348 = sbr.rel (%p8346) target = $region48
    $region47: #{basic_block_forward.1} parent=5 // pred_region
      %s8349 = ssub.s32 %s11, 2
      // Predicated region
      $region49: #{basic_block_forward.1} parent=47 // pred_check
        %p8350 = pneg %p150
      $region50: #{basic_block_forward.1} parent=47 // pred_check_branch
        %8352 = sbr.rel (%p8350) target = $region52
      $region51: #{basic_block_forward.1} parent=47 // pred_region
        %p8353 = scmp.lt.s32.totalorder %s17, 1
        %s8354 = scalar_select %p8353, %s17, 1
        %s8355 = smul.addr %s8354, 32
        %s8356 = smul.addr %s8355, 8
        %s8357 = scalar_lea.vmem %s5, %s8356
      $region52: #{basic_block_forward.1} parent=47 // pred_fallthru
        _
    $region48: #{basic_block_forward.1} parent=5 // pred_fallthru
      _
  $region6: #{basic_block_forward.1} parent=0 // loop_footer
    %s15 = sadd.s32 1, %s11
  $region7: #{basic_block_forward.1} parent=0 // loop_footer_branch
    %10 = sbr.rel target = $region3
  $region8: #{basic_block_forward.1} parent=0 // loop_exit
    _

</llo_original>
